<compile_context>
chip_gen: v7x
topology: tpu7x:2x2x1
jax: 0.10.0
libtpu: 0.0.40
codegen_flags: <defaults>
</compile_context>

<pallas_src>
import functools

import jax
import jax.numpy as jnp
from jax.experimental import pallas as pl
from jax.experimental.pallas import tpu as pltpu

RAW_FEATURE_NORM = "clipped_l2norm"   # args.raw_feature_norm_CMRC
LAMBDA_SOFTMAX = 4.0                  # args.lambda_softmax_CMRC
EPS = 1e-8


def cmrc_kernel(text_ref, image_ref,
                w_ss_ref, b_ss_ref, w1_ref, b1_ref, w2_ref, b2_ref,
                wr1_ref, br1_ref, wr2_ref, br2_ref,
                rf_ref, prob_ref, *, ew_dtype):
    t = text_ref[...]                 # (TB, Lt, Dp) bf16
    v = image_ref[...]                # (TB, Lr, Dp) bf16
    TB, Lt, Dp = t.shape
    t_f32 = t.astype(jnp.float32)

    # ---------------- Router ----------------
    tmean = jnp.mean(t_f32, axis=1)                                          # (TB, Dp)
    h = jnp.dot(tmean.astype(jnp.bfloat16), wr1_ref[...],
                preferred_element_type=jnp.float32) + br1_ref[...]
    h = jnp.maximum(h, 0.0)
    logits = jnp.dot(h.astype(jnp.bfloat16), wr2_ref[...],
                     preferred_element_type=jnp.float32) + br2_ref[...]      # (TB, Pp)
    prob_ref[...] = jax.nn.sigmoid(logits).astype(prob_ref.dtype)            # lane-dense

    # ------------- func_attention (SCAN, clipped_l2norm) -------------
    # s[b, q, r] = <text_bq, image_br>, computed directly in (Lt, Lr) layout.
    s = jnp.einsum('btd,brd->btr', t, v,
                   preferred_element_type=jnp.float32)                       # (TB, Lt, Lr)
    s = jnp.where(s > 0, s, 0.1 * s)                                         # LeakyReLU(0.1)
    # l2-normalize each region over the query axis (single rsqrt, EPS folded in)
    ssq = jnp.sum(s * s, axis=1, keepdims=True)                              # (TB, 1, Lr)
    s = s * jax.lax.rsqrt(ssq + EPS)
    # softmax over regions with temperature lambda_softmax (exact denominator)
    logit = s * LAMBDA_SOFTMAX
    m = jnp.max(logit, axis=-1, keepdims=True)
    e = jnp.exp(logit - m)
    attn = e / jnp.sum(e, axis=-1, keepdims=True)
    wctx = jnp.einsum('btr,brd->btd', attn.astype(jnp.bfloat16), v,
                      preferred_element_type=jnp.float32)                    # (TB, Lt, Dp)

    # ------------- Refinement.refine (flattened to (TB*Lt, Dp) matmuls) -------------
    wctx2 = wctx.reshape(TB * Lt, Dp).astype(jnp.bfloat16)
    # fc_scale | fc_shift fused into one (Dp, 2*Dp) matmul
    ss = jnp.dot(wctx2, w_ss_ref[...],
                 preferred_element_type=jnp.float32) + b_ss_ref[...]         # (TB*Lt, 2Dp)
    scaling = jnp.tanh(ss[:, :Dp].astype(ew_dtype))
    shifting = ss[:, Dp:].astype(ew_dtype)
    t2 = t.reshape(TB * Lt, Dp).astype(ew_dtype)
    x = (t2 * scaling + shifting).astype(jnp.bfloat16)
    h1 = jnp.maximum(
        jnp.dot(x, w1_ref[...], preferred_element_type=jnp.float32) + b1_ref[...], 0.0)
    modu = jnp.dot(h1.astype(jnp.bfloat16), w2_ref[...],
                   preferred_element_type=jnp.float32) + b2_ref[...]
    rf = modu + t_f32.reshape(TB * Lt, Dp)                                   # residual in f32
    rf_ref[...] = rf.reshape(TB, Lt, Dp).astype(rf_ref.dtype)


def _round_up(n, m):
    return ((n + m - 1) // m) * m


def _pad_axis(x, axis, target):
    pad = target - x.shape[axis]
    if pad <= 0:
        return x
    widths = [(0, 0)] * x.ndim
    widths[axis] = (0, pad)
    return jnp.pad(x, widths)


def _valid_tbs(B):
    # batch tiles: divisors of B whose sublane dim is clean for the (tb, 128) prob block
    divs = [d for d in range(1, B + 1) if B % d == 0 and (d % 8 == 0 or d == B)]
    return divs if divs else [B]


def _pick_tb(B, Lt, prefer_two_steps, target_rows=256):
    divs = _valid_tbs(B)
    big = [d for d in divs if d * Lt >= target_rows]      # full 256-row MXU pass
    multi = [d for d in divs if B // d >= 2]              # >=2 grid steps (v7x: 2 TCs)
    both = [d for d in big if B // d >= 2]
    if both:
        return min(both)
    if prefer_two_steps and multi:
        return max(multi)
    if big:
        return min(big)
    return max(multi) if multi else B


def _io_bytes(tb, Lt, Lr, Dp, Pp):
    # per-step pipelined I/O: text + rf (bf16), image (bf16), prob (f32)
    return (2 * tb * Lt * Dp + tb * Lr * Dp) * 2 + tb * Pp * 4


def _vmem_limit(tb, Lt, Lr, Dp, Hp, Pp):
    w_bytes = 2 * (Dp * 2 * Dp + 2 * Dp * Dp + Dp * Hp + Hp * Pp) \
        + 4 * (2 * Dp + 2 * Dp + Hp + Pp)                 # single-buffered weights/biases
    est = w_bytes + 2 * _io_bytes(tb, Lt, Lr, Dp, Pp)     # double-buffered I/O tiles
    # 2x margin + 8 MiB for f32 intermediates / compiler scratch; never the whole v7x VMEM
    return int(min(56 << 20, max(16 << 20, 2 * est + (8 << 20))))


def cross_modal_refinement_cell(text, image, params, *, tb=None):
    B, Lt, D = text.shape
    _, Lr, _ = image.shape
    hid = params["wr1"].shape[1]
    P = params["wr2"].shape[1]

    # note: bf16 native sublane pack is 16; multiples of 8 are correct, 16 is ideal.
    assert Lt % 8 == 0 and Lr % 8 == 0, "word/region counts must be multiples of 8"

    kind = jax.devices()[0].device_kind.lower()
    is_v7 = "v7" in kind
    ew_dtype = jnp.bfloat16 if ("v6" in kind or is_v7) else jnp.float32

    Dp = _round_up(D, 128)    # lane-dense embedding dim
    Hp = _round_up(hid, 128)
    Pp = _round_up(P, 128)    # lane-dense path_prob block

    if tb is None:
        tb = _pick_tb(B, Lt, prefer_two_steps=is_v7)
    assert B % tb == 0, "batch must be divisible by the batch tile"
    # shrink tb if the per-step I/O footprint would crowd VMEM (v7x has 64 MiB/TC)
    while tb > 1 and 2 * _io_bytes(tb, Lt, Lr, Dp, Pp) > (24 << 20):
        smaller = [d for d in _valid_tbs(B) if d < tb]
        if not smaller:
            break
        tb = max(smaller)

    bf16, f32 = jnp.bfloat16, jnp.float32

    # zero-pad embedding / hidden / path dims and cast MXU operands to bf16
    text_p = _pad_axis(text, 2, Dp).astype(bf16)
    image_p = _pad_axis(image, 2, Dp).astype(bf16)

    def pad_w(w, r, c):
        return _pad_axis(_pad_axis(w, 0, r), 1, c)

    w_ss = jnp.concatenate([pad_w(params["w_scale"], Dp, Dp),
                            pad_w(params["w_shift"], Dp, Dp)], axis=1).astype(bf16)
    b_ss = jnp.concatenate([_pad_axis(params["b_scale"], 1, Dp),
                            _pad_axis(params["b_shift"], 1, Dp)], axis=1).astype(f32)
    w1 = pad_w(params["w1"], Dp, Dp).astype(bf16)
    b1 = _pad_axis(params["b1"], 1, Dp).astype(f32)
    w2 = pad_w(params["w2"], Dp, Dp).astype(bf16)
    b2 = _pad_axis(params["b2"], 1, Dp).astype(f32)
    wr1 = pad_w(params["wr1"], Dp, Hp).astype(bf16)
    br1 = _pad_axis(params["br1"], 1, Hp).astype(f32)
    wr2 = pad_w(params["wr2"], Hp, Pp).astype(bf16)
    br2 = _pad_axis(params["br2"], 1, Pp).astype(f32)

    kernel = functools.partial(cmrc_kernel, ew_dtype=ew_dtype)
    vmem_bytes = _vmem_limit(tb, Lt, Lr, Dp, Hp, Pp)

    def build_and_run(single_buffer_weights):
        def const_spec(shape):
            idx = lambda b: (0,) * len(shape)
            if single_buffer_weights:
                try:
                    # constant block index every step -> one VMEM buffer is enough
                    return pl.BlockSpec(shape, idx, pipeline_mode=pl.Buffered(1))
                except Exception:
                    return pl.BlockSpec(shape, idx)
            return pl.BlockSpec(shape, idx)

        in_specs = [
            pl.BlockSpec((tb, Lt, Dp), lambda b: (b, 0, 0)),   # text tile
            pl.BlockSpec((tb, Lr, Dp), lambda b: (b, 0, 0)),   # image tile
            const_spec((Dp, 2 * Dp)), const_spec((1, 2 * Dp)),  # fused fc_scale|fc_shift
            const_spec((Dp, Dp)), const_spec((1, Dp)),          # fc_1
            const_spec((Dp, Dp)), const_spec((1, Dp)),          # fc_2
            const_spec((Dp, Hp)), const_spec((1, Hp)),          # router linear 1
            const_spec((Hp, Pp)), const_spec((1, Pp)),          # router linear 2
        ]
        out_specs = [
            pl.BlockSpec((tb, Lt, Dp), lambda b: (b, 0, 0)),   # rf_pairs_emb (bf16)
            pl.BlockSpec((tb, Pp), lambda b: (b, 0)),          # path_prob (lane-dense)
        ]
        out_shape = (jax.ShapeDtypeStruct((B, Lt, Dp), jnp.bfloat16),
                     jax.ShapeDtypeStruct((B, Pp), jnp.float32))

        fn = pl.pallas_call(
            kernel,
            out_shape=out_shape,
            grid_spec=pltpu.PrefetchScalarGridSpec(
                num_scalar_prefetch=0, grid=(B // tb,),
                in_specs=in_specs, out_specs=out_specs),
            compiler_params=pltpu.CompilerParams(
                dimension_semantics=("parallel",),
                vmem_limit_bytes=vmem_bytes),
        )
        return fn(text_p, image_p, w_ss, b_ss, w1, b1, w2, b2, wr1, br1, wr2, br2)

    try:
        rf_pad, prob = build_and_run(True)
    except Exception:
        # conservative fallback if single-buffered weight specs are rejected
        rf_pad, prob = build_and_run(False)

    rf = rf_pad if Dp == D else rf_pad[..., :D]
    return rf, prob[:, :P]


def init_params(key, D, hid, P):
    keys = jax.random.split(key, 6)

    def lin(k, din, dout):
        kw, kb = jax.random.split(k)
        w = jax.random.normal(kw, (din, dout), jnp.float32) * 0.1
        b = jax.random.normal(kb, (1, dout), jnp.float32) * 0.1
        return w, b

    w_scale, b_scale = lin(keys[0], D, D)
    w_shift, b_shift = lin(keys[1], D, D)
    w1, b1 = lin(keys[2], D, D)
    w2, b2 = lin(keys[3], D, D)
    wr1, br1 = lin(keys[4], D, hid)
    wr2, _ = lin(keys[5], hid, P)
    br2 = jnp.full((1, P), 1.5, jnp.float32)   # Router.init_weights(): last bias = 1.5
    return dict(w_scale=w_scale, b_scale=b_scale, w_shift=w_shift, b_shift=b_shift,
                w1=w1, b1=b1, w2=w2, b2=b2, wr1=wr1, br1=br1, wr2=wr2, br2=br2)


def reference(text, image, p):
    # plain-JAX (f32) replica of the PyTorch forward, for a correctness check
    tmean = text.mean(axis=1)
    h = jnp.maximum(tmean @ p["wr1"] + p["br1"], 0.0)
    prob = jax.nn.sigmoid(h @ p["wr2"] + p["br2"])

    attn = jnp.einsum('brd,btd->brt', image, text)
    attn = jnp.where(attn > 0, attn, 0.1 * attn)
    attn = attn / (jnp.sqrt((attn ** 2).sum(-1, keepdims=True)) + EPS)
    attn = jnp.swapaxes(attn, 1, 2)
    attn = jax.nn.softmax(attn * LAMBDA_SOFTMAX, axis=-1)
    wctx = jnp.einsum('btr,brd->btd', attn, image)

    scaling = jnp.tanh(wctx @ p["w_scale"] + p["b_scale"])
    shifting = wctx @ p["w_shift"] + p["b_shift"]
    h1 = jnp.maximum((text * scaling + shifting) @ p["w1"] + p["b1"], 0.0)
    rf = h1 @ p["w2"] + p["b2"] + text
    return rf, prob


if __name__ == "__main__":
    # B images, Lt words, Lr regions, embedding D, router hidden, num paths
    B, Lt, Lr, D, hid, P = 16, 16, 16, 32, 32, 4
    key = jax.random.PRNGKey(0)
    kt, ki, kp = jax.random.split(key, 3)
    text = jax.random.normal(kt, (B, Lt, D), jnp.float32)
    image = jax.random.normal(ki, (B, Lr, D), jnp.float32)
    params = init_params(kp, D, hid, P)

    rf, prob = cross_modal_refinement_cell(text, image, params)
    jax.block_until_ready((rf, prob))

    # reference computed in f32 from bf16-rounded inputs/weights (the kernel feeds the
    # MXU bf16 operands with f32 accumulation and emits rf in bf16, so compare against
    # the same input rounding with a bf16-scale tolerance on rf)
    q = lambda a: a.astype(jnp.bfloat16).astype(jnp.float32)
    params_q = {k: q(v) for k, v in params.items()}
    rf_ref, prob_ref = reference(q(text), q(image), params_q)

    assert rf.shape == (B, Lt, D) and prob.shape == (B, P)
    prob_err = float(jnp.max(jnp.abs(prob - prob_ref)))
    rf_err = float(jnp.max(jnp.abs(rf.astype(jnp.float32) - rf_ref)))
    assert prob_err < 1e-2, f"path_prob max err {prob_err}"
    assert rf_err < 2e-1, f"rf_pairs_emb max err {rf_err}"
    print("KERNEL_OK")
</pallas_src>

<mosaic_0001>
module attributes {stable_mosaic.version = 11 : i64} {
  func.func @cmrc_kernel(%arg0: i32, %arg1: memref<16x16x128xbf16, #tpu.memory_space<vmem>>, %arg2: memref<16x16x128xbf16, #tpu.memory_space<vmem>>, %arg3: memref<128x256xbf16, #tpu.memory_space<vmem>>, %arg4: memref<1x256xf32, #tpu.memory_space<vmem>>, %arg5: memref<128x128xbf16, #tpu.memory_space<vmem>>, %arg6: memref<1x128xf32, #tpu.memory_space<vmem>>, %arg7: memref<128x128xbf16, #tpu.memory_space<vmem>>, %arg8: memref<1x128xf32, #tpu.memory_space<vmem>>, %arg9: memref<128x128xbf16, #tpu.memory_space<vmem>>, %arg10: memref<1x128xf32, #tpu.memory_space<vmem>>, %arg11: memref<128x128xbf16, #tpu.memory_space<vmem>>, %arg12: memref<1x128xf32, #tpu.memory_space<vmem>>, %arg13: memref<16x16x128xbf16, #tpu.memory_space<vmem>>, %arg14: memref<16x128xf32, #tpu.memory_space<vmem>>) attributes {dimension_semantics = [#tpu.dimension_semantics<parallel>], iteration_bounds = array<i64: 1>, scalar_prefetch = 0 : i64, scratch_operands = 0 : i64, tpu.core_type = #tpu.core_type<tc>, window_params = [{transform_indices = @transform_0, window_bounds = array<i64: 16, 16, 128>}, {transform_indices = @transform_1, window_bounds = array<i64: 16, 16, 128>}, {pipeline_mode = #tpu.pipeline_mode<synchronous>, transform_indices = @transform_2, window_bounds = array<i64: 128, 256>}, {pipeline_mode = #tpu.pipeline_mode<synchronous>, transform_indices = @transform_3, window_bounds = array<i64: 1, 256>}, {pipeline_mode = #tpu.pipeline_mode<synchronous>, transform_indices = @transform_4, window_bounds = array<i64: 128, 128>}, {pipeline_mode = #tpu.pipeline_mode<synchronous>, transform_indices = @transform_5, window_bounds = array<i64: 1, 128>}, {pipeline_mode = #tpu.pipeline_mode<synchronous>, transform_indices = @transform_6, window_bounds = array<i64: 128, 128>}, {pipeline_mode = #tpu.pipeline_mode<synchronous>, transform_indices = @transform_7, window_bounds = array<i64: 1, 128>}, {pipeline_mode = #tpu.pipeline_mode<synchronous>, transform_indices = @transform_8, window_bounds = array<i64: 128, 128>}, {pipeline_mode = #tpu.pipeline_mode<synchronous>, transform_indices = @transform_9, window_bounds = array<i64: 1, 128>}, {pipeline_mode = #tpu.pipeline_mode<synchronous>, transform_indices = @transform_10, window_bounds = array<i64: 128, 128>}, {pipeline_mode = #tpu.pipeline_mode<synchronous>, transform_indices = @transform_11, window_bounds = array<i64: 1, 128>}, {transform_indices = @transform_12, window_bounds = array<i64: 16, 16, 128>}, {transform_indices = @transform_13, window_bounds = array<i64: 16, 128>}]} {
    %c0 = arith.constant 0 : index
    %c0_0 = arith.constant 0 : index
    %c0_1 = arith.constant 0 : index
    %0 = vector.load %arg1[%c0, %c0_0, %c0_1] : memref<16x16x128xbf16, #tpu.memory_space<vmem>>, vector<16x16x128xbf16>
    %c0_2 = arith.constant 0 : index
    %c0_3 = arith.constant 0 : index
    %c0_4 = arith.constant 0 : index
    %1 = vector.load %arg2[%c0_2, %c0_3, %c0_4] : memref<16x16x128xbf16, #tpu.memory_space<vmem>>, vector<16x16x128xbf16>
    %2 = arith.extf %0 : vector<16x16x128xbf16> to vector<16x16x128xf32>
    %cst = arith.constant dense<0.000000e+00> : vector<16x128xf32>
    %3 = vector.multi_reduction <add>, %2, %cst [1] : vector<16x16x128xf32> to vector<16x128xf32>
    %cst_5 = arith.constant 1.600000e+01 : f32
    %4 = vector.broadcast %cst_5 : f32 to vector<16x128xf32>
    %5 = arith.divf %3, %4 : vector<16x128xf32>
    %6 = arith.truncf %5 : vector<16x128xf32> to vector<16x128xbf16>
    %c0_6 = arith.constant 0 : index
    %c0_7 = arith.constant 0 : index
    %7 = vector.load %arg9[%c0_6, %c0_7] : memref<128x128xbf16, #tpu.memory_space<vmem>>, vector<128x128xbf16>
    %cst_8 = arith.constant dense<0.000000e+00> : vector<16x128xf32>
    %8 = tpu.matmul %6, %7, %cst_8 {dimension_numbers = #tpu.dot_dimension_numbers<[1], [0], [0], [1], [0, 0, 1, 1], [], []>} : vector<16x128xbf16>, vector<128x128xbf16>, vector<16x128xf32> -> vector<16x128xf32>
    %c0_9 = arith.constant 0 : index
    %c0_10 = arith.constant 0 : index
    %9 = vector.load %arg10[%c0_9, %c0_10] : memref<1x128xf32, #tpu.memory_space<vmem>>, vector<1x128xf32>
    %10 = vector.broadcast %9 : vector<1x128xf32> to vector<16x128xf32>
    %11 = arith.addf %8, %10 : vector<16x128xf32>
    %cst_11 = arith.constant 0.000000e+00 : f32
    %12 = vector.broadcast %cst_11 : f32 to vector<16x128xf32>
    %13 = arith.maximumf %11, %12 : vector<16x128xf32>
    %14 = arith.truncf %13 : vector<16x128xf32> to vector<16x128xbf16>
    %c0_12 = arith.constant 0 : index
    %c0_13 = arith.constant 0 : index
    %15 = vector.load %arg11[%c0_12, %c0_13] : memref<128x128xbf16, #tpu.memory_space<vmem>>, vector<128x128xbf16>
    %cst_14 = arith.constant dense<0.000000e+00> : vector<16x128xf32>
    %16 = tpu.matmul %14, %15, %cst_14 {dimension_numbers = #tpu.dot_dimension_numbers<[1], [0], [0], [1], [0, 0, 1, 1], [], []>} : vector<16x128xbf16>, vector<128x128xbf16>, vector<16x128xf32> -> vector<16x128xf32>
    %c0_15 = arith.constant 0 : index
    %c0_16 = arith.constant 0 : index
    %17 = vector.load %arg12[%c0_15, %c0_16] : memref<1x128xf32, #tpu.memory_space<vmem>>, vector<1x128xf32>
    %18 = vector.broadcast %17 : vector<1x128xf32> to vector<16x128xf32>
    %19 = arith.addf %16, %18 : vector<16x128xf32>
    %20 = arith.negf %19 : vector<16x128xf32>
    %21 = math.exp %20 : vector<16x128xf32>
    %cst_17 = arith.constant 1.000000e+00 : f32
    %22 = vector.broadcast %cst_17 : f32 to vector<16x128xf32>
    %23 = arith.addf %22, %21 : vector<16x128xf32>
    %24 = arith.divf %22, %23 : vector<16x128xf32>
    %c0_18 = arith.constant 0 : index
    %c0_19 = arith.constant 0 : index
    %25 = vector.load %arg14[%c0_18, %c0_19] : memref<16x128xf32, #tpu.memory_space<vmem>>, vector<16x128xf32>
    tpu.vector_store %arg14[%c0_18, %c0_19], %24 {strides = array<i32>} : memref<16x128xf32, #tpu.memory_space<vmem>>, vector<16x128xf32>,
    "tpu.trace_start"() <{level = 10 : i32, message = "btd,brd->btr"}> : () -> ()
    %cst_20 = arith.constant dense<0.000000e+00> : vector<16x16x16xf32>
    %26 = tpu.matmul %0, %1, %cst_20 {dimension_numbers = #tpu.dot_dimension_numbers<[2], [2], [1], [1], [0, 0, 0, 1, 1, 1], [0], [0]>} : vector<16x16x128xbf16>, vector<16x16x128xbf16>, vector<16x16x16xf32> -> vector<16x16x16xf32>
    %cst_21 = arith.constant 0.000000e+00 : f32
    "tpu.trace_stop"() : () -> ()
    %27 = vector.broadcast %cst_21 : f32 to vector<16x16x16xf32>
    %28 = arith.cmpf ogt, %26, %27 : vector<16x16x16xf32>
    %cst_22 = arith.constant 1.000000e-01 : f32
    %29 = vector.broadcast %cst_22 : f32 to vector<16x16x16xf32>
    %30 = arith.mulf %29, %26 : vector<16x16x16xf32>
    %31 = arith.select %28, %26, %30 : vector<16x16x16xi1>, vector<16x16x16xf32>
    %32 = arith.mulf %31, %31 : vector<16x16x16xf32>
    %cst_23 = arith.constant dense<0.000000e+00> : vector<16x16xf32>
    %33 = vector.multi_reduction <add>, %32, %cst_23 [1] : vector<16x16x16xf32> to vector<16x16xf32>
    %34 = vector.shape_cast %33 : vector<16x16xf32> to vector<16x1x16xf32>
    %cst_24 = arith.constant 9.99999993E-9 : f32
    %35 = vector.broadcast %cst_24 : f32 to vector<16x1x16xf32>
    %36 = arith.addf %34, %35 : vector<16x1x16xf32>
    %37 = math.rsqrt %36 : vector<16x1x16xf32>
    %38 = vector.broadcast %37 : vector<16x1x16xf32> to vector<16x16x16xf32>
    %39 = arith.mulf %31, %38 : vector<16x16x16xf32>
    %cst_25 = arith.constant 4.000000e+00 : f32
    %40 = vector.broadcast %cst_25 : f32 to vector<16x16x16xf32>
    %41 = arith.mulf %39, %40 : vector<16x16x16xf32>
    %cst_26 = arith.constant dense<0xFF800000> : vector<16x16xf32>
    %42 = vector.multi_reduction <maximumf>, %41, %cst_26 [2] : vector<16x16x16xf32> to vector<16x16xf32>
    %43 = vector.shape_cast %42 : vector<16x16xf32> to vector<16x16x1xf32>
    %44 = vector.broadcast %43 : vector<16x16x1xf32> to vector<16x16x16xf32>
    %45 = arith.subf %41, %44 : vector<16x16x16xf32>
    %46 = math.exp %45 : vector<16x16x16xf32>
    %cst_27 = arith.constant dense<0.000000e+00> : vector<16x16xf32>
    %47 = vector.multi_reduction <add>, %46, %cst_27 [2] : vector<16x16x16xf32> to vector<16x16xf32>
    %48 = vector.shape_cast %47 : vector<16x16xf32> to vector<16x16x1xf32>
    %49 = vector.broadcast %48 : vector<16x16x1xf32> to vector<16x16x16xf32>
    %50 = arith.divf %46, %49 : vector<16x16x16xf32>
    %51 = arith.truncf %50 : vector<16x16x16xf32> to vector<16x16x16xbf16>
    "tpu.trace_start"() <{level = 10 : i32, message = "btr,brd->btd"}> : () -> ()
    %cst_28 = arith.constant dense<0.000000e+00> : vector<16x16x128xf32>
    %52 = tpu.matmul %51, %1, %cst_28 {dimension_numbers = #tpu.dot_dimension_numbers<[2], [1], [1], [2], [0, 0, 0, 1, 1, 2], [0], [0]>} : vector<16x16x16xbf16>, vector<16x16x128xbf16>, vector<16x16x128xf32> -> vector<16x16x128xf32>
    "tpu.trace_stop"() : () -> ()
    %53 = vector.shape_cast %52 : vector<16x16x128xf32> to vector<256x128xf32>
    %54 = arith.truncf %53 : vector<256x128xf32> to vector<256x128xbf16>
    %c0_29 = arith.constant 0 : index
    %c0_30 = arith.constant 0 : index
    %55 = vector.load %arg3[%c0_29, %c0_30] : memref<128x256xbf16, #tpu.memory_space<vmem>>, vector<128x256xbf16>
    %cst_31 = arith.constant dense<0.000000e+00> : vector<256x256xf32>
    %56 = tpu.matmul %54, %55, %cst_31 {dimension_numbers = #tpu.dot_dimension_numbers<[1], [0], [0], [1], [0, 0, 1, 1], [], []>} : vector<256x128xbf16>, vector<128x256xbf16>, vector<256x256xf32> -> vector<256x256xf32>
    %c0_32 = arith.constant 0 : index
    %c0_33 = arith.constant 0 : index
    %57 = vector.load %arg4[%c0_32, %c0_33] : memref<1x256xf32, #tpu.memory_space<vmem>>, vector<1x256xf32>
    %58 = vector.broadcast %57 : vector<1x256xf32> to vector<256x256xf32>
    %59 = arith.addf %56, %58 : vector<256x256xf32>
    %60 = vector.extract_strided_slice %59 {offsets = [0, 0], sizes = [256, 128], strides = [1, 1]} : vector<256x256xf32> to vector<256x128xf32>
    %61 = math.tanh %60 : vector<256x128xf32>
    %62 = vector.extract_strided_slice %59 {offsets = [0, 128], sizes = [256, 128], strides = [1, 1]} : vector<256x256xf32> to vector<256x128xf32>
    %63 = vector.shape_cast %0 : vector<16x16x128xbf16> to vector<256x128xbf16>
    %64 = arith.extf %63 : vector<256x128xbf16> to vector<256x128xf32>
    %65 = arith.mulf %64, %61 : vector<256x128xf32>
    %66 = arith.addf %65, %62 : vector<256x128xf32>
    %67 = arith.truncf %66 : vector<256x128xf32> to vector<256x128xbf16>
    %c0_34 = arith.constant 0 : index
    %c0_35 = arith.constant 0 : index
    %68 = vector.load %arg5[%c0_34, %c0_35] : memref<128x128xbf16, #tpu.memory_space<vmem>>, vector<128x128xbf16>
    %cst_36 = arith.constant dense<0.000000e+00> : vector<256x128xf32>
    %69 = tpu.matmul %67, %68, %cst_36 {dimension_numbers = #tpu.dot_dimension_numbers<[1], [0], [0], [1], [0, 0, 1, 1], [], []>} : vector<256x128xbf16>, vector<128x128xbf16>, vector<256x128xf32> -> vector<256x128xf32>
    %c0_37 = arith.constant 0 : index
    %c0_38 = arith.constant 0 : index
    %70 = vector.load %arg6[%c0_37, %c0_38] : memref<1x128xf32, #tpu.memory_space<vmem>>, vector<1x128xf32>
    %71 = vector.broadcast %70 : vector<1x128xf32> to vector<256x128xf32>
    %72 = arith.addf %69, %71 : vector<256x128xf32>
    %cst_39 = arith.constant 0.000000e+00 : f32
    %73 = vector.broadcast %cst_39 : f32 to vector<256x128xf32>
    %74 = arith.maximumf %72, %73 : vector<256x128xf32>
    %75 = arith.truncf %74 : vector<256x128xf32> to vector<256x128xbf16>
    %c0_40 = arith.constant 0 : index
    %c0_41 = arith.constant 0 : index
    %76 = vector.load %arg7[%c0_40, %c0_41] : memref<128x128xbf16, #tpu.memory_space<vmem>>, vector<128x128xbf16>
    %cst_42 = arith.constant dense<0.000000e+00> : vector<256x128xf32>
    %77 = tpu.matmul %75, %76, %cst_42 {dimension_numbers = #tpu.dot_dimension_numbers<[1], [0], [0], [1], [0, 0, 1, 1], [], []>} : vector<256x128xbf16>, vector<128x128xbf16>, vector<256x128xf32> -> vector<256x128xf32>
    %c0_43 = arith.constant 0 : index
    %c0_44 = arith.constant 0 : index
    %78 = vector.load %arg8[%c0_43, %c0_44] : memref<1x128xf32, #tpu.memory_space<vmem>>, vector<1x128xf32>
    %79 = vector.broadcast %78 : vector<1x128xf32> to vector<256x128xf32>
    %80 = arith.addf %77, %79 : vector<256x128xf32>
    %81 = vector.shape_cast %2 : vector<16x16x128xf32> to vector<256x128xf32>
    %82 = arith.addf %80, %81 : vector<256x128xf32>
    %83 = vector.shape_cast %82 : vector<256x128xf32> to vector<16x16x128xf32>
    %84 = arith.truncf %83 : vector<16x16x128xf32> to vector<16x16x128xbf16>
    %c0_45 = arith.constant 0 : index
    %c0_46 = arith.constant 0 : index
    %c0_47 = arith.constant 0 : index
    %85 = vector.load %arg13[%c0_45, %c0_46, %c0_47] : memref<16x16x128xbf16, #tpu.memory_space<vmem>>, vector<16x16x128xbf16>
    tpu.vector_store %arg13[%c0_45, %c0_46, %c0_47], %84 {strides = array<i32>} : memref<16x16x128xbf16, #tpu.memory_space<vmem>>, vector<16x16x128xbf16>,
    return
  }
  func.func @transform_0(%arg0: i32) -> (i32, i32, i32) {
    %c0_i32 = arith.constant 0 : i32
    %c0_i32_0 = arith.constant 0 : i32
    %c0_i32_1 = arith.constant 0 : i32
    return %arg0, %c0_i32, %c0_i32_0 : i32, i32, i32
  }
  func.func @transform_1(%arg0: i32) -> (i32, i32, i32) {
    %c0_i32 = arith.constant 0 : i32
    %c0_i32_0 = arith.constant 0 : i32
    %c0_i32_1 = arith.constant 0 : i32
    return %arg0, %c0_i32, %c0_i32_0 : i32, i32, i32
  }
  func.func @transform_2(%arg0: i32) -> (i32, i32) {
    %c0_i32 = arith.constant 0 : i32
    %c0_i32_0 = arith.constant 0 : i32
    %c0_i32_1 = arith.constant 0 : i32
    return %c0_i32, %c0_i32_0 : i32, i32
  }
  func.func @transform_3(%arg0: i32) -> (i32, i32) {
    %c0_i32 = arith.constant 0 : i32
    %c0_i32_0 = arith.constant 0 : i32
    %c0_i32_1 = arith.constant 0 : i32
    return %c0_i32, %c0_i32_0 : i32, i32
  }
  func.func @transform_4(%arg0: i32) -> (i32, i32) {
    %c0_i32 = arith.constant 0 : i32
    %c0_i32_0 = arith.constant 0 : i32
    %c0_i32_1 = arith.constant 0 : i32
    return %c0_i32, %c0_i32_0 : i32, i32
  }
  func.func @transform_5(%arg0: i32) -> (i32, i32) {
    %c0_i32 = arith.constant 0 : i32
    %c0_i32_0 = arith.constant 0 : i32
    %c0_i32_1 = arith.constant 0 : i32
    return %c0_i32, %c0_i32_0 : i32, i32
  }
  func.func @transform_6(%arg0: i32) -> (i32, i32) {
    %c0_i32 = arith.constant 0 : i32
    %c0_i32_0 = arith.constant 0 : i32
    %c0_i32_1 = arith.constant 0 : i32
    return %c0_i32, %c0_i32_0 : i32, i32
  }
  func.func @transform_7(%arg0: i32) -> (i32, i32) {
    %c0_i32 = arith.constant 0 : i32
    %c0_i32_0 = arith.constant 0 : i32
    %c0_i32_1 = arith.constant 0 : i32
    return %c0_i32, %c0_i32_0 : i32, i32
  }
  func.func @transform_8(%arg0: i32) -> (i32, i32) {
    %c0_i32 = arith.constant 0 : i32
    %c0_i32_0 = arith.constant 0 : i32
    %c0_i32_1 = arith.constant 0 : i32
    return %c0_i32, %c0_i32_0 : i32, i32
  }
  func.func @transform_9(%arg0: i32) -> (i32, i32) {
    %c0_i32 = arith.constant 0 : i32
    %c0_i32_0 = arith.constant 0 : i32
    %c0_i32_1 = arith.constant 0 : i32
    return %c0_i32, %c0_i32_0 : i32, i32
  }
  func.func @transform_10(%arg0: i32) -> (i32, i32) {
    %c0_i32 = arith.constant 0 : i32
    %c0_i32_0 = arith.constant 0 : i32
    %c0_i32_1 = arith.constant 0 : i32
    return %c0_i32, %c0_i32_0 : i32, i32
  }
  func.func @transform_11(%arg0: i32) -> (i32, i32) {
    %c0_i32 = arith.constant 0 : i32
    %c0_i32_0 = arith.constant 0 : i32
    %c0_i32_1 = arith.constant 0 : i32
    return %c0_i32, %c0_i32_0 : i32, i32
  }
  func.func @transform_12(%arg0: i32) -> (i32, i32, i32) {
    %c0_i32 = arith.constant 0 : i32
    %c0_i32_0 = arith.constant 0 : i32
    %c0_i32_1 = arith.constant 0 : i32
    return %arg0, %c0_i32, %c0_i32_0 : i32, i32, i32
  }
  func.func @transform_13(%arg0: i32) -> (i32, i32) {
    %c0_i32 = arith.constant 0 : i32
    %c0_i32_0 = arith.constant 0 : i32
    return %arg0, %c0_i32 : i32, i32
  }
}

module attributes {stable_mosaic.version = 11 : i64} {
  func.func @cmrc_kernel(%arg0: i32, %arg1: memref<16x16x128xbf16, #tpu.memory_space<vmem>>, %arg2: memref<16x16x128xbf16, #tpu.memory_space<vmem>>, %arg3: memref<128x256xbf16, #tpu.memory_space<vmem>>, %arg4: memref<1x256xf32, #tpu.memory_space<vmem>>, %arg5: memref<128x128xbf16, #tpu.memory_space<vmem>>, %arg6: memref<1x128xf32, #tpu.memory_space<vmem>>, %arg7: memref<128x128xbf16, #tpu.memory_space<vmem>>, %arg8: memref<1x128xf32, #tpu.memory_space<vmem>>, %arg9: memref<128x128xbf16, #tpu.memory_space<vmem>>, %arg10: memref<1x128xf32, #tpu.memory_space<vmem>>, %arg11: memref<128x128xbf16, #tpu.memory_space<vmem>>, %arg12: memref<1x128xf32, #tpu.memory_space<vmem>>, %arg13: memref<16x16x128xbf16, #tpu.memory_space<vmem>>, %arg14: memref<16x128xf32, #tpu.memory_space<vmem>>) attributes {dimension_semantics = [#tpu.dimension_semantics<parallel>], iteration_bounds = array<i64: 1>, scalar_prefetch = 0 : i64, scratch_operands = 0 : i64, tpu.core_type = #tpu.core_type<tc>, window_params = [{transform_indices = @transform_0, window_bounds = array<i64: 16, 16, 128>}, {transform_indices = @transform_1, window_bounds = array<i64: 16, 16, 128>}, {pipeline_mode = #tpu.pipeline_mode<synchronous>, transform_indices = @transform_2, window_bounds = array<i64: 128, 256>}, {pipeline_mode = #tpu.pipeline_mode<synchronous>, transform_indices = @transform_3, window_bounds = array<i64: 1, 256>}, {pipeline_mode = #tpu.pipeline_mode<synchronous>, transform_indices = @transform_4, window_bounds = array<i64: 128, 128>}, {pipeline_mode = #tpu.pipeline_mode<synchronous>, transform_indices = @transform_5, window_bounds = array<i64: 1, 128>}, {pipeline_mode = #tpu.pipeline_mode<synchronous>, transform_indices = @transform_6, window_bounds = array<i64: 128, 128>}, {pipeline_mode = #tpu.pipeline_mode<synchronous>, transform_indices = @transform_7, window_bounds = array<i64: 1, 128>}, {pipeline_mode = #tpu.pipeline_mode<synchronous>, transform_indices = @transform_8, window_bounds = array<i64: 128, 128>}, {pipeline_mode = #tpu.pipeline_mode<synchronous>, transform_indices = @transform_9, window_bounds = array<i64: 1, 128>}, {pipeline_mode = #tpu.pipeline_mode<synchronous>, transform_indices = @transform_10, window_bounds = array<i64: 128, 128>}, {pipeline_mode = #tpu.pipeline_mode<synchronous>, transform_indices = @transform_11, window_bounds = array<i64: 1, 128>}, {transform_indices = @transform_12, window_bounds = array<i64: 16, 16, 128>}, {transform_indices = @transform_13, window_bounds = array<i64: 16, 128>}]} {
    %c0 = arith.constant 0 : index
    %c0_0 = arith.constant 0 : index
    %c0_1 = arith.constant 0 : index
    %0 = vector.load %arg1[%c0, %c0_0, %c0_1] : memref<16x16x128xbf16, #tpu.memory_space<vmem>>, vector<16x16x128xbf16>
    %c0_2 = arith.constant 0 : index
    %c0_3 = arith.constant 0 : index
    %c0_4 = arith.constant 0 : index
    %1 = vector.load %arg2[%c0_2, %c0_3, %c0_4] : memref<16x16x128xbf16, #tpu.memory_space<vmem>>, vector<16x16x128xbf16>
    %2 = arith.extf %0 : vector<16x16x128xbf16> to vector<16x16x128xf32>
    %cst = arith.constant dense<0.000000e+00> : vector<16x128xf32>
    %3 = vector.multi_reduction <add>, %2, %cst [1] : vector<16x16x128xf32> to vector<16x128xf32>
    %cst_5 = arith.constant 1.600000e+01 : f32
    %4 = vector.broadcast %cst_5 : f32 to vector<16x128xf32>
    %5 = arith.divf %3, %4 : vector<16x128xf32>
    %6 = arith.truncf %5 : vector<16x128xf32> to vector<16x128xbf16>
    %c0_6 = arith.constant 0 : index
    %c0_7 = arith.constant 0 : index
    %7 = vector.load %arg9[%c0_6, %c0_7] : memref<128x128xbf16, #tpu.memory_space<vmem>>, vector<128x128xbf16>
    %cst_8 = arith.constant dense<0.000000e+00> : vector<16x128xf32>
    %8 = tpu.matmul %6, %7, %cst_8 {dimension_numbers = #tpu.dot_dimension_numbers<[1], [0], [0], [1], [0, 0, 1, 1], [], []>} : vector<16x128xbf16>, vector<128x128xbf16>, vector<16x128xf32> -> vector<16x128xf32>
    %c0_9 = arith.constant 0 : index
    %c0_10 = arith.constant 0 : index
    %9 = vector.load %arg10[%c0_9, %c0_10] : memref<1x128xf32, #tpu.memory_space<vmem>>, vector<1x128xf32>
    %10 = vector.broadcast %9 : vector<1x128xf32> to vector<16x128xf32>
    %11 = arith.addf %8, %10 : vector<16x128xf32>
    %cst_11 = arith.constant 0.000000e+00 : f32
    %12 = vector.broadcast %cst_11 : f32 to vector<16x128xf32>
    %13 = arith.maximumf %11, %12 : vector<16x128xf32>
    %14 = arith.truncf %13 : vector<16x128xf32> to vector<16x128xbf16>
    %c0_12 = arith.constant 0 : index
    %c0_13 = arith.constant 0 : index
    %15 = vector.load %arg11[%c0_12, %c0_13] : memref<128x128xbf16, #tpu.memory_space<vmem>>, vector<128x128xbf16>
    %cst_14 = arith.constant dense<0.000000e+00> : vector<16x128xf32>
    %16 = tpu.matmul %14, %15, %cst_14 {dimension_numbers = #tpu.dot_dimension_numbers<[1], [0], [0], [1], [0, 0, 1, 1], [], []>} : vector<16x128xbf16>, vector<128x128xbf16>, vector<16x128xf32> -> vector<16x128xf32>
    %c0_15 = arith.constant 0 : index
    %c0_16 = arith.constant 0 : index
    %17 = vector.load %arg12[%c0_15, %c0_16] : memref<1x128xf32, #tpu.memory_space<vmem>>, vector<1x128xf32>
    %18 = vector.broadcast %17 : vector<1x128xf32> to vector<16x128xf32>
    %19 = arith.addf %16, %18 : vector<16x128xf32>
    %20 = arith.negf %19 : vector<16x128xf32>
    %21 = math.exp %20 : vector<16x128xf32>
    %cst_17 = arith.constant 1.000000e+00 : f32
    %22 = vector.broadcast %cst_17 : f32 to vector<16x128xf32>
    %23 = arith.addf %22, %21 : vector<16x128xf32>
    %24 = arith.divf %22, %23 : vector<16x128xf32>
    %c0_18 = arith.constant 0 : index
    %c0_19 = arith.constant 0 : index
    %25 = vector.load %arg14[%c0_18, %c0_19] : memref<16x128xf32, #tpu.memory_space<vmem>>, vector<16x128xf32>
    tpu.vector_store %arg14[%c0_18, %c0_19], %24 {strides = array<i32>} : memref<16x128xf32, #tpu.memory_space<vmem>>, vector<16x128xf32>,
    "tpu.trace_start"() <{level = 10 : i32, message = "btd,brd->btr"}> : () -> ()
    %cst_20 = arith.constant dense<0.000000e+00> : vector<16x16x16xf32>
    %26 = tpu.matmul %0, %1, %cst_20 {dimension_numbers = #tpu.dot_dimension_numbers<[2], [2], [1], [1], [0, 0, 0, 1, 1, 1], [0], [0]>} : vector<16x16x128xbf16>, vector<16x16x128xbf16>, vector<16x16x16xf32> -> vector<16x16x16xf32>
    %cst_21 = arith.constant 0.000000e+00 : f32
    "tpu.trace_stop"() : () -> ()
    %27 = vector.broadcast %cst_21 : f32 to vector<16x16x16xf32>
    %28 = arith.cmpf ogt, %26, %27 : vector<16x16x16xf32>
    %cst_22 = arith.constant 1.000000e-01 : f32
    %29 = vector.broadcast %cst_22 : f32 to vector<16x16x16xf32>
    %30 = arith.mulf %29, %26 : vector<16x16x16xf32>
    %31 = arith.select %28, %26, %30 : vector<16x16x16xi1>, vector<16x16x16xf32>
    %32 = arith.mulf %31, %31 : vector<16x16x16xf32>
    %cst_23 = arith.constant dense<0.000000e+00> : vector<16x16xf32>
    %33 = vector.multi_reduction <add>, %32, %cst_23 [1] : vector<16x16x16xf32> to vector<16x16xf32>
    %34 = vector.shape_cast %33 : vector<16x16xf32> to vector<16x1x16xf32>
    %cst_24 = arith.constant 9.99999993E-9 : f32
    %35 = vector.broadcast %cst_24 : f32 to vector<16x1x16xf32>
    %36 = arith.addf %34, %35 : vector<16x1x16xf32>
    %37 = math.rsqrt %36 : vector<16x1x16xf32>
    %38 = vector.broadcast %37 : vector<16x1x16xf32> to vector<16x16x16xf32>
    %39 = arith.mulf %31, %38 : vector<16x16x16xf32>
    %cst_25 = arith.constant 4.000000e+00 : f32
    %40 = vector.broadcast %cst_25 : f32 to vector<16x16x16xf32>
    %41 = arith.mulf %39, %40 : vector<16x16x16xf32>
    %cst_26 = arith.constant dense<0xFF800000> : vector<16x16xf32>
    %42 = vector.multi_reduction <maximumf>, %41, %cst_26 [2] : vector<16x16x16xf32> to vector<16x16xf32>
    %43 = vector.shape_cast %42 : vector<16x16xf32> to vector<16x16x1xf32>
    %44 = vector.broadcast %43 : vector<16x16x1xf32> to vector<16x16x16xf32>
    %45 = arith.subf %41, %44 : vector<16x16x16xf32>
    %46 = math.exp %45 : vector<16x16x16xf32>
    %cst_27 = arith.constant dense<0.000000e+00> : vector<16x16xf32>
    %47 = vector.multi_reduction <add>, %46, %cst_27 [2] : vector<16x16x16xf32> to vector<16x16xf32>
    %48 = vector.shape_cast %47 : vector<16x16xf32> to vector<16x16x1xf32>
    %49 = vector.broadcast %48 : vector<16x16x1xf32> to vector<16x16x16xf32>
    %50 = arith.divf %46, %49 : vector<16x16x16xf32>
    %51 = arith.truncf %50 : vector<16x16x16xf32> to vector<16x16x16xbf16>
    "tpu.trace_start"() <{level = 10 : i32, message = "btr,brd->btd"}> : () -> ()
    %cst_28 = arith.constant dense<0.000000e+00> : vector<16x16x128xf32>
    %52 = tpu.matmul %51, %1, %cst_28 {dimension_numbers = #tpu.dot_dimension_numbers<[2], [1], [1], [2], [0, 0, 0, 1, 1, 2], [0], [0]>} : vector<16x16x16xbf16>, vector<16x16x128xbf16>, vector<16x16x128xf32> -> vector<16x16x128xf32>
    "tpu.trace_stop"() : () -> ()
    %53 = vector.shape_cast %52 : vector<16x16x128xf32> to vector<256x128xf32>
    %54 = arith.truncf %53 : vector<256x128xf32> to vector<256x128xbf16>
    %c0_29 = arith.constant 0 : index
    %c0_30 = arith.constant 0 : index
    %55 = vector.load %arg3[%c0_29, %c0_30] : memref<128x256xbf16, #tpu.memory_space<vmem>>, vector<128x256xbf16>
    %cst_31 = arith.constant dense<0.000000e+00> : vector<256x256xf32>
    %56 = tpu.matmul %54, %55, %cst_31 {dimension_numbers = #tpu.dot_dimension_numbers<[1], [0], [0], [1], [0, 0, 1, 1], [], []>} : vector<256x128xbf16>, vector<128x256xbf16>, vector<256x256xf32> -> vector<256x256xf32>
    %c0_32 = arith.constant 0 : index
    %c0_33 = arith.constant 0 : index
    %57 = vector.load %arg4[%c0_32, %c0_33] : memref<1x256xf32, #tpu.memory_space<vmem>>, vector<1x256xf32>
    %58 = vector.broadcast %57 : vector<1x256xf32> to vector<256x256xf32>
    %59 = arith.addf %56, %58 : vector<256x256xf32>
    %60 = vector.extract_strided_slice %59 {offsets = [0, 0], sizes = [256, 128], strides = [1, 1]} : vector<256x256xf32> to vector<256x128xf32>
    %61 = math.tanh %60 : vector<256x128xf32>
    %62 = vector.extract_strided_slice %59 {offsets = [0, 128], sizes = [256, 128], strides = [1, 1]} : vector<256x256xf32> to vector<256x128xf32>
    %63 = vector.shape_cast %0 : vector<16x16x128xbf16> to vector<256x128xbf16>
    %64 = arith.extf %63 : vector<256x128xbf16> to vector<256x128xf32>
    %65 = arith.mulf %64, %61 : vector<256x128xf32>
    %66 = arith.addf %65, %62 : vector<256x128xf32>
    %67 = arith.truncf %66 : vector<256x128xf32> to vector<256x128xbf16>
    %c0_34 = arith.constant 0 : index
    %c0_35 = arith.constant 0 : index
    %68 = vector.load %arg5[%c0_34, %c0_35] : memref<128x128xbf16, #tpu.memory_space<vmem>>, vector<128x128xbf16>
    %cst_36 = arith.constant dense<0.000000e+00> : vector<256x128xf32>
    %69 = tpu.matmul %67, %68, %cst_36 {dimension_numbers = #tpu.dot_dimension_numbers<[1], [0], [0], [1], [0, 0, 1, 1], [], []>} : vector<256x128xbf16>, vector<128x128xbf16>, vector<256x128xf32> -> vector<256x128xf32>
    %c0_37 = arith.constant 0 : index
    %c0_38 = arith.constant 0 : index
    %70 = vector.load %arg6[%c0_37, %c0_38] : memref<1x128xf32, #tpu.memory_space<vmem>>, vector<1x128xf32>
    %71 = vector.broadcast %70 : vector<1x128xf32> to vector<256x128xf32>
    %72 = arith.addf %69, %71 : vector<256x128xf32>
    %cst_39 = arith.constant 0.000000e+00 : f32
    %73 = vector.broadcast %cst_39 : f32 to vector<256x128xf32>
    %74 = arith.maximumf %72, %73 : vector<256x128xf32>
    %75 = arith.truncf %74 : vector<256x128xf32> to vector<256x128xbf16>
    %c0_40 = arith.constant 0 : index
    %c0_41 = arith.constant 0 : index
    %76 = vector.load %arg7[%c0_40, %c0_41] : memref<128x128xbf16, #tpu.memory_space<vmem>>, vector<128x128xbf16>
    %cst_42 = arith.constant dense<0.000000e+00> : vector<256x128xf32>
    %77 = tpu.matmul %75, %76, %cst_42 {dimension_numbers = #tpu.dot_dimension_numbers<[1], [0], [0], [1], [0, 0, 1, 1], [], []>} : vector<256x128xbf16>, vector<128x128xbf16>, vector<256x128xf32> -> vector<256x128xf32>
    %c0_43 = arith.constant 0 : index
    %c0_44 = arith.constant 0 : index
    %78 = vector.load %arg8[%c0_43, %c0_44] : memref<1x128xf32, #tpu.memory_space<vmem>>, vector<1x128xf32>
    %79 = vector.broadcast %78 : vector<1x128xf32> to vector<256x128xf32>
    %80 = arith.addf %77, %79 : vector<256x128xf32>
    %81 = vector.shape_cast %2 : vector<16x16x128xf32> to vector<256x128xf32>
    %82 = arith.addf %80, %81 : vector<256x128xf32>
    %83 = vector.shape_cast %82 : vector<256x128xf32> to vector<16x16x128xf32>
    %84 = arith.truncf %83 : vector<16x16x128xf32> to vector<16x16x128xbf16>
    %c0_45 = arith.constant 0 : index
    %c0_46 = arith.constant 0 : index
    %c0_47 = arith.constant 0 : index
    %85 = vector.load %arg13[%c0_45, %c0_46, %c0_47] : memref<16x16x128xbf16, #tpu.memory_space<vmem>>, vector<16x16x128xbf16>
    tpu.vector_store %arg13[%c0_45, %c0_46, %c0_47], %84 {strides = array<i32>} : memref<16x16x128xbf16, #tpu.memory_space<vmem>>, vector<16x16x128xbf16>,
    return
  }
  func.func @transform_0(%arg0: i32) -> (i32, i32, i32) {
    %c0_i32 = arith.constant 0 : i32
    %c0_i32_0 = arith.constant 0 : i32
    %c0_i32_1 = arith.constant 0 : i32
    return %arg0, %c0_i32, %c0_i32_0 : i32, i32, i32
  }
  func.func @transform_1(%arg0: i32) -> (i32, i32, i32) {
    %c0_i32 = arith.constant 0 : i32
    %c0_i32_0 = arith.constant 0 : i32
    %c0_i32_1 = arith.constant 0 : i32
    return %arg0, %c0_i32, %c0_i32_0 : i32, i32, i32
  }
  func.func @transform_2(%arg0: i32) -> (i32, i32) {
    %c0_i32 = arith.constant 0 : i32
    %c0_i32_0 = arith.constant 0 : i32
    %c0_i32_1 = arith.constant 0 : i32
    return %c0_i32, %c0_i32_0 : i32, i32
  }
  func.func @transform_3(%arg0: i32) -> (i32, i32) {
    %c0_i32 = arith.constant 0 : i32
    %c0_i32_0 = arith.constant 0 : i32
    %c0_i32_1 = arith.constant 0 : i32
    return %c0_i32, %c0_i32_0 : i32, i32
  }
  func.func @transform_4(%arg0: i32) -> (i32, i32) {
    %c0_i32 = arith.constant 0 : i32
    %c0_i32_0 = arith.constant 0 : i32
    %c0_i32_1 = arith.constant 0 : i32
    return %c0_i32, %c0_i32_0 : i32, i32
  }
  func.func @transform_5(%arg0: i32) -> (i32, i32) {
    %c0_i32 = arith.constant 0 : i32
    %c0_i32_0 = arith.constant 0 : i32
    %c0_i32_1 = arith.constant 0 : i32
    return %c0_i32, %c0_i32_0 : i32, i32
  }
  func.func @transform_6(%arg0: i32) -> (i32, i32) {
    %c0_i32 = arith.constant 0 : i32
    %c0_i32_0 = arith.constant 0 : i32
    %c0_i32_1 = arith.constant 0 : i32
    return %c0_i32, %c0_i32_0 : i32, i32
  }
  func.func @transform_7(%arg0: i32) -> (i32, i32) {
    %c0_i32 = arith.constant 0 : i32
    %c0_i32_0 = arith.constant 0 : i32
    %c0_i32_1 = arith.constant 0 : i32
    return %c0_i32, %c0_i32_0 : i32, i32
  }
  func.func @transform_8(%arg0: i32) -> (i32, i32) {
    %c0_i32 = arith.constant 0 : i32
    %c0_i32_0 = arith.constant 0 : i32
    %c0_i32_1 = arith.constant 0 : i32
    return %c0_i32, %c0_i32_0 : i32, i32
  }
  func.func @transform_9(%arg0: i32) -> (i32, i32) {
    %c0_i32 = arith.constant 0 : i32
    %c0_i32_0 = arith.constant 0 : i32
    %c0_i32_1 = arith.constant 0 : i32
    return %c0_i32, %c0_i32_0 : i32, i32
  }
  func.func @transform_10(%arg0: i32) -> (i32, i32) {
    %c0_i32 = arith.constant 0 : i32
    %c0_i32_0 = arith.constant 0 : i32
    %c0_i32_1 = arith.constant 0 : i32
    return %c0_i32, %c0_i32_0 : i32, i32
  }
  func.func @transform_11(%arg0: i32) -> (i32, i32) {
    %c0_i32 = arith.constant 0 : i32
    %c0_i32_0 = arith.constant 0 : i32
    %c0_i32_1 = arith.constant 0 : i32
    return %c0_i32, %c0_i32_0 : i32, i32
  }
  func.func @transform_12(%arg0: i32) -> (i32, i32, i32) {
    %c0_i32 = arith.constant 0 : i32
    %c0_i32_0 = arith.constant 0 : i32
    %c0_i32_1 = arith.constant 0 : i32
    return %arg0, %c0_i32, %c0_i32_0 : i32, i32, i32
  }
  func.func @transform_13(%arg0: i32) -> (i32, i32) {
    %c0_i32 = arith.constant 0 : i32
    %c0_i32_0 = arith.constant 0 : i32
    return %arg0, %c0_i32 : i32, i32
  }
}

</mosaic_0001>

<llo_original>
// kernel: tpu_custom_call.1
$region0: #{tpu_custom_call.1}
  #allocation0 [shape = 'u32[]', space=smem, size = 0x4, offset = 0x4, fixed_abs, tag = 'smem constant byte address 0x4 - core index']
  #allocation1 [shape = 'u32[144,128]{1,0:T(1,128)}', space=vmem, size = 0x12000, scoped, tag = 'internal scratch']
  %s0 = inlined_call_operand.hbm [shape: bf16[16,16,128], index: 0, kind: input, shape index: {}]
  %s1 = inlined_call_operand.hbm [shape: bf16[16,16,128], index: 1, kind: input, shape index: {}]
  %s2 = inlined_call_operand.hbm [shape: bf16[128,256], index: 2, kind: input, shape index: {}]
  %s3 = inlined_call_operand.vmem [shape: f32[1,256], index: 3, kind: input, shape index: {}]
  %s4 = inlined_call_operand.hbm [shape: bf16[128,128], index: 4, kind: input, shape index: {}]
  %s5 = inlined_call_operand.vmem [shape: f32[1,128], index: 5, kind: input, shape index: {}]
  %s6 = inlined_call_operand.hbm [shape: bf16[128,128], index: 6, kind: input, shape index: {}]
  %s7 = inlined_call_operand.vmem [shape: f32[1,128], index: 7, kind: input, shape index: {}]
  %s8 = inlined_call_operand.hbm [shape: bf16[128,128], index: 8, kind: input, shape index: {}]
  %s9 = inlined_call_operand.vmem [shape: f32[1,128], index: 9, kind: input, shape index: {}]
  %s10 = inlined_call_operand.hbm [shape: bf16[128,128], index: 10, kind: input, shape index: {}]
  %s11 = inlined_call_operand.vmem [shape: f32[1,128], index: 11, kind: input, shape index: {}]
  %s12 = inlined_call_operand.hbm [shape: bf16[16,16,128], index: 12, kind: output, shape index: {0}]
  %s13 = inlined_call_operand.hbm [shape: f32[16,128], index: 13, kind: output, shape index: {1}]
  %14 = xla_tuple %s12, %s13
  %s15 = sld [smem:[#allocation0]]
  $region94: #{tpu_custom_call.1} parent=0
    _
  %s17 = ssub.s32 1, %s15
  %s18 = scalar_select 0, %s17, %s15
  $region1: #{tpu_custom_call.1} parent=0
    #allocation2 [shape = 'u8[65536]{0}', space=vmem, size = 0x10000, scoped, tag = 'input window, operand 0, single buffered']
    #allocation3 [shape = 's32[1]{0}', space=sflag, size = 0x4, scoped, tag = 'scoped memory for tpu_custom_call.1']
    #allocation4 [shape = 's32[1]{0}', space=sflag, size = 0x4, scoped, tag = 'scoped memory for tpu_custom_call.1']
    #allocation5 [shape = 'u8[65536]{0}', space=vmem, size = 0x10000, scoped, tag = 'input window, operand 1, single buffered']
    #allocation6 [shape = 's32[1]{0}', space=sflag, size = 0x4, scoped, tag = 'scoped memory for tpu_custom_call.1']
    #allocation7 [shape = 'u8[65536]{0}', space=vmem, size = 0x10000, scoped, tag = 'input window, operand 2, single buffered']
    #allocation8 [shape = 'u8[32768]{0}', space=vmem, size = 0x8000, scoped, tag = 'input window, operand 4, single buffered']
    #allocation9 [shape = 's32[1]{0}', space=sflag, size = 0x4, scoped, tag = 'scoped memory for tpu_custom_call.1']
    #allocation10 [shape = 'u8[32768]{0}', space=vmem, size = 0x8000, scoped, tag = 'input window, operand 6, single buffered']
    #allocation11 [shape = 'u8[32768]{0}', space=vmem, size = 0x8000, scoped, tag = 'input window, operand 8, single buffered']
    #allocation12 [shape = 's32[1]{0}', space=sflag, size = 0x4, scoped, tag = 'scoped memory for tpu_custom_call.1']
    #allocation13 [shape = 'u8[32768]{0}', space=vmem, size = 0x8000, scoped, tag = 'input window, operand 10, single buffered']
    #allocation14 [shape = 'u8[65536]{0}', space=vmem, size = 0x10000, scoped, tag = 'output window, operand 0, single buffered']
    #allocation15 [shape = 'u8[8192]{0}', space=vmem, size = 0x2000, scoped, tag = 'output window, operand 1, single buffered']
    #allocation16 [shape = 's32[1]{0}', space=sflag, size = 0x4, scoped, tag = 'scoped memory for tpu_custom_call.1']
    %19 = vsyncpa [#allocation3], 0
    %20 = vsyncpa [#allocation6], 0
    %21 = vsyncpa [#allocation9], 0
    %22 = vsyncpa [#allocation12], 0
    %23 = vsyncpa [#allocation4], 0
    %24 = vsyncpa [#allocation16], 0
    // Predicated region
    $region2: #{tpu_custom_call.1} parent=1 // pred_check
      _
    $region3: #{tpu_custom_call.1} parent=1 // pred_check_branch
      %26 = sbr.rel (0) target = $region5
    $region4: #{tpu_custom_call.1} parent=1 // pred_region
      %s28 = ssub.s32 2048, 2048
      %29 = vsyncadd [#allocation3], %s28
      %s30 = sshll.u32 [#allocation2], 4
      %s31 = int_to_ptr.vmem [resolvable:$true] %s30
      %36 = dma.hbm_to_vmem [thread:$0]  %s0, 2048, %s31, [#allocation3], 64, 64, 4
    $region5: #{tpu_custom_call.1} parent=1 // pred_fallthru
      _
    // Predicated region
    $region6: #{tpu_custom_call.1} parent=1 // pred_check
      _
    $region7: #{tpu_custom_call.1} parent=1 // pred_check_branch
      %38 = sbr.rel (0) target = $region9
    $region8: #{tpu_custom_call.1} parent=1 // pred_region
      %s40 = ssub.s32 2048, 2048
      %41 = vsyncadd [#allocation6], %s40
      %s42 = sshll.u32 [#allocation5], 4
      %s43 = int_to_ptr.vmem [resolvable:$true] %s42
      %48 = dma.hbm_to_vmem [thread:$0]  %s1, 2048, %s43, [#allocation6], 64, 64, 4
    $region9: #{tpu_custom_call.1} parent=1 // pred_fallthru
      _
    // Predicated region
    $region10: #{tpu_custom_call.1} parent=1 // pred_check
      _
    $region11: #{tpu_custom_call.1} parent=1 // pred_check_branch
      %50 = sbr.rel (0) target = $region13
    $region12: #{tpu_custom_call.1} parent=1 // pred_region
      %s52 = ssub.s32 2048, 2048
      %53 = vsyncadd [#allocation6], %s52
      %s54 = sshll.u32 [#allocation7], 4
      %s55 = int_to_ptr.vmem [resolvable:$true] %s54
      %60 = dma.hbm_to_vmem [thread:$0]  %s2, 2048, %s55, [#allocation6], 128, 128, 8
    $region13: #{tpu_custom_call.1} parent=1 // pred_fallthru
      _
    // Predicated region
    $region14: #{tpu_custom_call.1} parent=1 // pred_check
      _
    $region15: #{tpu_custom_call.1} parent=1 // pred_check_branch
      %62 = sbr.rel (0) target = $region17
    $region16: #{tpu_custom_call.1} parent=1 // pred_region
      _
    $region17: #{tpu_custom_call.1} parent=1 // pred_fallthru
      _
    // Predicated region
    $region18: #{tpu_custom_call.1} parent=1 // pred_check
      _
    $region19: #{tpu_custom_call.1} parent=1 // pred_check_branch
      %64 = sbr.rel (0) target = $region21
    $region20: #{tpu_custom_call.1} parent=1 // pred_region
      %s66 = ssub.s32 1024, 1024
      %67 = vsyncadd [#allocation9], %s66
      %s68 = sshll.u32 [#allocation8], 4
      %s69 = int_to_ptr.vmem [resolvable:$true] %s68
      %74 = dma.hbm_to_vmem [thread:$0]  %s4, 1024, %s69, [#allocation9], 64, 64, 4
    $region21: #{tpu_custom_call.1} parent=1 // pred_fallthru
      _
    // Predicated region
    $region22: #{tpu_custom_call.1} parent=1 // pred_check
      _
    $region23: #{tpu_custom_call.1} parent=1 // pred_check_branch
      %76 = sbr.rel (0) target = $region25
    $region24: #{tpu_custom_call.1} parent=1 // pred_region
      _
    $region25: #{tpu_custom_call.1} parent=1 // pred_fallthru
      _
    // Predicated region
    $region26: #{tpu_custom_call.1} parent=1 // pred_check
      _
    $region27: #{tpu_custom_call.1} parent=1 // pred_check_branch
      %78 = sbr.rel (0) target = $region29
    $region28: #{tpu_custom_call.1} parent=1 // pred_region
      %s80 = ssub.s32 1024, 1024
      %81 = vsyncadd [#allocation9], %s80
      %s82 = sshll.u32 [#allocation10], 4
      %s83 = int_to_ptr.vmem [resolvable:$true] %s82
      %88 = dma.hbm_to_vmem [thread:$0]  %s6, 1024, %s83, [#allocation9], 64, 64, 4
    $region29: #{tpu_custom_call.1} parent=1 // pred_fallthru
      _
    // Predicated region
    $region30: #{tpu_custom_call.1} parent=1 // pred_check
      _
    $region31: #{tpu_custom_call.1} parent=1 // pred_check_branch
      %90 = sbr.rel (0) target = $region33
    $region32: #{tpu_custom_call.1} parent=1 // pred_region
      _
    $region33: #{tpu_custom_call.1} parent=1 // pred_fallthru
      _
    // Predicated region
    $region34: #{tpu_custom_call.1} parent=1 // pred_check
      _
    $region35: #{tpu_custom_call.1} parent=1 // pred_check_branch
      %92 = sbr.rel (0) target = $region37
    $region36: #{tpu_custom_call.1} parent=1 // pred_region
      %s94 = ssub.s32 1024, 1024
      %95 = vsyncadd [#allocation12], %s94
      %s96 = sshll.u32 [#allocation11], 4
      %s97 = int_to_ptr.vmem [resolvable:$true] %s96
      %102 = dma.hbm_to_vmem [thread:$0]  %s8, 1024, %s97, [#allocation12], 64, 64, 4
    $region37: #{tpu_custom_call.1} parent=1 // pred_fallthru
      _
    // Predicated region
    $region38: #{tpu_custom_call.1} parent=1 // pred_check
      _
    $region39: #{tpu_custom_call.1} parent=1 // pred_check_branch
      %104 = sbr.rel (0) target = $region41
    $region40: #{tpu_custom_call.1} parent=1 // pred_region
      _
    $region41: #{tpu_custom_call.1} parent=1 // pred_fallthru
      _
    // Predicated region
    $region42: #{tpu_custom_call.1} parent=1 // pred_check
      _
    $region43: #{tpu_custom_call.1} parent=1 // pred_check_branch
      %106 = sbr.rel (0) target = $region45
    $region44: #{tpu_custom_call.1} parent=1 // pred_region
      %s108 = ssub.s32 1024, 1024
      %109 = vsyncadd [#allocation12], %s108
      %s110 = sshll.u32 [#allocation13], 4
      %s111 = int_to_ptr.vmem [resolvable:$true] %s110
      %116 = dma.hbm_to_vmem [thread:$0]  %s10, 1024, %s111, [#allocation12], 64, 64, 4
    $region45: #{tpu_custom_call.1} parent=1 // pred_fallthru
      _
    // Predicated region
    $region46: #{tpu_custom_call.1} parent=1 // pred_check
      _
    $region47: #{tpu_custom_call.1} parent=1 // pred_check_branch
      %118 = sbr.rel (0) target = $region49
    $region48: #{tpu_custom_call.1} parent=1 // pred_region
      _
    $region49: #{tpu_custom_call.1} parent=1 // pred_fallthru
      _
    // Predicated region
    $region50: #{tpu_custom_call.1} parent=1 // pred_check
      _
    $region51: #{tpu_custom_call.1} parent=1 // pred_check_branch
      %120 = sbr.rel (0) target = $region53
    $region52: #{tpu_custom_call.1} parent=1 // pred_region
      %121 = dma.done [#allocation3], 2048
    $region53: #{tpu_custom_call.1} parent=1 // pred_fallthru
      _
    // Predicated region
    $region54: #{tpu_custom_call.1} parent=1 // pred_check
      _
    $region55: #{tpu_custom_call.1} parent=1 // pred_check_branch
      %123 = sbr.rel (0) target = $region57
    $region56: #{tpu_custom_call.1} parent=1 // pred_region
      %124 = dma.done [#allocation6], 2048
    $region57: #{tpu_custom_call.1} parent=1 // pred_fallthru
      _
    // Predicated region
    $region58: #{tpu_custom_call.1} parent=1 // pred_check
      _
    $region59: #{tpu_custom_call.1} parent=1 // pred_check_branch
      %126 = sbr.rel (0) target = $region61
    $region60: #{tpu_custom_call.1} parent=1 // pred_region
      %127 = dma.done [#allocation6], 2048
    $region61: #{tpu_custom_call.1} parent=1 // pred_fallthru
      _
    // Predicated region
    $region62: #{tpu_custom_call.1} parent=1 // pred_check
      _
    $region63: #{tpu_custom_call.1} parent=1 // pred_check_branch
      %129 = sbr.rel (0) target = $region65
    $region64: #{tpu_custom_call.1} parent=1 // pred_region
      %130 = dma.done [#allocation9], 1024
    $region65: #{tpu_custom_call.1} parent=1 // pred_fallthru
      _
    // Predicated region
    $region66: #{tpu_custom_call.1} parent=1 // pred_check
      _
    $region67: #{tpu_custom_call.1} parent=1 // pred_check_branch
      %132 = sbr.rel (0) target = $region69
    $region68: #{tpu_custom_call.1} parent=1 // pred_region
      %133 = dma.done [#allocation9], 1024
    $region69: #{tpu_custom_call.1} parent=1 // pred_fallthru
      _
    // Predicated region
    $region70: #{tpu_custom_call.1} parent=1 // pred_check
      _
    $region71: #{tpu_custom_call.1} parent=1 // pred_check_branch
      %135 = sbr.rel (0) target = $region73
    $region72: #{tpu_custom_call.1} parent=1 // pred_region
      %136 = dma.done [#allocation12], 1024
    $region73: #{tpu_custom_call.1} parent=1 // pred_fallthru
      _
    // Predicated region
    $region74: #{tpu_custom_call.1} parent=1 // pred_check
      _
    $region75: #{tpu_custom_call.1} parent=1 // pred_check_branch
      %138 = sbr.rel (0) target = $region77
    $region76: #{tpu_custom_call.1} parent=1 // pred_region
      %139 = dma.done [#allocation12], 1024
    $region77: #{tpu_custom_call.1} parent=1 // pred_fallthru
      _
    %v141 = vld [vmem:[#allocation2] sm:$0xf]
    %v142 = vld [vmem:[#allocation2 + $0x4] sm:$0xf]
    %v143 = vld [vmem:[#allocation2 + $0x8] sm:$0xf]
    %v144 = vld [vmem:[#allocation2 + $0xc] sm:$0xf]
    %v145 = vld [vmem:[#allocation2 + $0x10] sm:$0xf]
    %v146 = vld [vmem:[#allocation2 + $0x14] sm:$0xf]
    %v147 = vld [vmem:[#allocation2 + $0x18] sm:$0xf]
    %v148 = vld [vmem:[#allocation2 + $0x1c] sm:$0xf]
    %v149 = vld [vmem:[#allocation2 + $0x20] sm:$0xf]
    %v150 = vld [vmem:[#allocation2 + $0x24] sm:$0xf]
    %v151 = vld [vmem:[#allocation2 + $0x28] sm:$0xf]
    %v152 = vld [vmem:[#allocation2 + $0x2c] sm:$0xf]
    %v153 = vld [vmem:[#allocation2 + $0x30] sm:$0xf]
    %v154 = vld [vmem:[#allocation2 + $0x34] sm:$0xf]
    %v155 = vld [vmem:[#allocation2 + $0x38] sm:$0xf]
    %v156 = vld [vmem:[#allocation2 + $0x3c] sm:$0xf]
    %v157 = vld [vmem:[#allocation2 + $0x40] sm:$0xf]
    %v158 = vld [vmem:[#allocation2 + $0x44] sm:$0xf]
    %v159 = vld [vmem:[#allocation2 + $0x48] sm:$0xf]
    %v160 = vld [vmem:[#allocation2 + $0x4c] sm:$0xf]
    %v161 = vld [vmem:[#allocation2 + $0x50] sm:$0xf]
    %v162 = vld [vmem:[#allocation2 + $0x54] sm:$0xf]
    %v163 = vld [vmem:[#allocation2 + $0x58] sm:$0xf]
    %v164 = vld [vmem:[#allocation2 + $0x5c] sm:$0xf]
    %v165 = vld [vmem:[#allocation2 + $0x60] sm:$0xf]
    %v166 = vld [vmem:[#allocation2 + $0x64] sm:$0xf]
    %v167 = vld [vmem:[#allocation2 + $0x68] sm:$0xf]
    %v168 = vld [vmem:[#allocation2 + $0x6c] sm:$0xf]
    %v169 = vld [vmem:[#allocation2 + $0x70] sm:$0xf]
    %v170 = vld [vmem:[#allocation2 + $0x74] sm:$0xf]
    %v171 = vld [vmem:[#allocation2 + $0x78] sm:$0xf]
    %v172 = vld [vmem:[#allocation2 + $0x7c] sm:$0xf]
    %v173 = vld [vmem:[#allocation5] sm:$0xf]
    %v174 = vld [vmem:[#allocation5 + $0x4] sm:$0xf]
    %v175 = vld [vmem:[#allocation5 + $0x8] sm:$0xf]
    %v176 = vld [vmem:[#allocation5 + $0xc] sm:$0xf]
    %v177 = vld [vmem:[#allocation5 + $0x10] sm:$0xf]
    %v178 = vld [vmem:[#allocation5 + $0x14] sm:$0xf]
    %v179 = vld [vmem:[#allocation5 + $0x18] sm:$0xf]
    %v180 = vld [vmem:[#allocation5 + $0x1c] sm:$0xf]
    %v181 = vld [vmem:[#allocation5 + $0x20] sm:$0xf]
    %v182 = vld [vmem:[#allocation5 + $0x24] sm:$0xf]
    %v183 = vld [vmem:[#allocation5 + $0x28] sm:$0xf]
    %v184 = vld [vmem:[#allocation5 + $0x2c] sm:$0xf]
    %v185 = vld [vmem:[#allocation5 + $0x30] sm:$0xf]
    %v186 = vld [vmem:[#allocation5 + $0x34] sm:$0xf]
    %v187 = vld [vmem:[#allocation5 + $0x38] sm:$0xf]
    %v188 = vld [vmem:[#allocation5 + $0x3c] sm:$0xf]
    %v189 = vld [vmem:[#allocation5 + $0x40] sm:$0xf]
    %v190 = vld [vmem:[#allocation5 + $0x44] sm:$0xf]
    %v191 = vld [vmem:[#allocation5 + $0x48] sm:$0xf]
    %v192 = vld [vmem:[#allocation5 + $0x4c] sm:$0xf]
    %v193 = vld [vmem:[#allocation5 + $0x50] sm:$0xf]
    %v194 = vld [vmem:[#allocation5 + $0x54] sm:$0xf]
    %v195 = vld [vmem:[#allocation5 + $0x58] sm:$0xf]
    %v196 = vld [vmem:[#allocation5 + $0x5c] sm:$0xf]
    %v197 = vld [vmem:[#allocation5 + $0x60] sm:$0xf]
    %v198 = vld [vmem:[#allocation5 + $0x64] sm:$0xf]
    %v199 = vld [vmem:[#allocation5 + $0x68] sm:$0xf]
    %v200 = vld [vmem:[#allocation5 + $0x6c] sm:$0xf]
    %v201 = vld [vmem:[#allocation5 + $0x70] sm:$0xf]
    %v202 = vld [vmem:[#allocation5 + $0x74] sm:$0xf]
    %v203 = vld [vmem:[#allocation5 + $0x78] sm:$0xf]
    %v204 = vld [vmem:[#allocation5 + $0x7c] sm:$0xf]
    %v205 = vunpack.c.l.bf16 %v141
    %v206 = vunpack.c.l.bf16 %v142
    %v207 = vunpack.c.l.bf16 %v143
    %v208 = vunpack.c.l.bf16 %v144
    %v209 = vunpack.c.l.bf16 %v145
    %v210 = vunpack.c.l.bf16 %v146
    %v211 = vunpack.c.l.bf16 %v147
    %v212 = vunpack.c.l.bf16 %v148
    %v213 = vunpack.c.l.bf16 %v149
    %v214 = vunpack.c.l.bf16 %v150
    %v215 = vunpack.c.l.bf16 %v151
    %v216 = vunpack.c.l.bf16 %v152
    %v217 = vunpack.c.l.bf16 %v153
    %v218 = vunpack.c.l.bf16 %v154
    %v219 = vunpack.c.l.bf16 %v155
    %v220 = vunpack.c.l.bf16 %v156
    %v221 = vunpack.c.l.bf16 %v157
    %v222 = vunpack.c.l.bf16 %v158
    %v223 = vunpack.c.l.bf16 %v159
    %v224 = vunpack.c.l.bf16 %v160
    %v225 = vunpack.c.l.bf16 %v161
    %v226 = vunpack.c.l.bf16 %v162
    %v227 = vunpack.c.l.bf16 %v163
    %v228 = vunpack.c.l.bf16 %v164
    %v229 = vunpack.c.l.bf16 %v165
    %v230 = vunpack.c.l.bf16 %v166
    %v231 = vunpack.c.l.bf16 %v167
    %v232 = vunpack.c.l.bf16 %v168
    %v233 = vunpack.c.l.bf16 %v169
    %v234 = vunpack.c.l.bf16 %v170
    %v235 = vunpack.c.l.bf16 %v171
    %v236 = vunpack.c.l.bf16 %v172
    %v237 = vadd.f32 %v205, %v206
    %v238 = vrot.slane %v237, 4
    %v239 = vadd.f32 %v237, %v238
    %v240 = vrot.slane %v239, 2
    %v241 = vadd.f32 %v239, %v240
    %v242 = vrot.slane %v241, 1
    %v243 = vadd.f32 %v241, %v242
    %v244 = vadd.f32 %v207, %v208
    %v245 = vrot.slane %v244, 4
    %v246 = vadd.f32 %v244, %v245
    %v247 = vrot.slane %v246, 2
    %v248 = vadd.f32 %v246, %v247
    %v249 = vrot.slane %v248, 1
    %v250 = vadd.f32 %v248, %v249
    %v251 = vadd.f32 %v209, %v210
    %v252 = vrot.slane %v251, 4
    %v253 = vadd.f32 %v251, %v252
    %v254 = vrot.slane %v253, 2
    %v255 = vadd.f32 %v253, %v254
    %v256 = vrot.slane %v255, 1
    %v257 = vadd.f32 %v255, %v256
    %v258 = vadd.f32 %v211, %v212
    %v259 = vrot.slane %v258, 4
    %v260 = vadd.f32 %v258, %v259
    %v261 = vrot.slane %v260, 2
    %v262 = vadd.f32 %v260, %v261
    %v263 = vrot.slane %v262, 1
    %v264 = vadd.f32 %v262, %v263
    %v265 = vadd.f32 %v213, %v214
    %v266 = vrot.slane %v265, 4
    %v267 = vadd.f32 %v265, %v266
    %v268 = vrot.slane %v267, 2
    %v269 = vadd.f32 %v267, %v268
    %v270 = vrot.slane %v269, 1
    %v271 = vadd.f32 %v269, %v270
    %v272 = vadd.f32 %v215, %v216
    %v273 = vrot.slane %v272, 4
    %v274 = vadd.f32 %v272, %v273
    %v275 = vrot.slane %v274, 2
    %v276 = vadd.f32 %v274, %v275
    %v277 = vrot.slane %v276, 1
    %v278 = vadd.f32 %v276, %v277
    %v279 = vadd.f32 %v217, %v218
    %v280 = vrot.slane %v279, 4
    %v281 = vadd.f32 %v279, %v280
    %v282 = vrot.slane %v281, 2
    %v283 = vadd.f32 %v281, %v282
    %v284 = vrot.slane %v283, 1
    %v285 = vadd.f32 %v283, %v284
    %v286 = vadd.f32 %v219, %v220
    %v287 = vrot.slane %v286, 4
    %v288 = vadd.f32 %v286, %v287
    %v289 = vrot.slane %v288, 2
    %v290 = vadd.f32 %v288, %v289
    %v291 = vrot.slane %v290, 1
    %v292 = vadd.f32 %v290, %v291
    %v293 = vadd.f32 %v221, %v222
    %v294 = vrot.slane %v293, 4
    %v295 = vadd.f32 %v293, %v294
    %v296 = vrot.slane %v295, 2
    %v297 = vadd.f32 %v295, %v296
    %v298 = vrot.slane %v297, 1
    %v299 = vadd.f32 %v297, %v298
    %v300 = vadd.f32 %v223, %v224
    %v301 = vrot.slane %v300, 4
    %v302 = vadd.f32 %v300, %v301
    %v303 = vrot.slane %v302, 2
    %v304 = vadd.f32 %v302, %v303
    %v305 = vrot.slane %v304, 1
    %v306 = vadd.f32 %v304, %v305
    %v307 = vadd.f32 %v225, %v226
    %v308 = vrot.slane %v307, 4
    %v309 = vadd.f32 %v307, %v308
    %v310 = vrot.slane %v309, 2
    %v311 = vadd.f32 %v309, %v310
    %v312 = vrot.slane %v311, 1
    %v313 = vadd.f32 %v311, %v312
    %v314 = vadd.f32 %v227, %v228
    %v315 = vrot.slane %v314, 4
    %v316 = vadd.f32 %v314, %v315
    %v317 = vrot.slane %v316, 2
    %v318 = vadd.f32 %v316, %v317
    %v319 = vrot.slane %v318, 1
    %v320 = vadd.f32 %v318, %v319
    %v321 = vadd.f32 %v229, %v230
    %v322 = vrot.slane %v321, 4
    %v323 = vadd.f32 %v321, %v322
    %v324 = vrot.slane %v323, 2
    %v325 = vadd.f32 %v323, %v324
    %v326 = vrot.slane %v325, 1
    %v327 = vadd.f32 %v325, %v326
    %v328 = vadd.f32 %v231, %v232
    %v329 = vrot.slane %v328, 4
    %v330 = vadd.f32 %v328, %v329
    %v331 = vrot.slane %v330, 2
    %v332 = vadd.f32 %v330, %v331
    %v333 = vrot.slane %v332, 1
    %v334 = vadd.f32 %v332, %v333
    %v335 = vadd.f32 %v233, %v234
    %v336 = vrot.slane %v335, 4
    %v337 = vadd.f32 %v335, %v336
    %v338 = vrot.slane %v337, 2
    %v339 = vadd.f32 %v337, %v338
    %v340 = vrot.slane %v339, 1
    %v341 = vadd.f32 %v339, %v340
    %v342 = vadd.f32 %v235, %v236
    %v343 = vrot.slane %v342, 4
    %v344 = vadd.f32 %v342, %v343
    %v345 = vrot.slane %v344, 2
    %v346 = vadd.f32 %v344, %v345
    %v347 = vrot.slane %v346, 1
    %v348 = vadd.f32 %v346, %v347
    %v349 = vrcp.pop 16.0
    %v350 = vmul.f32 %v243, %v349
    %v351 = vmul.f32 %v250, %v349
    %v352 = vmul.f32 %v257, %v349
    %v353 = vmul.f32 %v264, %v349
    %v354 = vmul.f32 %v271, %v349
    %v355 = vmul.f32 %v278, %v349
    %v356 = vmul.f32 %v285, %v349
    %v357 = vmul.f32 %v292, %v349
    %v358 = vmul.f32 %v299, %v349
    %v359 = vmul.f32 %v306, %v349
    %v360 = vmul.f32 %v313, %v349
    %v361 = vmul.f32 %v320, %v349
    %v362 = vmul.f32 %v327, %v349
    %v363 = vmul.f32 %v334, %v349
    %v364 = vmul.f32 %v341, %v349
    %v365 = vmul.f32 %v348, %v349
    %v366 = vpack.c.bf16 %v350, %v350
    %v367 = vpack.c.bf16 %v351, %v351
    %v368 = vpack.c.bf16 %v352, %v352
    %v369 = vpack.c.bf16 %v353, %v353
    %v370 = vpack.c.bf16 %v354, %v354
    %v371 = vpack.c.bf16 %v355, %v355
    %v372 = vpack.c.bf16 %v356, %v356
    %v373 = vpack.c.bf16 %v357, %v357
    %v374 = vpack.c.bf16 %v358, %v358
    %v375 = vpack.c.bf16 %v359, %v359
    %v376 = vpack.c.bf16 %v360, %v360
    %v377 = vpack.c.bf16 %v361, %v361
    %v378 = vpack.c.bf16 %v362, %v362
    %v379 = vpack.c.bf16 %v363, %v363
    %v380 = vpack.c.bf16 %v364, %v364
    %v381 = vpack.c.bf16 %v365, %v365
    %v382 = vld [vmem:[#allocation11] sm:$0xf]
    %v383 = vld [vmem:[#allocation11 + $0x4] sm:$0xf]
    %v384 = vld [vmem:[#allocation11 + $0x8] sm:$0xf]
    %v385 = vld [vmem:[#allocation11 + $0xc] sm:$0xf]
    %v386 = vld [vmem:[#allocation11 + $0x10] sm:$0xf]
    %v387 = vld [vmem:[#allocation11 + $0x14] sm:$0xf]
    %v388 = vld [vmem:[#allocation11 + $0x18] sm:$0xf]
    %v389 = vld [vmem:[#allocation11 + $0x1c] sm:$0xf]
    %v390 = vld [vmem:[#allocation11 + $0x20] sm:$0xf]
    %v391 = vld [vmem:[#allocation11 + $0x24] sm:$0xf]
    %v392 = vld [vmem:[#allocation11 + $0x28] sm:$0xf]
    %v393 = vld [vmem:[#allocation11 + $0x2c] sm:$0xf]
    %v394 = vld [vmem:[#allocation11 + $0x30] sm:$0xf]
    %v395 = vld [vmem:[#allocation11 + $0x34] sm:$0xf]
    %v396 = vld [vmem:[#allocation11 + $0x38] sm:$0xf]
    %v397 = vld [vmem:[#allocation11 + $0x3c] sm:$0xf]
    %v398 = vld [vmem:[%s9] sm:$0x1]
    %v400 = vlaneseq
    %v401 = vshrl.u32 %v400, 7
    %v402 = vsub.s32 0, %v401
    %v403 = vrot.slane %v398, %v402
    %v421 = vunpack.c.l.b16 %v366
    %v422 = vunpack.c.l.b16 %v367
    %v423 = vunpack.c.l.b16 %v368
    %v424 = vunpack.c.l.b16 %v369
    %v425 = vunpack.c.l.b16 %v370
    %v426 = vunpack.c.l.b16 %v371
    %v427 = vunpack.c.l.b16 %v372
    %v428 = vunpack.c.l.b16 %v373
    %v429 = vunpack.c.l.b16 %v374
    %v430 = vunpack.c.l.b16 %v375
    %v431 = vunpack.c.l.b16 %v376
    %v432 = vunpack.c.l.b16 %v377
    %v433 = vunpack.c.l.b16 %v378
    %v434 = vunpack.c.l.b16 %v379
    %v435 = vunpack.c.l.b16 %v380
    %v436 = vunpack.c.l.b16 %v381
    %vm437 = vcmask 1041409
    %v438 = vsel %vm437, %v422, %v421
    %vm439 = vcmask 1042434
    %v440 = vsel %vm439, %v423, %v438
    %vm441 = vcmask 1043459
    %v442 = vsel %vm441, %v424, %v440
    %vm443 = vcmask 1044484
    %v444 = vsel %vm443, %v425, %v442
    %vm445 = vcmask 1045509
    %v446 = vsel %vm445, %v426, %v444
    %vm447 = vcmask 1046534
    %v448 = vsel %vm447, %v427, %v446
    %vm449 = vcmask 1047559
    %v450 = vsel %vm449, %v428, %v448
    %v451 = vsel %vm437, %v430, %v429
    %v452 = vsel %vm439, %v431, %v451
    %v453 = vsel %vm441, %v432, %v452
    %v454 = vsel %vm443, %v433, %v453
    %v455 = vsel %vm445, %v434, %v454
    %v456 = vsel %vm447, %v435, %v455
    %v457 = vsel %vm449, %v436, %v456
    %v458 = vpack.c.b16 %v457, %v450
    %v476 = vunpack.c.l.b16 %v382
    %v477 = vunpack.c.l.b16 %v383
    %v478 = vunpack.c.l.b16 %v384
    %v479 = vunpack.c.l.b16 %v385
    %v480 = vunpack.c.l.b16 %v386
    %v481 = vunpack.c.l.b16 %v387
    %v482 = vunpack.c.l.b16 %v388
    %v483 = vunpack.c.l.b16 %v389
    %v484 = vunpack.c.l.b16 %v390
    %v485 = vunpack.c.l.b16 %v391
    %v486 = vunpack.c.l.b16 %v392
    %v487 = vunpack.c.l.b16 %v393
    %v488 = vunpack.c.l.b16 %v394
    %v489 = vunpack.c.l.b16 %v395
    %v490 = vunpack.c.l.b16 %v396
    %v491 = vunpack.c.l.b16 %v397
    %v492 = vpack.c.b16 %v477, %v476
    %v493 = vpack.c.b16 %v479, %v478
    %v494 = vpack.c.b16 %v481, %v480
    %v495 = vpack.c.b16 %v483, %v482
    %v496 = vpack.c.b16 %v485, %v484
    %v497 = vpack.c.b16 %v487, %v486
    %v498 = vpack.c.b16 %v489, %v488
    %v499 = vpack.c.b16 %v491, %v490
    %508 = vmatprep.subr.bf16.mxu0 0
    %509 = vmatpush1.bf16.msra.mxu0 %v492
    %510 = vmatprep.subr.bf16.mxu0 0
    %511 = vmatpush1.bf16.msra.mxu0 %v493
    %512 = vmatprep.subr.bf16.mxu0 0
    %513 = vmatpush1.bf16.msra.mxu0 %v494
    %514 = vmatprep.subr.bf16.mxu0 0
    %515 = vmatpush1.bf16.msra.mxu0 %v495
    %516 = vmatprep.subr.bf16.mxu0 0
    %517 = vmatpush1.bf16.msra.mxu0 %v496
    %518 = vmatprep.subr.bf16.mxu0 0
    %519 = vmatpush1.bf16.msra.mxu0 %v497
    %520 = vmatprep.subr.bf16.mxu0 0
    %521 = vmatpush1.bf16.msra.mxu0 %v498
    %522 = vmatprep.subr.bf16.mxu0 0
    %523 = vmatpush1.bf16.msra.mxu0 %v499
    %524 = vmatprep.subr.bf16.mxu0 0
    %525 = vmatpush1.bf16.msra.mxu0 0
    %526 = vmatprep.subr.bf16.mxu0 0
    %527 = vmatpush1.bf16.msra.mxu0 0
    %528 = vmatprep.subr.bf16.mxu0 0
    %529 = vmatpush1.bf16.msra.mxu0 0
    %530 = vmatprep.subr.bf16.mxu0 0
    %531 = vmatpush1.bf16.msra.mxu0 0
    %532 = vmatprep.subr.bf16.mxu0 0
    %533 = vmatpush1.bf16.msra.mxu0 0
    %534 = vmatprep.subr.bf16.mxu0 0
    %535 = vmatpush1.bf16.msra.mxu0 0
    %536 = vmatprep.subr.bf16.mxu0 0
    %537 = vmatpush1.bf16.msra.mxu0 0
    %538 = vmatprep.subr.bf16.mxu0 0
    %539 = vmatpush1.bf16.msra.mxu0 0
    %540 = vmatprep.mubr.bf16.mxu0 0
    %541 = vmatmul.mubr.bf16.gmra.mrb[0].mxu0 %v458
    %v542 = vpop.f32.mrb[0].mxu0
    %v543 = vadd.f32 %v403, %v542
    %v544 = vpop.f32.mrb[0].mxu0
    %v545 = vpop.f32.mrb[0].mxu0
    %v546 = vadd.f32 %v403, %v545
    %v547 = vpop.f32.mrb[0].mxu0
    %548 = vdwg.mxu0
    %v549 = vmax.f32 %v543, 0.0
    %v550 = vmax.f32 %v546, 0.0
    %v551 = vpack.c.bf16 %v550, %v549
    %v552 = vld [vmem:[#allocation13] sm:$0xf]
    %v553 = vld [vmem:[#allocation13 + $0x4] sm:$0xf]
    %v554 = vld [vmem:[#allocation13 + $0x8] sm:$0xf]
    %v555 = vld [vmem:[#allocation13 + $0xc] sm:$0xf]
    %v556 = vld [vmem:[#allocation13 + $0x10] sm:$0xf]
    %v557 = vld [vmem:[#allocation13 + $0x14] sm:$0xf]
    %v558 = vld [vmem:[#allocation13 + $0x18] sm:$0xf]
    %v559 = vld [vmem:[#allocation13 + $0x1c] sm:$0xf]
    %v560 = vld [vmem:[#allocation13 + $0x20] sm:$0xf]
    %v561 = vld [vmem:[#allocation13 + $0x24] sm:$0xf]
    %v562 = vld [vmem:[#allocation13 + $0x28] sm:$0xf]
    %v563 = vld [vmem:[#allocation13 + $0x2c] sm:$0xf]
    %v564 = vld [vmem:[#allocation13 + $0x30] sm:$0xf]
    %v565 = vld [vmem:[#allocation13 + $0x34] sm:$0xf]
    %v566 = vld [vmem:[#allocation13 + $0x38] sm:$0xf]
    %v567 = vld [vmem:[#allocation13 + $0x3c] sm:$0xf]
    %v568 = vld [vmem:[%s11] sm:$0x1]
    %v570 = vlaneseq
    %v571 = vshrl.u32 %v570, 7
    %v572 = vsub.s32 0, %v571
    %v573 = vrot.slane %v568, %v572
    %v591 = vunpack.c.l.b16 %v552
    %v592 = vunpack.c.l.b16 %v553
    %v593 = vunpack.c.l.b16 %v554
    %v594 = vunpack.c.l.b16 %v555
    %v595 = vunpack.c.l.b16 %v556
    %v596 = vunpack.c.l.b16 %v557
    %v597 = vunpack.c.l.b16 %v558
    %v598 = vunpack.c.l.b16 %v559
    %v599 = vunpack.c.l.b16 %v560
    %v600 = vunpack.c.l.b16 %v561
    %v601 = vunpack.c.l.b16 %v562
    %v602 = vunpack.c.l.b16 %v563
    %v603 = vunpack.c.l.b16 %v564
    %v604 = vunpack.c.l.b16 %v565
    %v605 = vunpack.c.l.b16 %v566
    %v606 = vunpack.c.l.b16 %v567
    %v607 = vpack.c.b16 %v592, %v591
    %v608 = vpack.c.b16 %v594, %v593
    %v609 = vpack.c.b16 %v596, %v595
    %v610 = vpack.c.b16 %v598, %v597
    %v611 = vpack.c.b16 %v600, %v599
    %v612 = vpack.c.b16 %v602, %v601
    %v613 = vpack.c.b16 %v604, %v603
    %v614 = vpack.c.b16 %v606, %v605
    %623 = vmatprep.subr.bf16.mxu0 0
    %624 = vmatpush1.bf16.msra.mxu0 %v607
    %625 = vmatprep.subr.bf16.mxu0 0
    %626 = vmatpush1.bf16.msra.mxu0 %v608
    %627 = vmatprep.subr.bf16.mxu0 0
    %628 = vmatpush1.bf16.msra.mxu0 %v609
    %629 = vmatprep.subr.bf16.mxu0 0
    %630 = vmatpush1.bf16.msra.mxu0 %v610
    %631 = vmatprep.subr.bf16.mxu0 0
    %632 = vmatpush1.bf16.msra.mxu0 %v611
    %633 = vmatprep.subr.bf16.mxu0 0
    %634 = vmatpush1.bf16.msra.mxu0 %v612
    %635 = vmatprep.subr.bf16.mxu0 0
    %636 = vmatpush1.bf16.msra.mxu0 %v613
    %637 = vmatprep.subr.bf16.mxu0 0
    %638 = vmatpush1.bf16.msra.mxu0 %v614
    %639 = vmatprep.subr.bf16.mxu0 0
    %640 = vmatpush1.bf16.msra.mxu0 0
    %641 = vmatprep.subr.bf16.mxu0 0
    %642 = vmatpush1.bf16.msra.mxu0 0
    %643 = vmatprep.subr.bf16.mxu0 0
    %644 = vmatpush1.bf16.msra.mxu0 0
    %645 = vmatprep.subr.bf16.mxu0 0
    %646 = vmatpush1.bf16.msra.mxu0 0
    %647 = vmatprep.subr.bf16.mxu0 0
    %648 = vmatpush1.bf16.msra.mxu0 0
    %649 = vmatprep.subr.bf16.mxu0 0
    %650 = vmatpush1.bf16.msra.mxu0 0
    %651 = vmatprep.subr.bf16.mxu0 0
    %652 = vmatpush1.bf16.msra.mxu0 0
    %653 = vmatprep.subr.bf16.mxu0 0
    %654 = vmatpush1.bf16.msra.mxu0 0
    %655 = vmatprep.mubr.bf16.mxu0 0
    %656 = vmatmul.mubr.bf16.gmra.mrb[0].mxu0 %v551
    %v657 = vpop.f32.mrb[0].mxu0
    %v658 = vadd.f32 %v573, %v657
    %v659 = vpop.f32.mrb[0].mxu0
    %v660 = vpop.f32.mrb[0].mxu0
    %v661 = vadd.f32 %v573, %v660
    %v662 = vpop.f32.mrb[0].mxu0
    %663 = vdwg.mxu0
    %v664 = vxor.u32 %v658, 2147483648
    %v665 = vxor.u32 %v661, 2147483648
    %v666 = vmul.f32 %v664, 1.442695
    %v667 = vpow.pop %v666
    %v668 = vmul.f32 %v665, 1.442695
    %v669 = vpow.pop %v668
    %v670 = vadd.f32 %v667, 1.0
    %v671 = vadd.f32 %v669, 1.0
    %v672 = vrcp.pop %v670
    %v673 = vmul.f32 1.0, %v672
    %v674 = vrcp.pop %v671
    %v675 = vmul.f32 1.0, %v674
    %676 = vst [vmem:[#allocation15] sm:$0xff] %v673
    %677 = vst [vmem:[#allocation15 + $0x8] sm:$0xff] %v675
    %v680 = vunpack.c.l.b16 %v141
    %v681 = vunpack.c.l.b16 %v142
    %v682 = vpack.c.b16 %v681, %v680
    %v686 = vunpack.c.l.b16 %v173
    %v687 = vunpack.c.l.b16 %v174
    %v688 = vpack.c.b16 %v687, %v686
    %690 = vmatprep.subr.bf16.mxu0 0
    %691 = vmatpush1.bf16.xpose.msra.mxu0 %v688
    %692 = vmatprep.subr.bf16.mxu0 0
    %693 = vmatpush1.bf16.xpose.msra.mxu0 0
    %694 = vmatprep.subr.bf16.mxu0 0
    %695 = vmatpush1.bf16.xpose.msra.mxu0 0
    %696 = vmatprep.subr.bf16.mxu0 0
    %697 = vmatpush1.bf16.xpose.msra.mxu0 0
    %698 = vmatprep.subr.bf16.mxu0 0
    %699 = vmatpush1.bf16.xpose.msra.mxu0 0
    %700 = vmatprep.subr.bf16.mxu0 0
    %701 = vmatpush1.bf16.xpose.msra.mxu0 0
    %702 = vmatprep.subr.bf16.mxu0 0
    %703 = vmatpush1.bf16.xpose.msra.mxu0 0
    %704 = vmatprep.subr.bf16.mxu0 0
    %705 = vmatpush1.bf16.xpose.msra.mxu0 0
    %706 = vmatprep.subr.bf16.mxu0 0
    %707 = vmatpush1.bf16.xpose.msra.mxu0 0
    %708 = vmatprep.subr.bf16.mxu0 0
    %709 = vmatpush1.bf16.xpose.msra.mxu0 0
    %710 = vmatprep.subr.bf16.mxu0 0
    %711 = vmatpush1.bf16.xpose.msra.mxu0 0
    %712 = vmatprep.subr.bf16.mxu0 0
    %713 = vmatpush1.bf16.xpose.msra.mxu0 0
    %714 = vmatprep.subr.bf16.mxu0 0
    %715 = vmatpush1.bf16.xpose.msra.mxu0 0
    %716 = vmatprep.subr.bf16.mxu0 0
    %717 = vmatpush1.bf16.xpose.msra.mxu0 0
    %718 = vmatprep.subr.bf16.mxu0 0
    %719 = vmatpush1.bf16.xpose.msra.mxu0 0
    %720 = vmatprep.subr.bf16.mxu0 0
    %721 = vmatpush1.bf16.xpose.msra.mxu0 0
    %722 = vmatprep.mubr.bf16.mxu0 0
    %723 = vmatmul.mubr.bf16.gmra.mrb[0].mxu0 %v682
    %v724 = vpop.f32.mrb[0].mxu0
    %v725 = vadd.f32 0.0, %v724
    %v726 = vpop.f32.mrb[0].mxu0
    %v727 = vpop.f32.mrb[0].mxu0
    %v728 = vadd.f32 0.0, %v727
    %v729 = vpop.f32.mrb[0].mxu0
    %730 = vdwg.mxu0
    %v733 = vunpack.c.l.b16 %v143
    %v734 = vunpack.c.l.b16 %v144
    %v735 = vpack.c.b16 %v734, %v733
    %v739 = vunpack.c.l.b16 %v175
    %v740 = vunpack.c.l.b16 %v176
    %v741 = vpack.c.b16 %v740, %v739
    %743 = vmatprep.subr.bf16.mxu0 0
    %744 = vmatpush1.bf16.xpose.msra.mxu0 %v741
    %745 = vmatprep.subr.bf16.mxu0 0
    %746 = vmatpush1.bf16.xpose.msra.mxu0 0
    %747 = vmatprep.subr.bf16.mxu0 0
    %748 = vmatpush1.bf16.xpose.msra.mxu0 0
    %749 = vmatprep.subr.bf16.mxu0 0
    %750 = vmatpush1.bf16.xpose.msra.mxu0 0
    %751 = vmatprep.subr.bf16.mxu0 0
    %752 = vmatpush1.bf16.xpose.msra.mxu0 0
    %753 = vmatprep.subr.bf16.mxu0 0
    %754 = vmatpush1.bf16.xpose.msra.mxu0 0
    %755 = vmatprep.subr.bf16.mxu0 0
    %756 = vmatpush1.bf16.xpose.msra.mxu0 0
    %757 = vmatprep.subr.bf16.mxu0 0
    %758 = vmatpush1.bf16.xpose.msra.mxu0 0
    %759 = vmatprep.subr.bf16.mxu0 0
    %760 = vmatpush1.bf16.xpose.msra.mxu0 0
    %761 = vmatprep.subr.bf16.mxu0 0
    %762 = vmatpush1.bf16.xpose.msra.mxu0 0
    %763 = vmatprep.subr.bf16.mxu0 0
    %764 = vmatpush1.bf16.xpose.msra.mxu0 0
    %765 = vmatprep.subr.bf16.mxu0 0
    %766 = vmatpush1.bf16.xpose.msra.mxu0 0
    %767 = vmatprep.subr.bf16.mxu0 0
    %768 = vmatpush1.bf16.xpose.msra.mxu0 0
    %769 = vmatprep.subr.bf16.mxu0 0
    %770 = vmatpush1.bf16.xpose.msra.mxu0 0
    %771 = vmatprep.subr.bf16.mxu0 0
    %772 = vmatpush1.bf16.xpose.msra.mxu0 0
    %773 = vmatprep.subr.bf16.mxu0 0
    %774 = vmatpush1.bf16.xpose.msra.mxu0 0
    %775 = vmatprep.mubr.bf16.mxu0 0
    %776 = vmatmul.mubr.bf16.gmra.mrb[0].mxu0 %v735
    %v777 = vpop.f32.mrb[0].mxu0
    %v778 = vadd.f32 0.0, %v777
    %v779 = vpop.f32.mrb[0].mxu0
    %v780 = vpop.f32.mrb[0].mxu0
    %v781 = vadd.f32 0.0, %v780
    %v782 = vpop.f32.mrb[0].mxu0
    %783 = vdwg.mxu0
    %v786 = vunpack.c.l.b16 %v145
    %v787 = vunpack.c.l.b16 %v146
    %v788 = vpack.c.b16 %v787, %v786
    %v792 = vunpack.c.l.b16 %v177
    %v793 = vunpack.c.l.b16 %v178
    %v794 = vpack.c.b16 %v793, %v792
    %796 = vmatprep.subr.bf16.mxu0 0
    %797 = vmatpush1.bf16.xpose.msra.mxu0 %v794
    %798 = vmatprep.subr.bf16.mxu0 0
    %799 = vmatpush1.bf16.xpose.msra.mxu0 0
    %800 = vmatprep.subr.bf16.mxu0 0
    %801 = vmatpush1.bf16.xpose.msra.mxu0 0
    %802 = vmatprep.subr.bf16.mxu0 0
    %803 = vmatpush1.bf16.xpose.msra.mxu0 0
    %804 = vmatprep.subr.bf16.mxu0 0
    %805 = vmatpush1.bf16.xpose.msra.mxu0 0
    %806 = vmatprep.subr.bf16.mxu0 0
    %807 = vmatpush1.bf16.xpose.msra.mxu0 0
    %808 = vmatprep.subr.bf16.mxu0 0
    %809 = vmatpush1.bf16.xpose.msra.mxu0 0
    %810 = vmatprep.subr.bf16.mxu0 0
    %811 = vmatpush1.bf16.xpose.msra.mxu0 0
    %812 = vmatprep.subr.bf16.mxu0 0
    %813 = vmatpush1.bf16.xpose.msra.mxu0 0
    %814 = vmatprep.subr.bf16.mxu0 0
    %815 = vmatpush1.bf16.xpose.msra.mxu0 0
    %816 = vmatprep.subr.bf16.mxu0 0
    %817 = vmatpush1.bf16.xpose.msra.mxu0 0
    %818 = vmatprep.subr.bf16.mxu0 0
    %819 = vmatpush1.bf16.xpose.msra.mxu0 0
    %820 = vmatprep.subr.bf16.mxu0 0
    %821 = vmatpush1.bf16.xpose.msra.mxu0 0
    %822 = vmatprep.subr.bf16.mxu0 0
    %823 = vmatpush1.bf16.xpose.msra.mxu0 0
    %824 = vmatprep.subr.bf16.mxu0 0
    %825 = vmatpush1.bf16.xpose.msra.mxu0 0
    %826 = vmatprep.subr.bf16.mxu0 0
    %827 = vmatpush1.bf16.xpose.msra.mxu0 0
    %828 = vmatprep.mubr.bf16.mxu0 0
    %829 = vmatmul.mubr.bf16.gmra.mrb[0].mxu0 %v788
    %v830 = vpop.f32.mrb[0].mxu0
    %v831 = vadd.f32 0.0, %v830
    %v832 = vpop.f32.mrb[0].mxu0
    %v833 = vpop.f32.mrb[0].mxu0
    %v834 = vadd.f32 0.0, %v833
    %v835 = vpop.f32.mrb[0].mxu0
    %836 = vdwg.mxu0
    %v839 = vunpack.c.l.b16 %v147
    %v840 = vunpack.c.l.b16 %v148
    %v841 = vpack.c.b16 %v840, %v839
    %v845 = vunpack.c.l.b16 %v179
    %v846 = vunpack.c.l.b16 %v180
    %v847 = vpack.c.b16 %v846, %v845
    %849 = vmatprep.subr.bf16.mxu0 0
    %850 = vmatpush1.bf16.xpose.msra.mxu0 %v847
    %851 = vmatprep.subr.bf16.mxu0 0
    %852 = vmatpush1.bf16.xpose.msra.mxu0 0
    %853 = vmatprep.subr.bf16.mxu0 0
    %854 = vmatpush1.bf16.xpose.msra.mxu0 0
    %855 = vmatprep.subr.bf16.mxu0 0
    %856 = vmatpush1.bf16.xpose.msra.mxu0 0
    %857 = vmatprep.subr.bf16.mxu0 0
    %858 = vmatpush1.bf16.xpose.msra.mxu0 0
    %859 = vmatprep.subr.bf16.mxu0 0
    %860 = vmatpush1.bf16.xpose.msra.mxu0 0
    %861 = vmatprep.subr.bf16.mxu0 0
    %862 = vmatpush1.bf16.xpose.msra.mxu0 0
    %863 = vmatprep.subr.bf16.mxu0 0
    %864 = vmatpush1.bf16.xpose.msra.mxu0 0
    %865 = vmatprep.subr.bf16.mxu0 0
    %866 = vmatpush1.bf16.xpose.msra.mxu0 0
    %867 = vmatprep.subr.bf16.mxu0 0
    %868 = vmatpush1.bf16.xpose.msra.mxu0 0
    %869 = vmatprep.subr.bf16.mxu0 0
    %870 = vmatpush1.bf16.xpose.msra.mxu0 0
    %871 = vmatprep.subr.bf16.mxu0 0
    %872 = vmatpush1.bf16.xpose.msra.mxu0 0
    %873 = vmatprep.subr.bf16.mxu0 0
    %874 = vmatpush1.bf16.xpose.msra.mxu0 0
    %875 = vmatprep.subr.bf16.mxu0 0
    %876 = vmatpush1.bf16.xpose.msra.mxu0 0
    %877 = vmatprep.subr.bf16.mxu0 0
    %878 = vmatpush1.bf16.xpose.msra.mxu0 0
    %879 = vmatprep.subr.bf16.mxu0 0
    %880 = vmatpush1.bf16.xpose.msra.mxu0 0
    %881 = vmatprep.mubr.bf16.mxu0 0
    %882 = vmatmul.mubr.bf16.gmra.mrb[0].mxu0 %v841
    %v883 = vpop.f32.mrb[0].mxu0
    %v884 = vadd.f32 0.0, %v883
    %v885 = vpop.f32.mrb[0].mxu0
    %v886 = vpop.f32.mrb[0].mxu0
    %v887 = vadd.f32 0.0, %v886
    %v888 = vpop.f32.mrb[0].mxu0
    %889 = vdwg.mxu0
    %v892 = vunpack.c.l.b16 %v149
    %v893 = vunpack.c.l.b16 %v150
    %v894 = vpack.c.b16 %v893, %v892
    %v898 = vunpack.c.l.b16 %v181
    %v899 = vunpack.c.l.b16 %v182
    %v900 = vpack.c.b16 %v899, %v898
    %902 = vmatprep.subr.bf16.mxu0 0
    %903 = vmatpush1.bf16.xpose.msra.mxu0 %v900
    %904 = vmatprep.subr.bf16.mxu0 0
    %905 = vmatpush1.bf16.xpose.msra.mxu0 0
    %906 = vmatprep.subr.bf16.mxu0 0
    %907 = vmatpush1.bf16.xpose.msra.mxu0 0
    %908 = vmatprep.subr.bf16.mxu0 0
    %909 = vmatpush1.bf16.xpose.msra.mxu0 0
    %910 = vmatprep.subr.bf16.mxu0 0
    %911 = vmatpush1.bf16.xpose.msra.mxu0 0
    %912 = vmatprep.subr.bf16.mxu0 0
    %913 = vmatpush1.bf16.xpose.msra.mxu0 0
    %914 = vmatprep.subr.bf16.mxu0 0
    %915 = vmatpush1.bf16.xpose.msra.mxu0 0
    %916 = vmatprep.subr.bf16.mxu0 0
    %917 = vmatpush1.bf16.xpose.msra.mxu0 0
    %918 = vmatprep.subr.bf16.mxu0 0
    %919 = vmatpush1.bf16.xpose.msra.mxu0 0
    %920 = vmatprep.subr.bf16.mxu0 0
    %921 = vmatpush1.bf16.xpose.msra.mxu0 0
    %922 = vmatprep.subr.bf16.mxu0 0
    %923 = vmatpush1.bf16.xpose.msra.mxu0 0
    %924 = vmatprep.subr.bf16.mxu0 0
    %925 = vmatpush1.bf16.xpose.msra.mxu0 0
    %926 = vmatprep.subr.bf16.mxu0 0
    %927 = vmatpush1.bf16.xpose.msra.mxu0 0
    %928 = vmatprep.subr.bf16.mxu0 0
    %929 = vmatpush1.bf16.xpose.msra.mxu0 0
    %930 = vmatprep.subr.bf16.mxu0 0
    %931 = vmatpush1.bf16.xpose.msra.mxu0 0
    %932 = vmatprep.subr.bf16.mxu0 0
    %933 = vmatpush1.bf16.xpose.msra.mxu0 0
    %934 = vmatprep.mubr.bf16.mxu0 0
    %935 = vmatmul.mubr.bf16.gmra.mrb[0].mxu0 %v894
    %v936 = vpop.f32.mrb[0].mxu0
    %v937 = vadd.f32 0.0, %v936
    %v938 = vpop.f32.mrb[0].mxu0
    %v939 = vpop.f32.mrb[0].mxu0
    %v940 = vadd.f32 0.0, %v939
    %v941 = vpop.f32.mrb[0].mxu0
    %942 = vdwg.mxu0
    %v945 = vunpack.c.l.b16 %v151
    %v946 = vunpack.c.l.b16 %v152
    %v947 = vpack.c.b16 %v946, %v945
    %v951 = vunpack.c.l.b16 %v183
    %v952 = vunpack.c.l.b16 %v184
    %v953 = vpack.c.b16 %v952, %v951
    %955 = vmatprep.subr.bf16.mxu0 0
    %956 = vmatpush1.bf16.xpose.msra.mxu0 %v953
    %957 = vmatprep.subr.bf16.mxu0 0
    %958 = vmatpush1.bf16.xpose.msra.mxu0 0
    %959 = vmatprep.subr.bf16.mxu0 0
    %960 = vmatpush1.bf16.xpose.msra.mxu0 0
    %961 = vmatprep.subr.bf16.mxu0 0
    %962 = vmatpush1.bf16.xpose.msra.mxu0 0
    %963 = vmatprep.subr.bf16.mxu0 0
    %964 = vmatpush1.bf16.xpose.msra.mxu0 0
    %965 = vmatprep.subr.bf16.mxu0 0
    %966 = vmatpush1.bf16.xpose.msra.mxu0 0
    %967 = vmatprep.subr.bf16.mxu0 0
    %968 = vmatpush1.bf16.xpose.msra.mxu0 0
    %969 = vmatprep.subr.bf16.mxu0 0
    %970 = vmatpush1.bf16.xpose.msra.mxu0 0
    %971 = vmatprep.subr.bf16.mxu0 0
    %972 = vmatpush1.bf16.xpose.msra.mxu0 0
    %973 = vmatprep.subr.bf16.mxu0 0
    %974 = vmatpush1.bf16.xpose.msra.mxu0 0
    %975 = vmatprep.subr.bf16.mxu0 0
    %976 = vmatpush1.bf16.xpose.msra.mxu0 0
    %977 = vmatprep.subr.bf16.mxu0 0
    %978 = vmatpush1.bf16.xpose.msra.mxu0 0
    %979 = vmatprep.subr.bf16.mxu0 0
    %980 = vmatpush1.bf16.xpose.msra.mxu0 0
    %981 = vmatprep.subr.bf16.mxu0 0
    %982 = vmatpush1.bf16.xpose.msra.mxu0 0
    %983 = vmatprep.subr.bf16.mxu0 0
    %984 = vmatpush1.bf16.xpose.msra.mxu0 0
    %985 = vmatprep.subr.bf16.mxu0 0
    %986 = vmatpush1.bf16.xpose.msra.mxu0 0
    %987 = vmatprep.mubr.bf16.mxu0 0
    %988 = vmatmul.mubr.bf16.gmra.mrb[0].mxu0 %v947
    %v989 = vpop.f32.mrb[0].mxu0
    %v990 = vadd.f32 0.0, %v989
    %v991 = vpop.f32.mrb[0].mxu0
    %v992 = vpop.f32.mrb[0].mxu0
    %v993 = vadd.f32 0.0, %v992
    %v994 = vpop.f32.mrb[0].mxu0
    %995 = vdwg.mxu0
    %v998 = vunpack.c.l.b16 %v153
    %v999 = vunpack.c.l.b16 %v154
    %v1000 = vpack.c.b16 %v999, %v998
    %v1004 = vunpack.c.l.b16 %v185
    %v1005 = vunpack.c.l.b16 %v186
    %v1006 = vpack.c.b16 %v1005, %v1004
    %1008 = vmatprep.subr.bf16.mxu0 0
    %1009 = vmatpush1.bf16.xpose.msra.mxu0 %v1006
    %1010 = vmatprep.subr.bf16.mxu0 0
    %1011 = vmatpush1.bf16.xpose.msra.mxu0 0
    %1012 = vmatprep.subr.bf16.mxu0 0
    %1013 = vmatpush1.bf16.xpose.msra.mxu0 0
    %1014 = vmatprep.subr.bf16.mxu0 0
    %1015 = vmatpush1.bf16.xpose.msra.mxu0 0
    %1016 = vmatprep.subr.bf16.mxu0 0
    %1017 = vmatpush1.bf16.xpose.msra.mxu0 0
    %1018 = vmatprep.subr.bf16.mxu0 0
    %1019 = vmatpush1.bf16.xpose.msra.mxu0 0
    %1020 = vmatprep.subr.bf16.mxu0 0
    %1021 = vmatpush1.bf16.xpose.msra.mxu0 0
    %1022 = vmatprep.subr.bf16.mxu0 0
    %1023 = vmatpush1.bf16.xpose.msra.mxu0 0
    %1024 = vmatprep.subr.bf16.mxu0 0
    %1025 = vmatpush1.bf16.xpose.msra.mxu0 0
    %1026 = vmatprep.subr.bf16.mxu0 0
    %1027 = vmatpush1.bf16.xpose.msra.mxu0 0
    %1028 = vmatprep.subr.bf16.mxu0 0
    %1029 = vmatpush1.bf16.xpose.msra.mxu0 0
    %1030 = vmatprep.subr.bf16.mxu0 0
    %1031 = vmatpush1.bf16.xpose.msra.mxu0 0
    %1032 = vmatprep.subr.bf16.mxu0 0
    %1033 = vmatpush1.bf16.xpose.msra.mxu0 0
    %1034 = vmatprep.subr.bf16.mxu0 0
    %1035 = vmatpush1.bf16.xpose.msra.mxu0 0
    %1036 = vmatprep.subr.bf16.mxu0 0
    %1037 = vmatpush1.bf16.xpose.msra.mxu0 0
    %1038 = vmatprep.subr.bf16.mxu0 0
    %1039 = vmatpush1.bf16.xpose.msra.mxu0 0
    %1040 = vmatprep.mubr.bf16.mxu0 0
    %1041 = vmatmul.mubr.bf16.gmra.mrb[0].mxu0 %v1000
    %v1042 = vpop.f32.mrb[0].mxu0
    %v1043 = vadd.f32 0.0, %v1042
    %v1044 = vpop.f32.mrb[0].mxu0
    %v1045 = vpop.f32.mrb[0].mxu0
    %v1046 = vadd.f32 0.0, %v1045
    %v1047 = vpop.f32.mrb[0].mxu0
    %1048 = vdwg.mxu0
    %v1051 = vunpack.c.l.b16 %v155
    %v1052 = vunpack.c.l.b16 %v156
    %v1053 = vpack.c.b16 %v1052, %v1051
    %v1057 = vunpack.c.l.b16 %v187
    %v1058 = vunpack.c.l.b16 %v188
    %v1059 = vpack.c.b16 %v1058, %v1057
    %1061 = vmatprep.subr.bf16.mxu0 0
    %1062 = vmatpush1.bf16.xpose.msra.mxu0 %v1059
    %1063 = vmatprep.subr.bf16.mxu0 0
    %1064 = vmatpush1.bf16.xpose.msra.mxu0 0
    %1065 = vmatprep.subr.bf16.mxu0 0
    %1066 = vmatpush1.bf16.xpose.msra.mxu0 0
    %1067 = vmatprep.subr.bf16.mxu0 0
    %1068 = vmatpush1.bf16.xpose.msra.mxu0 0
    %1069 = vmatprep.subr.bf16.mxu0 0
    %1070 = vmatpush1.bf16.xpose.msra.mxu0 0
    %1071 = vmatprep.subr.bf16.mxu0 0
    %1072 = vmatpush1.bf16.xpose.msra.mxu0 0
    %1073 = vmatprep.subr.bf16.mxu0 0
    %1074 = vmatpush1.bf16.xpose.msra.mxu0 0
    %1075 = vmatprep.subr.bf16.mxu0 0
    %1076 = vmatpush1.bf16.xpose.msra.mxu0 0
    %1077 = vmatprep.subr.bf16.mxu0 0
    %1078 = vmatpush1.bf16.xpose.msra.mxu0 0
    %1079 = vmatprep.subr.bf16.mxu0 0
    %1080 = vmatpush1.bf16.xpose.msra.mxu0 0
    %1081 = vmatprep.subr.bf16.mxu0 0
    %1082 = vmatpush1.bf16.xpose.msra.mxu0 0
    %1083 = vmatprep.subr.bf16.mxu0 0
    %1084 = vmatpush1.bf16.xpose.msra.mxu0 0
    %1085 = vmatprep.subr.bf16.mxu0 0
    %1086 = vmatpush1.bf16.xpose.msra.mxu0 0
    %1087 = vmatprep.subr.bf16.mxu0 0
    %1088 = vmatpush1.bf16.xpose.msra.mxu0 0
    %1089 = vmatprep.subr.bf16.mxu0 0
    %1090 = vmatpush1.bf16.xpose.msra.mxu0 0
    %1091 = vmatprep.subr.bf16.mxu0 0
    %1092 = vmatpush1.bf16.xpose.msra.mxu0 0
    %1093 = vmatprep.mubr.bf16.mxu0 0
    %1094 = vmatmul.mubr.bf16.gmra.mrb[0].mxu0 %v1053
    %v1095 = vpop.f32.mrb[0].mxu0
    %v1096 = vadd.f32 0.0, %v1095
    %v1097 = vpop.f32.mrb[0].mxu0
    %v1098 = vpop.f32.mrb[0].mxu0
    %v1099 = vadd.f32 0.0, %v1098
    %v1100 = vpop.f32.mrb[0].mxu0
    %1101 = vdwg.mxu0
    %v1104 = vunpack.c.l.b16 %v157
    %v1105 = vunpack.c.l.b16 %v158
    %v1106 = vpack.c.b16 %v1105, %v1104
    %v1110 = vunpack.c.l.b16 %v189
    %v1111 = vunpack.c.l.b16 %v190
    %v1112 = vpack.c.b16 %v1111, %v1110
    %1114 = vmatprep.subr.bf16.mxu0 0
    %1115 = vmatpush1.bf16.xpose.msra.mxu0 %v1112
    %1116 = vmatprep.subr.bf16.mxu0 0
    %1117 = vmatpush1.bf16.xpose.msra.mxu0 0
    %1118 = vmatprep.subr.bf16.mxu0 0
    %1119 = vmatpush1.bf16.xpose.msra.mxu0 0
    %1120 = vmatprep.subr.bf16.mxu0 0
    %1121 = vmatpush1.bf16.xpose.msra.mxu0 0
    %1122 = vmatprep.subr.bf16.mxu0 0
    %1123 = vmatpush1.bf16.xpose.msra.mxu0 0
    %1124 = vmatprep.subr.bf16.mxu0 0
    %1125 = vmatpush1.bf16.xpose.msra.mxu0 0
    %1126 = vmatprep.subr.bf16.mxu0 0
    %1127 = vmatpush1.bf16.xpose.msra.mxu0 0
    %1128 = vmatprep.subr.bf16.mxu0 0
    %1129 = vmatpush1.bf16.xpose.msra.mxu0 0
    %1130 = vmatprep.subr.bf16.mxu0 0
    %1131 = vmatpush1.bf16.xpose.msra.mxu0 0
    %1132 = vmatprep.subr.bf16.mxu0 0
    %1133 = vmatpush1.bf16.xpose.msra.mxu0 0
    %1134 = vmatprep.subr.bf16.mxu0 0
    %1135 = vmatpush1.bf16.xpose.msra.mxu0 0
    %1136 = vmatprep.subr.bf16.mxu0 0
    %1137 = vmatpush1.bf16.xpose.msra.mxu0 0
    %1138 = vmatprep.subr.bf16.mxu0 0
    %1139 = vmatpush1.bf16.xpose.msra.mxu0 0
    %1140 = vmatprep.subr.bf16.mxu0 0
    %1141 = vmatpush1.bf16.xpose.msra.mxu0 0
    %1142 = vmatprep.subr.bf16.mxu0 0
    %1143 = vmatpush1.bf16.xpose.msra.mxu0 0
    %1144 = vmatprep.subr.bf16.mxu0 0
    %1145 = vmatpush1.bf16.xpose.msra.mxu0 0
    %1146 = vmatprep.mubr.bf16.mxu0 0
    %1147 = vmatmul.mubr.bf16.gmra.mrb[0].mxu0 %v1106
    %v1148 = vpop.f32.mrb[0].mxu0
    %v1149 = vadd.f32 0.0, %v1148
    %v1150 = vpop.f32.mrb[0].mxu0
    %v1151 = vpop.f32.mrb[0].mxu0
    %v1152 = vadd.f32 0.0, %v1151
    %v1153 = vpop.f32.mrb[0].mxu0
    %1154 = vdwg.mxu0
    %v1157 = vunpack.c.l.b16 %v159
    %v1158 = vunpack.c.l.b16 %v160
    %v1159 = vpack.c.b16 %v1158, %v1157
    %v1163 = vunpack.c.l.b16 %v191
    %v1164 = vunpack.c.l.b16 %v192
    %v1165 = vpack.c.b16 %v1164, %v1163
    %1167 = vmatprep.subr.bf16.mxu0 0
    %1168 = vmatpush1.bf16.xpose.msra.mxu0 %v1165
    %1169 = vmatprep.subr.bf16.mxu0 0
    %1170 = vmatpush1.bf16.xpose.msra.mxu0 0
    %1171 = vmatprep.subr.bf16.mxu0 0
    %1172 = vmatpush1.bf16.xpose.msra.mxu0 0
    %1173 = vmatprep.subr.bf16.mxu0 0
    %1174 = vmatpush1.bf16.xpose.msra.mxu0 0
    %1175 = vmatprep.subr.bf16.mxu0 0
    %1176 = vmatpush1.bf16.xpose.msra.mxu0 0
    %1177 = vmatprep.subr.bf16.mxu0 0
    %1178 = vmatpush1.bf16.xpose.msra.mxu0 0
    %1179 = vmatprep.subr.bf16.mxu0 0
    %1180 = vmatpush1.bf16.xpose.msra.mxu0 0
    %1181 = vmatprep.subr.bf16.mxu0 0
    %1182 = vmatpush1.bf16.xpose.msra.mxu0 0
    %1183 = vmatprep.subr.bf16.mxu0 0
    %1184 = vmatpush1.bf16.xpose.msra.mxu0 0
    %1185 = vmatprep.subr.bf16.mxu0 0
    %1186 = vmatpush1.bf16.xpose.msra.mxu0 0
    %1187 = vmatprep.subr.bf16.mxu0 0
    %1188 = vmatpush1.bf16.xpose.msra.mxu0 0
    %1189 = vmatprep.subr.bf16.mxu0 0
    %1190 = vmatpush1.bf16.xpose.msra.mxu0 0
    %1191 = vmatprep.subr.bf16.mxu0 0
    %1192 = vmatpush1.bf16.xpose.msra.mxu0 0
    %1193 = vmatprep.subr.bf16.mxu0 0
    %1194 = vmatpush1.bf16.xpose.msra.mxu0 0
    %1195 = vmatprep.subr.bf16.mxu0 0
    %1196 = vmatpush1.bf16.xpose.msra.mxu0 0
    %1197 = vmatprep.subr.bf16.mxu0 0
    %1198 = vmatpush1.bf16.xpose.msra.mxu0 0
    %1199 = vmatprep.mubr.bf16.mxu0 0
    %1200 = vmatmul.mubr.bf16.gmra.mrb[0].mxu0 %v1159
    %v1201 = vpop.f32.mrb[0].mxu0
    %v1202 = vadd.f32 0.0, %v1201
    %v1203 = vpop.f32.mrb[0].mxu0
    %v1204 = vpop.f32.mrb[0].mxu0
    %v1205 = vadd.f32 0.0, %v1204
    %v1206 = vpop.f32.mrb[0].mxu0
    %1207 = vdwg.mxu0
    %v1210 = vunpack.c.l.b16 %v161
    %v1211 = vunpack.c.l.b16 %v162
    %v1212 = vpack.c.b16 %v1211, %v1210
    %v1216 = vunpack.c.l.b16 %v193
    %v1217 = vunpack.c.l.b16 %v194
    %v1218 = vpack.c.b16 %v1217, %v1216
    %1220 = vmatprep.subr.bf16.mxu0 0
    %1221 = vmatpush1.bf16.xpose.msra.mxu0 %v1218
    %1222 = vmatprep.subr.bf16.mxu0 0
    %1223 = vmatpush1.bf16.xpose.msra.mxu0 0
    %1224 = vmatprep.subr.bf16.mxu0 0
    %1225 = vmatpush1.bf16.xpose.msra.mxu0 0
    %1226 = vmatprep.subr.bf16.mxu0 0
    %1227 = vmatpush1.bf16.xpose.msra.mxu0 0
    %1228 = vmatprep.subr.bf16.mxu0 0
    %1229 = vmatpush1.bf16.xpose.msra.mxu0 0
    %1230 = vmatprep.subr.bf16.mxu0 0
    %1231 = vmatpush1.bf16.xpose.msra.mxu0 0
    %1232 = vmatprep.subr.bf16.mxu0 0
    %1233 = vmatpush1.bf16.xpose.msra.mxu0 0
    %1234 = vmatprep.subr.bf16.mxu0 0
    %1235 = vmatpush1.bf16.xpose.msra.mxu0 0
    %1236 = vmatprep.subr.bf16.mxu0 0
    %1237 = vmatpush1.bf16.xpose.msra.mxu0 0
    %1238 = vmatprep.subr.bf16.mxu0 0
    %1239 = vmatpush1.bf16.xpose.msra.mxu0 0
    %1240 = vmatprep.subr.bf16.mxu0 0
    %1241 = vmatpush1.bf16.xpose.msra.mxu0 0
    %1242 = vmatprep.subr.bf16.mxu0 0
    %1243 = vmatpush1.bf16.xpose.msra.mxu0 0
    %1244 = vmatprep.subr.bf16.mxu0 0
    %1245 = vmatpush1.bf16.xpose.msra.mxu0 0
    %1246 = vmatprep.subr.bf16.mxu0 0
    %1247 = vmatpush1.bf16.xpose.msra.mxu0 0
    %1248 = vmatprep.subr.bf16.mxu0 0
    %1249 = vmatpush1.bf16.xpose.msra.mxu0 0
    %1250 = vmatprep.subr.bf16.mxu0 0
    %1251 = vmatpush1.bf16.xpose.msra.mxu0 0
    %1252 = vmatprep.mubr.bf16.mxu0 0
    %1253 = vmatmul.mubr.bf16.gmra.mrb[0].mxu0 %v1212
    %v1254 = vpop.f32.mrb[0].mxu0
    %v1255 = vadd.f32 0.0, %v1254
    %v1256 = vpop.f32.mrb[0].mxu0
    %v1257 = vpop.f32.mrb[0].mxu0
    %v1258 = vadd.f32 0.0, %v1257
    %v1259 = vpop.f32.mrb[0].mxu0
    %1260 = vdwg.mxu0
    %v1263 = vunpack.c.l.b16 %v163
    %v1264 = vunpack.c.l.b16 %v164
    %v1265 = vpack.c.b16 %v1264, %v1263
    %v1269 = vunpack.c.l.b16 %v195
    %v1270 = vunpack.c.l.b16 %v196
    %v1271 = vpack.c.b16 %v1270, %v1269
    %1273 = vmatprep.subr.bf16.mxu0 0
    %1274 = vmatpush1.bf16.xpose.msra.mxu0 %v1271
    %1275 = vmatprep.subr.bf16.mxu0 0
    %1276 = vmatpush1.bf16.xpose.msra.mxu0 0
    %1277 = vmatprep.subr.bf16.mxu0 0
    %1278 = vmatpush1.bf16.xpose.msra.mxu0 0
    %1279 = vmatprep.subr.bf16.mxu0 0
    %1280 = vmatpush1.bf16.xpose.msra.mxu0 0
    %1281 = vmatprep.subr.bf16.mxu0 0
    %1282 = vmatpush1.bf16.xpose.msra.mxu0 0
    %1283 = vmatprep.subr.bf16.mxu0 0
    %1284 = vmatpush1.bf16.xpose.msra.mxu0 0
    %1285 = vmatprep.subr.bf16.mxu0 0
    %1286 = vmatpush1.bf16.xpose.msra.mxu0 0
    %1287 = vmatprep.subr.bf16.mxu0 0
    %1288 = vmatpush1.bf16.xpose.msra.mxu0 0
    %1289 = vmatprep.subr.bf16.mxu0 0
    %1290 = vmatpush1.bf16.xpose.msra.mxu0 0
    %1291 = vmatprep.subr.bf16.mxu0 0
    %1292 = vmatpush1.bf16.xpose.msra.mxu0 0
    %1293 = vmatprep.subr.bf16.mxu0 0
    %1294 = vmatpush1.bf16.xpose.msra.mxu0 0
    %1295 = vmatprep.subr.bf16.mxu0 0
    %1296 = vmatpush1.bf16.xpose.msra.mxu0 0
    %1297 = vmatprep.subr.bf16.mxu0 0
    %1298 = vmatpush1.bf16.xpose.msra.mxu0 0
    %1299 = vmatprep.subr.bf16.mxu0 0
    %1300 = vmatpush1.bf16.xpose.msra.mxu0 0
    %1301 = vmatprep.subr.bf16.mxu0 0
    %1302 = vmatpush1.bf16.xpose.msra.mxu0 0
    %1303 = vmatprep.subr.bf16.mxu0 0
    %1304 = vmatpush1.bf16.xpose.msra.mxu0 0
    %1305 = vmatprep.mubr.bf16.mxu0 0
    %1306 = vmatmul.mubr.bf16.gmra.mrb[0].mxu0 %v1265
    %v1307 = vpop.f32.mrb[0].mxu0
    %v1308 = vadd.f32 0.0, %v1307
    %v1309 = vpop.f32.mrb[0].mxu0
    %v1310 = vpop.f32.mrb[0].mxu0
    %v1311 = vadd.f32 0.0, %v1310
    %v1312 = vpop.f32.mrb[0].mxu0
    %1313 = vdwg.mxu0
    %v1316 = vunpack.c.l.b16 %v165
    %v1317 = vunpack.c.l.b16 %v166
    %v1318 = vpack.c.b16 %v1317, %v1316
    %v1322 = vunpack.c.l.b16 %v197
    %v1323 = vunpack.c.l.b16 %v198
    %v1324 = vpack.c.b16 %v1323, %v1322
    %1326 = vmatprep.subr.bf16.mxu0 0
    %1327 = vmatpush1.bf16.xpose.msra.mxu0 %v1324
    %1328 = vmatprep.subr.bf16.mxu0 0
    %1329 = vmatpush1.bf16.xpose.msra.mxu0 0
    %1330 = vmatprep.subr.bf16.mxu0 0
    %1331 = vmatpush1.bf16.xpose.msra.mxu0 0
    %1332 = vmatprep.subr.bf16.mxu0 0
    %1333 = vmatpush1.bf16.xpose.msra.mxu0 0
    %1334 = vmatprep.subr.bf16.mxu0 0
    %1335 = vmatpush1.bf16.xpose.msra.mxu0 0
    %1336 = vmatprep.subr.bf16.mxu0 0
    %1337 = vmatpush1.bf16.xpose.msra.mxu0 0
    %1338 = vmatprep.subr.bf16.mxu0 0
    %1339 = vmatpush1.bf16.xpose.msra.mxu0 0
    %1340 = vmatprep.subr.bf16.mxu0 0
    %1341 = vmatpush1.bf16.xpose.msra.mxu0 0
    %1342 = vmatprep.subr.bf16.mxu0 0
    %1343 = vmatpush1.bf16.xpose.msra.mxu0 0
    %1344 = vmatprep.subr.bf16.mxu0 0
    %1345 = vmatpush1.bf16.xpose.msra.mxu0 0
    %1346 = vmatprep.subr.bf16.mxu0 0
    %1347 = vmatpush1.bf16.xpose.msra.mxu0 0
    %1348 = vmatprep.subr.bf16.mxu0 0
    %1349 = vmatpush1.bf16.xpose.msra.mxu0 0
    %1350 = vmatprep.subr.bf16.mxu0 0
    %1351 = vmatpush1.bf16.xpose.msra.mxu0 0
    %1352 = vmatprep.subr.bf16.mxu0 0
    %1353 = vmatpush1.bf16.xpose.msra.mxu0 0
    %1354 = vmatprep.subr.bf16.mxu0 0
    %1355 = vmatpush1.bf16.xpose.msra.mxu0 0
    %1356 = vmatprep.subr.bf16.mxu0 0
    %1357 = vmatpush1.bf16.xpose.msra.mxu0 0
    %1358 = vmatprep.mubr.bf16.mxu0 0
    %1359 = vmatmul.mubr.bf16.gmra.mrb[0].mxu0 %v1318
    %v1360 = vpop.f32.mrb[0].mxu0
    %v1361 = vadd.f32 0.0, %v1360
    %v1362 = vpop.f32.mrb[0].mxu0
    %v1363 = vpop.f32.mrb[0].mxu0
    %v1364 = vadd.f32 0.0, %v1363
    %v1365 = vpop.f32.mrb[0].mxu0
    %1366 = vdwg.mxu0
    %v1369 = vunpack.c.l.b16 %v167
    %v1370 = vunpack.c.l.b16 %v168
    %v1371 = vpack.c.b16 %v1370, %v1369
    %v1375 = vunpack.c.l.b16 %v199
    %v1376 = vunpack.c.l.b16 %v200
    %v1377 = vpack.c.b16 %v1376, %v1375
    %1379 = vmatprep.subr.bf16.mxu0 0
    %1380 = vmatpush1.bf16.xpose.msra.mxu0 %v1377
    %1381 = vmatprep.subr.bf16.mxu0 0
    %1382 = vmatpush1.bf16.xpose.msra.mxu0 0
    %1383 = vmatprep.subr.bf16.mxu0 0
    %1384 = vmatpush1.bf16.xpose.msra.mxu0 0
    %1385 = vmatprep.subr.bf16.mxu0 0
    %1386 = vmatpush1.bf16.xpose.msra.mxu0 0
    %1387 = vmatprep.subr.bf16.mxu0 0
    %1388 = vmatpush1.bf16.xpose.msra.mxu0 0
    %1389 = vmatprep.subr.bf16.mxu0 0
    %1390 = vmatpush1.bf16.xpose.msra.mxu0 0
    %1391 = vmatprep.subr.bf16.mxu0 0
    %1392 = vmatpush1.bf16.xpose.msra.mxu0 0
    %1393 = vmatprep.subr.bf16.mxu0 0
    %1394 = vmatpush1.bf16.xpose.msra.mxu0 0
    %1395 = vmatprep.subr.bf16.mxu0 0
    %1396 = vmatpush1.bf16.xpose.msra.mxu0 0
    %1397 = vmatprep.subr.bf16.mxu0 0
    %1398 = vmatpush1.bf16.xpose.msra.mxu0 0
    %1399 = vmatprep.subr.bf16.mxu0 0
    %1400 = vmatpush1.bf16.xpose.msra.mxu0 0
    %1401 = vmatprep.subr.bf16.mxu0 0
    %1402 = vmatpush1.bf16.xpose.msra.mxu0 0
    %1403 = vmatprep.subr.bf16.mxu0 0
    %1404 = vmatpush1.bf16.xpose.msra.mxu0 0
    %1405 = vmatprep.subr.bf16.mxu0 0
    %1406 = vmatpush1.bf16.xpose.msra.mxu0 0
    %1407 = vmatprep.subr.bf16.mxu0 0
    %1408 = vmatpush1.bf16.xpose.msra.mxu0 0
    %1409 = vmatprep.subr.bf16.mxu0 0
    %1410 = vmatpush1.bf16.xpose.msra.mxu0 0
    %1411 = vmatprep.mubr.bf16.mxu0 0
    %1412 = vmatmul.mubr.bf16.gmra.mrb[0].mxu0 %v1371
    %v1413 = vpop.f32.mrb[0].mxu0
    %v1414 = vadd.f32 0.0, %v1413
    %v1415 = vpop.f32.mrb[0].mxu0
    %v1416 = vpop.f32.mrb[0].mxu0
    %v1417 = vadd.f32 0.0, %v1416
    %v1418 = vpop.f32.mrb[0].mxu0
    %1419 = vdwg.mxu0
    %v1422 = vunpack.c.l.b16 %v169
    %v1423 = vunpack.c.l.b16 %v170
    %v1424 = vpack.c.b16 %v1423, %v1422
    %v1428 = vunpack.c.l.b16 %v201
    %v1429 = vunpack.c.l.b16 %v202
    %v1430 = vpack.c.b16 %v1429, %v1428
    %1432 = vmatprep.subr.bf16.mxu0 0
    %1433 = vmatpush1.bf16.xpose.msra.mxu0 %v1430
    %1434 = vmatprep.subr.bf16.mxu0 0
    %1435 = vmatpush1.bf16.xpose.msra.mxu0 0
    %1436 = vmatprep.subr.bf16.mxu0 0
    %1437 = vmatpush1.bf16.xpose.msra.mxu0 0
    %1438 = vmatprep.subr.bf16.mxu0 0
    %1439 = vmatpush1.bf16.xpose.msra.mxu0 0
    %1440 = vmatprep.subr.bf16.mxu0 0
    %1441 = vmatpush1.bf16.xpose.msra.mxu0 0
    %1442 = vmatprep.subr.bf16.mxu0 0
    %1443 = vmatpush1.bf16.xpose.msra.mxu0 0
    %1444 = vmatprep.subr.bf16.mxu0 0
    %1445 = vmatpush1.bf16.xpose.msra.mxu0 0
    %1446 = vmatprep.subr.bf16.mxu0 0
    %1447 = vmatpush1.bf16.xpose.msra.mxu0 0
    %1448 = vmatprep.subr.bf16.mxu0 0
    %1449 = vmatpush1.bf16.xpose.msra.mxu0 0
    %1450 = vmatprep.subr.bf16.mxu0 0
    %1451 = vmatpush1.bf16.xpose.msra.mxu0 0
    %1452 = vmatprep.subr.bf16.mxu0 0
    %1453 = vmatpush1.bf16.xpose.msra.mxu0 0
    %1454 = vmatprep.subr.bf16.mxu0 0
    %1455 = vmatpush1.bf16.xpose.msra.mxu0 0
    %1456 = vmatprep.subr.bf16.mxu0 0
    %1457 = vmatpush1.bf16.xpose.msra.mxu0 0
    %1458 = vmatprep.subr.bf16.mxu0 0
    %1459 = vmatpush1.bf16.xpose.msra.mxu0 0
    %1460 = vmatprep.subr.bf16.mxu0 0
    %1461 = vmatpush1.bf16.xpose.msra.mxu0 0
    %1462 = vmatprep.subr.bf16.mxu0 0
    %1463 = vmatpush1.bf16.xpose.msra.mxu0 0
    %1464 = vmatprep.mubr.bf16.mxu0 0
    %1465 = vmatmul.mubr.bf16.gmra.mrb[0].mxu0 %v1424
    %v1466 = vpop.f32.mrb[0].mxu0
    %v1467 = vadd.f32 0.0, %v1466
    %v1468 = vpop.f32.mrb[0].mxu0
    %v1469 = vpop.f32.mrb[0].mxu0
    %v1470 = vadd.f32 0.0, %v1469
    %v1471 = vpop.f32.mrb[0].mxu0
    %1472 = vdwg.mxu0
    %v1475 = vunpack.c.l.b16 %v171
    %v1476 = vunpack.c.l.b16 %v172
    %v1477 = vpack.c.b16 %v1476, %v1475
    %v1481 = vunpack.c.l.b16 %v203
    %v1482 = vunpack.c.l.b16 %v204
    %v1483 = vpack.c.b16 %v1482, %v1481
    %1485 = vmatprep.subr.bf16.mxu0 0
    %1486 = vmatpush1.bf16.xpose.msra.mxu0 %v1483
    %1487 = vmatprep.subr.bf16.mxu0 0
    %1488 = vmatpush1.bf16.xpose.msra.mxu0 0
    %1489 = vmatprep.subr.bf16.mxu0 0
    %1490 = vmatpush1.bf16.xpose.msra.mxu0 0
    %1491 = vmatprep.subr.bf16.mxu0 0
    %1492 = vmatpush1.bf16.xpose.msra.mxu0 0
    %1493 = vmatprep.subr.bf16.mxu0 0
    %1494 = vmatpush1.bf16.xpose.msra.mxu0 0
    %1495 = vmatprep.subr.bf16.mxu0 0
    %1496 = vmatpush1.bf16.xpose.msra.mxu0 0
    %1497 = vmatprep.subr.bf16.mxu0 0
    %1498 = vmatpush1.bf16.xpose.msra.mxu0 0
    %1499 = vmatprep.subr.bf16.mxu0 0
    %1500 = vmatpush1.bf16.xpose.msra.mxu0 0
    %1501 = vmatprep.subr.bf16.mxu0 0
    %1502 = vmatpush1.bf16.xpose.msra.mxu0 0
    %1503 = vmatprep.subr.bf16.mxu0 0
    %1504 = vmatpush1.bf16.xpose.msra.mxu0 0
    %1505 = vmatprep.subr.bf16.mxu0 0
    %1506 = vmatpush1.bf16.xpose.msra.mxu0 0
    %1507 = vmatprep.subr.bf16.mxu0 0
    %1508 = vmatpush1.bf16.xpose.msra.mxu0 0
    %1509 = vmatprep.subr.bf16.mxu0 0
    %1510 = vmatpush1.bf16.xpose.msra.mxu0 0
    %1511 = vmatprep.subr.bf16.mxu0 0
    %1512 = vmatpush1.bf16.xpose.msra.mxu0 0
    %1513 = vmatprep.subr.bf16.mxu0 0
    %1514 = vmatpush1.bf16.xpose.msra.mxu0 0
    %1515 = vmatprep.subr.bf16.mxu0 0
    %1516 = vmatpush1.bf16.xpose.msra.mxu0 0
    %1517 = vmatprep.mubr.bf16.mxu0 0
    %1518 = vmatmul.mubr.bf16.gmra.mrb[0].mxu0 %v1477
    %v1519 = vpop.f32.mrb[0].mxu0
    %v1520 = vadd.f32 0.0, %v1519
    %v1521 = vpop.f32.mrb[0].mxu0
    %v1522 = vpop.f32.mrb[0].mxu0
    %v1523 = vadd.f32 0.0, %v1522
    %v1524 = vpop.f32.mrb[0].mxu0
    %1525 = vdwg.mxu0
    %vm1526 = vcmp.gt.f32.partialorder %v725, 0.0
    %vm1527 = vcmp.gt.f32.partialorder %v728, 0.0
    %vm1528 = vcmp.gt.f32.partialorder %v778, 0.0
    %vm1529 = vcmp.gt.f32.partialorder %v781, 0.0
    %vm1530 = vcmp.gt.f32.partialorder %v831, 0.0
    %vm1531 = vcmp.gt.f32.partialorder %v834, 0.0
    %vm1532 = vcmp.gt.f32.partialorder %v884, 0.0
    %vm1533 = vcmp.gt.f32.partialorder %v887, 0.0
    %vm1534 = vcmp.gt.f32.partialorder %v937, 0.0
    %vm1535 = vcmp.gt.f32.partialorder %v940, 0.0
    %vm1536 = vcmp.gt.f32.partialorder %v990, 0.0
    %vm1537 = vcmp.gt.f32.partialorder %v993, 0.0
    %vm1538 = vcmp.gt.f32.partialorder %v1043, 0.0
    %vm1539 = vcmp.gt.f32.partialorder %v1046, 0.0
    %vm1540 = vcmp.gt.f32.partialorder %v1096, 0.0
    %vm1541 = vcmp.gt.f32.partialorder %v1099, 0.0
    %vm1542 = vcmp.gt.f32.partialorder %v1149, 0.0
    %vm1543 = vcmp.gt.f32.partialorder %v1152, 0.0
    %vm1544 = vcmp.gt.f32.partialorder %v1202, 0.0
    %vm1545 = vcmp.gt.f32.partialorder %v1205, 0.0
    %vm1546 = vcmp.gt.f32.partialorder %v1255, 0.0
    %vm1547 = vcmp.gt.f32.partialorder %v1258, 0.0
    %vm1548 = vcmp.gt.f32.partialorder %v1308, 0.0
    %vm1549 = vcmp.gt.f32.partialorder %v1311, 0.0
    %vm1550 = vcmp.gt.f32.partialorder %v1361, 0.0
    %vm1551 = vcmp.gt.f32.partialorder %v1364, 0.0
    %vm1552 = vcmp.gt.f32.partialorder %v1414, 0.0
    %vm1553 = vcmp.gt.f32.partialorder %v1417, 0.0
    %vm1554 = vcmp.gt.f32.partialorder %v1467, 0.0
    %vm1555 = vcmp.gt.f32.partialorder %v1470, 0.0
    %vm1556 = vcmp.gt.f32.partialorder %v1520, 0.0
    %vm1557 = vcmp.gt.f32.partialorder %v1523, 0.0
    %v1558 = vmul.f32 %v725, 0.1
    %v1559 = vmul.f32 %v728, 0.1
    %v1560 = vmul.f32 %v778, 0.1
    %v1561 = vmul.f32 %v781, 0.1
    %v1562 = vmul.f32 %v831, 0.1
    %v1563 = vmul.f32 %v834, 0.1
    %v1564 = vmul.f32 %v884, 0.1
    %v1565 = vmul.f32 %v887, 0.1
    %v1566 = vmul.f32 %v937, 0.1
    %v1567 = vmul.f32 %v940, 0.1
    %v1568 = vmul.f32 %v990, 0.1
    %v1569 = vmul.f32 %v993, 0.1
    %v1570 = vmul.f32 %v1043, 0.1
    %v1571 = vmul.f32 %v1046, 0.1
    %v1572 = vmul.f32 %v1096, 0.1
    %v1573 = vmul.f32 %v1099, 0.1
    %v1574 = vmul.f32 %v1149, 0.1
    %v1575 = vmul.f32 %v1152, 0.1
    %v1576 = vmul.f32 %v1202, 0.1
    %v1577 = vmul.f32 %v1205, 0.1
    %v1578 = vmul.f32 %v1255, 0.1
    %v1579 = vmul.f32 %v1258, 0.1
    %v1580 = vmul.f32 %v1308, 0.1
    %v1581 = vmul.f32 %v1311, 0.1
    %v1582 = vmul.f32 %v1361, 0.1
    %v1583 = vmul.f32 %v1364, 0.1
    %v1584 = vmul.f32 %v1414, 0.1
    %v1585 = vmul.f32 %v1417, 0.1
    %v1586 = vmul.f32 %v1467, 0.1
    %v1587 = vmul.f32 %v1470, 0.1
    %v1588 = vmul.f32 %v1520, 0.1
    %v1589 = vmul.f32 %v1523, 0.1
    %v1590 = vsel %vm1526, %v725, %v1558
    %v1591 = vsel %vm1527, %v728, %v1559
    %v1592 = vsel %vm1528, %v778, %v1560
    %v1593 = vsel %vm1529, %v781, %v1561
    %v1594 = vsel %vm1530, %v831, %v1562
    %v1595 = vsel %vm1531, %v834, %v1563
    %v1596 = vsel %vm1532, %v884, %v1564
    %v1597 = vsel %vm1533, %v887, %v1565
    %v1598 = vsel %vm1534, %v937, %v1566
    %v1599 = vsel %vm1535, %v940, %v1567
    %v1600 = vsel %vm1536, %v990, %v1568
    %v1601 = vsel %vm1537, %v993, %v1569
    %v1602 = vsel %vm1538, %v1043, %v1570
    %v1603 = vsel %vm1539, %v1046, %v1571
    %v1604 = vsel %vm1540, %v1096, %v1572
    %v1605 = vsel %vm1541, %v1099, %v1573
    %v1606 = vsel %vm1542, %v1149, %v1574
    %v1607 = vsel %vm1543, %v1152, %v1575
    %v1608 = vsel %vm1544, %v1202, %v1576
    %v1609 = vsel %vm1545, %v1205, %v1577
    %v1610 = vsel %vm1546, %v1255, %v1578
    %v1611 = vsel %vm1547, %v1258, %v1579
    %v1612 = vsel %vm1548, %v1308, %v1580
    %v1613 = vsel %vm1549, %v1311, %v1581
    %v1614 = vsel %vm1550, %v1361, %v1582
    %v1615 = vsel %vm1551, %v1364, %v1583
    %v1616 = vsel %vm1552, %v1414, %v1584
    %v1617 = vsel %vm1553, %v1417, %v1585
    %v1618 = vsel %vm1554, %v1467, %v1586
    %v1619 = vsel %vm1555, %v1470, %v1587
    %v1620 = vsel %vm1556, %v1520, %v1588
    %v1621 = vsel %vm1557, %v1523, %v1589
    %v1622 = vmul.f32 %v1590, %v1590
    %v1623 = vmul.f32 %v1591, %v1591
    %v1624 = vmul.f32 %v1592, %v1592
    %v1625 = vmul.f32 %v1593, %v1593
    %v1626 = vmul.f32 %v1594, %v1594
    %v1627 = vmul.f32 %v1595, %v1595
    %v1628 = vmul.f32 %v1596, %v1596
    %v1629 = vmul.f32 %v1597, %v1597
    %v1630 = vmul.f32 %v1598, %v1598
    %v1631 = vmul.f32 %v1599, %v1599
    %v1632 = vmul.f32 %v1600, %v1600
    %v1633 = vmul.f32 %v1601, %v1601
    %v1634 = vmul.f32 %v1602, %v1602
    %v1635 = vmul.f32 %v1603, %v1603
    %v1636 = vmul.f32 %v1604, %v1604
    %v1637 = vmul.f32 %v1605, %v1605
    %v1638 = vmul.f32 %v1606, %v1606
    %v1639 = vmul.f32 %v1607, %v1607
    %v1640 = vmul.f32 %v1608, %v1608
    %v1641 = vmul.f32 %v1609, %v1609
    %v1642 = vmul.f32 %v1610, %v1610
    %v1643 = vmul.f32 %v1611, %v1611
    %v1644 = vmul.f32 %v1612, %v1612
    %v1645 = vmul.f32 %v1613, %v1613
    %v1646 = vmul.f32 %v1614, %v1614
    %v1647 = vmul.f32 %v1615, %v1615
    %v1648 = vmul.f32 %v1616, %v1616
    %v1649 = vmul.f32 %v1617, %v1617
    %v1650 = vmul.f32 %v1618, %v1618
    %v1651 = vmul.f32 %v1619, %v1619
    %v1652 = vmul.f32 %v1620, %v1620
    %v1653 = vmul.f32 %v1621, %v1621
    %vm1654 = vcmask 130048
    %v1655 = vsel %vm1654, %v1622, 0.0
    %v1656 = vsel %vm1654, %v1623, 0.0
    %v1657 = vadd.f32 %v1655, %v1656
    %v1658 = vrot.slane %v1657, 4
    %v1659 = vadd.f32 %v1657, %v1658
    %v1660 = vrot.slane %v1659, 2
    %v1661 = vadd.f32 %v1659, %v1660
    %v1662 = vrot.slane %v1661, 1
    %v1663 = vadd.f32 %v1661, %v1662
    %v1664 = vsel %vm1654, %v1624, 0.0
    %v1665 = vsel %vm1654, %v1625, 0.0
    %v1666 = vadd.f32 %v1664, %v1665
    %v1667 = vrot.slane %v1666, 4
    %v1668 = vadd.f32 %v1666, %v1667
    %v1669 = vrot.slane %v1668, 2
    %v1670 = vadd.f32 %v1668, %v1669
    %v1671 = vrot.slane %v1670, 1
    %v1672 = vadd.f32 %v1670, %v1671
    %v1673 = vsel %vm1654, %v1626, 0.0
    %v1674 = vsel %vm1654, %v1627, 0.0
    %v1675 = vadd.f32 %v1673, %v1674
    %v1676 = vrot.slane %v1675, 4
    %v1677 = vadd.f32 %v1675, %v1676
    %v1678 = vrot.slane %v1677, 2
    %v1679 = vadd.f32 %v1677, %v1678
    %v1680 = vrot.slane %v1679, 1
    %v1681 = vadd.f32 %v1679, %v1680
    %v1682 = vsel %vm1654, %v1628, 0.0
    %v1683 = vsel %vm1654, %v1629, 0.0
    %v1684 = vadd.f32 %v1682, %v1683
    %v1685 = vrot.slane %v1684, 4
    %v1686 = vadd.f32 %v1684, %v1685
    %v1687 = vrot.slane %v1686, 2
    %v1688 = vadd.f32 %v1686, %v1687
    %v1689 = vrot.slane %v1688, 1
    %v1690 = vadd.f32 %v1688, %v1689
    %v1691 = vsel %vm1654, %v1630, 0.0
    %v1692 = vsel %vm1654, %v1631, 0.0
    %v1693 = vadd.f32 %v1691, %v1692
    %v1694 = vrot.slane %v1693, 4
    %v1695 = vadd.f32 %v1693, %v1694
    %v1696 = vrot.slane %v1695, 2
    %v1697 = vadd.f32 %v1695, %v1696
    %v1698 = vrot.slane %v1697, 1
    %v1699 = vadd.f32 %v1697, %v1698
    %v1700 = vsel %vm1654, %v1632, 0.0
    %v1701 = vsel %vm1654, %v1633, 0.0
    %v1702 = vadd.f32 %v1700, %v1701
    %v1703 = vrot.slane %v1702, 4
    %v1704 = vadd.f32 %v1702, %v1703
    %v1705 = vrot.slane %v1704, 2
    %v1706 = vadd.f32 %v1704, %v1705
    %v1707 = vrot.slane %v1706, 1
    %v1708 = vadd.f32 %v1706, %v1707
    %v1709 = vsel %vm1654, %v1634, 0.0
    %v1710 = vsel %vm1654, %v1635, 0.0
    %v1711 = vadd.f32 %v1709, %v1710
    %v1712 = vrot.slane %v1711, 4
    %v1713 = vadd.f32 %v1711, %v1712
    %v1714 = vrot.slane %v1713, 2
    %v1715 = vadd.f32 %v1713, %v1714
    %v1716 = vrot.slane %v1715, 1
    %v1717 = vadd.f32 %v1715, %v1716
    %v1718 = vsel %vm1654, %v1636, 0.0
    %v1719 = vsel %vm1654, %v1637, 0.0
    %v1720 = vadd.f32 %v1718, %v1719
    %v1721 = vrot.slane %v1720, 4
    %v1722 = vadd.f32 %v1720, %v1721
    %v1723 = vrot.slane %v1722, 2
    %v1724 = vadd.f32 %v1722, %v1723
    %v1725 = vrot.slane %v1724, 1
    %v1726 = vadd.f32 %v1724, %v1725
    %v1727 = vsel %vm1654, %v1638, 0.0
    %v1728 = vsel %vm1654, %v1639, 0.0
    %v1729 = vadd.f32 %v1727, %v1728
    %v1730 = vrot.slane %v1729, 4
    %v1731 = vadd.f32 %v1729, %v1730
    %v1732 = vrot.slane %v1731, 2
    %v1733 = vadd.f32 %v1731, %v1732
    %v1734 = vrot.slane %v1733, 1
    %v1735 = vadd.f32 %v1733, %v1734
    %v1736 = vsel %vm1654, %v1640, 0.0
    %v1737 = vsel %vm1654, %v1641, 0.0
    %v1738 = vadd.f32 %v1736, %v1737
    %v1739 = vrot.slane %v1738, 4
    %v1740 = vadd.f32 %v1738, %v1739
    %v1741 = vrot.slane %v1740, 2
    %v1742 = vadd.f32 %v1740, %v1741
    %v1743 = vrot.slane %v1742, 1
    %v1744 = vadd.f32 %v1742, %v1743
    %v1745 = vsel %vm1654, %v1642, 0.0
    %v1746 = vsel %vm1654, %v1643, 0.0
    %v1747 = vadd.f32 %v1745, %v1746
    %v1748 = vrot.slane %v1747, 4
    %v1749 = vadd.f32 %v1747, %v1748
    %v1750 = vrot.slane %v1749, 2
    %v1751 = vadd.f32 %v1749, %v1750
    %v1752 = vrot.slane %v1751, 1
    %v1753 = vadd.f32 %v1751, %v1752
    %v1754 = vsel %vm1654, %v1644, 0.0
    %v1755 = vsel %vm1654, %v1645, 0.0
    %v1756 = vadd.f32 %v1754, %v1755
    %v1757 = vrot.slane %v1756, 4
    %v1758 = vadd.f32 %v1756, %v1757
    %v1759 = vrot.slane %v1758, 2
    %v1760 = vadd.f32 %v1758, %v1759
    %v1761 = vrot.slane %v1760, 1
    %v1762 = vadd.f32 %v1760, %v1761
    %v1763 = vsel %vm1654, %v1646, 0.0
    %v1764 = vsel %vm1654, %v1647, 0.0
    %v1765 = vadd.f32 %v1763, %v1764
    %v1766 = vrot.slane %v1765, 4
    %v1767 = vadd.f32 %v1765, %v1766
    %v1768 = vrot.slane %v1767, 2
    %v1769 = vadd.f32 %v1767, %v1768
    %v1770 = vrot.slane %v1769, 1
    %v1771 = vadd.f32 %v1769, %v1770
    %v1772 = vsel %vm1654, %v1648, 0.0
    %v1773 = vsel %vm1654, %v1649, 0.0
    %v1774 = vadd.f32 %v1772, %v1773
    %v1775 = vrot.slane %v1774, 4
    %v1776 = vadd.f32 %v1774, %v1775
    %v1777 = vrot.slane %v1776, 2
    %v1778 = vadd.f32 %v1776, %v1777
    %v1779 = vrot.slane %v1778, 1
    %v1780 = vadd.f32 %v1778, %v1779
    %v1781 = vsel %vm1654, %v1650, 0.0
    %v1782 = vsel %vm1654, %v1651, 0.0
    %v1783 = vadd.f32 %v1781, %v1782
    %v1784 = vrot.slane %v1783, 4
    %v1785 = vadd.f32 %v1783, %v1784
    %v1786 = vrot.slane %v1785, 2
    %v1787 = vadd.f32 %v1785, %v1786
    %v1788 = vrot.slane %v1787, 1
    %v1789 = vadd.f32 %v1787, %v1788
    %v1790 = vsel %vm1654, %v1652, 0.0
    %v1791 = vsel %vm1654, %v1653, 0.0
    %v1792 = vadd.f32 %v1790, %v1791
    %v1793 = vrot.slane %v1792, 4
    %v1794 = vadd.f32 %v1792, %v1793
    %v1795 = vrot.slane %v1794, 2
    %v1796 = vadd.f32 %v1794, %v1795
    %v1797 = vrot.slane %v1796, 1
    %v1798 = vadd.f32 %v1796, %v1797
    %v1799 = vadd.f32 %v1663, 1e-08
    %v1800 = vadd.f32 %v1672, 1e-08
    %v1801 = vadd.f32 %v1681, 1e-08
    %v1802 = vadd.f32 %v1690, 1e-08
    %v1803 = vadd.f32 %v1699, 1e-08
    %v1804 = vadd.f32 %v1708, 1e-08
    %v1805 = vadd.f32 %v1717, 1e-08
    %v1806 = vadd.f32 %v1726, 1e-08
    %v1807 = vadd.f32 %v1735, 1e-08
    %v1808 = vadd.f32 %v1744, 1e-08
    %v1809 = vadd.f32 %v1753, 1e-08
    %v1810 = vadd.f32 %v1762, 1e-08
    %v1811 = vadd.f32 %v1771, 1e-08
    %v1812 = vadd.f32 %v1780, 1e-08
    %v1813 = vadd.f32 %v1789, 1e-08
    %v1814 = vadd.f32 %v1798, 1e-08
    %v1815 = vrsqrt.pop %v1799
    %v1816 = vrsqrt.pop %v1800
    %v1817 = vrsqrt.pop %v1801
    %v1818 = vrsqrt.pop %v1802
    %v1819 = vrsqrt.pop %v1803
    %v1820 = vrsqrt.pop %v1804
    %v1821 = vrsqrt.pop %v1805
    %v1822 = vrsqrt.pop %v1806
    %v1823 = vrsqrt.pop %v1807
    %v1824 = vrsqrt.pop %v1808
    %v1825 = vrsqrt.pop %v1809
    %v1826 = vrsqrt.pop %v1810
    %v1827 = vrsqrt.pop %v1811
    %v1828 = vrsqrt.pop %v1812
    %v1829 = vrsqrt.pop %v1813
    %v1830 = vrsqrt.pop %v1814
    %v1831 = vmul.f32 %v1590, %v1815
    %v1832 = vmul.f32 %v1591, %v1815
    %v1833 = vmul.f32 %v1592, %v1816
    %v1834 = vmul.f32 %v1593, %v1816
    %v1835 = vmul.f32 %v1594, %v1817
    %v1836 = vmul.f32 %v1595, %v1817
    %v1837 = vmul.f32 %v1596, %v1818
    %v1838 = vmul.f32 %v1597, %v1818
    %v1839 = vmul.f32 %v1598, %v1819
    %v1840 = vmul.f32 %v1599, %v1819
    %v1841 = vmul.f32 %v1600, %v1820
    %v1842 = vmul.f32 %v1601, %v1820
    %v1843 = vmul.f32 %v1602, %v1821
    %v1844 = vmul.f32 %v1603, %v1821
    %v1845 = vmul.f32 %v1604, %v1822
    %v1846 = vmul.f32 %v1605, %v1822
    %v1847 = vmul.f32 %v1606, %v1823
    %v1848 = vmul.f32 %v1607, %v1823
    %v1849 = vmul.f32 %v1608, %v1824
    %v1850 = vmul.f32 %v1609, %v1824
    %v1851 = vmul.f32 %v1610, %v1825
    %v1852 = vmul.f32 %v1611, %v1825
    %v1853 = vmul.f32 %v1612, %v1826
    %v1854 = vmul.f32 %v1613, %v1826
    %v1855 = vmul.f32 %v1614, %v1827
    %v1856 = vmul.f32 %v1615, %v1827
    %v1857 = vmul.f32 %v1616, %v1828
    %v1858 = vmul.f32 %v1617, %v1828
    %v1859 = vmul.f32 %v1618, %v1829
    %v1860 = vmul.f32 %v1619, %v1829
    %v1861 = vmul.f32 %v1620, %v1830
    %v1862 = vmul.f32 %v1621, %v1830
    %v1863 = vmul.f32 %v1831, 4.0
    %v1864 = vmul.f32 %v1832, 4.0
    %v1865 = vmul.f32 %v1833, 4.0
    %v1866 = vmul.f32 %v1834, 4.0
    %v1867 = vmul.f32 %v1835, 4.0
    %v1868 = vmul.f32 %v1836, 4.0
    %v1869 = vmul.f32 %v1837, 4.0
    %v1870 = vmul.f32 %v1838, 4.0
    %v1871 = vmul.f32 %v1839, 4.0
    %v1872 = vmul.f32 %v1840, 4.0
    %v1873 = vmul.f32 %v1841, 4.0
    %v1874 = vmul.f32 %v1842, 4.0
    %v1875 = vmul.f32 %v1843, 4.0
    %v1876 = vmul.f32 %v1844, 4.0
    %v1877 = vmul.f32 %v1845, 4.0
    %v1878 = vmul.f32 %v1846, 4.0
    %v1879 = vmul.f32 %v1847, 4.0
    %v1880 = vmul.f32 %v1848, 4.0
    %v1881 = vmul.f32 %v1849, 4.0
    %v1882 = vmul.f32 %v1850, 4.0
    %v1883 = vmul.f32 %v1851, 4.0
    %v1884 = vmul.f32 %v1852, 4.0
    %v1885 = vmul.f32 %v1853, 4.0
    %v1886 = vmul.f32 %v1854, 4.0
    %v1887 = vmul.f32 %v1855, 4.0
    %v1888 = vmul.f32 %v1856, 4.0
    %v1889 = vmul.f32 %v1857, 4.0
    %v1890 = vmul.f32 %v1858, 4.0
    %v1891 = vmul.f32 %v1859, 4.0
    %v1892 = vmul.f32 %v1860, 4.0
    %v1893 = vmul.f32 %v1861, 4.0
    %v1894 = vmul.f32 %v1862, 4.0
    %v1895 = vsel %vm1654, %v1863, -inf
    %1896 = vmax.xlane.f32.xlu0 %v1895
    %v1897 = vpop.xlane.xlu0 %1896
    %v1898 = vsel %vm1654, %v1864, -inf
    %1899 = vmax.xlane.f32.xlu0 %v1898
    %v1900 = vpop.xlane.xlu0 %1899
    %v1901 = vsel %vm1654, %v1865, -inf
    %1902 = vmax.xlane.f32.xlu0 %v1901
    %v1903 = vpop.xlane.xlu0 %1902
    %v1904 = vsel %vm1654, %v1866, -inf
    %1905 = vmax.xlane.f32.xlu0 %v1904
    %v1906 = vpop.xlane.xlu0 %1905
    %v1907 = vsel %vm1654, %v1867, -inf
    %1908 = vmax.xlane.f32.xlu0 %v1907
    %v1909 = vpop.xlane.xlu0 %1908
    %v1910 = vsel %vm1654, %v1868, -inf
    %1911 = vmax.xlane.f32.xlu0 %v1910
    %v1912 = vpop.xlane.xlu0 %1911
    %v1913 = vsel %vm1654, %v1869, -inf
    %1914 = vmax.xlane.f32.xlu0 %v1913
    %v1915 = vpop.xlane.xlu0 %1914
    %v1916 = vsel %vm1654, %v1870, -inf
    %1917 = vmax.xlane.f32.xlu0 %v1916
    %v1918 = vpop.xlane.xlu0 %1917
    %v1919 = vsel %vm1654, %v1871, -inf
    %1920 = vmax.xlane.f32.xlu0 %v1919
    %v1921 = vpop.xlane.xlu0 %1920
    %v1922 = vsel %vm1654, %v1872, -inf
    %1923 = vmax.xlane.f32.xlu0 %v1922
    %v1924 = vpop.xlane.xlu0 %1923
    %v1925 = vsel %vm1654, %v1873, -inf
    %1926 = vmax.xlane.f32.xlu0 %v1925
    %v1927 = vpop.xlane.xlu0 %1926
    %v1928 = vsel %vm1654, %v1874, -inf
    %1929 = vmax.xlane.f32.xlu0 %v1928
    %v1930 = vpop.xlane.xlu0 %1929
    %v1931 = vsel %vm1654, %v1875, -inf
    %1932 = vmax.xlane.f32.xlu0 %v1931
    %v1933 = vpop.xlane.xlu0 %1932
    %v1934 = vsel %vm1654, %v1876, -inf
    %1935 = vmax.xlane.f32.xlu0 %v1934
    %v1936 = vpop.xlane.xlu0 %1935
    %v1937 = vsel %vm1654, %v1877, -inf
    %1938 = vmax.xlane.f32.xlu0 %v1937
    %v1939 = vpop.xlane.xlu0 %1938
    %v1940 = vsel %vm1654, %v1878, -inf
    %1941 = vmax.xlane.f32.xlu0 %v1940
    %v1942 = vpop.xlane.xlu0 %1941
    %v1943 = vsel %vm1654, %v1879, -inf
    %1944 = vmax.xlane.f32.xlu0 %v1943
    %v1945 = vpop.xlane.xlu0 %1944
    %v1946 = vsel %vm1654, %v1880, -inf
    %1947 = vmax.xlane.f32.xlu0 %v1946
    %v1948 = vpop.xlane.xlu0 %1947
    %v1949 = vsel %vm1654, %v1881, -inf
    %1950 = vmax.xlane.f32.xlu0 %v1949
    %v1951 = vpop.xlane.xlu0 %1950
    %v1952 = vsel %vm1654, %v1882, -inf
    %1953 = vmax.xlane.f32.xlu0 %v1952
    %v1954 = vpop.xlane.xlu0 %1953
    %v1955 = vsel %vm1654, %v1883, -inf
    %1956 = vmax.xlane.f32.xlu0 %v1955
    %v1957 = vpop.xlane.xlu0 %1956
    %v1958 = vsel %vm1654, %v1884, -inf
    %1959 = vmax.xlane.f32.xlu0 %v1958
    %v1960 = vpop.xlane.xlu0 %1959
    %v1961 = vsel %vm1654, %v1885, -inf
    %1962 = vmax.xlane.f32.xlu0 %v1961
    %v1963 = vpop.xlane.xlu0 %1962
    %v1964 = vsel %vm1654, %v1886, -inf
    %1965 = vmax.xlane.f32.xlu0 %v1964
    %v1966 = vpop.xlane.xlu0 %1965
    %v1967 = vsel %vm1654, %v1887, -inf
    %1968 = vmax.xlane.f32.xlu0 %v1967
    %v1969 = vpop.xlane.xlu0 %1968
    %v1970 = vsel %vm1654, %v1888, -inf
    %1971 = vmax.xlane.f32.xlu0 %v1970
    %v1972 = vpop.xlane.xlu0 %1971
    %v1973 = vsel %vm1654, %v1889, -inf
    %1974 = vmax.xlane.f32.xlu0 %v1973
    %v1975 = vpop.xlane.xlu0 %1974
    %v1976 = vsel %vm1654, %v1890, -inf
    %1977 = vmax.xlane.f32.xlu0 %v1976
    %v1978 = vpop.xlane.xlu0 %1977
    %v1979 = vsel %vm1654, %v1891, -inf
    %1980 = vmax.xlane.f32.xlu0 %v1979
    %v1981 = vpop.xlane.xlu0 %1980
    %v1982 = vsel %vm1654, %v1892, -inf
    %1983 = vmax.xlane.f32.xlu0 %v1982
    %v1984 = vpop.xlane.xlu0 %1983
    %v1985 = vsel %vm1654, %v1893, -inf
    %1986 = vmax.xlane.f32.xlu0 %v1985
    %v1987 = vpop.xlane.xlu0 %1986
    %v1988 = vsel %vm1654, %v1894, -inf
    %1989 = vmax.xlane.f32.xlu0 %v1988
    %v1990 = vpop.xlane.xlu0 %1989
    %v1991 = vsub.f32 %v1863, %v1897
    %v1992 = vsub.f32 %v1864, %v1900
    %v1993 = vsub.f32 %v1865, %v1903
    %v1994 = vsub.f32 %v1866, %v1906
    %v1995 = vsub.f32 %v1867, %v1909
    %v1996 = vsub.f32 %v1868, %v1912
    %v1997 = vsub.f32 %v1869, %v1915
    %v1998 = vsub.f32 %v1870, %v1918
    %v1999 = vsub.f32 %v1871, %v1921
    %v2000 = vsub.f32 %v1872, %v1924
    %v2001 = vsub.f32 %v1873, %v1927
    %v2002 = vsub.f32 %v1874, %v1930
    %v2003 = vsub.f32 %v1875, %v1933
    %v2004 = vsub.f32 %v1876, %v1936
    %v2005 = vsub.f32 %v1877, %v1939
    %v2006 = vsub.f32 %v1878, %v1942
    %v2007 = vsub.f32 %v1879, %v1945
    %v2008 = vsub.f32 %v1880, %v1948
    %v2009 = vsub.f32 %v1881, %v1951
    %v2010 = vsub.f32 %v1882, %v1954
    %v2011 = vsub.f32 %v1883, %v1957
    %v2012 = vsub.f32 %v1884, %v1960
    %v2013 = vsub.f32 %v1885, %v1963
    %v2014 = vsub.f32 %v1886, %v1966
    %v2015 = vsub.f32 %v1887, %v1969
    %v2016 = vsub.f32 %v1888, %v1972
    %v2017 = vsub.f32 %v1889, %v1975
    %v2018 = vsub.f32 %v1890, %v1978
    %v2019 = vsub.f32 %v1891, %v1981
    %v2020 = vsub.f32 %v1892, %v1984
    %v2021 = vsub.f32 %v1893, %v1987
    %v2022 = vsub.f32 %v1894, %v1990
    %v2023 = vmul.f32 %v1991, 1.442695
    %v2024 = vpow.pop %v2023
    %v2025 = vmul.f32 %v1992, 1.442695
    %v2026 = vpow.pop %v2025
    %v2027 = vmul.f32 %v1993, 1.442695
    %v2028 = vpow.pop %v2027
    %v2029 = vmul.f32 %v1994, 1.442695
    %v2030 = vpow.pop %v2029
    %v2031 = vmul.f32 %v1995, 1.442695
    %v2032 = vpow.pop %v2031
    %v2033 = vmul.f32 %v1996, 1.442695
    %v2034 = vpow.pop %v2033
    %v2035 = vmul.f32 %v1997, 1.442695
    %v2036 = vpow.pop %v2035
    %v2037 = vmul.f32 %v1998, 1.442695
    %v2038 = vpow.pop %v2037
    %v2039 = vmul.f32 %v1999, 1.442695
    %v2040 = vpow.pop %v2039
    %v2041 = vmul.f32 %v2000, 1.442695
    %v2042 = vpow.pop %v2041
    %v2043 = vmul.f32 %v2001, 1.442695
    %v2044 = vpow.pop %v2043
    %v2045 = vmul.f32 %v2002, 1.442695
    %v2046 = vpow.pop %v2045
    %v2047 = vmul.f32 %v2003, 1.442695
    %v2048 = vpow.pop %v2047
    %v2049 = vmul.f32 %v2004, 1.442695
    %v2050 = vpow.pop %v2049
    %v2051 = vmul.f32 %v2005, 1.442695
    %v2052 = vpow.pop %v2051
    %v2053 = vmul.f32 %v2006, 1.442695
    %v2054 = vpow.pop %v2053
    %v2055 = vmul.f32 %v2007, 1.442695
    %v2056 = vpow.pop %v2055
    %v2057 = vmul.f32 %v2008, 1.442695
    %v2058 = vpow.pop %v2057
    %v2059 = vmul.f32 %v2009, 1.442695
    %v2060 = vpow.pop %v2059
    %v2061 = vmul.f32 %v2010, 1.442695
    %v2062 = vpow.pop %v2061
    %v2063 = vmul.f32 %v2011, 1.442695
    %v2064 = vpow.pop %v2063
    %v2065 = vmul.f32 %v2012, 1.442695
    %v2066 = vpow.pop %v2065
    %v2067 = vmul.f32 %v2013, 1.442695
    %v2068 = vpow.pop %v2067
    %v2069 = vmul.f32 %v2014, 1.442695
    %v2070 = vpow.pop %v2069
    %v2071 = vmul.f32 %v2015, 1.442695
    %v2072 = vpow.pop %v2071
    %v2073 = vmul.f32 %v2016, 1.442695
    %v2074 = vpow.pop %v2073
    %v2075 = vmul.f32 %v2017, 1.442695
    %v2076 = vpow.pop %v2075
    %v2077 = vmul.f32 %v2018, 1.442695
    %v2078 = vpow.pop %v2077
    %v2079 = vmul.f32 %v2019, 1.442695
    %v2080 = vpow.pop %v2079
    %v2081 = vmul.f32 %v2020, 1.442695
    %v2082 = vpow.pop %v2081
    %v2083 = vmul.f32 %v2021, 1.442695
    %v2084 = vpow.pop %v2083
    %v2085 = vmul.f32 %v2022, 1.442695
    %v2086 = vpow.pop %v2085
    %v2087 = vsel %vm1654, %v2024, 0.0
    %2088 = vadd.xlane.f32.xlu0 %v2087
    %v2089 = vpop.xlane.xlu0 %2088
    %v2090 = vsel %vm1654, %v2026, 0.0
    %2091 = vadd.xlane.f32.xlu0 %v2090
    %v2092 = vpop.xlane.xlu0 %2091
    %v2093 = vsel %vm1654, %v2028, 0.0
    %2094 = vadd.xlane.f32.xlu0 %v2093
    %v2095 = vpop.xlane.xlu0 %2094
    %v2096 = vsel %vm1654, %v2030, 0.0
    %2097 = vadd.xlane.f32.xlu0 %v2096
    %v2098 = vpop.xlane.xlu0 %2097
    %v2099 = vsel %vm1654, %v2032, 0.0
    %2100 = vadd.xlane.f32.xlu0 %v2099
    %v2101 = vpop.xlane.xlu0 %2100
    %v2102 = vsel %vm1654, %v2034, 0.0
    %2103 = vadd.xlane.f32.xlu0 %v2102
    %v2104 = vpop.xlane.xlu0 %2103
    %v2105 = vsel %vm1654, %v2036, 0.0
    %2106 = vadd.xlane.f32.xlu0 %v2105
    %v2107 = vpop.xlane.xlu0 %2106
    %v2108 = vsel %vm1654, %v2038, 0.0
    %2109 = vadd.xlane.f32.xlu0 %v2108
    %v2110 = vpop.xlane.xlu0 %2109
    %v2111 = vsel %vm1654, %v2040, 0.0
    %2112 = vadd.xlane.f32.xlu0 %v2111
    %v2113 = vpop.xlane.xlu0 %2112
    %v2114 = vsel %vm1654, %v2042, 0.0
    %2115 = vadd.xlane.f32.xlu0 %v2114
    %v2116 = vpop.xlane.xlu0 %2115
    %v2117 = vsel %vm1654, %v2044, 0.0
    %2118 = vadd.xlane.f32.xlu0 %v2117
    %v2119 = vpop.xlane.xlu0 %2118
    %v2120 = vsel %vm1654, %v2046, 0.0
    %2121 = vadd.xlane.f32.xlu0 %v2120
    %v2122 = vpop.xlane.xlu0 %2121
    %v2123 = vsel %vm1654, %v2048, 0.0
    %2124 = vadd.xlane.f32.xlu0 %v2123
    %v2125 = vpop.xlane.xlu0 %2124
    %v2126 = vsel %vm1654, %v2050, 0.0
    %2127 = vadd.xlane.f32.xlu0 %v2126
    %v2128 = vpop.xlane.xlu0 %2127
    %v2129 = vsel %vm1654, %v2052, 0.0
    %2130 = vadd.xlane.f32.xlu0 %v2129
    %v2131 = vpop.xlane.xlu0 %2130
    %v2132 = vsel %vm1654, %v2054, 0.0
    %2133 = vadd.xlane.f32.xlu0 %v2132
    %v2134 = vpop.xlane.xlu0 %2133
    %v2135 = vsel %vm1654, %v2056, 0.0
    %2136 = vadd.xlane.f32.xlu0 %v2135
    %v2137 = vpop.xlane.xlu0 %2136
    %v2138 = vsel %vm1654, %v2058, 0.0
    %2139 = vadd.xlane.f32.xlu0 %v2138
    %v2140 = vpop.xlane.xlu0 %2139
    %v2141 = vsel %vm1654, %v2060, 0.0
    %2142 = vadd.xlane.f32.xlu0 %v2141
    %v2143 = vpop.xlane.xlu0 %2142
    %v2144 = vsel %vm1654, %v2062, 0.0
    %2145 = vadd.xlane.f32.xlu0 %v2144
    %v2146 = vpop.xlane.xlu0 %2145
    %v2147 = vsel %vm1654, %v2064, 0.0
    %2148 = vadd.xlane.f32.xlu0 %v2147
    %v2149 = vpop.xlane.xlu0 %2148
    %v2150 = vsel %vm1654, %v2066, 0.0
    %2151 = vadd.xlane.f32.xlu0 %v2150
    %v2152 = vpop.xlane.xlu0 %2151
    %v2153 = vsel %vm1654, %v2068, 0.0
    %2154 = vadd.xlane.f32.xlu0 %v2153
    %v2155 = vpop.xlane.xlu0 %2154
    %v2156 = vsel %vm1654, %v2070, 0.0
    %2157 = vadd.xlane.f32.xlu0 %v2156
    %v2158 = vpop.xlane.xlu0 %2157
    %v2159 = vsel %vm1654, %v2072, 0.0
    %2160 = vadd.xlane.f32.xlu0 %v2159
    %v2161 = vpop.xlane.xlu0 %2160
    %v2162 = vsel %vm1654, %v2074, 0.0
    %2163 = vadd.xlane.f32.xlu0 %v2162
    %v2164 = vpop.xlane.xlu0 %2163
    %v2165 = vsel %vm1654, %v2076, 0.0
    %2166 = vadd.xlane.f32.xlu0 %v2165
    %v2167 = vpop.xlane.xlu0 %2166
    %v2168 = vsel %vm1654, %v2078, 0.0
    %2169 = vadd.xlane.f32.xlu0 %v2168
    %v2170 = vpop.xlane.xlu0 %2169
    %v2171 = vsel %vm1654, %v2080, 0.0
    %2172 = vadd.xlane.f32.xlu0 %v2171
    %v2173 = vpop.xlane.xlu0 %2172
    %v2174 = vsel %vm1654, %v2082, 0.0
    %2175 = vadd.xlane.f32.xlu0 %v2174
    %v2176 = vpop.xlane.xlu0 %2175
    %v2177 = vsel %vm1654, %v2084, 0.0
    %2178 = vadd.xlane.f32.xlu0 %v2177
    %v2179 = vpop.xlane.xlu0 %2178
    %v2180 = vsel %vm1654, %v2086, 0.0
    %2181 = vadd.xlane.f32.xlu0 %v2180
    %v2182 = vpop.xlane.xlu0 %2181
    %v2183 = vrcp.pop %v2089
    %v2184 = vmul.f32 %v2024, %v2183
    %v2185 = vrcp.pop %v2092
    %v2186 = vmul.f32 %v2026, %v2185
    %v2187 = vrcp.pop %v2095
    %v2188 = vmul.f32 %v2028, %v2187
    %v2189 = vrcp.pop %v2098
    %v2190 = vmul.f32 %v2030, %v2189
    %v2191 = vrcp.pop %v2101
    %v2192 = vmul.f32 %v2032, %v2191
    %v2193 = vrcp.pop %v2104
    %v2194 = vmul.f32 %v2034, %v2193
    %v2195 = vrcp.pop %v2107
    %v2196 = vmul.f32 %v2036, %v2195
    %v2197 = vrcp.pop %v2110
    %v2198 = vmul.f32 %v2038, %v2197
    %v2199 = vrcp.pop %v2113
    %v2200 = vmul.f32 %v2040, %v2199
    %v2201 = vrcp.pop %v2116
    %v2202 = vmul.f32 %v2042, %v2201
    %v2203 = vrcp.pop %v2119
    %v2204 = vmul.f32 %v2044, %v2203
    %v2205 = vrcp.pop %v2122
    %v2206 = vmul.f32 %v2046, %v2205
    %v2207 = vrcp.pop %v2125
    %v2208 = vmul.f32 %v2048, %v2207
    %v2209 = vrcp.pop %v2128
    %v2210 = vmul.f32 %v2050, %v2209
    %v2211 = vrcp.pop %v2131
    %v2212 = vmul.f32 %v2052, %v2211
    %v2213 = vrcp.pop %v2134
    %v2214 = vmul.f32 %v2054, %v2213
    %v2215 = vrcp.pop %v2137
    %v2216 = vmul.f32 %v2056, %v2215
    %v2217 = vrcp.pop %v2140
    %v2218 = vmul.f32 %v2058, %v2217
    %v2219 = vrcp.pop %v2143
    %v2220 = vmul.f32 %v2060, %v2219
    %v2221 = vrcp.pop %v2146
    %v2222 = vmul.f32 %v2062, %v2221
    %v2223 = vrcp.pop %v2149
    %v2224 = vmul.f32 %v2064, %v2223
    %v2225 = vrcp.pop %v2152
    %v2226 = vmul.f32 %v2066, %v2225
    %v2227 = vrcp.pop %v2155
    %v2228 = vmul.f32 %v2068, %v2227
    %v2229 = vrcp.pop %v2158
    %v2230 = vmul.f32 %v2070, %v2229
    %v2231 = vrcp.pop %v2161
    %v2232 = vmul.f32 %v2072, %v2231
    %v2233 = vrcp.pop %v2164
    %v2234 = vmul.f32 %v2074, %v2233
    %v2235 = vrcp.pop %v2167
    %v2236 = vmul.f32 %v2076, %v2235
    %v2237 = vrcp.pop %v2170
    %v2238 = vmul.f32 %v2078, %v2237
    %v2239 = vrcp.pop %v2173
    %v2240 = vmul.f32 %v2080, %v2239
    %v2241 = vrcp.pop %v2176
    %v2242 = vmul.f32 %v2082, %v2241
    %v2243 = vrcp.pop %v2179
    %v2244 = vmul.f32 %v2084, %v2243
    %v2245 = vrcp.pop %v2182
    %v2246 = vmul.f32 %v2086, %v2245
    %v2247 = vpack.c.bf16 %v2186, %v2184
    %v2248 = vpack.c.bf16 %v2190, %v2188
    %v2249 = vpack.c.bf16 %v2194, %v2192
    %v2250 = vpack.c.bf16 %v2198, %v2196
    %v2251 = vpack.c.bf16 %v2202, %v2200
    %v2252 = vpack.c.bf16 %v2206, %v2204
    %v2253 = vpack.c.bf16 %v2210, %v2208
    %v2254 = vpack.c.bf16 %v2214, %v2212
    %v2255 = vpack.c.bf16 %v2218, %v2216
    %v2256 = vpack.c.bf16 %v2222, %v2220
    %v2257 = vpack.c.bf16 %v2226, %v2224
    %v2258 = vpack.c.bf16 %v2230, %v2228
    %v2259 = vpack.c.bf16 %v2234, %v2232
    %v2260 = vpack.c.bf16 %v2238, %v2236
    %v2261 = vpack.c.bf16 %v2242, %v2240
    %v2262 = vpack.c.bf16 %v2246, %v2244
    %v2264 = vsel %vm1654, %v2247, 0
    %2266 = vmatprep.subr.bf16.mxu0 0
    %2267 = vmatpush1.bf16.msra.mxu0 %v688
    %2268 = vmatprep.subr.bf16.mxu0 0
    %2269 = vmatpush1.bf16.msra.mxu0 0
    %2270 = vmatprep.subr.bf16.mxu0 0
    %2271 = vmatpush1.bf16.msra.mxu0 0
    %2272 = vmatprep.subr.bf16.mxu0 0
    %2273 = vmatpush1.bf16.msra.mxu0 0
    %2274 = vmatprep.subr.bf16.mxu0 0
    %2275 = vmatpush1.bf16.msra.mxu0 0
    %2276 = vmatprep.subr.bf16.mxu0 0
    %2277 = vmatpush1.bf16.msra.mxu0 0
    %2278 = vmatprep.subr.bf16.mxu0 0
    %2279 = vmatpush1.bf16.msra.mxu0 0
    %2280 = vmatprep.subr.bf16.mxu0 0
    %2281 = vmatpush1.bf16.msra.mxu0 0
    %2282 = vmatprep.subr.bf16.mxu0 0
    %2283 = vmatpush1.bf16.msra.mxu0 0
    %2284 = vmatprep.subr.bf16.mxu0 0
    %2285 = vmatpush1.bf16.msra.mxu0 0
    %2286 = vmatprep.subr.bf16.mxu0 0
    %2287 = vmatpush1.bf16.msra.mxu0 0
    %2288 = vmatprep.subr.bf16.mxu0 0
    %2289 = vmatpush1.bf16.msra.mxu0 0
    %2290 = vmatprep.subr.bf16.mxu0 0
    %2291 = vmatpush1.bf16.msra.mxu0 0
    %2292 = vmatprep.subr.bf16.mxu0 0
    %2293 = vmatpush1.bf16.msra.mxu0 0
    %2294 = vmatprep.subr.bf16.mxu0 0
    %2295 = vmatpush1.bf16.msra.mxu0 0
    %2296 = vmatprep.subr.bf16.mxu0 0
    %2297 = vmatpush1.bf16.msra.mxu0 0
    %2298 = vmatprep.mubr.bf16.mxu0 0
    %2299 = vmatmul.mubr.bf16.gmra.mrb[0].mxu0 %v2264
    %v2300 = vpop.f32.mrb[0].mxu0
    %v2301 = vadd.f32 0.0, %v2300
    %v2302 = vpop.f32.mrb[0].mxu0
    %v2303 = vpop.f32.mrb[0].mxu0
    %v2304 = vadd.f32 0.0, %v2303
    %v2305 = vpop.f32.mrb[0].mxu0
    %2306 = vdwg.mxu0
    %v2308 = vsel %vm1654, %v2248, 0
    %2310 = vmatprep.subr.bf16.mxu0 0
    %2311 = vmatpush1.bf16.msra.mxu0 %v741
    %2312 = vmatprep.subr.bf16.mxu0 0
    %2313 = vmatpush1.bf16.msra.mxu0 0
    %2314 = vmatprep.subr.bf16.mxu0 0
    %2315 = vmatpush1.bf16.msra.mxu0 0
    %2316 = vmatprep.subr.bf16.mxu0 0
    %2317 = vmatpush1.bf16.msra.mxu0 0
    %2318 = vmatprep.subr.bf16.mxu0 0
    %2319 = vmatpush1.bf16.msra.mxu0 0
    %2320 = vmatprep.subr.bf16.mxu0 0
    %2321 = vmatpush1.bf16.msra.mxu0 0
    %2322 = vmatprep.subr.bf16.mxu0 0
    %2323 = vmatpush1.bf16.msra.mxu0 0
    %2324 = vmatprep.subr.bf16.mxu0 0
    %2325 = vmatpush1.bf16.msra.mxu0 0
    %2326 = vmatprep.subr.bf16.mxu0 0
    %2327 = vmatpush1.bf16.msra.mxu0 0
    %2328 = vmatprep.subr.bf16.mxu0 0
    %2329 = vmatpush1.bf16.msra.mxu0 0
    %2330 = vmatprep.subr.bf16.mxu0 0
    %2331 = vmatpush1.bf16.msra.mxu0 0
    %2332 = vmatprep.subr.bf16.mxu0 0
    %2333 = vmatpush1.bf16.msra.mxu0 0
    %2334 = vmatprep.subr.bf16.mxu0 0
    %2335 = vmatpush1.bf16.msra.mxu0 0
    %2336 = vmatprep.subr.bf16.mxu0 0
    %2337 = vmatpush1.bf16.msra.mxu0 0
    %2338 = vmatprep.subr.bf16.mxu0 0
    %2339 = vmatpush1.bf16.msra.mxu0 0
    %2340 = vmatprep.subr.bf16.mxu0 0
    %2341 = vmatpush1.bf16.msra.mxu0 0
    %2342 = vmatprep.mubr.bf16.mxu0 0
    %2343 = vmatmul.mubr.bf16.gmra.mrb[0].mxu0 %v2308
    %v2344 = vpop.f32.mrb[0].mxu0
    %v2345 = vadd.f32 0.0, %v2344
    %v2346 = vpop.f32.mrb[0].mxu0
    %v2347 = vpop.f32.mrb[0].mxu0
    %v2348 = vadd.f32 0.0, %v2347
    %v2349 = vpop.f32.mrb[0].mxu0
    %2350 = vdwg.mxu0
    %v2352 = vsel %vm1654, %v2249, 0
    %2354 = vmatprep.subr.bf16.mxu0 0
    %2355 = vmatpush1.bf16.msra.mxu0 %v794
    %2356 = vmatprep.subr.bf16.mxu0 0
    %2357 = vmatpush1.bf16.msra.mxu0 0
    %2358 = vmatprep.subr.bf16.mxu0 0
    %2359 = vmatpush1.bf16.msra.mxu0 0
    %2360 = vmatprep.subr.bf16.mxu0 0
    %2361 = vmatpush1.bf16.msra.mxu0 0
    %2362 = vmatprep.subr.bf16.mxu0 0
    %2363 = vmatpush1.bf16.msra.mxu0 0
    %2364 = vmatprep.subr.bf16.mxu0 0
    %2365 = vmatpush1.bf16.msra.mxu0 0
    %2366 = vmatprep.subr.bf16.mxu0 0
    %2367 = vmatpush1.bf16.msra.mxu0 0
    %2368 = vmatprep.subr.bf16.mxu0 0
    %2369 = vmatpush1.bf16.msra.mxu0 0
    %2370 = vmatprep.subr.bf16.mxu0 0
    %2371 = vmatpush1.bf16.msra.mxu0 0
    %2372 = vmatprep.subr.bf16.mxu0 0
    %2373 = vmatpush1.bf16.msra.mxu0 0
    %2374 = vmatprep.subr.bf16.mxu0 0
    %2375 = vmatpush1.bf16.msra.mxu0 0
    %2376 = vmatprep.subr.bf16.mxu0 0
    %2377 = vmatpush1.bf16.msra.mxu0 0
    %2378 = vmatprep.subr.bf16.mxu0 0
    %2379 = vmatpush1.bf16.msra.mxu0 0
    %2380 = vmatprep.subr.bf16.mxu0 0
    %2381 = vmatpush1.bf16.msra.mxu0 0
    %2382 = vmatprep.subr.bf16.mxu0 0
    %2383 = vmatpush1.bf16.msra.mxu0 0
    %2384 = vmatprep.subr.bf16.mxu0 0
    %2385 = vmatpush1.bf16.msra.mxu0 0
    %2386 = vmatprep.mubr.bf16.mxu0 0
    %2387 = vmatmul.mubr.bf16.gmra.mrb[0].mxu0 %v2352
    %v2388 = vpop.f32.mrb[0].mxu0
    %v2389 = vadd.f32 0.0, %v2388
    %v2390 = vpop.f32.mrb[0].mxu0
    %v2391 = vpop.f32.mrb[0].mxu0
    %v2392 = vadd.f32 0.0, %v2391
    %v2393 = vpop.f32.mrb[0].mxu0
    %2394 = vdwg.mxu0
    %v2396 = vsel %vm1654, %v2250, 0
    %2398 = vmatprep.subr.bf16.mxu0 0
    %2399 = vmatpush1.bf16.msra.mxu0 %v847
    %2400 = vmatprep.subr.bf16.mxu0 0
    %2401 = vmatpush1.bf16.msra.mxu0 0
    %2402 = vmatprep.subr.bf16.mxu0 0
    %2403 = vmatpush1.bf16.msra.mxu0 0
    %2404 = vmatprep.subr.bf16.mxu0 0
    %2405 = vmatpush1.bf16.msra.mxu0 0
    %2406 = vmatprep.subr.bf16.mxu0 0
    %2407 = vmatpush1.bf16.msra.mxu0 0
    %2408 = vmatprep.subr.bf16.mxu0 0
    %2409 = vmatpush1.bf16.msra.mxu0 0
    %2410 = vmatprep.subr.bf16.mxu0 0
    %2411 = vmatpush1.bf16.msra.mxu0 0
    %2412 = vmatprep.subr.bf16.mxu0 0
    %2413 = vmatpush1.bf16.msra.mxu0 0
    %2414 = vmatprep.subr.bf16.mxu0 0
    %2415 = vmatpush1.bf16.msra.mxu0 0
    %2416 = vmatprep.subr.bf16.mxu0 0
    %2417 = vmatpush1.bf16.msra.mxu0 0
    %2418 = vmatprep.subr.bf16.mxu0 0
    %2419 = vmatpush1.bf16.msra.mxu0 0
    %2420 = vmatprep.subr.bf16.mxu0 0
    %2421 = vmatpush1.bf16.msra.mxu0 0
    %2422 = vmatprep.subr.bf16.mxu0 0
    %2423 = vmatpush1.bf16.msra.mxu0 0
    %2424 = vmatprep.subr.bf16.mxu0 0
    %2425 = vmatpush1.bf16.msra.mxu0 0
    %2426 = vmatprep.subr.bf16.mxu0 0
    %2427 = vmatpush1.bf16.msra.mxu0 0
    %2428 = vmatprep.subr.bf16.mxu0 0
    %2429 = vmatpush1.bf16.msra.mxu0 0
    %2430 = vmatprep.mubr.bf16.mxu0 0
    %2431 = vmatmul.mubr.bf16.gmra.mrb[0].mxu0 %v2396
    %v2432 = vpop.f32.mrb[0].mxu0
    %v2433 = vadd.f32 0.0, %v2432
    %v2434 = vpop.f32.mrb[0].mxu0
    %v2435 = vpop.f32.mrb[0].mxu0
    %v2436 = vadd.f32 0.0, %v2435
    %v2437 = vpop.f32.mrb[0].mxu0
    %2438 = vdwg.mxu0
    %v2440 = vsel %vm1654, %v2251, 0
    %2442 = vmatprep.subr.bf16.mxu0 0
    %2443 = vmatpush1.bf16.msra.mxu0 %v900
    %2444 = vmatprep.subr.bf16.mxu0 0
    %2445 = vmatpush1.bf16.msra.mxu0 0
    %2446 = vmatprep.subr.bf16.mxu0 0
    %2447 = vmatpush1.bf16.msra.mxu0 0
    %2448 = vmatprep.subr.bf16.mxu0 0
    %2449 = vmatpush1.bf16.msra.mxu0 0
    %2450 = vmatprep.subr.bf16.mxu0 0
    %2451 = vmatpush1.bf16.msra.mxu0 0
    %2452 = vmatprep.subr.bf16.mxu0 0
    %2453 = vmatpush1.bf16.msra.mxu0 0
    %2454 = vmatprep.subr.bf16.mxu0 0
    %2455 = vmatpush1.bf16.msra.mxu0 0
    %2456 = vmatprep.subr.bf16.mxu0 0
    %2457 = vmatpush1.bf16.msra.mxu0 0
    %2458 = vmatprep.subr.bf16.mxu0 0
    %2459 = vmatpush1.bf16.msra.mxu0 0
    %2460 = vmatprep.subr.bf16.mxu0 0
    %2461 = vmatpush1.bf16.msra.mxu0 0
    %2462 = vmatprep.subr.bf16.mxu0 0
    %2463 = vmatpush1.bf16.msra.mxu0 0
    %2464 = vmatprep.subr.bf16.mxu0 0
    %2465 = vmatpush1.bf16.msra.mxu0 0
    %2466 = vmatprep.subr.bf16.mxu0 0
    %2467 = vmatpush1.bf16.msra.mxu0 0
    %2468 = vmatprep.subr.bf16.mxu0 0
    %2469 = vmatpush1.bf16.msra.mxu0 0
    %2470 = vmatprep.subr.bf16.mxu0 0
    %2471 = vmatpush1.bf16.msra.mxu0 0
    %2472 = vmatprep.subr.bf16.mxu0 0
    %2473 = vmatpush1.bf16.msra.mxu0 0
    %2474 = vmatprep.mubr.bf16.mxu0 0
    %2475 = vmatmul.mubr.bf16.gmra.mrb[0].mxu0 %v2440
    %v2476 = vpop.f32.mrb[0].mxu0
    %v2477 = vadd.f32 0.0, %v2476
    %v2478 = vpop.f32.mrb[0].mxu0
    %v2479 = vpop.f32.mrb[0].mxu0
    %v2480 = vadd.f32 0.0, %v2479
    %v2481 = vpop.f32.mrb[0].mxu0
    %2482 = vdwg.mxu0
    %v2484 = vsel %vm1654, %v2252, 0
    %2486 = vmatprep.subr.bf16.mxu0 0
    %2487 = vmatpush1.bf16.msra.mxu0 %v953
    %2488 = vmatprep.subr.bf16.mxu0 0
    %2489 = vmatpush1.bf16.msra.mxu0 0
    %2490 = vmatprep.subr.bf16.mxu0 0
    %2491 = vmatpush1.bf16.msra.mxu0 0
    %2492 = vmatprep.subr.bf16.mxu0 0
    %2493 = vmatpush1.bf16.msra.mxu0 0
    %2494 = vmatprep.subr.bf16.mxu0 0
    %2495 = vmatpush1.bf16.msra.mxu0 0
    %2496 = vmatprep.subr.bf16.mxu0 0
    %2497 = vmatpush1.bf16.msra.mxu0 0
    %2498 = vmatprep.subr.bf16.mxu0 0
    %2499 = vmatpush1.bf16.msra.mxu0 0
    %2500 = vmatprep.subr.bf16.mxu0 0
    %2501 = vmatpush1.bf16.msra.mxu0 0
    %2502 = vmatprep.subr.bf16.mxu0 0
    %2503 = vmatpush1.bf16.msra.mxu0 0
    %2504 = vmatprep.subr.bf16.mxu0 0
    %2505 = vmatpush1.bf16.msra.mxu0 0
    %2506 = vmatprep.subr.bf16.mxu0 0
    %2507 = vmatpush1.bf16.msra.mxu0 0
    %2508 = vmatprep.subr.bf16.mxu0 0
    %2509 = vmatpush1.bf16.msra.mxu0 0
    %2510 = vmatprep.subr.bf16.mxu0 0
    %2511 = vmatpush1.bf16.msra.mxu0 0
    %2512 = vmatprep.subr.bf16.mxu0 0
    %2513 = vmatpush1.bf16.msra.mxu0 0
    %2514 = vmatprep.subr.bf16.mxu0 0
    %2515 = vmatpush1.bf16.msra.mxu0 0
    %2516 = vmatprep.subr.bf16.mxu0 0
    %2517 = vmatpush1.bf16.msra.mxu0 0
    %2518 = vmatprep.mubr.bf16.mxu0 0
    %2519 = vmatmul.mubr.bf16.gmra.mrb[0].mxu0 %v2484
    %v2520 = vpop.f32.mrb[0].mxu0
    %v2521 = vadd.f32 0.0, %v2520
    %v2522 = vpop.f32.mrb[0].mxu0
    %v2523 = vpop.f32.mrb[0].mxu0
    %v2524 = vadd.f32 0.0, %v2523
    %v2525 = vpop.f32.mrb[0].mxu0
    %2526 = vdwg.mxu0
    %v2528 = vsel %vm1654, %v2253, 0
    %2530 = vmatprep.subr.bf16.mxu0 0
    %2531 = vmatpush1.bf16.msra.mxu0 %v1006
    %2532 = vmatprep.subr.bf16.mxu0 0
    %2533 = vmatpush1.bf16.msra.mxu0 0
    %2534 = vmatprep.subr.bf16.mxu0 0
    %2535 = vmatpush1.bf16.msra.mxu0 0
    %2536 = vmatprep.subr.bf16.mxu0 0
    %2537 = vmatpush1.bf16.msra.mxu0 0
    %2538 = vmatprep.subr.bf16.mxu0 0
    %2539 = vmatpush1.bf16.msra.mxu0 0
    %2540 = vmatprep.subr.bf16.mxu0 0
    %2541 = vmatpush1.bf16.msra.mxu0 0
    %2542 = vmatprep.subr.bf16.mxu0 0
    %2543 = vmatpush1.bf16.msra.mxu0 0
    %2544 = vmatprep.subr.bf16.mxu0 0
    %2545 = vmatpush1.bf16.msra.mxu0 0
    %2546 = vmatprep.subr.bf16.mxu0 0
    %2547 = vmatpush1.bf16.msra.mxu0 0
    %2548 = vmatprep.subr.bf16.mxu0 0
    %2549 = vmatpush1.bf16.msra.mxu0 0
    %2550 = vmatprep.subr.bf16.mxu0 0
    %2551 = vmatpush1.bf16.msra.mxu0 0
    %2552 = vmatprep.subr.bf16.mxu0 0
    %2553 = vmatpush1.bf16.msra.mxu0 0
    %2554 = vmatprep.subr.bf16.mxu0 0
    %2555 = vmatpush1.bf16.msra.mxu0 0
    %2556 = vmatprep.subr.bf16.mxu0 0
    %2557 = vmatpush1.bf16.msra.mxu0 0
    %2558 = vmatprep.subr.bf16.mxu0 0
    %2559 = vmatpush1.bf16.msra.mxu0 0
    %2560 = vmatprep.subr.bf16.mxu0 0
    %2561 = vmatpush1.bf16.msra.mxu0 0
    %2562 = vmatprep.mubr.bf16.mxu0 0
    %2563 = vmatmul.mubr.bf16.gmra.mrb[0].mxu0 %v2528
    %v2564 = vpop.f32.mrb[0].mxu0
    %v2565 = vadd.f32 0.0, %v2564
    %v2566 = vpop.f32.mrb[0].mxu0
    %v2567 = vpop.f32.mrb[0].mxu0
    %v2568 = vadd.f32 0.0, %v2567
    %v2569 = vpop.f32.mrb[0].mxu0
    %2570 = vdwg.mxu0
    %v2572 = vsel %vm1654, %v2254, 0
    %2574 = vmatprep.subr.bf16.mxu0 0
    %2575 = vmatpush1.bf16.msra.mxu0 %v1059
    %2576 = vmatprep.subr.bf16.mxu0 0
    %2577 = vmatpush1.bf16.msra.mxu0 0
    %2578 = vmatprep.subr.bf16.mxu0 0
    %2579 = vmatpush1.bf16.msra.mxu0 0
    %2580 = vmatprep.subr.bf16.mxu0 0
    %2581 = vmatpush1.bf16.msra.mxu0 0
    %2582 = vmatprep.subr.bf16.mxu0 0
    %2583 = vmatpush1.bf16.msra.mxu0 0
    %2584 = vmatprep.subr.bf16.mxu0 0
    %2585 = vmatpush1.bf16.msra.mxu0 0
    %2586 = vmatprep.subr.bf16.mxu0 0
    %2587 = vmatpush1.bf16.msra.mxu0 0
    %2588 = vmatprep.subr.bf16.mxu0 0
    %2589 = vmatpush1.bf16.msra.mxu0 0
    %2590 = vmatprep.subr.bf16.mxu0 0
    %2591 = vmatpush1.bf16.msra.mxu0 0
    %2592 = vmatprep.subr.bf16.mxu0 0
    %2593 = vmatpush1.bf16.msra.mxu0 0
    %2594 = vmatprep.subr.bf16.mxu0 0
    %2595 = vmatpush1.bf16.msra.mxu0 0
    %2596 = vmatprep.subr.bf16.mxu0 0
    %2597 = vmatpush1.bf16.msra.mxu0 0
    %2598 = vmatprep.subr.bf16.mxu0 0
    %2599 = vmatpush1.bf16.msra.mxu0 0
    %2600 = vmatprep.subr.bf16.mxu0 0
    %2601 = vmatpush1.bf16.msra.mxu0 0
    %2602 = vmatprep.subr.bf16.mxu0 0
    %2603 = vmatpush1.bf16.msra.mxu0 0
    %2604 = vmatprep.subr.bf16.mxu0 0
    %2605 = vmatpush1.bf16.msra.mxu0 0
    %2606 = vmatprep.mubr.bf16.mxu0 0
    %2607 = vmatmul.mubr.bf16.gmra.mrb[0].mxu0 %v2572
    %v2608 = vpop.f32.mrb[0].mxu0
    %v2609 = vadd.f32 0.0, %v2608
    %v2610 = vpop.f32.mrb[0].mxu0
    %v2611 = vpop.f32.mrb[0].mxu0
    %v2612 = vadd.f32 0.0, %v2611
    %v2613 = vpop.f32.mrb[0].mxu0
    %2614 = vdwg.mxu0
    %v2616 = vsel %vm1654, %v2255, 0
    %2618 = vmatprep.subr.bf16.mxu0 0
    %2619 = vmatpush1.bf16.msra.mxu0 %v1112
    %2620 = vmatprep.subr.bf16.mxu0 0
    %2621 = vmatpush1.bf16.msra.mxu0 0
    %2622 = vmatprep.subr.bf16.mxu0 0
    %2623 = vmatpush1.bf16.msra.mxu0 0
    %2624 = vmatprep.subr.bf16.mxu0 0
    %2625 = vmatpush1.bf16.msra.mxu0 0
    %2626 = vmatprep.subr.bf16.mxu0 0
    %2627 = vmatpush1.bf16.msra.mxu0 0
    %2628 = vmatprep.subr.bf16.mxu0 0
    %2629 = vmatpush1.bf16.msra.mxu0 0
    %2630 = vmatprep.subr.bf16.mxu0 0
    %2631 = vmatpush1.bf16.msra.mxu0 0
    %2632 = vmatprep.subr.bf16.mxu0 0
    %2633 = vmatpush1.bf16.msra.mxu0 0
    %2634 = vmatprep.subr.bf16.mxu0 0
    %2635 = vmatpush1.bf16.msra.mxu0 0
    %2636 = vmatprep.subr.bf16.mxu0 0
    %2637 = vmatpush1.bf16.msra.mxu0 0
    %2638 = vmatprep.subr.bf16.mxu0 0
    %2639 = vmatpush1.bf16.msra.mxu0 0
    %2640 = vmatprep.subr.bf16.mxu0 0
    %2641 = vmatpush1.bf16.msra.mxu0 0
    %2642 = vmatprep.subr.bf16.mxu0 0
    %2643 = vmatpush1.bf16.msra.mxu0 0
    %2644 = vmatprep.subr.bf16.mxu0 0
    %2645 = vmatpush1.bf16.msra.mxu0 0
    %2646 = vmatprep.subr.bf16.mxu0 0
    %2647 = vmatpush1.bf16.msra.mxu0 0
    %2648 = vmatprep.subr.bf16.mxu0 0
    %2649 = vmatpush1.bf16.msra.mxu0 0
    %2650 = vmatprep.mubr.bf16.mxu0 0
    %2651 = vmatmul.mubr.bf16.gmra.mrb[0].mxu0 %v2616
    %v2652 = vpop.f32.mrb[0].mxu0
    %v2653 = vadd.f32 0.0, %v2652
    %v2654 = vpop.f32.mrb[0].mxu0
    %v2655 = vpop.f32.mrb[0].mxu0
    %v2656 = vadd.f32 0.0, %v2655
    %v2657 = vpop.f32.mrb[0].mxu0
    %2658 = vdwg.mxu0
    %v2660 = vsel %vm1654, %v2256, 0
    %2662 = vmatprep.subr.bf16.mxu0 0
    %2663 = vmatpush1.bf16.msra.mxu0 %v1165
    %2664 = vmatprep.subr.bf16.mxu0 0
    %2665 = vmatpush1.bf16.msra.mxu0 0
    %2666 = vmatprep.subr.bf16.mxu0 0
    %2667 = vmatpush1.bf16.msra.mxu0 0
    %2668 = vmatprep.subr.bf16.mxu0 0
    %2669 = vmatpush1.bf16.msra.mxu0 0
    %2670 = vmatprep.subr.bf16.mxu0 0
    %2671 = vmatpush1.bf16.msra.mxu0 0
    %2672 = vmatprep.subr.bf16.mxu0 0
    %2673 = vmatpush1.bf16.msra.mxu0 0
    %2674 = vmatprep.subr.bf16.mxu0 0
    %2675 = vmatpush1.bf16.msra.mxu0 0
    %2676 = vmatprep.subr.bf16.mxu0 0
    %2677 = vmatpush1.bf16.msra.mxu0 0
    %2678 = vmatprep.subr.bf16.mxu0 0
    %2679 = vmatpush1.bf16.msra.mxu0 0
    %2680 = vmatprep.subr.bf16.mxu0 0
    %2681 = vmatpush1.bf16.msra.mxu0 0
    %2682 = vmatprep.subr.bf16.mxu0 0
    %2683 = vmatpush1.bf16.msra.mxu0 0
    %2684 = vmatprep.subr.bf16.mxu0 0
    %2685 = vmatpush1.bf16.msra.mxu0 0
    %2686 = vmatprep.subr.bf16.mxu0 0
    %2687 = vmatpush1.bf16.msra.mxu0 0
    %2688 = vmatprep.subr.bf16.mxu0 0
    %2689 = vmatpush1.bf16.msra.mxu0 0
    %2690 = vmatprep.subr.bf16.mxu0 0
    %2691 = vmatpush1.bf16.msra.mxu0 0
    %2692 = vmatprep.subr.bf16.mxu0 0
    %2693 = vmatpush1.bf16.msra.mxu0 0
    %2694 = vmatprep.mubr.bf16.mxu0 0
    %2695 = vmatmul.mubr.bf16.gmra.mrb[0].mxu0 %v2660
    %v2696 = vpop.f32.mrb[0].mxu0
    %v2697 = vadd.f32 0.0, %v2696
    %v2698 = vpop.f32.mrb[0].mxu0
    %v2699 = vpop.f32.mrb[0].mxu0
    %v2700 = vadd.f32 0.0, %v2699
    %v2701 = vpop.f32.mrb[0].mxu0
    %2702 = vdwg.mxu0
    %v2704 = vsel %vm1654, %v2257, 0
    %2706 = vmatprep.subr.bf16.mxu0 0
    %2707 = vmatpush1.bf16.msra.mxu0 %v1218
    %2708 = vmatprep.subr.bf16.mxu0 0
    %2709 = vmatpush1.bf16.msra.mxu0 0
    %2710 = vmatprep.subr.bf16.mxu0 0
    %2711 = vmatpush1.bf16.msra.mxu0 0
    %2712 = vmatprep.subr.bf16.mxu0 0
    %2713 = vmatpush1.bf16.msra.mxu0 0
    %2714 = vmatprep.subr.bf16.mxu0 0
    %2715 = vmatpush1.bf16.msra.mxu0 0
    %2716 = vmatprep.subr.bf16.mxu0 0
    %2717 = vmatpush1.bf16.msra.mxu0 0
    %2718 = vmatprep.subr.bf16.mxu0 0
    %2719 = vmatpush1.bf16.msra.mxu0 0
    %2720 = vmatprep.subr.bf16.mxu0 0
    %2721 = vmatpush1.bf16.msra.mxu0 0
    %2722 = vmatprep.subr.bf16.mxu0 0
    %2723 = vmatpush1.bf16.msra.mxu0 0
    %2724 = vmatprep.subr.bf16.mxu0 0
    %2725 = vmatpush1.bf16.msra.mxu0 0
    %2726 = vmatprep.subr.bf16.mxu0 0
    %2727 = vmatpush1.bf16.msra.mxu0 0
    %2728 = vmatprep.subr.bf16.mxu0 0
    %2729 = vmatpush1.bf16.msra.mxu0 0
    %2730 = vmatprep.subr.bf16.mxu0 0
    %2731 = vmatpush1.bf16.msra.mxu0 0
    %2732 = vmatprep.subr.bf16.mxu0 0
    %2733 = vmatpush1.bf16.msra.mxu0 0
    %2734 = vmatprep.subr.bf16.mxu0 0
    %2735 = vmatpush1.bf16.msra.mxu0 0
    %2736 = vmatprep.subr.bf16.mxu0 0
    %2737 = vmatpush1.bf16.msra.mxu0 0
    %2738 = vmatprep.mubr.bf16.mxu0 0
    %2739 = vmatmul.mubr.bf16.gmra.mrb[0].mxu0 %v2704
    %v2740 = vpop.f32.mrb[0].mxu0
    %v2741 = vadd.f32 0.0, %v2740
    %v2742 = vpop.f32.mrb[0].mxu0
    %v2743 = vpop.f32.mrb[0].mxu0
    %v2744 = vadd.f32 0.0, %v2743
    %v2745 = vpop.f32.mrb[0].mxu0
    %2746 = vdwg.mxu0
    %v2748 = vsel %vm1654, %v2258, 0
    %2750 = vmatprep.subr.bf16.mxu0 0
    %2751 = vmatpush1.bf16.msra.mxu0 %v1271
    %2752 = vmatprep.subr.bf16.mxu0 0
    %2753 = vmatpush1.bf16.msra.mxu0 0
    %2754 = vmatprep.subr.bf16.mxu0 0
    %2755 = vmatpush1.bf16.msra.mxu0 0
    %2756 = vmatprep.subr.bf16.mxu0 0
    %2757 = vmatpush1.bf16.msra.mxu0 0
    %2758 = vmatprep.subr.bf16.mxu0 0
    %2759 = vmatpush1.bf16.msra.mxu0 0
    %2760 = vmatprep.subr.bf16.mxu0 0
    %2761 = vmatpush1.bf16.msra.mxu0 0
    %2762 = vmatprep.subr.bf16.mxu0 0
    %2763 = vmatpush1.bf16.msra.mxu0 0
    %2764 = vmatprep.subr.bf16.mxu0 0
    %2765 = vmatpush1.bf16.msra.mxu0 0
    %2766 = vmatprep.subr.bf16.mxu0 0
    %2767 = vmatpush1.bf16.msra.mxu0 0
    %2768 = vmatprep.subr.bf16.mxu0 0
    %2769 = vmatpush1.bf16.msra.mxu0 0
    %2770 = vmatprep.subr.bf16.mxu0 0
    %2771 = vmatpush1.bf16.msra.mxu0 0
    %2772 = vmatprep.subr.bf16.mxu0 0
    %2773 = vmatpush1.bf16.msra.mxu0 0
    %2774 = vmatprep.subr.bf16.mxu0 0
    %2775 = vmatpush1.bf16.msra.mxu0 0
    %2776 = vmatprep.subr.bf16.mxu0 0
    %2777 = vmatpush1.bf16.msra.mxu0 0
    %2778 = vmatprep.subr.bf16.mxu0 0
    %2779 = vmatpush1.bf16.msra.mxu0 0
    %2780 = vmatprep.subr.bf16.mxu0 0
    %2781 = vmatpush1.bf16.msra.mxu0 0
    %2782 = vmatprep.mubr.bf16.mxu0 0
    %2783 = vmatmul.mubr.bf16.gmra.mrb[0].mxu0 %v2748
    %v2784 = vpop.f32.mrb[0].mxu0
    %v2785 = vadd.f32 0.0, %v2784
    %v2786 = vpop.f32.mrb[0].mxu0
    %v2787 = vpop.f32.mrb[0].mxu0
    %v2788 = vadd.f32 0.0, %v2787
    %v2789 = vpop.f32.mrb[0].mxu0
    %2790 = vdwg.mxu0
    %v2792 = vsel %vm1654, %v2259, 0
    %2794 = vmatprep.subr.bf16.mxu0 0
    %2795 = vmatpush1.bf16.msra.mxu0 %v1324
    %2796 = vmatprep.subr.bf16.mxu0 0
    %2797 = vmatpush1.bf16.msra.mxu0 0
    %2798 = vmatprep.subr.bf16.mxu0 0
    %2799 = vmatpush1.bf16.msra.mxu0 0
    %2800 = vmatprep.subr.bf16.mxu0 0
    %2801 = vmatpush1.bf16.msra.mxu0 0
    %2802 = vmatprep.subr.bf16.mxu0 0
    %2803 = vmatpush1.bf16.msra.mxu0 0
    %2804 = vmatprep.subr.bf16.mxu0 0
    %2805 = vmatpush1.bf16.msra.mxu0 0
    %2806 = vmatprep.subr.bf16.mxu0 0
    %2807 = vmatpush1.bf16.msra.mxu0 0
    %2808 = vmatprep.subr.bf16.mxu0 0
    %2809 = vmatpush1.bf16.msra.mxu0 0
    %2810 = vmatprep.subr.bf16.mxu0 0
    %2811 = vmatpush1.bf16.msra.mxu0 0
    %2812 = vmatprep.subr.bf16.mxu0 0
    %2813 = vmatpush1.bf16.msra.mxu0 0
    %2814 = vmatprep.subr.bf16.mxu0 0
    %2815 = vmatpush1.bf16.msra.mxu0 0
    %2816 = vmatprep.subr.bf16.mxu0 0
    %2817 = vmatpush1.bf16.msra.mxu0 0
    %2818 = vmatprep.subr.bf16.mxu0 0
    %2819 = vmatpush1.bf16.msra.mxu0 0
    %2820 = vmatprep.subr.bf16.mxu0 0
    %2821 = vmatpush1.bf16.msra.mxu0 0
    %2822 = vmatprep.subr.bf16.mxu0 0
    %2823 = vmatpush1.bf16.msra.mxu0 0
    %2824 = vmatprep.subr.bf16.mxu0 0
    %2825 = vmatpush1.bf16.msra.mxu0 0
    %2826 = vmatprep.mubr.bf16.mxu0 0
    %2827 = vmatmul.mubr.bf16.gmra.mrb[0].mxu0 %v2792
    %v2828 = vpop.f32.mrb[0].mxu0
    %v2829 = vadd.f32 0.0, %v2828
    %v2830 = vpop.f32.mrb[0].mxu0
    %v2831 = vpop.f32.mrb[0].mxu0
    %v2832 = vadd.f32 0.0, %v2831
    %v2833 = vpop.f32.mrb[0].mxu0
    %2834 = vdwg.mxu0
    %v2836 = vsel %vm1654, %v2260, 0
    %2838 = vmatprep.subr.bf16.mxu0 0
    %2839 = vmatpush1.bf16.msra.mxu0 %v1377
    %2840 = vmatprep.subr.bf16.mxu0 0
    %2841 = vmatpush1.bf16.msra.mxu0 0
    %2842 = vmatprep.subr.bf16.mxu0 0
    %2843 = vmatpush1.bf16.msra.mxu0 0
    %2844 = vmatprep.subr.bf16.mxu0 0
    %2845 = vmatpush1.bf16.msra.mxu0 0
    %2846 = vmatprep.subr.bf16.mxu0 0
    %2847 = vmatpush1.bf16.msra.mxu0 0
    %2848 = vmatprep.subr.bf16.mxu0 0
    %2849 = vmatpush1.bf16.msra.mxu0 0
    %2850 = vmatprep.subr.bf16.mxu0 0
    %2851 = vmatpush1.bf16.msra.mxu0 0
    %2852 = vmatprep.subr.bf16.mxu0 0
    %2853 = vmatpush1.bf16.msra.mxu0 0
    %2854 = vmatprep.subr.bf16.mxu0 0
    %2855 = vmatpush1.bf16.msra.mxu0 0
    %2856 = vmatprep.subr.bf16.mxu0 0
    %2857 = vmatpush1.bf16.msra.mxu0 0
    %2858 = vmatprep.subr.bf16.mxu0 0
    %2859 = vmatpush1.bf16.msra.mxu0 0
    %2860 = vmatprep.subr.bf16.mxu0 0
    %2861 = vmatpush1.bf16.msra.mxu0 0
    %2862 = vmatprep.subr.bf16.mxu0 0
    %2863 = vmatpush1.bf16.msra.mxu0 0
    %2864 = vmatprep.subr.bf16.mxu0 0
    %2865 = vmatpush1.bf16.msra.mxu0 0
    %2866 = vmatprep.subr.bf16.mxu0 0
    %2867 = vmatpush1.bf16.msra.mxu0 0
    %2868 = vmatprep.subr.bf16.mxu0 0
    %2869 = vmatpush1.bf16.msra.mxu0 0
    %2870 = vmatprep.mubr.bf16.mxu0 0
    %2871 = vmatmul.mubr.bf16.gmra.mrb[0].mxu0 %v2836
    %v2872 = vpop.f32.mrb[0].mxu0
    %v2873 = vadd.f32 0.0, %v2872
    %v2874 = vpop.f32.mrb[0].mxu0
    %v2875 = vpop.f32.mrb[0].mxu0
    %v2876 = vadd.f32 0.0, %v2875
    %v2877 = vpop.f32.mrb[0].mxu0
    %2878 = vdwg.mxu0
    %v2880 = vsel %vm1654, %v2261, 0
    %2882 = vmatprep.subr.bf16.mxu0 0
    %2883 = vmatpush1.bf16.msra.mxu0 %v1430
    %2884 = vmatprep.subr.bf16.mxu0 0
    %2885 = vmatpush1.bf16.msra.mxu0 0
    %2886 = vmatprep.subr.bf16.mxu0 0
    %2887 = vmatpush1.bf16.msra.mxu0 0
    %2888 = vmatprep.subr.bf16.mxu0 0
    %2889 = vmatpush1.bf16.msra.mxu0 0
    %2890 = vmatprep.subr.bf16.mxu0 0
    %2891 = vmatpush1.bf16.msra.mxu0 0
    %2892 = vmatprep.subr.bf16.mxu0 0
    %2893 = vmatpush1.bf16.msra.mxu0 0
    %2894 = vmatprep.subr.bf16.mxu0 0
    %2895 = vmatpush1.bf16.msra.mxu0 0
    %2896 = vmatprep.subr.bf16.mxu0 0
    %2897 = vmatpush1.bf16.msra.mxu0 0
    %2898 = vmatprep.subr.bf16.mxu0 0
    %2899 = vmatpush1.bf16.msra.mxu0 0
    %2900 = vmatprep.subr.bf16.mxu0 0
    %2901 = vmatpush1.bf16.msra.mxu0 0
    %2902 = vmatprep.subr.bf16.mxu0 0
    %2903 = vmatpush1.bf16.msra.mxu0 0
    %2904 = vmatprep.subr.bf16.mxu0 0
    %2905 = vmatpush1.bf16.msra.mxu0 0
    %2906 = vmatprep.subr.bf16.mxu0 0
    %2907 = vmatpush1.bf16.msra.mxu0 0
    %2908 = vmatprep.subr.bf16.mxu0 0
    %2909 = vmatpush1.bf16.msra.mxu0 0
    %2910 = vmatprep.subr.bf16.mxu0 0
    %2911 = vmatpush1.bf16.msra.mxu0 0
    %2912 = vmatprep.subr.bf16.mxu0 0
    %2913 = vmatpush1.bf16.msra.mxu0 0
    %2914 = vmatprep.mubr.bf16.mxu0 0
    %2915 = vmatmul.mubr.bf16.gmra.mrb[0].mxu0 %v2880
    %v2916 = vpop.f32.mrb[0].mxu0
    %v2917 = vadd.f32 0.0, %v2916
    %v2918 = vpop.f32.mrb[0].mxu0
    %v2919 = vpop.f32.mrb[0].mxu0
    %v2920 = vadd.f32 0.0, %v2919
    %v2921 = vpop.f32.mrb[0].mxu0
    %2922 = vdwg.mxu0
    %v2924 = vsel %vm1654, %v2262, 0
    %2926 = vmatprep.subr.bf16.mxu0 0
    %2927 = vmatpush1.bf16.msra.mxu0 %v1483
    %2928 = vmatprep.subr.bf16.mxu0 0
    %2929 = vmatpush1.bf16.msra.mxu0 0
    %2930 = vmatprep.subr.bf16.mxu0 0
    %2931 = vmatpush1.bf16.msra.mxu0 0
    %2932 = vmatprep.subr.bf16.mxu0 0
    %2933 = vmatpush1.bf16.msra.mxu0 0
    %2934 = vmatprep.subr.bf16.mxu0 0
    %2935 = vmatpush1.bf16.msra.mxu0 0
    %2936 = vmatprep.subr.bf16.mxu0 0
    %2937 = vmatpush1.bf16.msra.mxu0 0
    %2938 = vmatprep.subr.bf16.mxu0 0
    %2939 = vmatpush1.bf16.msra.mxu0 0
    %2940 = vmatprep.subr.bf16.mxu0 0
    %2941 = vmatpush1.bf16.msra.mxu0 0
    %2942 = vmatprep.subr.bf16.mxu0 0
    %2943 = vmatpush1.bf16.msra.mxu0 0
    %2944 = vmatprep.subr.bf16.mxu0 0
    %2945 = vmatpush1.bf16.msra.mxu0 0
    %2946 = vmatprep.subr.bf16.mxu0 0
    %2947 = vmatpush1.bf16.msra.mxu0 0
    %2948 = vmatprep.subr.bf16.mxu0 0
    %2949 = vmatpush1.bf16.msra.mxu0 0
    %2950 = vmatprep.subr.bf16.mxu0 0
    %2951 = vmatpush1.bf16.msra.mxu0 0
    %2952 = vmatprep.subr.bf16.mxu0 0
    %2953 = vmatpush1.bf16.msra.mxu0 0
    %2954 = vmatprep.subr.bf16.mxu0 0
    %2955 = vmatpush1.bf16.msra.mxu0 0
    %2956 = vmatprep.subr.bf16.mxu0 0
    %2957 = vmatpush1.bf16.msra.mxu0 0
    %2958 = vmatprep.mubr.bf16.mxu0 0
    %2959 = vmatmul.mubr.bf16.gmra.mrb[0].mxu0 %v2924
    %v2960 = vpop.f32.mrb[0].mxu0
    %v2961 = vadd.f32 0.0, %v2960
    %v2962 = vpop.f32.mrb[0].mxu0
    %v2963 = vpop.f32.mrb[0].mxu0
    %v2964 = vadd.f32 0.0, %v2963
    %v2965 = vpop.f32.mrb[0].mxu0
    %2966 = vdwg.mxu0
    %v2967 = vpack.c.bf16 %v2304, %v2301
    %v2968 = vpack.c.bf16 %v2348, %v2345
    %v2969 = vpack.c.bf16 %v2392, %v2389
    %v2970 = vpack.c.bf16 %v2436, %v2433
    %v2971 = vpack.c.bf16 %v2480, %v2477
    %v2972 = vpack.c.bf16 %v2524, %v2521
    %v2973 = vpack.c.bf16 %v2568, %v2565
    %v2974 = vpack.c.bf16 %v2612, %v2609
    %v2975 = vpack.c.bf16 %v2656, %v2653
    %v2976 = vpack.c.bf16 %v2700, %v2697
    %v2977 = vpack.c.bf16 %v2744, %v2741
    %v2978 = vpack.c.bf16 %v2788, %v2785
    %v2979 = vpack.c.bf16 %v2832, %v2829
    %v2980 = vpack.c.bf16 %v2876, %v2873
    %v2981 = vpack.c.bf16 %v2920, %v2917
    %v2982 = vpack.c.bf16 %v2964, %v2961
    %v2983 = vld [vmem:[#allocation7] sm:$0xff]
    %v2984 = vld [vmem:[#allocation7 + $0x8] sm:$0xff]
    %v2985 = vld [vmem:[#allocation7 + $0x10] sm:$0xff]
    %v2986 = vld [vmem:[#allocation7 + $0x18] sm:$0xff]
    %v2987 = vld [vmem:[#allocation7 + $0x20] sm:$0xff]
    %v2988 = vld [vmem:[#allocation7 + $0x28] sm:$0xff]
    %v2989 = vld [vmem:[#allocation7 + $0x30] sm:$0xff]
    %v2990 = vld [vmem:[#allocation7 + $0x38] sm:$0xff]
    %v2991 = vld [vmem:[#allocation7 + $0x40] sm:$0xff]
    %v2992 = vld [vmem:[#allocation7 + $0x48] sm:$0xff]
    %v2993 = vld [vmem:[#allocation7 + $0x50] sm:$0xff]
    %v2994 = vld [vmem:[#allocation7 + $0x58] sm:$0xff]
    %v2995 = vld [vmem:[#allocation7 + $0x60] sm:$0xff]
    %v2996 = vld [vmem:[#allocation7 + $0x68] sm:$0xff]
    %v2997 = vld [vmem:[#allocation7 + $0x70] sm:$0xff]
    %v2998 = vld [vmem:[#allocation7 + $0x78] sm:$0xff]
    %v2999 = vld [vmem:[%s3] sm:$0x3]
    %v3001 = vlaneseq
    %v3002 = vshrl.u32 %v3001, 7
    %v3003 = vsub.s32 0, %v3002
    %v3004 = vrot.slane %v2999, %v3003
    %v3005 = vlaneseq
    %v3006 = vshrl.u32 %v3005, 7
    %v3007 = vsub.s32 1, %v3006
    %v3008 = vrot.slane %v2999, %v3007
    %v3027 = vunpack.c.l.b16 %v2983
    %v3028 = vunpack.c.h.b16 %v2983
    %v3029 = vunpack.c.l.b16 %v2984
    %v3030 = vunpack.c.h.b16 %v2984
    %v3031 = vunpack.c.l.b16 %v2985
    %v3032 = vunpack.c.h.b16 %v2985
    %v3033 = vunpack.c.l.b16 %v2986
    %v3034 = vunpack.c.h.b16 %v2986
    %v3035 = vunpack.c.l.b16 %v2987
    %v3036 = vunpack.c.h.b16 %v2987
    %v3037 = vunpack.c.l.b16 %v2988
    %v3038 = vunpack.c.h.b16 %v2988
    %v3039 = vunpack.c.l.b16 %v2989
    %v3040 = vunpack.c.h.b16 %v2989
    %v3041 = vunpack.c.l.b16 %v2990
    %v3042 = vunpack.c.h.b16 %v2990
    %v3043 = vunpack.c.l.b16 %v2991
    %v3044 = vunpack.c.h.b16 %v2991
    %v3045 = vunpack.c.l.b16 %v2992
    %v3046 = vunpack.c.h.b16 %v2992
    %v3047 = vunpack.c.l.b16 %v2993
    %v3048 = vunpack.c.h.b16 %v2993
    %v3049 = vunpack.c.l.b16 %v2994
    %v3050 = vunpack.c.h.b16 %v2994
    %v3051 = vunpack.c.l.b16 %v2995
    %v3052 = vunpack.c.h.b16 %v2995
    %v3053 = vunpack.c.l.b16 %v2996
    %v3054 = vunpack.c.h.b16 %v2996
    %v3055 = vunpack.c.l.b16 %v2997
    %v3056 = vunpack.c.h.b16 %v2997
    %v3057 = vunpack.c.l.b16 %v2998
    %v3058 = vunpack.c.h.b16 %v2998
    %v3059 = vpack.c.b16 %v3029, %v3027
    %v3060 = vpack.c.b16 %v3030, %v3028
    %v3061 = vpack.c.b16 %v3033, %v3031
    %v3062 = vpack.c.b16 %v3034, %v3032
    %v3063 = vpack.c.b16 %v3037, %v3035
    %v3064 = vpack.c.b16 %v3038, %v3036
    %v3065 = vpack.c.b16 %v3041, %v3039
    %v3066 = vpack.c.b16 %v3042, %v3040
    %v3067 = vpack.c.b16 %v3045, %v3043
    %v3068 = vpack.c.b16 %v3046, %v3044
    %v3069 = vpack.c.b16 %v3049, %v3047
    %v3070 = vpack.c.b16 %v3050, %v3048
    %v3071 = vpack.c.b16 %v3053, %v3051
    %v3072 = vpack.c.b16 %v3054, %v3052
    %v3073 = vpack.c.b16 %v3057, %v3055
    %v3074 = vpack.c.b16 %v3058, %v3056
    %3091 = vmatprep.subr.bf16.mxu0 %v3060
    %3092 = vmatpush1.bf16.msra.mxu0 %v3059
    %3093 = vmatprep.subr.bf16.mxu0 %v3062
    %3094 = vmatpush1.bf16.msra.mxu0 %v3061
    %3095 = vmatprep.subr.bf16.mxu0 %v3064
    %3096 = vmatpush1.bf16.msra.mxu0 %v3063
    %3097 = vmatprep.subr.bf16.mxu0 %v3066
    %3098 = vmatpush1.bf16.msra.mxu0 %v3065
    %3099 = vmatprep.subr.bf16.mxu0 %v3068
    %3100 = vmatpush1.bf16.msra.mxu0 %v3067
    %3101 = vmatprep.subr.bf16.mxu0 %v3070
    %3102 = vmatpush1.bf16.msra.mxu0 %v3069
    %3103 = vmatprep.subr.bf16.mxu0 %v3072
    %3104 = vmatpush1.bf16.msra.mxu0 %v3071
    %3105 = vmatprep.subr.bf16.mxu0 %v3074
    %3106 = vmatpush1.bf16.msra.mxu0 %v3073
    %3107 = vmatprep.subr.bf16.mxu0 0
    %3108 = vmatpush1.bf16.msra.mxu0 0
    %3109 = vmatprep.subr.bf16.mxu0 0
    %3110 = vmatpush1.bf16.msra.mxu0 0
    %3111 = vmatprep.subr.bf16.mxu0 0
    %3112 = vmatpush1.bf16.msra.mxu0 0
    %3113 = vmatprep.subr.bf16.mxu0 0
    %3114 = vmatpush1.bf16.msra.mxu0 0
    %3115 = vmatprep.subr.bf16.mxu0 0
    %3116 = vmatpush1.bf16.msra.mxu0 0
    %3117 = vmatprep.subr.bf16.mxu0 0
    %3118 = vmatpush1.bf16.msra.mxu0 0
    %3119 = vmatprep.subr.bf16.mxu0 0
    %3120 = vmatpush1.bf16.msra.mxu0 0
    %3121 = vmatprep.subr.bf16.mxu0 0
    %3122 = vmatpush1.bf16.msra.mxu0 0
    %3123 = vmatprep.mubr.bf16.mxu0 0
    %3124 = vmatmul.mubr.bf16.gmra.mrb[0].mxu0 %v2967
    %v3125 = vpop.f32.mrb[0].mxu0
    %v3126 = vadd.f32 %v3004, %v3125
    %v3127 = vpop.f32.mrb[0].mxu0
    %v3128 = vadd.f32 %v3008, %v3127
    %v3129 = vpop.f32.mrb[0].mxu0
    %v3130 = vadd.f32 %v3004, %v3129
    %v3131 = vpop.f32.mrb[0].mxu0
    %v3132 = vadd.f32 %v3008, %v3131
    %3133 = vmatprep.mubr.bf16.mxu0 0
    %3134 = vmatmul.mubr.bf16.gmra.mrb[0].mxu0 %v2968
    %v3135 = vpop.f32.mrb[0].mxu0
    %v3136 = vadd.f32 %v3004, %v3135
    %v3137 = vpop.f32.mrb[0].mxu0
    %v3138 = vadd.f32 %v3008, %v3137
    %v3139 = vpop.f32.mrb[0].mxu0
    %v3140 = vadd.f32 %v3004, %v3139
    %v3141 = vpop.f32.mrb[0].mxu0
    %v3142 = vadd.f32 %v3008, %v3141
    %3143 = vmatprep.mubr.bf16.mxu0 0
    %3144 = vmatmul.mubr.bf16.gmra.mrb[0].mxu0 %v2969
    %v3145 = vpop.f32.mrb[0].mxu0
    %v3146 = vadd.f32 %v3004, %v3145
    %v3147 = vpop.f32.mrb[0].mxu0
    %v3148 = vadd.f32 %v3008, %v3147
    %v3149 = vpop.f32.mrb[0].mxu0
    %v3150 = vadd.f32 %v3004, %v3149
    %v3151 = vpop.f32.mrb[0].mxu0
    %v3152 = vadd.f32 %v3008, %v3151
    %3153 = vmatprep.mubr.bf16.mxu0 0
    %3154 = vmatmul.mubr.bf16.gmra.mrb[0].mxu0 %v2970
    %v3155 = vpop.f32.mrb[0].mxu0
    %v3156 = vadd.f32 %v3004, %v3155
    %v3157 = vpop.f32.mrb[0].mxu0
    %v3158 = vadd.f32 %v3008, %v3157
    %v3159 = vpop.f32.mrb[0].mxu0
    %v3160 = vadd.f32 %v3004, %v3159
    %v3161 = vpop.f32.mrb[0].mxu0
    %v3162 = vadd.f32 %v3008, %v3161
    %3163 = vmatprep.mubr.bf16.mxu0 0
    %3164 = vmatmul.mubr.bf16.gmra.mrb[0].mxu0 %v2971
    %v3165 = vpop.f32.mrb[0].mxu0
    %v3166 = vadd.f32 %v3004, %v3165
    %v3167 = vpop.f32.mrb[0].mxu0
    %v3168 = vadd.f32 %v3008, %v3167
    %v3169 = vpop.f32.mrb[0].mxu0
    %v3170 = vadd.f32 %v3004, %v3169
    %v3171 = vpop.f32.mrb[0].mxu0
    %v3172 = vadd.f32 %v3008, %v3171
    %3173 = vmatprep.mubr.bf16.mxu0 0
    %3174 = vmatmul.mubr.bf16.gmra.mrb[0].mxu0 %v2972
    %v3175 = vpop.f32.mrb[0].mxu0
    %v3176 = vadd.f32 %v3004, %v3175
    %v3177 = vpop.f32.mrb[0].mxu0
    %v3178 = vadd.f32 %v3008, %v3177
    %v3179 = vpop.f32.mrb[0].mxu0
    %v3180 = vadd.f32 %v3004, %v3179
    %v3181 = vpop.f32.mrb[0].mxu0
    %v3182 = vadd.f32 %v3008, %v3181
    %3183 = vmatprep.mubr.bf16.mxu0 0
    %3184 = vmatmul.mubr.bf16.gmra.mrb[0].mxu0 %v2973
    %v3185 = vpop.f32.mrb[0].mxu0
    %v3186 = vadd.f32 %v3004, %v3185
    %v3187 = vpop.f32.mrb[0].mxu0
    %v3188 = vadd.f32 %v3008, %v3187
    %v3189 = vpop.f32.mrb[0].mxu0
    %v3190 = vadd.f32 %v3004, %v3189
    %v3191 = vpop.f32.mrb[0].mxu0
    %v3192 = vadd.f32 %v3008, %v3191
    %3193 = vmatprep.mubr.bf16.mxu0 0
    %3194 = vmatmul.mubr.bf16.gmra.mrb[0].mxu0 %v2974
    %v3195 = vpop.f32.mrb[0].mxu0
    %v3196 = vadd.f32 %v3004, %v3195
    %v3197 = vpop.f32.mrb[0].mxu0
    %v3198 = vadd.f32 %v3008, %v3197
    %v3199 = vpop.f32.mrb[0].mxu0
    %v3200 = vadd.f32 %v3004, %v3199
    %v3201 = vpop.f32.mrb[0].mxu0
    %v3202 = vadd.f32 %v3008, %v3201
    %3203 = vmatprep.mubr.bf16.mxu0 0
    %3204 = vmatmul.mubr.bf16.gmra.mrb[0].mxu0 %v2975
    %v3205 = vpop.f32.mrb[0].mxu0
    %v3206 = vadd.f32 %v3004, %v3205
    %v3207 = vpop.f32.mrb[0].mxu0
    %v3208 = vadd.f32 %v3008, %v3207
    %v3209 = vpop.f32.mrb[0].mxu0
    %v3210 = vadd.f32 %v3004, %v3209
    %v3211 = vpop.f32.mrb[0].mxu0
    %v3212 = vadd.f32 %v3008, %v3211
    %3213 = vmatprep.mubr.bf16.mxu0 0
    %3214 = vmatmul.mubr.bf16.gmra.mrb[0].mxu0 %v2976
    %v3215 = vpop.f32.mrb[0].mxu0
    %v3216 = vadd.f32 %v3004, %v3215
    %v3217 = vpop.f32.mrb[0].mxu0
    %v3218 = vadd.f32 %v3008, %v3217
    %v3219 = vpop.f32.mrb[0].mxu0
    %v3220 = vadd.f32 %v3004, %v3219
    %v3221 = vpop.f32.mrb[0].mxu0
    %v3222 = vadd.f32 %v3008, %v3221
    %3223 = vmatprep.mubr.bf16.mxu0 0
    %3224 = vmatmul.mubr.bf16.gmra.mrb[0].mxu0 %v2977
    %v3225 = vpop.f32.mrb[0].mxu0
    %v3226 = vadd.f32 %v3004, %v3225
    %v3227 = vpop.f32.mrb[0].mxu0
    %v3228 = vadd.f32 %v3008, %v3227
    %v3229 = vpop.f32.mrb[0].mxu0
    %v3230 = vadd.f32 %v3004, %v3229
    %v3231 = vpop.f32.mrb[0].mxu0
    %v3232 = vadd.f32 %v3008, %v3231
    %3233 = vmatprep.mubr.bf16.mxu0 0
    %3234 = vmatmul.mubr.bf16.gmra.mrb[0].mxu0 %v2978
    %v3235 = vpop.f32.mrb[0].mxu0
    %v3236 = vadd.f32 %v3004, %v3235
    %v3237 = vpop.f32.mrb[0].mxu0
    %v3238 = vadd.f32 %v3008, %v3237
    %v3239 = vpop.f32.mrb[0].mxu0
    %v3240 = vadd.f32 %v3004, %v3239
    %v3241 = vpop.f32.mrb[0].mxu0
    %v3242 = vadd.f32 %v3008, %v3241
    %3243 = vmatprep.mubr.bf16.mxu0 0
    %3244 = vmatmul.mubr.bf16.gmra.mrb[0].mxu0 %v2979
    %v3245 = vpop.f32.mrb[0].mxu0
    %v3246 = vadd.f32 %v3004, %v3245
    %v3247 = vpop.f32.mrb[0].mxu0
    %v3248 = vadd.f32 %v3008, %v3247
    %v3249 = vpop.f32.mrb[0].mxu0
    %v3250 = vadd.f32 %v3004, %v3249
    %v3251 = vpop.f32.mrb[0].mxu0
    %v3252 = vadd.f32 %v3008, %v3251
    %3253 = vmatprep.mubr.bf16.mxu0 0
    %3254 = vmatmul.mubr.bf16.gmra.mrb[0].mxu0 %v2980
    %v3255 = vpop.f32.mrb[0].mxu0
    %v3256 = vadd.f32 %v3004, %v3255
    %v3257 = vpop.f32.mrb[0].mxu0
    %v3258 = vadd.f32 %v3008, %v3257
    %v3259 = vpop.f32.mrb[0].mxu0
    %v3260 = vadd.f32 %v3004, %v3259
    %v3261 = vpop.f32.mrb[0].mxu0
    %v3262 = vadd.f32 %v3008, %v3261
    %3263 = vmatprep.mubr.bf16.mxu0 0
    %3264 = vmatmul.mubr.bf16.gmra.mrb[0].mxu0 %v2981
    %v3265 = vpop.f32.mrb[0].mxu0
    %v3266 = vadd.f32 %v3004, %v3265
    %v3267 = vpop.f32.mrb[0].mxu0
    %v3268 = vadd.f32 %v3008, %v3267
    %v3269 = vpop.f32.mrb[0].mxu0
    %v3270 = vadd.f32 %v3004, %v3269
    %v3271 = vpop.f32.mrb[0].mxu0
    %v3272 = vadd.f32 %v3008, %v3271
    %3273 = vmatprep.mubr.bf16.mxu0 0
    %3274 = vmatmul.mubr.bf16.gmra.mrb[0].mxu0 %v2982
    %v3275 = vpop.f32.mrb[0].mxu0
    %v3276 = vadd.f32 %v3004, %v3275
    %v3277 = vpop.f32.mrb[0].mxu0
    %v3278 = vadd.f32 %v3008, %v3277
    %v3279 = vpop.f32.mrb[0].mxu0
    %v3280 = vadd.f32 %v3004, %v3279
    %v3281 = vpop.f32.mrb[0].mxu0
    %v3282 = vadd.f32 %v3008, %v3281
    %3283 = vdwg.mxu0
    %v3284 = vtanh.pop %v3126
    %v3285 = vtanh.pop %v3130
    %v3286 = vtanh.pop %v3136
    %v3287 = vtanh.pop %v3140
    %v3288 = vtanh.pop %v3146
    %v3289 = vtanh.pop %v3150
    %v3290 = vtanh.pop %v3156
    %v3291 = vtanh.pop %v3160
    %v3292 = vtanh.pop %v3166
    %v3293 = vtanh.pop %v3170
    %v3294 = vtanh.pop %v3176
    %v3295 = vtanh.pop %v3180
    %v3296 = vtanh.pop %v3186
    %v3297 = vtanh.pop %v3190
    %v3298 = vtanh.pop %v3196
    %v3299 = vtanh.pop %v3200
    %v3300 = vtanh.pop %v3206
    %v3301 = vtanh.pop %v3210
    %v3302 = vtanh.pop %v3216
    %v3303 = vtanh.pop %v3220
    %v3304 = vtanh.pop %v3226
    %v3305 = vtanh.pop %v3230
    %v3306 = vtanh.pop %v3236
    %v3307 = vtanh.pop %v3240
    %v3308 = vtanh.pop %v3246
    %v3309 = vtanh.pop %v3250
    %v3310 = vtanh.pop %v3256
    %v3311 = vtanh.pop %v3260
    %v3312 = vtanh.pop %v3266
    %v3313 = vtanh.pop %v3270
    %v3314 = vtanh.pop %v3276
    %v3315 = vtanh.pop %v3280
    %v3316 = vmul.f32 %v205, %v3284
    %v3317 = vmul.f32 %v206, %v3285
    %v3318 = vmul.f32 %v207, %v3286
    %v3319 = vmul.f32 %v208, %v3287
    %v3320 = vmul.f32 %v209, %v3288
    %v3321 = vmul.f32 %v210, %v3289
    %v3322 = vmul.f32 %v211, %v3290
    %v3323 = vmul.f32 %v212, %v3291
    %v3324 = vmul.f32 %v213, %v3292
    %v3325 = vmul.f32 %v214, %v3293
    %v3326 = vmul.f32 %v215, %v3294
    %v3327 = vmul.f32 %v216, %v3295
    %v3328 = vmul.f32 %v217, %v3296
    %v3329 = vmul.f32 %v218, %v3297
    %v3330 = vmul.f32 %v219, %v3298
    %v3331 = vmul.f32 %v220, %v3299
    %v3332 = vmul.f32 %v221, %v3300
    %v3333 = vmul.f32 %v222, %v3301
    %v3334 = vmul.f32 %v223, %v3302
    %v3335 = vmul.f32 %v224, %v3303
    %v3336 = vmul.f32 %v225, %v3304
    %v3337 = vmul.f32 %v226, %v3305
    %v3338 = vmul.f32 %v227, %v3306
    %v3339 = vmul.f32 %v228, %v3307
    %v3340 = vmul.f32 %v229, %v3308
    %v3341 = vmul.f32 %v230, %v3309
    %v3342 = vmul.f32 %v231, %v3310
    %v3343 = vmul.f32 %v232, %v3311
    %v3344 = vmul.f32 %v233, %v3312
    %v3345 = vmul.f32 %v234, %v3313
    %v3346 = vmul.f32 %v235, %v3314
    %v3347 = vmul.f32 %v236, %v3315
    %v3348 = vadd.f32 %v3316, %v3128
    %v3349 = vadd.f32 %v3317, %v3132
    %v3350 = vadd.f32 %v3318, %v3138
    %v3351 = vadd.f32 %v3319, %v3142
    %v3352 = vadd.f32 %v3320, %v3148
    %v3353 = vadd.f32 %v3321, %v3152
    %v3354 = vadd.f32 %v3322, %v3158
    %v3355 = vadd.f32 %v3323, %v3162
    %v3356 = vadd.f32 %v3324, %v3168
    %v3357 = vadd.f32 %v3325, %v3172
    %v3358 = vadd.f32 %v3326, %v3178
    %v3359 = vadd.f32 %v3327, %v3182
    %v3360 = vadd.f32 %v3328, %v3188
    %v3361 = vadd.f32 %v3329, %v3192
    %v3362 = vadd.f32 %v3330, %v3198
    %v3363 = vadd.f32 %v3331, %v3202
    %v3364 = vadd.f32 %v3332, %v3208
    %v3365 = vadd.f32 %v3333, %v3212
    %v3366 = vadd.f32 %v3334, %v3218
    %v3367 = vadd.f32 %v3335, %v3222
    %v3368 = vadd.f32 %v3336, %v3228
    %v3369 = vadd.f32 %v3337, %v3232
    %v3370 = vadd.f32 %v3338, %v3238
    %v3371 = vadd.f32 %v3339, %v3242
    %v3372 = vadd.f32 %v3340, %v3248
    %v3373 = vadd.f32 %v3341, %v3252
    %v3374 = vadd.f32 %v3342, %v3258
    %v3375 = vadd.f32 %v3343, %v3262
    %v3376 = vadd.f32 %v3344, %v3268
    %v3377 = vadd.f32 %v3345, %v3272
    %v3378 = vadd.f32 %v3346, %v3278
    %v3379 = vadd.f32 %v3347, %v3282
    %v3380 = vpack.c.bf16 %v3349, %v3348
    %v3381 = vpack.c.bf16 %v3351, %v3350
    %v3382 = vpack.c.bf16 %v3353, %v3352
    %v3383 = vpack.c.bf16 %v3355, %v3354
    %v3384 = vpack.c.bf16 %v3357, %v3356
    %v3385 = vpack.c.bf16 %v3359, %v3358
    %v3386 = vpack.c.bf16 %v3361, %v3360
    %v3387 = vpack.c.bf16 %v3363, %v3362
    %v3388 = vpack.c.bf16 %v3365, %v3364
    %v3389 = vpack.c.bf16 %v3367, %v3366
    %v3390 = vpack.c.bf16 %v3369, %v3368
    %v3391 = vpack.c.bf16 %v3371, %v3370
    %v3392 = vpack.c.bf16 %v3373, %v3372
    %v3393 = vpack.c.bf16 %v3375, %v3374
    %v3394 = vpack.c.bf16 %v3377, %v3376
    %v3395 = vpack.c.bf16 %v3379, %v3378
    %v3396 = vld [vmem:[#allocation8] sm:$0xf]
    %v3397 = vld [vmem:[#allocation8 + $0x4] sm:$0xf]
    %v3398 = vld [vmem:[#allocation8 + $0x8] sm:$0xf]
    %v3399 = vld [vmem:[#allocation8 + $0xc] sm:$0xf]
    %v3400 = vld [vmem:[#allocation8 + $0x10] sm:$0xf]
    %v3401 = vld [vmem:[#allocation8 + $0x14] sm:$0xf]
    %v3402 = vld [vmem:[#allocation8 + $0x18] sm:$0xf]
    %v3403 = vld [vmem:[#allocation8 + $0x1c] sm:$0xf]
    %v3404 = vld [vmem:[#allocation8 + $0x20] sm:$0xf]
    %v3405 = vld [vmem:[#allocation8 + $0x24] sm:$0xf]
    %v3406 = vld [vmem:[#allocation8 + $0x28] sm:$0xf]
    %v3407 = vld [vmem:[#allocation8 + $0x2c] sm:$0xf]
    %v3408 = vld [vmem:[#allocation8 + $0x30] sm:$0xf]
    %v3409 = vld [vmem:[#allocation8 + $0x34] sm:$0xf]
    %v3410 = vld [vmem:[#allocation8 + $0x38] sm:$0xf]
    %v3411 = vld [vmem:[#allocation8 + $0x3c] sm:$0xf]
    %v3412 = vld [vmem:[%s5] sm:$0x1]
    %v3414 = vlaneseq
    %v3415 = vshrl.u32 %v3414, 7
    %v3416 = vsub.s32 0, %v3415
    %v3417 = vrot.slane %v3412, %v3416
    %v3435 = vunpack.c.l.b16 %v3396
    %v3436 = vunpack.c.l.b16 %v3397
    %v3437 = vunpack.c.l.b16 %v3398
    %v3438 = vunpack.c.l.b16 %v3399
    %v3439 = vunpack.c.l.b16 %v3400
    %v3440 = vunpack.c.l.b16 %v3401
    %v3441 = vunpack.c.l.b16 %v3402
    %v3442 = vunpack.c.l.b16 %v3403
    %v3443 = vunpack.c.l.b16 %v3404
    %v3444 = vunpack.c.l.b16 %v3405
    %v3445 = vunpack.c.l.b16 %v3406
    %v3446 = vunpack.c.l.b16 %v3407
    %v3447 = vunpack.c.l.b16 %v3408
    %v3448 = vunpack.c.l.b16 %v3409
    %v3449 = vunpack.c.l.b16 %v3410
    %v3450 = vunpack.c.l.b16 %v3411
    %v3451 = vpack.c.b16 %v3436, %v3435
    %v3452 = vpack.c.b16 %v3438, %v3437
    %v3453 = vpack.c.b16 %v3440, %v3439
    %v3454 = vpack.c.b16 %v3442, %v3441
    %v3455 = vpack.c.b16 %v3444, %v3443
    %v3456 = vpack.c.b16 %v3446, %v3445
    %v3457 = vpack.c.b16 %v3448, %v3447
    %v3458 = vpack.c.b16 %v3450, %v3449
    %3467 = vmatprep.subr.bf16.mxu0 0
    %3468 = vmatpush1.bf16.msra.mxu0 %v3451
    %3469 = vmatprep.subr.bf16.mxu0 0
    %3470 = vmatpush1.bf16.msra.mxu0 %v3452
    %3471 = vmatprep.subr.bf16.mxu0 0
    %3472 = vmatpush1.bf16.msra.mxu0 %v3453
    %3473 = vmatprep.subr.bf16.mxu0 0
    %3474 = vmatpush1.bf16.msra.mxu0 %v3454
    %3475 = vmatprep.subr.bf16.mxu0 0
    %3476 = vmatpush1.bf16.msra.mxu0 %v3455
    %3477 = vmatprep.subr.bf16.mxu0 0
    %3478 = vmatpush1.bf16.msra.mxu0 %v3456
    %3479 = vmatprep.subr.bf16.mxu0 0
    %3480 = vmatpush1.bf16.msra.mxu0 %v3457
    %3481 = vmatprep.subr.bf16.mxu0 0
    %3482 = vmatpush1.bf16.msra.mxu0 %v3458
    %3483 = vmatprep.subr.bf16.mxu0 0
    %3484 = vmatpush1.bf16.msra.mxu0 0
    %3485 = vmatprep.subr.bf16.mxu0 0
    %3486 = vmatpush1.bf16.msra.mxu0 0
    %3487 = vmatprep.subr.bf16.mxu0 0
    %3488 = vmatpush1.bf16.msra.mxu0 0
    %3489 = vmatprep.subr.bf16.mxu0 0
    %3490 = vmatpush1.bf16.msra.mxu0 0
    %3491 = vmatprep.subr.bf16.mxu0 0
    %3492 = vmatpush1.bf16.msra.mxu0 0
    %3493 = vmatprep.subr.bf16.mxu0 0
    %3494 = vmatpush1.bf16.msra.mxu0 0
    %3495 = vmatprep.subr.bf16.mxu0 0
    %3496 = vmatpush1.bf16.msra.mxu0 0
    %3497 = vmatprep.subr.bf16.mxu0 0
    %3498 = vmatpush1.bf16.msra.mxu0 0
    %3499 = vmatprep.mubr.bf16.mxu0 0
    %3500 = vmatmul.mubr.bf16.gmra.mrb[0].mxu0 %v3380
    %v3501 = vpop.f32.mrb[0].mxu0
    %v3502 = vadd.f32 %v3417, %v3501
    %v3503 = vpop.f32.mrb[0].mxu0
    %v3504 = vpop.f32.mrb[0].mxu0
    %v3505 = vadd.f32 %v3417, %v3504
    %v3506 = vpop.f32.mrb[0].mxu0
    %3507 = vmatprep.mubr.bf16.mxu0 0
    %3508 = vmatmul.mubr.bf16.gmra.mrb[0].mxu0 %v3381
    %v3509 = vpop.f32.mrb[0].mxu0
    %v3510 = vadd.f32 %v3417, %v3509
    %v3511 = vpop.f32.mrb[0].mxu0
    %v3512 = vpop.f32.mrb[0].mxu0
    %v3513 = vadd.f32 %v3417, %v3512
    %v3514 = vpop.f32.mrb[0].mxu0
    %3515 = vmatprep.mubr.bf16.mxu0 0
    %3516 = vmatmul.mubr.bf16.gmra.mrb[0].mxu0 %v3382
    %v3517 = vpop.f32.mrb[0].mxu0
    %v3518 = vadd.f32 %v3417, %v3517
    %v3519 = vpop.f32.mrb[0].mxu0
    %v3520 = vpop.f32.mrb[0].mxu0
    %v3521 = vadd.f32 %v3417, %v3520
    %v3522 = vpop.f32.mrb[0].mxu0
    %3523 = vmatprep.mubr.bf16.mxu0 0
    %3524 = vmatmul.mubr.bf16.gmra.mrb[0].mxu0 %v3383
    %v3525 = vpop.f32.mrb[0].mxu0
    %v3526 = vadd.f32 %v3417, %v3525
    %v3527 = vpop.f32.mrb[0].mxu0
    %v3528 = vpop.f32.mrb[0].mxu0
    %v3529 = vadd.f32 %v3417, %v3528
    %v3530 = vpop.f32.mrb[0].mxu0
    %3531 = vmatprep.mubr.bf16.mxu0 0
    %3532 = vmatmul.mubr.bf16.gmra.mrb[0].mxu0 %v3384
    %v3533 = vpop.f32.mrb[0].mxu0
    %v3534 = vadd.f32 %v3417, %v3533
    %v3535 = vpop.f32.mrb[0].mxu0
    %v3536 = vpop.f32.mrb[0].mxu0
    %v3537 = vadd.f32 %v3417, %v3536
    %v3538 = vpop.f32.mrb[0].mxu0
    %3539 = vmatprep.mubr.bf16.mxu0 0
    %3540 = vmatmul.mubr.bf16.gmra.mrb[0].mxu0 %v3385
    %v3541 = vpop.f32.mrb[0].mxu0
    %v3542 = vadd.f32 %v3417, %v3541
    %v3543 = vpop.f32.mrb[0].mxu0
    %v3544 = vpop.f32.mrb[0].mxu0
    %v3545 = vadd.f32 %v3417, %v3544
    %v3546 = vpop.f32.mrb[0].mxu0
    %3547 = vmatprep.mubr.bf16.mxu0 0
    %3548 = vmatmul.mubr.bf16.gmra.mrb[0].mxu0 %v3386
    %v3549 = vpop.f32.mrb[0].mxu0
    %v3550 = vadd.f32 %v3417, %v3549
    %v3551 = vpop.f32.mrb[0].mxu0
    %v3552 = vpop.f32.mrb[0].mxu0
    %v3553 = vadd.f32 %v3417, %v3552
    %v3554 = vpop.f32.mrb[0].mxu0
    %3555 = vmatprep.mubr.bf16.mxu0 0
    %3556 = vmatmul.mubr.bf16.gmra.mrb[0].mxu0 %v3387
    %v3557 = vpop.f32.mrb[0].mxu0
    %v3558 = vadd.f32 %v3417, %v3557
    %v3559 = vpop.f32.mrb[0].mxu0
    %v3560 = vpop.f32.mrb[0].mxu0
    %v3561 = vadd.f32 %v3417, %v3560
    %v3562 = vpop.f32.mrb[0].mxu0
    %3563 = vmatprep.mubr.bf16.mxu0 0
    %3564 = vmatmul.mubr.bf16.gmra.mrb[0].mxu0 %v3388
    %v3565 = vpop.f32.mrb[0].mxu0
    %v3566 = vadd.f32 %v3417, %v3565
    %v3567 = vpop.f32.mrb[0].mxu0
    %v3568 = vpop.f32.mrb[0].mxu0
    %v3569 = vadd.f32 %v3417, %v3568
    %v3570 = vpop.f32.mrb[0].mxu0
    %3571 = vmatprep.mubr.bf16.mxu0 0
    %3572 = vmatmul.mubr.bf16.gmra.mrb[0].mxu0 %v3389
    %v3573 = vpop.f32.mrb[0].mxu0
    %v3574 = vadd.f32 %v3417, %v3573
    %v3575 = vpop.f32.mrb[0].mxu0
    %v3576 = vpop.f32.mrb[0].mxu0
    %v3577 = vadd.f32 %v3417, %v3576
    %v3578 = vpop.f32.mrb[0].mxu0
    %3579 = vmatprep.mubr.bf16.mxu0 0
    %3580 = vmatmul.mubr.bf16.gmra.mrb[0].mxu0 %v3390
    %v3581 = vpop.f32.mrb[0].mxu0
    %v3582 = vadd.f32 %v3417, %v3581
    %v3583 = vpop.f32.mrb[0].mxu0
    %v3584 = vpop.f32.mrb[0].mxu0
    %v3585 = vadd.f32 %v3417, %v3584
    %v3586 = vpop.f32.mrb[0].mxu0
    %3587 = vmatprep.mubr.bf16.mxu0 0
    %3588 = vmatmul.mubr.bf16.gmra.mrb[0].mxu0 %v3391
    %v3589 = vpop.f32.mrb[0].mxu0
    %v3590 = vadd.f32 %v3417, %v3589
    %v3591 = vpop.f32.mrb[0].mxu0
    %v3592 = vpop.f32.mrb[0].mxu0
    %v3593 = vadd.f32 %v3417, %v3592
    %v3594 = vpop.f32.mrb[0].mxu0
    %3595 = vmatprep.mubr.bf16.mxu0 0
    %3596 = vmatmul.mubr.bf16.gmra.mrb[0].mxu0 %v3392
    %v3597 = vpop.f32.mrb[0].mxu0
    %v3598 = vadd.f32 %v3417, %v3597
    %v3599 = vpop.f32.mrb[0].mxu0
    %v3600 = vpop.f32.mrb[0].mxu0
    %v3601 = vadd.f32 %v3417, %v3600
    %v3602 = vpop.f32.mrb[0].mxu0
    %3603 = vmatprep.mubr.bf16.mxu0 0
    %3604 = vmatmul.mubr.bf16.gmra.mrb[0].mxu0 %v3393
    %v3605 = vpop.f32.mrb[0].mxu0
    %v3606 = vadd.f32 %v3417, %v3605
    %v3607 = vpop.f32.mrb[0].mxu0
    %v3608 = vpop.f32.mrb[0].mxu0
    %v3609 = vadd.f32 %v3417, %v3608
    %v3610 = vpop.f32.mrb[0].mxu0
    %3611 = vmatprep.mubr.bf16.mxu0 0
    %3612 = vmatmul.mubr.bf16.gmra.mrb[0].mxu0 %v3394
    %v3613 = vpop.f32.mrb[0].mxu0
    %v3614 = vadd.f32 %v3417, %v3613
    %v3615 = vpop.f32.mrb[0].mxu0
    %v3616 = vpop.f32.mrb[0].mxu0
    %v3617 = vadd.f32 %v3417, %v3616
    %v3618 = vpop.f32.mrb[0].mxu0
    %3619 = vmatprep.mubr.bf16.mxu0 0
    %3620 = vmatmul.mubr.bf16.gmra.mrb[0].mxu0 %v3395
    %v3621 = vpop.f32.mrb[0].mxu0
    %v3622 = vadd.f32 %v3417, %v3621
    %v3623 = vpop.f32.mrb[0].mxu0
    %v3624 = vpop.f32.mrb[0].mxu0
    %v3625 = vadd.f32 %v3417, %v3624
    %v3626 = vpop.f32.mrb[0].mxu0
    %3627 = vdwg.mxu0
    %v3628 = vmax.f32 %v3502, 0.0
    %v3629 = vmax.f32 %v3505, 0.0
    %v3630 = vmax.f32 %v3510, 0.0
    %v3631 = vmax.f32 %v3513, 0.0
    %v3632 = vmax.f32 %v3518, 0.0
    %v3633 = vmax.f32 %v3521, 0.0
    %v3634 = vmax.f32 %v3526, 0.0
    %v3635 = vmax.f32 %v3529, 0.0
    %v3636 = vmax.f32 %v3534, 0.0
    %v3637 = vmax.f32 %v3537, 0.0
    %v3638 = vmax.f32 %v3542, 0.0
    %v3639 = vmax.f32 %v3545, 0.0
    %v3640 = vmax.f32 %v3550, 0.0
    %v3641 = vmax.f32 %v3553, 0.0
    %v3642 = vmax.f32 %v3558, 0.0
    %v3643 = vmax.f32 %v3561, 0.0
    %v3644 = vmax.f32 %v3566, 0.0
    %v3645 = vmax.f32 %v3569, 0.0
    %v3646 = vmax.f32 %v3574, 0.0
    %v3647 = vmax.f32 %v3577, 0.0
    %v3648 = vmax.f32 %v3582, 0.0
    %v3649 = vmax.f32 %v3585, 0.0
    %v3650 = vmax.f32 %v3590, 0.0
    %v3651 = vmax.f32 %v3593, 0.0
    %v3652 = vmax.f32 %v3598, 0.0
    %v3653 = vmax.f32 %v3601, 0.0
    %v3654 = vmax.f32 %v3606, 0.0
    %v3655 = vmax.f32 %v3609, 0.0
    %v3656 = vmax.f32 %v3614, 0.0
    %v3657 = vmax.f32 %v3617, 0.0
    %v3658 = vmax.f32 %v3622, 0.0
    %v3659 = vmax.f32 %v3625, 0.0
    %v3660 = vpack.c.bf16 %v3629, %v3628
    %v3661 = vpack.c.bf16 %v3631, %v3630
    %v3662 = vpack.c.bf16 %v3633, %v3632
    %v3663 = vpack.c.bf16 %v3635, %v3634
    %v3664 = vpack.c.bf16 %v3637, %v3636
    %v3665 = vpack.c.bf16 %v3639, %v3638
    %v3666 = vpack.c.bf16 %v3641, %v3640
    %v3667 = vpack.c.bf16 %v3643, %v3642
    %v3668 = vpack.c.bf16 %v3645, %v3644
    %v3669 = vpack.c.bf16 %v3647, %v3646
    %v3670 = vpack.c.bf16 %v3649, %v3648
    %v3671 = vpack.c.bf16 %v3651, %v3650
    %v3672 = vpack.c.bf16 %v3653, %v3652
    %v3673 = vpack.c.bf16 %v3655, %v3654
    %v3674 = vpack.c.bf16 %v3657, %v3656
    %v3675 = vpack.c.bf16 %v3659, %v3658
    %v3676 = vld [vmem:[#allocation10] sm:$0xf]
    %v3677 = vld [vmem:[#allocation10 + $0x4] sm:$0xf]
    %v3678 = vld [vmem:[#allocation10 + $0x8] sm:$0xf]
    %v3679 = vld [vmem:[#allocation10 + $0xc] sm:$0xf]
    %v3680 = vld [vmem:[#allocation10 + $0x10] sm:$0xf]
    %v3681 = vld [vmem:[#allocation10 + $0x14] sm:$0xf]
    %v3682 = vld [vmem:[#allocation10 + $0x18] sm:$0xf]
    %v3683 = vld [vmem:[#allocation10 + $0x1c] sm:$0xf]
    %v3684 = vld [vmem:[#allocation10 + $0x20] sm:$0xf]
    %v3685 = vld [vmem:[#allocation10 + $0x24] sm:$0xf]
    %v3686 = vld [vmem:[#allocation10 + $0x28] sm:$0xf]
    %v3687 = vld [vmem:[#allocation10 + $0x2c] sm:$0xf]
    %v3688 = vld [vmem:[#allocation10 + $0x30] sm:$0xf]
    %v3689 = vld [vmem:[#allocation10 + $0x34] sm:$0xf]
    %v3690 = vld [vmem:[#allocation10 + $0x38] sm:$0xf]
    %v3691 = vld [vmem:[#allocation10 + $0x3c] sm:$0xf]
    %v3692 = vld [vmem:[%s7] sm:$0x1]
    %v3694 = vlaneseq
    %v3695 = vshrl.u32 %v3694, 7
    %v3696 = vsub.s32 0, %v3695
    %v3697 = vrot.slane %v3692, %v3696
    %v3715 = vunpack.c.l.b16 %v3676
    %v3716 = vunpack.c.l.b16 %v3677
    %v3717 = vunpack.c.l.b16 %v3678
    %v3718 = vunpack.c.l.b16 %v3679
    %v3719 = vunpack.c.l.b16 %v3680
    %v3720 = vunpack.c.l.b16 %v3681
    %v3721 = vunpack.c.l.b16 %v3682
    %v3722 = vunpack.c.l.b16 %v3683
    %v3723 = vunpack.c.l.b16 %v3684
    %v3724 = vunpack.c.l.b16 %v3685
    %v3725 = vunpack.c.l.b16 %v3686
    %v3726 = vunpack.c.l.b16 %v3687
    %v3727 = vunpack.c.l.b16 %v3688
    %v3728 = vunpack.c.l.b16 %v3689
    %v3729 = vunpack.c.l.b16 %v3690
    %v3730 = vunpack.c.l.b16 %v3691
    %v3731 = vpack.c.b16 %v3716, %v3715
    %v3732 = vpack.c.b16 %v3718, %v3717
    %v3733 = vpack.c.b16 %v3720, %v3719
    %v3734 = vpack.c.b16 %v3722, %v3721
    %v3735 = vpack.c.b16 %v3724, %v3723
    %v3736 = vpack.c.b16 %v3726, %v3725
    %v3737 = vpack.c.b16 %v3728, %v3727
    %v3738 = vpack.c.b16 %v3730, %v3729
    %3747 = vmatprep.subr.bf16.mxu0 0
    %3748 = vmatpush1.bf16.msra.mxu0 %v3731
    %3749 = vmatprep.subr.bf16.mxu0 0
    %3750 = vmatpush1.bf16.msra.mxu0 %v3732
    %3751 = vmatprep.subr.bf16.mxu0 0
    %3752 = vmatpush1.bf16.msra.mxu0 %v3733
    %3753 = vmatprep.subr.bf16.mxu0 0
    %3754 = vmatpush1.bf16.msra.mxu0 %v3734
    %3755 = vmatprep.subr.bf16.mxu0 0
    %3756 = vmatpush1.bf16.msra.mxu0 %v3735
    %3757 = vmatprep.subr.bf16.mxu0 0
    %3758 = vmatpush1.bf16.msra.mxu0 %v3736
    %3759 = vmatprep.subr.bf16.mxu0 0
    %3760 = vmatpush1.bf16.msra.mxu0 %v3737
    %3761 = vmatprep.subr.bf16.mxu0 0
    %3762 = vmatpush1.bf16.msra.mxu0 %v3738
    %3763 = vmatprep.subr.bf16.mxu0 0
    %3764 = vmatpush1.bf16.msra.mxu0 0
    %3765 = vmatprep.subr.bf16.mxu0 0
    %3766 = vmatpush1.bf16.msra.mxu0 0
    %3767 = vmatprep.subr.bf16.mxu0 0
    %3768 = vmatpush1.bf16.msra.mxu0 0
    %3769 = vmatprep.subr.bf16.mxu0 0
    %3770 = vmatpush1.bf16.msra.mxu0 0
    %3771 = vmatprep.subr.bf16.mxu0 0
    %3772 = vmatpush1.bf16.msra.mxu0 0
    %3773 = vmatprep.subr.bf16.mxu0 0
    %3774 = vmatpush1.bf16.msra.mxu0 0
    %3775 = vmatprep.subr.bf16.mxu0 0
    %3776 = vmatpush1.bf16.msra.mxu0 0
    %3777 = vmatprep.subr.bf16.mxu0 0
    %3778 = vmatpush1.bf16.msra.mxu0 0
    %3779 = vmatprep.mubr.bf16.mxu0 0
    %3780 = vmatmul.mubr.bf16.gmra.mrb[0].mxu0 %v3660
    %v3781 = vpop.f32.mrb[0].mxu0
    %v3782 = vadd.f32 %v3697, %v3781
    %v3783 = vpop.f32.mrb[0].mxu0
    %v3784 = vpop.f32.mrb[0].mxu0
    %v3785 = vadd.f32 %v3697, %v3784
    %v3786 = vpop.f32.mrb[0].mxu0
    %3787 = vmatprep.mubr.bf16.mxu0 0
    %3788 = vmatmul.mubr.bf16.gmra.mrb[0].mxu0 %v3661
    %v3789 = vpop.f32.mrb[0].mxu0
    %v3790 = vadd.f32 %v3697, %v3789
    %v3791 = vpop.f32.mrb[0].mxu0
    %v3792 = vpop.f32.mrb[0].mxu0
    %v3793 = vadd.f32 %v3697, %v3792
    %v3794 = vpop.f32.mrb[0].mxu0
    %3795 = vmatprep.mubr.bf16.mxu0 0
    %3796 = vmatmul.mubr.bf16.gmra.mrb[0].mxu0 %v3662
    %v3797 = vpop.f32.mrb[0].mxu0
    %v3798 = vadd.f32 %v3697, %v3797
    %v3799 = vpop.f32.mrb[0].mxu0
    %v3800 = vpop.f32.mrb[0].mxu0
    %v3801 = vadd.f32 %v3697, %v3800
    %v3802 = vpop.f32.mrb[0].mxu0
    %3803 = vmatprep.mubr.bf16.mxu0 0
    %3804 = vmatmul.mubr.bf16.gmra.mrb[0].mxu0 %v3663
    %v3805 = vpop.f32.mrb[0].mxu0
    %v3806 = vadd.f32 %v3697, %v3805
    %v3807 = vpop.f32.mrb[0].mxu0
    %v3808 = vpop.f32.mrb[0].mxu0
    %v3809 = vadd.f32 %v3697, %v3808
    %v3810 = vpop.f32.mrb[0].mxu0
    %3811 = vmatprep.mubr.bf16.mxu0 0
    %3812 = vmatmul.mubr.bf16.gmra.mrb[0].mxu0 %v3664
    %v3813 = vpop.f32.mrb[0].mxu0
    %v3814 = vadd.f32 %v3697, %v3813
    %v3815 = vpop.f32.mrb[0].mxu0
    %v3816 = vpop.f32.mrb[0].mxu0
    %v3817 = vadd.f32 %v3697, %v3816
    %v3818 = vpop.f32.mrb[0].mxu0
    %3819 = vmatprep.mubr.bf16.mxu0 0
    %3820 = vmatmul.mubr.bf16.gmra.mrb[0].mxu0 %v3665
    %v3821 = vpop.f32.mrb[0].mxu0
    %v3822 = vadd.f32 %v3697, %v3821
    %v3823 = vpop.f32.mrb[0].mxu0
    %v3824 = vpop.f32.mrb[0].mxu0
    %v3825 = vadd.f32 %v3697, %v3824
    %v3826 = vpop.f32.mrb[0].mxu0
    %3827 = vmatprep.mubr.bf16.mxu0 0
    %3828 = vmatmul.mubr.bf16.gmra.mrb[0].mxu0 %v3666
    %v3829 = vpop.f32.mrb[0].mxu0
    %v3830 = vadd.f32 %v3697, %v3829
    %v3831 = vpop.f32.mrb[0].mxu0
    %v3832 = vpop.f32.mrb[0].mxu0
    %v3833 = vadd.f32 %v3697, %v3832
    %v3834 = vpop.f32.mrb[0].mxu0
    %3835 = vmatprep.mubr.bf16.mxu0 0
    %3836 = vmatmul.mubr.bf16.gmra.mrb[0].mxu0 %v3667
    %v3837 = vpop.f32.mrb[0].mxu0
    %v3838 = vadd.f32 %v3697, %v3837
    %v3839 = vpop.f32.mrb[0].mxu0
    %v3840 = vpop.f32.mrb[0].mxu0
    %v3841 = vadd.f32 %v3697, %v3840
    %v3842 = vpop.f32.mrb[0].mxu0
    %3843 = vmatprep.mubr.bf16.mxu0 0
    %3844 = vmatmul.mubr.bf16.gmra.mrb[0].mxu0 %v3668
    %v3845 = vpop.f32.mrb[0].mxu0
    %v3846 = vadd.f32 %v3697, %v3845
    %v3847 = vpop.f32.mrb[0].mxu0
    %v3848 = vpop.f32.mrb[0].mxu0
    %v3849 = vadd.f32 %v3697, %v3848
    %v3850 = vpop.f32.mrb[0].mxu0
    %3851 = vmatprep.mubr.bf16.mxu0 0
    %3852 = vmatmul.mubr.bf16.gmra.mrb[0].mxu0 %v3669
    %v3853 = vpop.f32.mrb[0].mxu0
    %v3854 = vadd.f32 %v3697, %v3853
    %v3855 = vpop.f32.mrb[0].mxu0
    %v3856 = vpop.f32.mrb[0].mxu0
    %v3857 = vadd.f32 %v3697, %v3856
    %v3858 = vpop.f32.mrb[0].mxu0
    %3859 = vmatprep.mubr.bf16.mxu0 0
    %3860 = vmatmul.mubr.bf16.gmra.mrb[0].mxu0 %v3670
    %v3861 = vpop.f32.mrb[0].mxu0
    %v3862 = vadd.f32 %v3697, %v3861
    %v3863 = vpop.f32.mrb[0].mxu0
    %v3864 = vpop.f32.mrb[0].mxu0
    %v3865 = vadd.f32 %v3697, %v3864
    %v3866 = vpop.f32.mrb[0].mxu0
    %3867 = vmatprep.mubr.bf16.mxu0 0
    %3868 = vmatmul.mubr.bf16.gmra.mrb[0].mxu0 %v3671
    %v3869 = vpop.f32.mrb[0].mxu0
    %v3870 = vadd.f32 %v3697, %v3869
    %v3871 = vpop.f32.mrb[0].mxu0
    %v3872 = vpop.f32.mrb[0].mxu0
    %v3873 = vadd.f32 %v3697, %v3872
    %v3874 = vpop.f32.mrb[0].mxu0
    %3875 = vmatprep.mubr.bf16.mxu0 0
    %3876 = vmatmul.mubr.bf16.gmra.mrb[0].mxu0 %v3672
    %v3877 = vpop.f32.mrb[0].mxu0
    %v3878 = vadd.f32 %v3697, %v3877
    %v3879 = vpop.f32.mrb[0].mxu0
    %v3880 = vpop.f32.mrb[0].mxu0
    %v3881 = vadd.f32 %v3697, %v3880
    %v3882 = vpop.f32.mrb[0].mxu0
    %3883 = vmatprep.mubr.bf16.mxu0 0
    %3884 = vmatmul.mubr.bf16.gmra.mrb[0].mxu0 %v3673
    %v3885 = vpop.f32.mrb[0].mxu0
    %v3886 = vadd.f32 %v3697, %v3885
    %v3887 = vpop.f32.mrb[0].mxu0
    %v3888 = vpop.f32.mrb[0].mxu0
    %v3889 = vadd.f32 %v3697, %v3888
    %v3890 = vpop.f32.mrb[0].mxu0
    %3891 = vmatprep.mubr.bf16.mxu0 0
    %3892 = vmatmul.mubr.bf16.gmra.mrb[0].mxu0 %v3674
    %v3893 = vpop.f32.mrb[0].mxu0
    %v3894 = vadd.f32 %v3697, %v3893
    %v3895 = vpop.f32.mrb[0].mxu0
    %v3896 = vpop.f32.mrb[0].mxu0
    %v3897 = vadd.f32 %v3697, %v3896
    %v3898 = vpop.f32.mrb[0].mxu0
    %3899 = vmatprep.mubr.bf16.mxu0 0
    %3900 = vmatmul.mubr.bf16.gmra.mrb[0].mxu0 %v3675
    %v3901 = vpop.f32.mrb[0].mxu0
    %v3902 = vadd.f32 %v3697, %v3901
    %v3903 = vpop.f32.mrb[0].mxu0
    %v3904 = vpop.f32.mrb[0].mxu0
    %v3905 = vadd.f32 %v3697, %v3904
    %v3906 = vpop.f32.mrb[0].mxu0
    %3907 = vdwg.mxu0
    %v3908 = vadd.f32 %v3782, %v205
    %v3909 = vadd.f32 %v3785, %v206
    %v3910 = vadd.f32 %v3790, %v207
    %v3911 = vadd.f32 %v3793, %v208
    %v3912 = vadd.f32 %v3798, %v209
    %v3913 = vadd.f32 %v3801, %v210
    %v3914 = vadd.f32 %v3806, %v211
    %v3915 = vadd.f32 %v3809, %v212
    %v3916 = vadd.f32 %v3814, %v213
    %v3917 = vadd.f32 %v3817, %v214
    %v3918 = vadd.f32 %v3822, %v215
    %v3919 = vadd.f32 %v3825, %v216
    %v3920 = vadd.f32 %v3830, %v217
    %v3921 = vadd.f32 %v3833, %v218
    %v3922 = vadd.f32 %v3838, %v219
    %v3923 = vadd.f32 %v3841, %v220
    %v3924 = vadd.f32 %v3846, %v221
    %v3925 = vadd.f32 %v3849, %v222
    %v3926 = vadd.f32 %v3854, %v223
    %v3927 = vadd.f32 %v3857, %v224
    %v3928 = vadd.f32 %v3862, %v225
    %v3929 = vadd.f32 %v3865, %v226
    %v3930 = vadd.f32 %v3870, %v227
    %v3931 = vadd.f32 %v3873, %v228
    %v3932 = vadd.f32 %v3878, %v229
    %v3933 = vadd.f32 %v3881, %v230
    %v3934 = vadd.f32 %v3886, %v231
    %v3935 = vadd.f32 %v3889, %v232
    %v3936 = vadd.f32 %v3894, %v233
    %v3937 = vadd.f32 %v3897, %v234
    %v3938 = vadd.f32 %v3902, %v235
    %v3939 = vadd.f32 %v3905, %v236
    %v3940 = vpack.c.bf16 %v3909, %v3908
    %v3941 = vpack.c.bf16 %v3911, %v3910
    %v3942 = vpack.c.bf16 %v3913, %v3912
    %v3943 = vpack.c.bf16 %v3915, %v3914
    %v3944 = vpack.c.bf16 %v3917, %v3916
    %v3945 = vpack.c.bf16 %v3919, %v3918
    %v3946 = vpack.c.bf16 %v3921, %v3920
    %v3947 = vpack.c.bf16 %v3923, %v3922
    %v3948 = vpack.c.bf16 %v3925, %v3924
    %v3949 = vpack.c.bf16 %v3927, %v3926
    %v3950 = vpack.c.bf16 %v3929, %v3928
    %v3951 = vpack.c.bf16 %v3931, %v3930
    %v3952 = vpack.c.bf16 %v3933, %v3932
    %v3953 = vpack.c.bf16 %v3935, %v3934
    %v3954 = vpack.c.bf16 %v3937, %v3936
    %v3955 = vpack.c.bf16 %v3939, %v3938
    %v3972 = vunpack.c.l.b16 %v3940
    %v3973 = vunpack.c.h.b16 %v3940
    %v3974 = vunpack.c.l.b16 %v3941
    %v3975 = vunpack.c.h.b16 %v3941
    %v3976 = vunpack.c.l.b16 %v3942
    %v3977 = vunpack.c.h.b16 %v3942
    %v3978 = vunpack.c.l.b16 %v3943
    %v3979 = vunpack.c.h.b16 %v3943
    %v3980 = vunpack.c.l.b16 %v3944
    %v3981 = vunpack.c.h.b16 %v3944
    %v3982 = vunpack.c.l.b16 %v3945
    %v3983 = vunpack.c.h.b16 %v3945
    %v3984 = vunpack.c.l.b16 %v3946
    %v3985 = vunpack.c.h.b16 %v3946
    %v3986 = vunpack.c.l.b16 %v3947
    %v3987 = vunpack.c.h.b16 %v3947
    %v3988 = vunpack.c.l.b16 %v3948
    %v3989 = vunpack.c.h.b16 %v3948
    %v3990 = vunpack.c.l.b16 %v3949
    %v3991 = vunpack.c.h.b16 %v3949
    %v3992 = vunpack.c.l.b16 %v3950
    %v3993 = vunpack.c.h.b16 %v3950
    %v3994 = vunpack.c.l.b16 %v3951
    %v3995 = vunpack.c.h.b16 %v3951
    %v3996 = vunpack.c.l.b16 %v3952
    %v3997 = vunpack.c.h.b16 %v3952
    %v3998 = vunpack.c.l.b16 %v3953
    %v3999 = vunpack.c.h.b16 %v3953
    %v4000 = vunpack.c.l.b16 %v3954
    %v4001 = vunpack.c.h.b16 %v3954
    %v4002 = vunpack.c.l.b16 %v3955
    %v4003 = vunpack.c.h.b16 %v3955
    %v4004 = vpack.c.b16 %v3972, %v3972
    %v4005 = vpack.c.b16 %v3973, %v3973
    %v4006 = vpack.c.b16 %v3974, %v3974
    %v4007 = vpack.c.b16 %v3975, %v3975
    %v4008 = vpack.c.b16 %v3976, %v3976
    %v4009 = vpack.c.b16 %v3977, %v3977
    %v4010 = vpack.c.b16 %v3978, %v3978
    %v4011 = vpack.c.b16 %v3979, %v3979
    %v4012 = vpack.c.b16 %v3980, %v3980
    %v4013 = vpack.c.b16 %v3981, %v3981
    %v4014 = vpack.c.b16 %v3982, %v3982
    %v4015 = vpack.c.b16 %v3983, %v3983
    %v4016 = vpack.c.b16 %v3984, %v3984
    %v4017 = vpack.c.b16 %v3985, %v3985
    %v4018 = vpack.c.b16 %v3986, %v3986
    %v4019 = vpack.c.b16 %v3987, %v3987
    %v4020 = vpack.c.b16 %v3988, %v3988
    %v4021 = vpack.c.b16 %v3989, %v3989
    %v4022 = vpack.c.b16 %v3990, %v3990
    %v4023 = vpack.c.b16 %v3991, %v3991
    %v4024 = vpack.c.b16 %v3992, %v3992
    %v4025 = vpack.c.b16 %v3993, %v3993
    %v4026 = vpack.c.b16 %v3994, %v3994
    %v4027 = vpack.c.b16 %v3995, %v3995
    %v4028 = vpack.c.b16 %v3996, %v3996
    %v4029 = vpack.c.b16 %v3997, %v3997
    %v4030 = vpack.c.b16 %v3998, %v3998
    %v4031 = vpack.c.b16 %v3999, %v3999
    %v4032 = vpack.c.b16 %v4000, %v4000
    %v4033 = vpack.c.b16 %v4001, %v4001
    %v4034 = vpack.c.b16 %v4002, %v4002
    %v4035 = vpack.c.b16 %v4003, %v4003
    %4068 = vst [vmem:[#allocation14] sm:$0xf] %v4004
    %4069 = vst [vmem:[#allocation14 + $0x4] sm:$0xf] %v4005
    %4070 = vst [vmem:[#allocation14 + $0x8] sm:$0xf] %v4006
    %4071 = vst [vmem:[#allocation14 + $0xc] sm:$0xf] %v4007
    %4072 = vst [vmem:[#allocation14 + $0x10] sm:$0xf] %v4008
    %4073 = vst [vmem:[#allocation14 + $0x14] sm:$0xf] %v4009
    %4074 = vst [vmem:[#allocation14 + $0x18] sm:$0xf] %v4010
    %4075 = vst [vmem:[#allocation14 + $0x1c] sm:$0xf] %v4011
    %4076 = vst [vmem:[#allocation14 + $0x20] sm:$0xf] %v4012
    %4077 = vst [vmem:[#allocation14 + $0x24] sm:$0xf] %v4013
    %4078 = vst [vmem:[#allocation14 + $0x28] sm:$0xf] %v4014
    %4079 = vst [vmem:[#allocation14 + $0x2c] sm:$0xf] %v4015
    %4080 = vst [vmem:[#allocation14 + $0x30] sm:$0xf] %v4016
    %4081 = vst [vmem:[#allocation14 + $0x34] sm:$0xf] %v4017
    %4082 = vst [vmem:[#allocation14 + $0x38] sm:$0xf] %v4018
    %4083 = vst [vmem:[#allocation14 + $0x3c] sm:$0xf] %v4019
    %4084 = vst [vmem:[#allocation14 + $0x40] sm:$0xf] %v4020
    %4085 = vst [vmem:[#allocation14 + $0x44] sm:$0xf] %v4021
    %4086 = vst [vmem:[#allocation14 + $0x48] sm:$0xf] %v4022
    %4087 = vst [vmem:[#allocation14 + $0x4c] sm:$0xf] %v4023
    %4088 = vst [vmem:[#allocation14 + $0x50] sm:$0xf] %v4024
    %4089 = vst [vmem:[#allocation14 + $0x54] sm:$0xf] %v4025
    %4090 = vst [vmem:[#allocation14 + $0x58] sm:$0xf] %v4026
    %4091 = vst [vmem:[#allocation14 + $0x5c] sm:$0xf] %v4027
    %4092 = vst [vmem:[#allocation14 + $0x60] sm:$0xf] %v4028
    %4093 = vst [vmem:[#allocation14 + $0x64] sm:$0xf] %v4029
    %4094 = vst [vmem:[#allocation14 + $0x68] sm:$0xf] %v4030
    %4095 = vst [vmem:[#allocation14 + $0x6c] sm:$0xf] %v4031
    %4096 = vst [vmem:[#allocation14 + $0x70] sm:$0xf] %v4032
    %4097 = vst [vmem:[#allocation14 + $0x74] sm:$0xf] %v4033
    %4098 = vst [vmem:[#allocation14 + $0x78] sm:$0xf] %v4034
    %4099 = vst [vmem:[#allocation14 + $0x7c] sm:$0xf] %v4035
    // Predicated region
    $region78: #{tpu_custom_call.1} parent=1 // pred_check
      _
    $region79: #{tpu_custom_call.1} parent=1 // pred_check_branch
      %4101 = sbr.rel (0) target = $region81
    $region80: #{tpu_custom_call.1} parent=1 // pred_region
      %s4103 = ssub.s32 2048, 2048
      %4104 = vsyncadd [#allocation4], %s4103
      %s4105 = sshll.u32 [#allocation14], 4
      %s4106 = int_to_ptr.vmem [resolvable:$true] %s4105
      %4111 = dma.vmem_to_hbm [thread:$0]  %s4106, 2048, %s12, [#allocation4], 64, 64, 4
    $region81: #{tpu_custom_call.1} parent=1 // pred_fallthru
      _
    // Predicated region
    $region82: #{tpu_custom_call.1} parent=1 // pred_check
      _
    $region83: #{tpu_custom_call.1} parent=1 // pred_check_branch
      %4113 = sbr.rel (0) target = $region85
    $region84: #{tpu_custom_call.1} parent=1 // pred_region
      %s4115 = ssub.s32 256, 256
      %4116 = vsyncadd [#allocation16], %s4115
      %s4117 = sshll.u32 [#allocation15], 4
      %s4118 = int_to_ptr.vmem [resolvable:$true] %s4117
      %4123 = dma.vmem_to_hbm [thread:$0]  %s4118, 256, %s13, [#allocation16], 128, 128, 8
    $region85: #{tpu_custom_call.1} parent=1 // pred_fallthru
      _
    // Predicated region
    $region86: #{tpu_custom_call.1} parent=1 // pred_check
      _
    $region87: #{tpu_custom_call.1} parent=1 // pred_check_branch
      %4125 = sbr.rel (0) target = $region89
    $region88: #{tpu_custom_call.1} parent=1 // pred_region
      %4126 = dma.done [#allocation4], 2048
    $region89: #{tpu_custom_call.1} parent=1 // pred_fallthru
      _
    // Predicated region
    $region90: #{tpu_custom_call.1} parent=1 // pred_check
      _
    $region91: #{tpu_custom_call.1} parent=1 // pred_check_branch
      %4128 = sbr.rel (0) target = $region93
    $region92: #{tpu_custom_call.1} parent=1 // pred_region
      %4129 = dma.done [#allocation16], 256
    $region93: #{tpu_custom_call.1} parent=1 // pred_fallthru
      _
    %4130 = vsyncpa [#allocation3], 1
    %4131 = vsyncpa [#allocation6], 1
    %4132 = vsyncpa [#allocation9], 1
    %4133 = vsyncpa [#allocation12], 1
    %4134 = vsyncpa [#allocation4], 1
    %4135 = vsyncpa [#allocation16], 1

// kernel: tpu_custom_call.1
$region0: #{tpu_custom_call.1}
  #allocation0 [shape = 'u32[]', space=smem, size = 0x4, offset = 0x4, fixed_abs, tag = 'smem constant byte address 0x4 - core index']
  #allocation1 [shape = 'u32[144,128]{1,0:T(1,128)}', space=vmem, size = 0x12000, scoped, tag = 'internal scratch']
  %s0 = inlined_call_operand.hbm [shape: bf16[16,16,128], index: 0, kind: input, shape index: {}]
  %s1 = inlined_call_operand.hbm [shape: bf16[16,16,128], index: 1, kind: input, shape index: {}]
  %s2 = inlined_call_operand.hbm [shape: bf16[128,256], index: 2, kind: input, shape index: {}]
  %s3 = inlined_call_operand.vmem [shape: f32[1,256], index: 3, kind: input, shape index: {}]
  %s4 = inlined_call_operand.hbm [shape: bf16[128,128], index: 4, kind: input, shape index: {}]
  %s5 = inlined_call_operand.vmem [shape: f32[1,128], index: 5, kind: input, shape index: {}]
  %s6 = inlined_call_operand.hbm [shape: bf16[128,128], index: 6, kind: input, shape index: {}]
  %s7 = inlined_call_operand.vmem [shape: f32[1,128], index: 7, kind: input, shape index: {}]
  %s8 = inlined_call_operand.hbm [shape: bf16[128,128], index: 8, kind: input, shape index: {}]
  %s9 = inlined_call_operand.vmem [shape: f32[1,128], index: 9, kind: input, shape index: {}]
  %s10 = inlined_call_operand.hbm [shape: bf16[128,128], index: 10, kind: input, shape index: {}]
  %s11 = inlined_call_operand.vmem [shape: f32[1,128], index: 11, kind: input, shape index: {}]
  %s12 = inlined_call_operand.hbm [shape: bf16[16,16,128], index: 12, kind: output, shape index: {0}]
  %s13 = inlined_call_operand.hbm [shape: f32[16,128], index: 13, kind: output, shape index: {1}]
  %14 = xla_tuple %s12, %s13
  %s15 = sld [smem:[#allocation0]]
  $region94: #{tpu_custom_call.1} parent=0
    _
  %s17 = ssub.s32 1, %s15
  %s18 = scalar_select 0, %s17, %s15
  $region1: #{tpu_custom_call.1} parent=0
    #allocation2 [shape = 'u8[65536]{0}', space=vmem, size = 0x10000, scoped, tag = 'input window, operand 0, single buffered']
    #allocation3 [shape = 's32[1]{0}', space=sflag, size = 0x4, scoped, tag = 'scoped memory for tpu_custom_call.1']
    #allocation4 [shape = 's32[1]{0}', space=sflag, size = 0x4, scoped, tag = 'scoped memory for tpu_custom_call.1']
    #allocation5 [shape = 'u8[65536]{0}', space=vmem, size = 0x10000, scoped, tag = 'input window, operand 1, single buffered']
    #allocation6 [shape = 's32[1]{0}', space=sflag, size = 0x4, scoped, tag = 'scoped memory for tpu_custom_call.1']
    #allocation7 [shape = 'u8[65536]{0}', space=vmem, size = 0x10000, scoped, tag = 'input window, operand 2, single buffered']
    #allocation8 [shape = 'u8[32768]{0}', space=vmem, size = 0x8000, scoped, tag = 'input window, operand 4, single buffered']
    #allocation9 [shape = 's32[1]{0}', space=sflag, size = 0x4, scoped, tag = 'scoped memory for tpu_custom_call.1']
    #allocation10 [shape = 'u8[32768]{0}', space=vmem, size = 0x8000, scoped, tag = 'input window, operand 6, single buffered']
    #allocation11 [shape = 'u8[32768]{0}', space=vmem, size = 0x8000, scoped, tag = 'input window, operand 8, single buffered']
    #allocation12 [shape = 's32[1]{0}', space=sflag, size = 0x4, scoped, tag = 'scoped memory for tpu_custom_call.1']
    #allocation13 [shape = 'u8[32768]{0}', space=vmem, size = 0x8000, scoped, tag = 'input window, operand 10, single buffered']
    #allocation14 [shape = 'u8[65536]{0}', space=vmem, size = 0x10000, scoped, tag = 'output window, operand 0, single buffered']
    #allocation15 [shape = 'u8[8192]{0}', space=vmem, size = 0x2000, scoped, tag = 'output window, operand 1, single buffered']
    #allocation16 [shape = 's32[1]{0}', space=sflag, size = 0x4, scoped, tag = 'scoped memory for tpu_custom_call.1']
    %19 = vsyncpa [#allocation3], 0
    %20 = vsyncpa [#allocation6], 0
    %21 = vsyncpa [#allocation9], 0
    %22 = vsyncpa [#allocation12], 0
    %23 = vsyncpa [#allocation4], 0
    %24 = vsyncpa [#allocation16], 0
    // Predicated region
    $region2: #{tpu_custom_call.1} parent=1 // pred_check
      _
    $region3: #{tpu_custom_call.1} parent=1 // pred_check_branch
      %26 = sbr.rel (0) target = $region5
    $region4: #{tpu_custom_call.1} parent=1 // pred_region
      %s28 = ssub.s32 2048, 2048
      %29 = vsyncadd [#allocation3], %s28
      %s30 = sshll.u32 [#allocation2], 4
      %s31 = int_to_ptr.vmem [resolvable:$true] %s30
      %36 = dma.hbm_to_vmem [thread:$0]  %s0, 2048, %s31, [#allocation3], 64, 64, 4
    $region5: #{tpu_custom_call.1} parent=1 // pred_fallthru
      _
    // Predicated region
    $region6: #{tpu_custom_call.1} parent=1 // pred_check
      _
    $region7: #{tpu_custom_call.1} parent=1 // pred_check_branch
      %38 = sbr.rel (0) target = $region9
    $region8: #{tpu_custom_call.1} parent=1 // pred_region
      %s40 = ssub.s32 2048, 2048
      %41 = vsyncadd [#allocation6], %s40
      %s42 = sshll.u32 [#allocation5], 4
      %s43 = int_to_ptr.vmem [resolvable:$true] %s42
      %48 = dma.hbm_to_vmem [thread:$0]  %s1, 2048, %s43, [#allocation6], 64, 64, 4
    $region9: #{tpu_custom_call.1} parent=1 // pred_fallthru
      _
    // Predicated region
    $region10: #{tpu_custom_call.1} parent=1 // pred_check
      _
    $region11: #{tpu_custom_call.1} parent=1 // pred_check_branch
      %50 = sbr.rel (0) target = $region13
    $region12: #{tpu_custom_call.1} parent=1 // pred_region
      %s52 = ssub.s32 2048, 2048
      %53 = vsyncadd [#allocation6], %s52
      %s54 = sshll.u32 [#allocation7], 4
      %s55 = int_to_ptr.vmem [resolvable:$true] %s54
      %60 = dma.hbm_to_vmem [thread:$0]  %s2, 2048, %s55, [#allocation6], 128, 128, 8
    $region13: #{tpu_custom_call.1} parent=1 // pred_fallthru
      _
    // Predicated region
    $region14: #{tpu_custom_call.1} parent=1 // pred_check
      _
    $region15: #{tpu_custom_call.1} parent=1 // pred_check_branch
      %62 = sbr.rel (0) target = $region17
    $region16: #{tpu_custom_call.1} parent=1 // pred_region
      _
    $region17: #{tpu_custom_call.1} parent=1 // pred_fallthru
      _
    // Predicated region
    $region18: #{tpu_custom_call.1} parent=1 // pred_check
      _
    $region19: #{tpu_custom_call.1} parent=1 // pred_check_branch
      %64 = sbr.rel (0) target = $region21
    $region20: #{tpu_custom_call.1} parent=1 // pred_region
      %s66 = ssub.s32 1024, 1024
      %67 = vsyncadd [#allocation9], %s66
      %s68 = sshll.u32 [#allocation8], 4
      %s69 = int_to_ptr.vmem [resolvable:$true] %s68
      %74 = dma.hbm_to_vmem [thread:$0]  %s4, 1024, %s69, [#allocation9], 64, 64, 4
    $region21: #{tpu_custom_call.1} parent=1 // pred_fallthru
      _
    // Predicated region
    $region22: #{tpu_custom_call.1} parent=1 // pred_check
      _
    $region23: #{tpu_custom_call.1} parent=1 // pred_check_branch
      %76 = sbr.rel (0) target = $region25
    $region24: #{tpu_custom_call.1} parent=1 // pred_region
      _
    $region25: #{tpu_custom_call.1} parent=1 // pred_fallthru
      _
    // Predicated region
    $region26: #{tpu_custom_call.1} parent=1 // pred_check
      _
    $region27: #{tpu_custom_call.1} parent=1 // pred_check_branch
      %78 = sbr.rel (0) target = $region29
    $region28: #{tpu_custom_call.1} parent=1 // pred_region
      %s80 = ssub.s32 1024, 1024
      %81 = vsyncadd [#allocation9], %s80
      %s82 = sshll.u32 [#allocation10], 4
      %s83 = int_to_ptr.vmem [resolvable:$true] %s82
      %88 = dma.hbm_to_vmem [thread:$0]  %s6, 1024, %s83, [#allocation9], 64, 64, 4
    $region29: #{tpu_custom_call.1} parent=1 // pred_fallthru
      _
    // Predicated region
    $region30: #{tpu_custom_call.1} parent=1 // pred_check
      _
    $region31: #{tpu_custom_call.1} parent=1 // pred_check_branch
      %90 = sbr.rel (0) target = $region33
    $region32: #{tpu_custom_call.1} parent=1 // pred_region
      _
    $region33: #{tpu_custom_call.1} parent=1 // pred_fallthru
      _
    // Predicated region
    $region34: #{tpu_custom_call.1} parent=1 // pred_check
      _
    $region35: #{tpu_custom_call.1} parent=1 // pred_check_branch
      %92 = sbr.rel (0) target = $region37
    $region36: #{tpu_custom_call.1} parent=1 // pred_region
      %s94 = ssub.s32 1024, 1024
      %95 = vsyncadd [#allocation12], %s94
      %s96 = sshll.u32 [#allocation11], 4
      %s97 = int_to_ptr.vmem [resolvable:$true] %s96
      %102 = dma.hbm_to_vmem [thread:$0]  %s8, 1024, %s97, [#allocation12], 64, 64, 4
    $region37: #{tpu_custom_call.1} parent=1 // pred_fallthru
      _
    // Predicated region
    $region38: #{tpu_custom_call.1} parent=1 // pred_check
      _
    $region39: #{tpu_custom_call.1} parent=1 // pred_check_branch
      %104 = sbr.rel (0) target = $region41
    $region40: #{tpu_custom_call.1} parent=1 // pred_region
      _
    $region41: #{tpu_custom_call.1} parent=1 // pred_fallthru
      _
    // Predicated region
    $region42: #{tpu_custom_call.1} parent=1 // pred_check
      _
    $region43: #{tpu_custom_call.1} parent=1 // pred_check_branch
      %106 = sbr.rel (0) target = $region45
    $region44: #{tpu_custom_call.1} parent=1 // pred_region
      %s108 = ssub.s32 1024, 1024
      %109 = vsyncadd [#allocation12], %s108
      %s110 = sshll.u32 [#allocation13], 4
      %s111 = int_to_ptr.vmem [resolvable:$true] %s110
      %116 = dma.hbm_to_vmem [thread:$0]  %s10, 1024, %s111, [#allocation12], 64, 64, 4
    $region45: #{tpu_custom_call.1} parent=1 // pred_fallthru
      _
    // Predicated region
    $region46: #{tpu_custom_call.1} parent=1 // pred_check
      _
    $region47: #{tpu_custom_call.1} parent=1 // pred_check_branch
      %118 = sbr.rel (0) target = $region49
    $region48: #{tpu_custom_call.1} parent=1 // pred_region
      _
    $region49: #{tpu_custom_call.1} parent=1 // pred_fallthru
      _
    // Predicated region
    $region50: #{tpu_custom_call.1} parent=1 // pred_check
      _
    $region51: #{tpu_custom_call.1} parent=1 // pred_check_branch
      %120 = sbr.rel (0) target = $region53
    $region52: #{tpu_custom_call.1} parent=1 // pred_region
      %121 = dma.done [#allocation3], 2048
    $region53: #{tpu_custom_call.1} parent=1 // pred_fallthru
      _
    // Predicated region
    $region54: #{tpu_custom_call.1} parent=1 // pred_check
      _
    $region55: #{tpu_custom_call.1} parent=1 // pred_check_branch
      %123 = sbr.rel (0) target = $region57
    $region56: #{tpu_custom_call.1} parent=1 // pred_region
      %124 = dma.done [#allocation6], 2048
    $region57: #{tpu_custom_call.1} parent=1 // pred_fallthru
      _
    // Predicated region
    $region58: #{tpu_custom_call.1} parent=1 // pred_check
      _
    $region59: #{tpu_custom_call.1} parent=1 // pred_check_branch
      %126 = sbr.rel (0) target = $region61
    $region60: #{tpu_custom_call.1} parent=1 // pred_region
      %127 = dma.done [#allocation6], 2048
    $region61: #{tpu_custom_call.1} parent=1 // pred_fallthru
      _
    // Predicated region
    $region62: #{tpu_custom_call.1} parent=1 // pred_check
      _
    $region63: #{tpu_custom_call.1} parent=1 // pred_check_branch
      %129 = sbr.rel (0) target = $region65
    $region64: #{tpu_custom_call.1} parent=1 // pred_region
      %130 = dma.done [#allocation9], 1024
    $region65: #{tpu_custom_call.1} parent=1 // pred_fallthru
      _
    // Predicated region
    $region66: #{tpu_custom_call.1} parent=1 // pred_check
      _
    $region67: #{tpu_custom_call.1} parent=1 // pred_check_branch
      %132 = sbr.rel (0) target = $region69
    $region68: #{tpu_custom_call.1} parent=1 // pred_region
      %133 = dma.done [#allocation9], 1024
    $region69: #{tpu_custom_call.1} parent=1 // pred_fallthru
      _
    // Predicated region
    $region70: #{tpu_custom_call.1} parent=1 // pred_check
      _
    $region71: #{tpu_custom_call.1} parent=1 // pred_check_branch
      %135 = sbr.rel (0) target = $region73
    $region72: #{tpu_custom_call.1} parent=1 // pred_region
      %136 = dma.done [#allocation12], 1024
    $region73: #{tpu_custom_call.1} parent=1 // pred_fallthru
      _
    // Predicated region
    $region74: #{tpu_custom_call.1} parent=1 // pred_check
      _
    $region75: #{tpu_custom_call.1} parent=1 // pred_check_branch
      %138 = sbr.rel (0) target = $region77
    $region76: #{tpu_custom_call.1} parent=1 // pred_region
      %139 = dma.done [#allocation12], 1024
    $region77: #{tpu_custom_call.1} parent=1 // pred_fallthru
      _
    %v141 = vld [vmem:[#allocation2] sm:$0xf]
    %v142 = vld [vmem:[#allocation2 + $0x4] sm:$0xf]
    %v143 = vld [vmem:[#allocation2 + $0x8] sm:$0xf]
    %v144 = vld [vmem:[#allocation2 + $0xc] sm:$0xf]
    %v145 = vld [vmem:[#allocation2 + $0x10] sm:$0xf]
    %v146 = vld [vmem:[#allocation2 + $0x14] sm:$0xf]
    %v147 = vld [vmem:[#allocation2 + $0x18] sm:$0xf]
    %v148 = vld [vmem:[#allocation2 + $0x1c] sm:$0xf]
    %v149 = vld [vmem:[#allocation2 + $0x20] sm:$0xf]
    %v150 = vld [vmem:[#allocation2 + $0x24] sm:$0xf]
    %v151 = vld [vmem:[#allocation2 + $0x28] sm:$0xf]
    %v152 = vld [vmem:[#allocation2 + $0x2c] sm:$0xf]
    %v153 = vld [vmem:[#allocation2 + $0x30] sm:$0xf]
    %v154 = vld [vmem:[#allocation2 + $0x34] sm:$0xf]
    %v155 = vld [vmem:[#allocation2 + $0x38] sm:$0xf]
    %v156 = vld [vmem:[#allocation2 + $0x3c] sm:$0xf]
    %v157 = vld [vmem:[#allocation2 + $0x40] sm:$0xf]
    %v158 = vld [vmem:[#allocation2 + $0x44] sm:$0xf]
    %v159 = vld [vmem:[#allocation2 + $0x48] sm:$0xf]
    %v160 = vld [vmem:[#allocation2 + $0x4c] sm:$0xf]
    %v161 = vld [vmem:[#allocation2 + $0x50] sm:$0xf]
    %v162 = vld [vmem:[#allocation2 + $0x54] sm:$0xf]
    %v163 = vld [vmem:[#allocation2 + $0x58] sm:$0xf]
    %v164 = vld [vmem:[#allocation2 + $0x5c] sm:$0xf]
    %v165 = vld [vmem:[#allocation2 + $0x60] sm:$0xf]
    %v166 = vld [vmem:[#allocation2 + $0x64] sm:$0xf]
    %v167 = vld [vmem:[#allocation2 + $0x68] sm:$0xf]
    %v168 = vld [vmem:[#allocation2 + $0x6c] sm:$0xf]
    %v169 = vld [vmem:[#allocation2 + $0x70] sm:$0xf]
    %v170 = vld [vmem:[#allocation2 + $0x74] sm:$0xf]
    %v171 = vld [vmem:[#allocation2 + $0x78] sm:$0xf]
    %v172 = vld [vmem:[#allocation2 + $0x7c] sm:$0xf]
    %v173 = vld [vmem:[#allocation5] sm:$0xf]
    %v174 = vld [vmem:[#allocation5 + $0x4] sm:$0xf]
    %v175 = vld [vmem:[#allocation5 + $0x8] sm:$0xf]
    %v176 = vld [vmem:[#allocation5 + $0xc] sm:$0xf]
    %v177 = vld [vmem:[#allocation5 + $0x10] sm:$0xf]
    %v178 = vld [vmem:[#allocation5 + $0x14] sm:$0xf]
    %v179 = vld [vmem:[#allocation5 + $0x18] sm:$0xf]
    %v180 = vld [vmem:[#allocation5 + $0x1c] sm:$0xf]
    %v181 = vld [vmem:[#allocation5 + $0x20] sm:$0xf]
    %v182 = vld [vmem:[#allocation5 + $0x24] sm:$0xf]
    %v183 = vld [vmem:[#allocation5 + $0x28] sm:$0xf]
    %v184 = vld [vmem:[#allocation5 + $0x2c] sm:$0xf]
    %v185 = vld [vmem:[#allocation5 + $0x30] sm:$0xf]
    %v186 = vld [vmem:[#allocation5 + $0x34] sm:$0xf]
    %v187 = vld [vmem:[#allocation5 + $0x38] sm:$0xf]
    %v188 = vld [vmem:[#allocation5 + $0x3c] sm:$0xf]
    %v189 = vld [vmem:[#allocation5 + $0x40] sm:$0xf]
    %v190 = vld [vmem:[#allocation5 + $0x44] sm:$0xf]
    %v191 = vld [vmem:[#allocation5 + $0x48] sm:$0xf]
    %v192 = vld [vmem:[#allocation5 + $0x4c] sm:$0xf]
    %v193 = vld [vmem:[#allocation5 + $0x50] sm:$0xf]
    %v194 = vld [vmem:[#allocation5 + $0x54] sm:$0xf]
    %v195 = vld [vmem:[#allocation5 + $0x58] sm:$0xf]
    %v196 = vld [vmem:[#allocation5 + $0x5c] sm:$0xf]
    %v197 = vld [vmem:[#allocation5 + $0x60] sm:$0xf]
    %v198 = vld [vmem:[#allocation5 + $0x64] sm:$0xf]
    %v199 = vld [vmem:[#allocation5 + $0x68] sm:$0xf]
    %v200 = vld [vmem:[#allocation5 + $0x6c] sm:$0xf]
    %v201 = vld [vmem:[#allocation5 + $0x70] sm:$0xf]
    %v202 = vld [vmem:[#allocation5 + $0x74] sm:$0xf]
    %v203 = vld [vmem:[#allocation5 + $0x78] sm:$0xf]
    %v204 = vld [vmem:[#allocation5 + $0x7c] sm:$0xf]
    %v205 = vunpack.c.l.bf16 %v141
    %v206 = vunpack.c.l.bf16 %v142
    %v207 = vunpack.c.l.bf16 %v143
    %v208 = vunpack.c.l.bf16 %v144
    %v209 = vunpack.c.l.bf16 %v145
    %v210 = vunpack.c.l.bf16 %v146
    %v211 = vunpack.c.l.bf16 %v147
    %v212 = vunpack.c.l.bf16 %v148
    %v213 = vunpack.c.l.bf16 %v149
    %v214 = vunpack.c.l.bf16 %v150
    %v215 = vunpack.c.l.bf16 %v151
    %v216 = vunpack.c.l.bf16 %v152
    %v217 = vunpack.c.l.bf16 %v153
    %v218 = vunpack.c.l.bf16 %v154
    %v219 = vunpack.c.l.bf16 %v155
    %v220 = vunpack.c.l.bf16 %v156
    %v221 = vunpack.c.l.bf16 %v157
    %v222 = vunpack.c.l.bf16 %v158
    %v223 = vunpack.c.l.bf16 %v159
    %v224 = vunpack.c.l.bf16 %v160
    %v225 = vunpack.c.l.bf16 %v161
    %v226 = vunpack.c.l.bf16 %v162
    %v227 = vunpack.c.l.bf16 %v163
    %v228 = vunpack.c.l.bf16 %v164
    %v229 = vunpack.c.l.bf16 %v165
    %v230 = vunpack.c.l.bf16 %v166
    %v231 = vunpack.c.l.bf16 %v167
    %v232 = vunpack.c.l.bf16 %v168
    %v233 = vunpack.c.l.bf16 %v169
    %v234 = vunpack.c.l.bf16 %v170
    %v235 = vunpack.c.l.bf16 %v171
    %v236 = vunpack.c.l.bf16 %v172
    %v237 = vadd.f32 %v205, %v206
    %v238 = vrot.slane %v237, 4
    %v239 = vadd.f32 %v237, %v238
    %v240 = vrot.slane %v239, 2
    %v241 = vadd.f32 %v239, %v240
    %v242 = vrot.slane %v241, 1
    %v243 = vadd.f32 %v241, %v242
    %v244 = vadd.f32 %v207, %v208
    %v245 = vrot.slane %v244, 4
    %v246 = vadd.f32 %v244, %v245
    %v247 = vrot.slane %v246, 2
    %v248 = vadd.f32 %v246, %v247
    %v249 = vrot.slane %v248, 1
    %v250 = vadd.f32 %v248, %v249
    %v251 = vadd.f32 %v209, %v210
    %v252 = vrot.slane %v251, 4
    %v253 = vadd.f32 %v251, %v252
    %v254 = vrot.slane %v253, 2
    %v255 = vadd.f32 %v253, %v254
    %v256 = vrot.slane %v255, 1
    %v257 = vadd.f32 %v255, %v256
    %v258 = vadd.f32 %v211, %v212
    %v259 = vrot.slane %v258, 4
    %v260 = vadd.f32 %v258, %v259
    %v261 = vrot.slane %v260, 2
    %v262 = vadd.f32 %v260, %v261
    %v263 = vrot.slane %v262, 1
    %v264 = vadd.f32 %v262, %v263
    %v265 = vadd.f32 %v213, %v214
    %v266 = vrot.slane %v265, 4
    %v267 = vadd.f32 %v265, %v266
    %v268 = vrot.slane %v267, 2
    %v269 = vadd.f32 %v267, %v268
    %v270 = vrot.slane %v269, 1
    %v271 = vadd.f32 %v269, %v270
    %v272 = vadd.f32 %v215, %v216
    %v273 = vrot.slane %v272, 4
    %v274 = vadd.f32 %v272, %v273
    %v275 = vrot.slane %v274, 2
    %v276 = vadd.f32 %v274, %v275
    %v277 = vrot.slane %v276, 1
    %v278 = vadd.f32 %v276, %v277
    %v279 = vadd.f32 %v217, %v218
    %v280 = vrot.slane %v279, 4
    %v281 = vadd.f32 %v279, %v280
    %v282 = vrot.slane %v281, 2
    %v283 = vadd.f32 %v281, %v282
    %v284 = vrot.slane %v283, 1
    %v285 = vadd.f32 %v283, %v284
    %v286 = vadd.f32 %v219, %v220
    %v287 = vrot.slane %v286, 4
    %v288 = vadd.f32 %v286, %v287
    %v289 = vrot.slane %v288, 2
    %v290 = vadd.f32 %v288, %v289
    %v291 = vrot.slane %v290, 1
    %v292 = vadd.f32 %v290, %v291
    %v293 = vadd.f32 %v221, %v222
    %v294 = vrot.slane %v293, 4
    %v295 = vadd.f32 %v293, %v294
    %v296 = vrot.slane %v295, 2
    %v297 = vadd.f32 %v295, %v296
    %v298 = vrot.slane %v297, 1
    %v299 = vadd.f32 %v297, %v298
    %v300 = vadd.f32 %v223, %v224
    %v301 = vrot.slane %v300, 4
    %v302 = vadd.f32 %v300, %v301
    %v303 = vrot.slane %v302, 2
    %v304 = vadd.f32 %v302, %v303
    %v305 = vrot.slane %v304, 1
    %v306 = vadd.f32 %v304, %v305
    %v307 = vadd.f32 %v225, %v226
    %v308 = vrot.slane %v307, 4
    %v309 = vadd.f32 %v307, %v308
    %v310 = vrot.slane %v309, 2
    %v311 = vadd.f32 %v309, %v310
    %v312 = vrot.slane %v311, 1
    %v313 = vadd.f32 %v311, %v312
    %v314 = vadd.f32 %v227, %v228
    %v315 = vrot.slane %v314, 4
    %v316 = vadd.f32 %v314, %v315
    %v317 = vrot.slane %v316, 2
    %v318 = vadd.f32 %v316, %v317
    %v319 = vrot.slane %v318, 1
    %v320 = vadd.f32 %v318, %v319
    %v321 = vadd.f32 %v229, %v230
    %v322 = vrot.slane %v321, 4
    %v323 = vadd.f32 %v321, %v322
    %v324 = vrot.slane %v323, 2
    %v325 = vadd.f32 %v323, %v324
    %v326 = vrot.slane %v325, 1
    %v327 = vadd.f32 %v325, %v326
    %v328 = vadd.f32 %v231, %v232
    %v329 = vrot.slane %v328, 4
    %v330 = vadd.f32 %v328, %v329
    %v331 = vrot.slane %v330, 2
    %v332 = vadd.f32 %v330, %v331
    %v333 = vrot.slane %v332, 1
    %v334 = vadd.f32 %v332, %v333
    %v335 = vadd.f32 %v233, %v234
    %v336 = vrot.slane %v335, 4
    %v337 = vadd.f32 %v335, %v336
    %v338 = vrot.slane %v337, 2
    %v339 = vadd.f32 %v337, %v338
    %v340 = vrot.slane %v339, 1
    %v341 = vadd.f32 %v339, %v340
    %v342 = vadd.f32 %v235, %v236
    %v343 = vrot.slane %v342, 4
    %v344 = vadd.f32 %v342, %v343
    %v345 = vrot.slane %v344, 2
    %v346 = vadd.f32 %v344, %v345
    %v347 = vrot.slane %v346, 1
    %v348 = vadd.f32 %v346, %v347
    %v349 = vrcp.pop 16.0
    %v350 = vmul.f32 %v243, %v349
    %v351 = vmul.f32 %v250, %v349
    %v352 = vmul.f32 %v257, %v349
    %v353 = vmul.f32 %v264, %v349
    %v354 = vmul.f32 %v271, %v349
    %v355 = vmul.f32 %v278, %v349
    %v356 = vmul.f32 %v285, %v349
    %v357 = vmul.f32 %v292, %v349
    %v358 = vmul.f32 %v299, %v349
    %v359 = vmul.f32 %v306, %v349
    %v360 = vmul.f32 %v313, %v349
    %v361 = vmul.f32 %v320, %v349
    %v362 = vmul.f32 %v327, %v349
    %v363 = vmul.f32 %v334, %v349
    %v364 = vmul.f32 %v341, %v349
    %v365 = vmul.f32 %v348, %v349
    %v366 = vpack.c.bf16 %v350, %v350
    %v367 = vpack.c.bf16 %v351, %v351
    %v368 = vpack.c.bf16 %v352, %v352
    %v369 = vpack.c.bf16 %v353, %v353
    %v370 = vpack.c.bf16 %v354, %v354
    %v371 = vpack.c.bf16 %v355, %v355
    %v372 = vpack.c.bf16 %v356, %v356
    %v373 = vpack.c.bf16 %v357, %v357
    %v374 = vpack.c.bf16 %v358, %v358
    %v375 = vpack.c.bf16 %v359, %v359
    %v376 = vpack.c.bf16 %v360, %v360
    %v377 = vpack.c.bf16 %v361, %v361
    %v378 = vpack.c.bf16 %v362, %v362
    %v379 = vpack.c.bf16 %v363, %v363
    %v380 = vpack.c.bf16 %v364, %v364
    %v381 = vpack.c.bf16 %v365, %v365
    %v382 = vld [vmem:[#allocation11] sm:$0xf]
    %v383 = vld [vmem:[#allocation11 + $0x4] sm:$0xf]
    %v384 = vld [vmem:[#allocation11 + $0x8] sm:$0xf]
    %v385 = vld [vmem:[#allocation11 + $0xc] sm:$0xf]
    %v386 = vld [vmem:[#allocation11 + $0x10] sm:$0xf]
    %v387 = vld [vmem:[#allocation11 + $0x14] sm:$0xf]
    %v388 = vld [vmem:[#allocation11 + $0x18] sm:$0xf]
    %v389 = vld [vmem:[#allocation11 + $0x1c] sm:$0xf]
    %v390 = vld [vmem:[#allocation11 + $0x20] sm:$0xf]
    %v391 = vld [vmem:[#allocation11 + $0x24] sm:$0xf]
    %v392 = vld [vmem:[#allocation11 + $0x28] sm:$0xf]
    %v393 = vld [vmem:[#allocation11 + $0x2c] sm:$0xf]
    %v394 = vld [vmem:[#allocation11 + $0x30] sm:$0xf]
    %v395 = vld [vmem:[#allocation11 + $0x34] sm:$0xf]
    %v396 = vld [vmem:[#allocation11 + $0x38] sm:$0xf]
    %v397 = vld [vmem:[#allocation11 + $0x3c] sm:$0xf]
    %v398 = vld [vmem:[%s9] sm:$0x1]
    %v400 = vlaneseq
    %v401 = vshrl.u32 %v400, 7
    %v402 = vsub.s32 0, %v401
    %v403 = vrot.slane %v398, %v402
    %v421 = vunpack.c.l.b16 %v366
    %v422 = vunpack.c.l.b16 %v367
    %v423 = vunpack.c.l.b16 %v368
    %v424 = vunpack.c.l.b16 %v369
    %v425 = vunpack.c.l.b16 %v370
    %v426 = vunpack.c.l.b16 %v371
    %v427 = vunpack.c.l.b16 %v372
    %v428 = vunpack.c.l.b16 %v373
    %v429 = vunpack.c.l.b16 %v374
    %v430 = vunpack.c.l.b16 %v375
    %v431 = vunpack.c.l.b16 %v376
    %v432 = vunpack.c.l.b16 %v377
    %v433 = vunpack.c.l.b16 %v378
    %v434 = vunpack.c.l.b16 %v379
    %v435 = vunpack.c.l.b16 %v380
    %v436 = vunpack.c.l.b16 %v381
    %vm437 = vcmask 1041409
    %v438 = vsel %vm437, %v422, %v421
    %vm439 = vcmask 1042434
    %v440 = vsel %vm439, %v423, %v438
    %vm441 = vcmask 1043459
    %v442 = vsel %vm441, %v424, %v440
    %vm443 = vcmask 1044484
    %v444 = vsel %vm443, %v425, %v442
    %vm445 = vcmask 1045509
    %v446 = vsel %vm445, %v426, %v444
    %vm447 = vcmask 1046534
    %v448 = vsel %vm447, %v427, %v446
    %vm449 = vcmask 1047559
    %v450 = vsel %vm449, %v428, %v448
    %v451 = vsel %vm437, %v430, %v429
    %v452 = vsel %vm439, %v431, %v451
    %v453 = vsel %vm441, %v432, %v452
    %v454 = vsel %vm443, %v433, %v453
    %v455 = vsel %vm445, %v434, %v454
    %v456 = vsel %vm447, %v435, %v455
    %v457 = vsel %vm449, %v436, %v456
    %v458 = vpack.c.b16 %v457, %v450
    %v476 = vunpack.c.l.b16 %v382
    %v477 = vunpack.c.l.b16 %v383
    %v478 = vunpack.c.l.b16 %v384
    %v479 = vunpack.c.l.b16 %v385
    %v480 = vunpack.c.l.b16 %v386
    %v481 = vunpack.c.l.b16 %v387
    %v482 = vunpack.c.l.b16 %v388
    %v483 = vunpack.c.l.b16 %v389
    %v484 = vunpack.c.l.b16 %v390
    %v485 = vunpack.c.l.b16 %v391
    %v486 = vunpack.c.l.b16 %v392
    %v487 = vunpack.c.l.b16 %v393
    %v488 = vunpack.c.l.b16 %v394
    %v489 = vunpack.c.l.b16 %v395
    %v490 = vunpack.c.l.b16 %v396
    %v491 = vunpack.c.l.b16 %v397
    %v492 = vpack.c.b16 %v477, %v476
    %v493 = vpack.c.b16 %v479, %v478
    %v494 = vpack.c.b16 %v481, %v480
    %v495 = vpack.c.b16 %v483, %v482
    %v496 = vpack.c.b16 %v485, %v484
    %v497 = vpack.c.b16 %v487, %v486
    %v498 = vpack.c.b16 %v489, %v488
    %v499 = vpack.c.b16 %v491, %v490
    %508 = vmatprep.subr.bf16.mxu0 0
    %509 = vmatpush1.bf16.msra.mxu0 %v492
    %510 = vmatprep.subr.bf16.mxu0 0
    %511 = vmatpush1.bf16.msra.mxu0 %v493
    %512 = vmatprep.subr.bf16.mxu0 0
    %513 = vmatpush1.bf16.msra.mxu0 %v494
    %514 = vmatprep.subr.bf16.mxu0 0
    %515 = vmatpush1.bf16.msra.mxu0 %v495
    %516 = vmatprep.subr.bf16.mxu0 0
    %517 = vmatpush1.bf16.msra.mxu0 %v496
    %518 = vmatprep.subr.bf16.mxu0 0
    %519 = vmatpush1.bf16.msra.mxu0 %v497
    %520 = vmatprep.subr.bf16.mxu0 0
    %521 = vmatpush1.bf16.msra.mxu0 %v498
    %522 = vmatprep.subr.bf16.mxu0 0
    %523 = vmatpush1.bf16.msra.mxu0 %v499
    %524 = vmatprep.subr.bf16.mxu0 0
    %525 = vmatpush1.bf16.msra.mxu0 0
    %526 = vmatprep.subr.bf16.mxu0 0
    %527 = vmatpush1.bf16.msra.mxu0 0
    %528 = vmatprep.subr.bf16.mxu0 0
    %529 = vmatpush1.bf16.msra.mxu0 0
    %530 = vmatprep.subr.bf16.mxu0 0
    %531 = vmatpush1.bf16.msra.mxu0 0
    %532 = vmatprep.subr.bf16.mxu0 0
    %533 = vmatpush1.bf16.msra.mxu0 0
    %534 = vmatprep.subr.bf16.mxu0 0
    %535 = vmatpush1.bf16.msra.mxu0 0
    %536 = vmatprep.subr.bf16.mxu0 0
    %537 = vmatpush1.bf16.msra.mxu0 0
    %538 = vmatprep.subr.bf16.mxu0 0
    %539 = vmatpush1.bf16.msra.mxu0 0
    %540 = vmatprep.mubr.bf16.mxu0 0
    %541 = vmatmul.mubr.bf16.gmra.mrb[0].mxu0 %v458
    %v542 = vpop.f32.mrb[0].mxu0
    %v543 = vadd.f32 %v403, %v542
    %v544 = vpop.f32.mrb[0].mxu0
    %v545 = vpop.f32.mrb[0].mxu0
    %v546 = vadd.f32 %v403, %v545
    %v547 = vpop.f32.mrb[0].mxu0
    %548 = vdwg.mxu0
    %v549 = vmax.f32 %v543, 0.0
    %v550 = vmax.f32 %v546, 0.0
    %v551 = vpack.c.bf16 %v550, %v549
    %v552 = vld [vmem:[#allocation13] sm:$0xf]
    %v553 = vld [vmem:[#allocation13 + $0x4] sm:$0xf]
    %v554 = vld [vmem:[#allocation13 + $0x8] sm:$0xf]
    %v555 = vld [vmem:[#allocation13 + $0xc] sm:$0xf]
    %v556 = vld [vmem:[#allocation13 + $0x10] sm:$0xf]
    %v557 = vld [vmem:[#allocation13 + $0x14] sm:$0xf]
    %v558 = vld [vmem:[#allocation13 + $0x18] sm:$0xf]
    %v559 = vld [vmem:[#allocation13 + $0x1c] sm:$0xf]
    %v560 = vld [vmem:[#allocation13 + $0x20] sm:$0xf]
    %v561 = vld [vmem:[#allocation13 + $0x24] sm:$0xf]
    %v562 = vld [vmem:[#allocation13 + $0x28] sm:$0xf]
    %v563 = vld [vmem:[#allocation13 + $0x2c] sm:$0xf]
    %v564 = vld [vmem:[#allocation13 + $0x30] sm:$0xf]
    %v565 = vld [vmem:[#allocation13 + $0x34] sm:$0xf]
    %v566 = vld [vmem:[#allocation13 + $0x38] sm:$0xf]
    %v567 = vld [vmem:[#allocation13 + $0x3c] sm:$0xf]
    %v568 = vld [vmem:[%s11] sm:$0x1]
    %v570 = vlaneseq
    %v571 = vshrl.u32 %v570, 7
    %v572 = vsub.s32 0, %v571
    %v573 = vrot.slane %v568, %v572
    %v591 = vunpack.c.l.b16 %v552
    %v592 = vunpack.c.l.b16 %v553
    %v593 = vunpack.c.l.b16 %v554
    %v594 = vunpack.c.l.b16 %v555
    %v595 = vunpack.c.l.b16 %v556
    %v596 = vunpack.c.l.b16 %v557
    %v597 = vunpack.c.l.b16 %v558
    %v598 = vunpack.c.l.b16 %v559
    %v599 = vunpack.c.l.b16 %v560
    %v600 = vunpack.c.l.b16 %v561
    %v601 = vunpack.c.l.b16 %v562
    %v602 = vunpack.c.l.b16 %v563
    %v603 = vunpack.c.l.b16 %v564
    %v604 = vunpack.c.l.b16 %v565
    %v605 = vunpack.c.l.b16 %v566
    %v606 = vunpack.c.l.b16 %v567
    %v607 = vpack.c.b16 %v592, %v591
    %v608 = vpack.c.b16 %v594, %v593
    %v609 = vpack.c.b16 %v596, %v595
    %v610 = vpack.c.b16 %v598, %v597
    %v611 = vpack.c.b16 %v600, %v599
    %v612 = vpack.c.b16 %v602, %v601
    %v613 = vpack.c.b16 %v604, %v603
    %v614 = vpack.c.b16 %v606, %v605
    %623 = vmatprep.subr.bf16.mxu0 0
    %624 = vmatpush1.bf16.msra.mxu0 %v607
    %625 = vmatprep.subr.bf16.mxu0 0
    %626 = vmatpush1.bf16.msra.mxu0 %v608
    %627 = vmatprep.subr.bf16.mxu0 0
    %628 = vmatpush1.bf16.msra.mxu0 %v609
    %629 = vmatprep.subr.bf16.mxu0 0
    %630 = vmatpush1.bf16.msra.mxu0 %v610
    %631 = vmatprep.subr.bf16.mxu0 0
    %632 = vmatpush1.bf16.msra.mxu0 %v611
    %633 = vmatprep.subr.bf16.mxu0 0
    %634 = vmatpush1.bf16.msra.mxu0 %v612
    %635 = vmatprep.subr.bf16.mxu0 0
    %636 = vmatpush1.bf16.msra.mxu0 %v613
    %637 = vmatprep.subr.bf16.mxu0 0
    %638 = vmatpush1.bf16.msra.mxu0 %v614
    %639 = vmatprep.subr.bf16.mxu0 0
    %640 = vmatpush1.bf16.msra.mxu0 0
    %641 = vmatprep.subr.bf16.mxu0 0
    %642 = vmatpush1.bf16.msra.mxu0 0
    %643 = vmatprep.subr.bf16.mxu0 0
    %644 = vmatpush1.bf16.msra.mxu0 0
    %645 = vmatprep.subr.bf16.mxu0 0
    %646 = vmatpush1.bf16.msra.mxu0 0
    %647 = vmatprep.subr.bf16.mxu0 0
    %648 = vmatpush1.bf16.msra.mxu0 0
    %649 = vmatprep.subr.bf16.mxu0 0
    %650 = vmatpush1.bf16.msra.mxu0 0
    %651 = vmatprep.subr.bf16.mxu0 0
    %652 = vmatpush1.bf16.msra.mxu0 0
    %653 = vmatprep.subr.bf16.mxu0 0
    %654 = vmatpush1.bf16.msra.mxu0 0
    %655 = vmatprep.mubr.bf16.mxu0 0
    %656 = vmatmul.mubr.bf16.gmra.mrb[0].mxu0 %v551
    %v657 = vpop.f32.mrb[0].mxu0
    %v658 = vadd.f32 %v573, %v657
    %v659 = vpop.f32.mrb[0].mxu0
    %v660 = vpop.f32.mrb[0].mxu0
    %v661 = vadd.f32 %v573, %v660
    %v662 = vpop.f32.mrb[0].mxu0
    %663 = vdwg.mxu0
    %v664 = vxor.u32 %v658, 2147483648
    %v665 = vxor.u32 %v661, 2147483648
    %v666 = vmul.f32 %v664, 1.442695
    %v667 = vpow.pop %v666
    %v668 = vmul.f32 %v665, 1.442695
    %v669 = vpow.pop %v668
    %v670 = vadd.f32 %v667, 1.0
    %v671 = vadd.f32 %v669, 1.0
    %v672 = vrcp.pop %v670
    %v673 = vmul.f32 1.0, %v672
    %v674 = vrcp.pop %v671
    %v675 = vmul.f32 1.0, %v674
    %676 = vst [vmem:[#allocation15] sm:$0xff] %v673
    %677 = vst [vmem:[#allocation15 + $0x8] sm:$0xff] %v675
    %v680 = vunpack.c.l.b16 %v141
    %v681 = vunpack.c.l.b16 %v142
    %v682 = vpack.c.b16 %v681, %v680
    %v686 = vunpack.c.l.b16 %v173
    %v687 = vunpack.c.l.b16 %v174
    %v688 = vpack.c.b16 %v687, %v686
    %690 = vmatprep.subr.bf16.mxu0 0
    %691 = vmatpush1.bf16.xpose.msra.mxu0 %v688
    %692 = vmatprep.subr.bf16.mxu0 0
    %693 = vmatpush1.bf16.xpose.msra.mxu0 0
    %694 = vmatprep.subr.bf16.mxu0 0
    %695 = vmatpush1.bf16.xpose.msra.mxu0 0
    %696 = vmatprep.subr.bf16.mxu0 0
    %697 = vmatpush1.bf16.xpose.msra.mxu0 0
    %698 = vmatprep.subr.bf16.mxu0 0
    %699 = vmatpush1.bf16.xpose.msra.mxu0 0
    %700 = vmatprep.subr.bf16.mxu0 0
    %701 = vmatpush1.bf16.xpose.msra.mxu0 0
    %702 = vmatprep.subr.bf16.mxu0 0
    %703 = vmatpush1.bf16.xpose.msra.mxu0 0
    %704 = vmatprep.subr.bf16.mxu0 0
    %705 = vmatpush1.bf16.xpose.msra.mxu0 0
    %706 = vmatprep.subr.bf16.mxu0 0
    %707 = vmatpush1.bf16.xpose.msra.mxu0 0
    %708 = vmatprep.subr.bf16.mxu0 0
    %709 = vmatpush1.bf16.xpose.msra.mxu0 0
    %710 = vmatprep.subr.bf16.mxu0 0
    %711 = vmatpush1.bf16.xpose.msra.mxu0 0
    %712 = vmatprep.subr.bf16.mxu0 0
    %713 = vmatpush1.bf16.xpose.msra.mxu0 0
    %714 = vmatprep.subr.bf16.mxu0 0
    %715 = vmatpush1.bf16.xpose.msra.mxu0 0
    %716 = vmatprep.subr.bf16.mxu0 0
    %717 = vmatpush1.bf16.xpose.msra.mxu0 0
    %718 = vmatprep.subr.bf16.mxu0 0
    %719 = vmatpush1.bf16.xpose.msra.mxu0 0
    %720 = vmatprep.subr.bf16.mxu0 0
    %721 = vmatpush1.bf16.xpose.msra.mxu0 0
    %722 = vmatprep.mubr.bf16.mxu0 0
    %723 = vmatmul.mubr.bf16.gmra.mrb[0].mxu0 %v682
    %v724 = vpop.f32.mrb[0].mxu0
    %v725 = vadd.f32 0.0, %v724
    %v726 = vpop.f32.mrb[0].mxu0
    %v727 = vpop.f32.mrb[0].mxu0
    %v728 = vadd.f32 0.0, %v727
    %v729 = vpop.f32.mrb[0].mxu0
    %730 = vdwg.mxu0
    %v733 = vunpack.c.l.b16 %v143
    %v734 = vunpack.c.l.b16 %v144
    %v735 = vpack.c.b16 %v734, %v733
    %v739 = vunpack.c.l.b16 %v175
    %v740 = vunpack.c.l.b16 %v176
    %v741 = vpack.c.b16 %v740, %v739
    %743 = vmatprep.subr.bf16.mxu0 0
    %744 = vmatpush1.bf16.xpose.msra.mxu0 %v741
    %745 = vmatprep.subr.bf16.mxu0 0
    %746 = vmatpush1.bf16.xpose.msra.mxu0 0
    %747 = vmatprep.subr.bf16.mxu0 0
    %748 = vmatpush1.bf16.xpose.msra.mxu0 0
    %749 = vmatprep.subr.bf16.mxu0 0
    %750 = vmatpush1.bf16.xpose.msra.mxu0 0
    %751 = vmatprep.subr.bf16.mxu0 0
    %752 = vmatpush1.bf16.xpose.msra.mxu0 0
    %753 = vmatprep.subr.bf16.mxu0 0
    %754 = vmatpush1.bf16.xpose.msra.mxu0 0
    %755 = vmatprep.subr.bf16.mxu0 0
    %756 = vmatpush1.bf16.xpose.msra.mxu0 0
    %757 = vmatprep.subr.bf16.mxu0 0
    %758 = vmatpush1.bf16.xpose.msra.mxu0 0
    %759 = vmatprep.subr.bf16.mxu0 0
    %760 = vmatpush1.bf16.xpose.msra.mxu0 0
    %761 = vmatprep.subr.bf16.mxu0 0
    %762 = vmatpush1.bf16.xpose.msra.mxu0 0
    %763 = vmatprep.subr.bf16.mxu0 0
    %764 = vmatpush1.bf16.xpose.msra.mxu0 0
    %765 = vmatprep.subr.bf16.mxu0 0
    %766 = vmatpush1.bf16.xpose.msra.mxu0 0
    %767 = vmatprep.subr.bf16.mxu0 0
    %768 = vmatpush1.bf16.xpose.msra.mxu0 0
    %769 = vmatprep.subr.bf16.mxu0 0
    %770 = vmatpush1.bf16.xpose.msra.mxu0 0
    %771 = vmatprep.subr.bf16.mxu0 0
    %772 = vmatpush1.bf16.xpose.msra.mxu0 0
    %773 = vmatprep.subr.bf16.mxu0 0
    %774 = vmatpush1.bf16.xpose.msra.mxu0 0
    %775 = vmatprep.mubr.bf16.mxu0 0
    %776 = vmatmul.mubr.bf16.gmra.mrb[0].mxu0 %v735
    %v777 = vpop.f32.mrb[0].mxu0
    %v778 = vadd.f32 0.0, %v777
    %v779 = vpop.f32.mrb[0].mxu0
    %v780 = vpop.f32.mrb[0].mxu0
    %v781 = vadd.f32 0.0, %v780
    %v782 = vpop.f32.mrb[0].mxu0
    %783 = vdwg.mxu0
    %v786 = vunpack.c.l.b16 %v145
    %v787 = vunpack.c.l.b16 %v146
    %v788 = vpack.c.b16 %v787, %v786
    %v792 = vunpack.c.l.b16 %v177
    %v793 = vunpack.c.l.b16 %v178
    %v794 = vpack.c.b16 %v793, %v792
    %796 = vmatprep.subr.bf16.mxu0 0
    %797 = vmatpush1.bf16.xpose.msra.mxu0 %v794
    %798 = vmatprep.subr.bf16.mxu0 0
    %799 = vmatpush1.bf16.xpose.msra.mxu0 0
    %800 = vmatprep.subr.bf16.mxu0 0
    %801 = vmatpush1.bf16.xpose.msra.mxu0 0
    %802 = vmatprep.subr.bf16.mxu0 0
    %803 = vmatpush1.bf16.xpose.msra.mxu0 0
    %804 = vmatprep.subr.bf16.mxu0 0
    %805 = vmatpush1.bf16.xpose.msra.mxu0 0
    %806 = vmatprep.subr.bf16.mxu0 0
    %807 = vmatpush1.bf16.xpose.msra.mxu0 0
    %808 = vmatprep.subr.bf16.mxu0 0
    %809 = vmatpush1.bf16.xpose.msra.mxu0 0
    %810 = vmatprep.subr.bf16.mxu0 0
    %811 = vmatpush1.bf16.xpose.msra.mxu0 0
    %812 = vmatprep.subr.bf16.mxu0 0
    %813 = vmatpush1.bf16.xpose.msra.mxu0 0
    %814 = vmatprep.subr.bf16.mxu0 0
    %815 = vmatpush1.bf16.xpose.msra.mxu0 0
    %816 = vmatprep.subr.bf16.mxu0 0
    %817 = vmatpush1.bf16.xpose.msra.mxu0 0
    %818 = vmatprep.subr.bf16.mxu0 0
    %819 = vmatpush1.bf16.xpose.msra.mxu0 0
    %820 = vmatprep.subr.bf16.mxu0 0
    %821 = vmatpush1.bf16.xpose.msra.mxu0 0
    %822 = vmatprep.subr.bf16.mxu0 0
    %823 = vmatpush1.bf16.xpose.msra.mxu0 0
    %824 = vmatprep.subr.bf16.mxu0 0
    %825 = vmatpush1.bf16.xpose.msra.mxu0 0
    %826 = vmatprep.subr.bf16.mxu0 0
    %827 = vmatpush1.bf16.xpose.msra.mxu0 0
    %828 = vmatprep.mubr.bf16.mxu0 0
    %829 = vmatmul.mubr.bf16.gmra.mrb[0].mxu0 %v788
    %v830 = vpop.f32.mrb[0].mxu0
    %v831 = vadd.f32 0.0, %v830
    %v832 = vpop.f32.mrb[0].mxu0
    %v833 = vpop.f32.mrb[0].mxu0
    %v834 = vadd.f32 0.0, %v833
    %v835 = vpop.f32.mrb[0].mxu0
    %836 = vdwg.mxu0
    %v839 = vunpack.c.l.b16 %v147
    %v840 = vunpack.c.l.b16 %v148
    %v841 = vpack.c.b16 %v840, %v839
    %v845 = vunpack.c.l.b16 %v179
    %v846 = vunpack.c.l.b16 %v180
    %v847 = vpack.c.b16 %v846, %v845
    %849 = vmatprep.subr.bf16.mxu0 0
    %850 = vmatpush1.bf16.xpose.msra.mxu0 %v847
    %851 = vmatprep.subr.bf16.mxu0 0
    %852 = vmatpush1.bf16.xpose.msra.mxu0 0
    %853 = vmatprep.subr.bf16.mxu0 0
    %854 = vmatpush1.bf16.xpose.msra.mxu0 0
    %855 = vmatprep.subr.bf16.mxu0 0
    %856 = vmatpush1.bf16.xpose.msra.mxu0 0
    %857 = vmatprep.subr.bf16.mxu0 0
    %858 = vmatpush1.bf16.xpose.msra.mxu0 0
    %859 = vmatprep.subr.bf16.mxu0 0
    %860 = vmatpush1.bf16.xpose.msra.mxu0 0
    %861 = vmatprep.subr.bf16.mxu0 0
    %862 = vmatpush1.bf16.xpose.msra.mxu0 0
    %863 = vmatprep.subr.bf16.mxu0 0
    %864 = vmatpush1.bf16.xpose.msra.mxu0 0
    %865 = vmatprep.subr.bf16.mxu0 0
    %866 = vmatpush1.bf16.xpose.msra.mxu0 0
    %867 = vmatprep.subr.bf16.mxu0 0
    %868 = vmatpush1.bf16.xpose.msra.mxu0 0
    %869 = vmatprep.subr.bf16.mxu0 0
    %870 = vmatpush1.bf16.xpose.msra.mxu0 0
    %871 = vmatprep.subr.bf16.mxu0 0
    %872 = vmatpush1.bf16.xpose.msra.mxu0 0
    %873 = vmatprep.subr.bf16.mxu0 0
    %874 = vmatpush1.bf16.xpose.msra.mxu0 0
    %875 = vmatprep.subr.bf16.mxu0 0
    %876 = vmatpush1.bf16.xpose.msra.mxu0 0
    %877 = vmatprep.subr.bf16.mxu0 0
    %878 = vmatpush1.bf16.xpose.msra.mxu0 0
    %879 = vmatprep.subr.bf16.mxu0 0
    %880 = vmatpush1.bf16.xpose.msra.mxu0 0
    %881 = vmatprep.mubr.bf16.mxu0 0
    %882 = vmatmul.mubr.bf16.gmra.mrb[0].mxu0 %v841
    %v883 = vpop.f32.mrb[0].mxu0
    %v884 = vadd.f32 0.0, %v883
    %v885 = vpop.f32.mrb[0].mxu0
    %v886 = vpop.f32.mrb[0].mxu0
    %v887 = vadd.f32 0.0, %v886
    %v888 = vpop.f32.mrb[0].mxu0
    %889 = vdwg.mxu0
    %v892 = vunpack.c.l.b16 %v149
    %v893 = vunpack.c.l.b16 %v150
    %v894 = vpack.c.b16 %v893, %v892
    %v898 = vunpack.c.l.b16 %v181
    %v899 = vunpack.c.l.b16 %v182
    %v900 = vpack.c.b16 %v899, %v898
    %902 = vmatprep.subr.bf16.mxu0 0
    %903 = vmatpush1.bf16.xpose.msra.mxu0 %v900
    %904 = vmatprep.subr.bf16.mxu0 0
    %905 = vmatpush1.bf16.xpose.msra.mxu0 0
    %906 = vmatprep.subr.bf16.mxu0 0
    %907 = vmatpush1.bf16.xpose.msra.mxu0 0
    %908 = vmatprep.subr.bf16.mxu0 0
    %909 = vmatpush1.bf16.xpose.msra.mxu0 0
    %910 = vmatprep.subr.bf16.mxu0 0
    %911 = vmatpush1.bf16.xpose.msra.mxu0 0
    %912 = vmatprep.subr.bf16.mxu0 0
    %913 = vmatpush1.bf16.xpose.msra.mxu0 0
    %914 = vmatprep.subr.bf16.mxu0 0
    %915 = vmatpush1.bf16.xpose.msra.mxu0 0
    %916 = vmatprep.subr.bf16.mxu0 0
    %917 = vmatpush1.bf16.xpose.msra.mxu0 0
    %918 = vmatprep.subr.bf16.mxu0 0
    %919 = vmatpush1.bf16.xpose.msra.mxu0 0
    %920 = vmatprep.subr.bf16.mxu0 0
    %921 = vmatpush1.bf16.xpose.msra.mxu0 0
    %922 = vmatprep.subr.bf16.mxu0 0
    %923 = vmatpush1.bf16.xpose.msra.mxu0 0
    %924 = vmatprep.subr.bf16.mxu0 0
    %925 = vmatpush1.bf16.xpose.msra.mxu0 0
    %926 = vmatprep.subr.bf16.mxu0 0
    %927 = vmatpush1.bf16.xpose.msra.mxu0 0
    %928 = vmatprep.subr.bf16.mxu0 0
    %929 = vmatpush1.bf16.xpose.msra.mxu0 0
    %930 = vmatprep.subr.bf16.mxu0 0
    %931 = vmatpush1.bf16.xpose.msra.mxu0 0
    %932 = vmatprep.subr.bf16.mxu0 0
    %933 = vmatpush1.bf16.xpose.msra.mxu0 0
    %934 = vmatprep.mubr.bf16.mxu0 0
    %935 = vmatmul.mubr.bf16.gmra.mrb[0].mxu0 %v894
    %v936 = vpop.f32.mrb[0].mxu0
    %v937 = vadd.f32 0.0, %v936
    %v938 = vpop.f32.mrb[0].mxu0
    %v939 = vpop.f32.mrb[0].mxu0
    %v940 = vadd.f32 0.0, %v939
    %v941 = vpop.f32.mrb[0].mxu0
    %942 = vdwg.mxu0
    %v945 = vunpack.c.l.b16 %v151
    %v946 = vunpack.c.l.b16 %v152
    %v947 = vpack.c.b16 %v946, %v945
    %v951 = vunpack.c.l.b16 %v183
    %v952 = vunpack.c.l.b16 %v184
    %v953 = vpack.c.b16 %v952, %v951
    %955 = vmatprep.subr.bf16.mxu0 0
    %956 = vmatpush1.bf16.xpose.msra.mxu0 %v953
    %957 = vmatprep.subr.bf16.mxu0 0
    %958 = vmatpush1.bf16.xpose.msra.mxu0 0
    %959 = vmatprep.subr.bf16.mxu0 0
    %960 = vmatpush1.bf16.xpose.msra.mxu0 0
    %961 = vmatprep.subr.bf16.mxu0 0
    %962 = vmatpush1.bf16.xpose.msra.mxu0 0
    %963 = vmatprep.subr.bf16.mxu0 0
    %964 = vmatpush1.bf16.xpose.msra.mxu0 0
    %965 = vmatprep.subr.bf16.mxu0 0
    %966 = vmatpush1.bf16.xpose.msra.mxu0 0
    %967 = vmatprep.subr.bf16.mxu0 0
    %968 = vmatpush1.bf16.xpose.msra.mxu0 0
    %969 = vmatprep.subr.bf16.mxu0 0
    %970 = vmatpush1.bf16.xpose.msra.mxu0 0
    %971 = vmatprep.subr.bf16.mxu0 0
    %972 = vmatpush1.bf16.xpose.msra.mxu0 0
    %973 = vmatprep.subr.bf16.mxu0 0
    %974 = vmatpush1.bf16.xpose.msra.mxu0 0
    %975 = vmatprep.subr.bf16.mxu0 0
    %976 = vmatpush1.bf16.xpose.msra.mxu0 0
    %977 = vmatprep.subr.bf16.mxu0 0
    %978 = vmatpush1.bf16.xpose.msra.mxu0 0
    %979 = vmatprep.subr.bf16.mxu0 0
    %980 = vmatpush1.bf16.xpose.msra.mxu0 0
    %981 = vmatprep.subr.bf16.mxu0 0
    %982 = vmatpush1.bf16.xpose.msra.mxu0 0
    %983 = vmatprep.subr.bf16.mxu0 0
    %984 = vmatpush1.bf16.xpose.msra.mxu0 0
    %985 = vmatprep.subr.bf16.mxu0 0
    %986 = vmatpush1.bf16.xpose.msra.mxu0 0
    %987 = vmatprep.mubr.bf16.mxu0 0
    %988 = vmatmul.mubr.bf16.gmra.mrb[0].mxu0 %v947
    %v989 = vpop.f32.mrb[0].mxu0
    %v990 = vadd.f32 0.0, %v989
    %v991 = vpop.f32.mrb[0].mxu0
    %v992 = vpop.f32.mrb[0].mxu0
    %v993 = vadd.f32 0.0, %v992
    %v994 = vpop.f32.mrb[0].mxu0
    %995 = vdwg.mxu0
    %v998 = vunpack.c.l.b16 %v153
    %v999 = vunpack.c.l.b16 %v154
    %v1000 = vpack.c.b16 %v999, %v998
    %v1004 = vunpack.c.l.b16 %v185
    %v1005 = vunpack.c.l.b16 %v186
    %v1006 = vpack.c.b16 %v1005, %v1004
    %1008 = vmatprep.subr.bf16.mxu0 0
    %1009 = vmatpush1.bf16.xpose.msra.mxu0 %v1006
    %1010 = vmatprep.subr.bf16.mxu0 0
    %1011 = vmatpush1.bf16.xpose.msra.mxu0 0
    %1012 = vmatprep.subr.bf16.mxu0 0
    %1013 = vmatpush1.bf16.xpose.msra.mxu0 0
    %1014 = vmatprep.subr.bf16.mxu0 0
    %1015 = vmatpush1.bf16.xpose.msra.mxu0 0
    %1016 = vmatprep.subr.bf16.mxu0 0
    %1017 = vmatpush1.bf16.xpose.msra.mxu0 0
    %1018 = vmatprep.subr.bf16.mxu0 0
    %1019 = vmatpush1.bf16.xpose.msra.mxu0 0
    %1020 = vmatprep.subr.bf16.mxu0 0
    %1021 = vmatpush1.bf16.xpose.msra.mxu0 0
    %1022 = vmatprep.subr.bf16.mxu0 0
    %1023 = vmatpush1.bf16.xpose.msra.mxu0 0
    %1024 = vmatprep.subr.bf16.mxu0 0
    %1025 = vmatpush1.bf16.xpose.msra.mxu0 0
    %1026 = vmatprep.subr.bf16.mxu0 0
    %1027 = vmatpush1.bf16.xpose.msra.mxu0 0
    %1028 = vmatprep.subr.bf16.mxu0 0
    %1029 = vmatpush1.bf16.xpose.msra.mxu0 0
    %1030 = vmatprep.subr.bf16.mxu0 0
    %1031 = vmatpush1.bf16.xpose.msra.mxu0 0
    %1032 = vmatprep.subr.bf16.mxu0 0
    %1033 = vmatpush1.bf16.xpose.msra.mxu0 0
    %1034 = vmatprep.subr.bf16.mxu0 0
    %1035 = vmatpush1.bf16.xpose.msra.mxu0 0
    %1036 = vmatprep.subr.bf16.mxu0 0
    %1037 = vmatpush1.bf16.xpose.msra.mxu0 0
    %1038 = vmatprep.subr.bf16.mxu0 0
    %1039 = vmatpush1.bf16.xpose.msra.mxu0 0
    %1040 = vmatprep.mubr.bf16.mxu0 0
    %1041 = vmatmul.mubr.bf16.gmra.mrb[0].mxu0 %v1000
    %v1042 = vpop.f32.mrb[0].mxu0
    %v1043 = vadd.f32 0.0, %v1042
    %v1044 = vpop.f32.mrb[0].mxu0
    %v1045 = vpop.f32.mrb[0].mxu0
    %v1046 = vadd.f32 0.0, %v1045
    %v1047 = vpop.f32.mrb[0].mxu0
    %1048 = vdwg.mxu0
    %v1051 = vunpack.c.l.b16 %v155
    %v1052 = vunpack.c.l.b16 %v156
    %v1053 = vpack.c.b16 %v1052, %v1051
    %v1057 = vunpack.c.l.b16 %v187
    %v1058 = vunpack.c.l.b16 %v188
    %v1059 = vpack.c.b16 %v1058, %v1057
    %1061 = vmatprep.subr.bf16.mxu0 0
    %1062 = vmatpush1.bf16.xpose.msra.mxu0 %v1059
    %1063 = vmatprep.subr.bf16.mxu0 0
    %1064 = vmatpush1.bf16.xpose.msra.mxu0 0
    %1065 = vmatprep.subr.bf16.mxu0 0
    %1066 = vmatpush1.bf16.xpose.msra.mxu0 0
    %1067 = vmatprep.subr.bf16.mxu0 0
    %1068 = vmatpush1.bf16.xpose.msra.mxu0 0
    %1069 = vmatprep.subr.bf16.mxu0 0
    %1070 = vmatpush1.bf16.xpose.msra.mxu0 0
    %1071 = vmatprep.subr.bf16.mxu0 0
    %1072 = vmatpush1.bf16.xpose.msra.mxu0 0
    %1073 = vmatprep.subr.bf16.mxu0 0
    %1074 = vmatpush1.bf16.xpose.msra.mxu0 0
    %1075 = vmatprep.subr.bf16.mxu0 0
    %1076 = vmatpush1.bf16.xpose.msra.mxu0 0
    %1077 = vmatprep.subr.bf16.mxu0 0
    %1078 = vmatpush1.bf16.xpose.msra.mxu0 0
    %1079 = vmatprep.subr.bf16.mxu0 0
    %1080 = vmatpush1.bf16.xpose.msra.mxu0 0
    %1081 = vmatprep.subr.bf16.mxu0 0
    %1082 = vmatpush1.bf16.xpose.msra.mxu0 0
    %1083 = vmatprep.subr.bf16.mxu0 0
    %1084 = vmatpush1.bf16.xpose.msra.mxu0 0
    %1085 = vmatprep.subr.bf16.mxu0 0
    %1086 = vmatpush1.bf16.xpose.msra.mxu0 0
    %1087 = vmatprep.subr.bf16.mxu0 0
    %1088 = vmatpush1.bf16.xpose.msra.mxu0 0
    %1089 = vmatprep.subr.bf16.mxu0 0
    %1090 = vmatpush1.bf16.xpose.msra.mxu0 0
    %1091 = vmatprep.subr.bf16.mxu0 0
    %1092 = vmatpush1.bf16.xpose.msra.mxu0 0
    %1093 = vmatprep.mubr.bf16.mxu0 0
    %1094 = vmatmul.mubr.bf16.gmra.mrb[0].mxu0 %v1053
    %v1095 = vpop.f32.mrb[0].mxu0
    %v1096 = vadd.f32 0.0, %v1095
    %v1097 = vpop.f32.mrb[0].mxu0
    %v1098 = vpop.f32.mrb[0].mxu0
    %v1099 = vadd.f32 0.0, %v1098
    %v1100 = vpop.f32.mrb[0].mxu0
    %1101 = vdwg.mxu0
    %v1104 = vunpack.c.l.b16 %v157
    %v1105 = vunpack.c.l.b16 %v158
    %v1106 = vpack.c.b16 %v1105, %v1104
    %v1110 = vunpack.c.l.b16 %v189
    %v1111 = vunpack.c.l.b16 %v190
    %v1112 = vpack.c.b16 %v1111, %v1110
    %1114 = vmatprep.subr.bf16.mxu0 0
    %1115 = vmatpush1.bf16.xpose.msra.mxu0 %v1112
    %1116 = vmatprep.subr.bf16.mxu0 0
    %1117 = vmatpush1.bf16.xpose.msra.mxu0 0
    %1118 = vmatprep.subr.bf16.mxu0 0
    %1119 = vmatpush1.bf16.xpose.msra.mxu0 0
    %1120 = vmatprep.subr.bf16.mxu0 0
    %1121 = vmatpush1.bf16.xpose.msra.mxu0 0
    %1122 = vmatprep.subr.bf16.mxu0 0
    %1123 = vmatpush1.bf16.xpose.msra.mxu0 0
    %1124 = vmatprep.subr.bf16.mxu0 0
    %1125 = vmatpush1.bf16.xpose.msra.mxu0 0
    %1126 = vmatprep.subr.bf16.mxu0 0
    %1127 = vmatpush1.bf16.xpose.msra.mxu0 0
    %1128 = vmatprep.subr.bf16.mxu0 0
    %1129 = vmatpush1.bf16.xpose.msra.mxu0 0
    %1130 = vmatprep.subr.bf16.mxu0 0
    %1131 = vmatpush1.bf16.xpose.msra.mxu0 0
    %1132 = vmatprep.subr.bf16.mxu0 0
    %1133 = vmatpush1.bf16.xpose.msra.mxu0 0
    %1134 = vmatprep.subr.bf16.mxu0 0
    %1135 = vmatpush1.bf16.xpose.msra.mxu0 0
    %1136 = vmatprep.subr.bf16.mxu0 0
    %1137 = vmatpush1.bf16.xpose.msra.mxu0 0
    %1138 = vmatprep.subr.bf16.mxu0 0
    %1139 = vmatpush1.bf16.xpose.msra.mxu0 0
    %1140 = vmatprep.subr.bf16.mxu0 0
    %1141 = vmatpush1.bf16.xpose.msra.mxu0 0
    %1142 = vmatprep.subr.bf16.mxu0 0
    %1143 = vmatpush1.bf16.xpose.msra.mxu0 0
    %1144 = vmatprep.subr.bf16.mxu0 0
    %1145 = vmatpush1.bf16.xpose.msra.mxu0 0
    %1146 = vmatprep.mubr.bf16.mxu0 0
    %1147 = vmatmul.mubr.bf16.gmra.mrb[0].mxu0 %v1106
    %v1148 = vpop.f32.mrb[0].mxu0
    %v1149 = vadd.f32 0.0, %v1148
    %v1150 = vpop.f32.mrb[0].mxu0
    %v1151 = vpop.f32.mrb[0].mxu0
    %v1152 = vadd.f32 0.0, %v1151
    %v1153 = vpop.f32.mrb[0].mxu0
    %1154 = vdwg.mxu0
    %v1157 = vunpack.c.l.b16 %v159
    %v1158 = vunpack.c.l.b16 %v160
    %v1159 = vpack.c.b16 %v1158, %v1157
    %v1163 = vunpack.c.l.b16 %v191
    %v1164 = vunpack.c.l.b16 %v192
    %v1165 = vpack.c.b16 %v1164, %v1163
    %1167 = vmatprep.subr.bf16.mxu0 0
    %1168 = vmatpush1.bf16.xpose.msra.mxu0 %v1165
    %1169 = vmatprep.subr.bf16.mxu0 0
    %1170 = vmatpush1.bf16.xpose.msra.mxu0 0
    %1171 = vmatprep.subr.bf16.mxu0 0
    %1172 = vmatpush1.bf16.xpose.msra.mxu0 0
    %1173 = vmatprep.subr.bf16.mxu0 0
    %1174 = vmatpush1.bf16.xpose.msra.mxu0 0
    %1175 = vmatprep.subr.bf16.mxu0 0
    %1176 = vmatpush1.bf16.xpose.msra.mxu0 0
    %1177 = vmatprep.subr.bf16.mxu0 0
    %1178 = vmatpush1.bf16.xpose.msra.mxu0 0
    %1179 = vmatprep.subr.bf16.mxu0 0
    %1180 = vmatpush1.bf16.xpose.msra.mxu0 0
    %1181 = vmatprep.subr.bf16.mxu0 0
    %1182 = vmatpush1.bf16.xpose.msra.mxu0 0
    %1183 = vmatprep.subr.bf16.mxu0 0
    %1184 = vmatpush1.bf16.xpose.msra.mxu0 0
    %1185 = vmatprep.subr.bf16.mxu0 0
    %1186 = vmatpush1.bf16.xpose.msra.mxu0 0
    %1187 = vmatprep.subr.bf16.mxu0 0
    %1188 = vmatpush1.bf16.xpose.msra.mxu0 0
    %1189 = vmatprep.subr.bf16.mxu0 0
    %1190 = vmatpush1.bf16.xpose.msra.mxu0 0
    %1191 = vmatprep.subr.bf16.mxu0 0
    %1192 = vmatpush1.bf16.xpose.msra.mxu0 0
    %1193 = vmatprep.subr.bf16.mxu0 0
    %1194 = vmatpush1.bf16.xpose.msra.mxu0 0
    %1195 = vmatprep.subr.bf16.mxu0 0
    %1196 = vmatpush1.bf16.xpose.msra.mxu0 0
    %1197 = vmatprep.subr.bf16.mxu0 0
    %1198 = vmatpush1.bf16.xpose.msra.mxu0 0
    %1199 = vmatprep.mubr.bf16.mxu0 0
    %1200 = vmatmul.mubr.bf16.gmra.mrb[0].mxu0 %v1159
    %v1201 = vpop.f32.mrb[0].mxu0
    %v1202 = vadd.f32 0.0, %v1201
    %v1203 = vpop.f32.mrb[0].mxu0
    %v1204 = vpop.f32.mrb[0].mxu0
    %v1205 = vadd.f32 0.0, %v1204
    %v1206 = vpop.f32.mrb[0].mxu0
    %1207 = vdwg.mxu0
    %v1210 = vunpack.c.l.b16 %v161
    %v1211 = vunpack.c.l.b16 %v162
    %v1212 = vpack.c.b16 %v1211, %v1210
    %v1216 = vunpack.c.l.b16 %v193
    %v1217 = vunpack.c.l.b16 %v194
    %v1218 = vpack.c.b16 %v1217, %v1216
    %1220 = vmatprep.subr.bf16.mxu0 0
    %1221 = vmatpush1.bf16.xpose.msra.mxu0 %v1218
    %1222 = vmatprep.subr.bf16.mxu0 0
    %1223 = vmatpush1.bf16.xpose.msra.mxu0 0
    %1224 = vmatprep.subr.bf16.mxu0 0
    %1225 = vmatpush1.bf16.xpose.msra.mxu0 0
    %1226 = vmatprep.subr.bf16.mxu0 0
    %1227 = vmatpush1.bf16.xpose.msra.mxu0 0
    %1228 = vmatprep.subr.bf16.mxu0 0
    %1229 = vmatpush1.bf16.xpose.msra.mxu0 0
    %1230 = vmatprep.subr.bf16.mxu0 0
    %1231 = vmatpush1.bf16.xpose.msra.mxu0 0
    %1232 = vmatprep.subr.bf16.mxu0 0
    %1233 = vmatpush1.bf16.xpose.msra.mxu0 0
    %1234 = vmatprep.subr.bf16.mxu0 0
    %1235 = vmatpush1.bf16.xpose.msra.mxu0 0
    %1236 = vmatprep.subr.bf16.mxu0 0
    %1237 = vmatpush1.bf16.xpose.msra.mxu0 0
    %1238 = vmatprep.subr.bf16.mxu0 0
    %1239 = vmatpush1.bf16.xpose.msra.mxu0 0
    %1240 = vmatprep.subr.bf16.mxu0 0
    %1241 = vmatpush1.bf16.xpose.msra.mxu0 0
    %1242 = vmatprep.subr.bf16.mxu0 0
    %1243 = vmatpush1.bf16.xpose.msra.mxu0 0
    %1244 = vmatprep.subr.bf16.mxu0 0
    %1245 = vmatpush1.bf16.xpose.msra.mxu0 0
    %1246 = vmatprep.subr.bf16.mxu0 0
    %1247 = vmatpush1.bf16.xpose.msra.mxu0 0
    %1248 = vmatprep.subr.bf16.mxu0 0
    %1249 = vmatpush1.bf16.xpose.msra.mxu0 0
    %1250 = vmatprep.subr.bf16.mxu0 0
    %1251 = vmatpush1.bf16.xpose.msra.mxu0 0
    %1252 = vmatprep.mubr.bf16.mxu0 0
    %1253 = vmatmul.mubr.bf16.gmra.mrb[0].mxu0 %v1212
    %v1254 = vpop.f32.mrb[0].mxu0
    %v1255 = vadd.f32 0.0, %v1254
    %v1256 = vpop.f32.mrb[0].mxu0
    %v1257 = vpop.f32.mrb[0].mxu0
    %v1258 = vadd.f32 0.0, %v1257
    %v1259 = vpop.f32.mrb[0].mxu0
    %1260 = vdwg.mxu0
    %v1263 = vunpack.c.l.b16 %v163
    %v1264 = vunpack.c.l.b16 %v164
    %v1265 = vpack.c.b16 %v1264, %v1263
    %v1269 = vunpack.c.l.b16 %v195
    %v1270 = vunpack.c.l.b16 %v196
    %v1271 = vpack.c.b16 %v1270, %v1269
    %1273 = vmatprep.subr.bf16.mxu0 0
    %1274 = vmatpush1.bf16.xpose.msra.mxu0 %v1271
    %1275 = vmatprep.subr.bf16.mxu0 0
    %1276 = vmatpush1.bf16.xpose.msra.mxu0 0
    %1277 = vmatprep.subr.bf16.mxu0 0
    %1278 = vmatpush1.bf16.xpose.msra.mxu0 0
    %1279 = vmatprep.subr.bf16.mxu0 0
    %1280 = vmatpush1.bf16.xpose.msra.mxu0 0
    %1281 = vmatprep.subr.bf16.mxu0 0
    %1282 = vmatpush1.bf16.xpose.msra.mxu0 0
    %1283 = vmatprep.subr.bf16.mxu0 0
    %1284 = vmatpush1.bf16.xpose.msra.mxu0 0
    %1285 = vmatprep.subr.bf16.mxu0 0
    %1286 = vmatpush1.bf16.xpose.msra.mxu0 0
    %1287 = vmatprep.subr.bf16.mxu0 0
    %1288 = vmatpush1.bf16.xpose.msra.mxu0 0
    %1289 = vmatprep.subr.bf16.mxu0 0
    %1290 = vmatpush1.bf16.xpose.msra.mxu0 0
    %1291 = vmatprep.subr.bf16.mxu0 0
    %1292 = vmatpush1.bf16.xpose.msra.mxu0 0
    %1293 = vmatprep.subr.bf16.mxu0 0
    %1294 = vmatpush1.bf16.xpose.msra.mxu0 0
    %1295 = vmatprep.subr.bf16.mxu0 0
    %1296 = vmatpush1.bf16.xpose.msra.mxu0 0
    %1297 = vmatprep.subr.bf16.mxu0 0
    %1298 = vmatpush1.bf16.xpose.msra.mxu0 0
    %1299 = vmatprep.subr.bf16.mxu0 0
    %1300 = vmatpush1.bf16.xpose.msra.mxu0 0
    %1301 = vmatprep.subr.bf16.mxu0 0
    %1302 = vmatpush1.bf16.xpose.msra.mxu0 0
    %1303 = vmatprep.subr.bf16.mxu0 0
    %1304 = vmatpush1.bf16.xpose.msra.mxu0 0
    %1305 = vmatprep.mubr.bf16.mxu0 0
    %1306 = vmatmul.mubr.bf16.gmra.mrb[0].mxu0 %v1265
    %v1307 = vpop.f32.mrb[0].mxu0
    %v1308 = vadd.f32 0.0, %v1307
    %v1309 = vpop.f32.mrb[0].mxu0
    %v1310 = vpop.f32.mrb[0].mxu0
    %v1311 = vadd.f32 0.0, %v1310
    %v1312 = vpop.f32.mrb[0].mxu0
    %1313 = vdwg.mxu0
    %v1316 = vunpack.c.l.b16 %v165
    %v1317 = vunpack.c.l.b16 %v166
    %v1318 = vpack.c.b16 %v1317, %v1316
    %v1322 = vunpack.c.l.b16 %v197
    %v1323 = vunpack.c.l.b16 %v198
    %v1324 = vpack.c.b16 %v1323, %v1322
    %1326 = vmatprep.subr.bf16.mxu0 0
    %1327 = vmatpush1.bf16.xpose.msra.mxu0 %v1324
    %1328 = vmatprep.subr.bf16.mxu0 0
    %1329 = vmatpush1.bf16.xpose.msra.mxu0 0
    %1330 = vmatprep.subr.bf16.mxu0 0
    %1331 = vmatpush1.bf16.xpose.msra.mxu0 0
    %1332 = vmatprep.subr.bf16.mxu0 0
    %1333 = vmatpush1.bf16.xpose.msra.mxu0 0
    %1334 = vmatprep.subr.bf16.mxu0 0
    %1335 = vmatpush1.bf16.xpose.msra.mxu0 0
    %1336 = vmatprep.subr.bf16.mxu0 0
    %1337 = vmatpush1.bf16.xpose.msra.mxu0 0
    %1338 = vmatprep.subr.bf16.mxu0 0
    %1339 = vmatpush1.bf16.xpose.msra.mxu0 0
    %1340 = vmatprep.subr.bf16.mxu0 0
    %1341 = vmatpush1.bf16.xpose.msra.mxu0 0
    %1342 = vmatprep.subr.bf16.mxu0 0
    %1343 = vmatpush1.bf16.xpose.msra.mxu0 0
    %1344 = vmatprep.subr.bf16.mxu0 0
    %1345 = vmatpush1.bf16.xpose.msra.mxu0 0
    %1346 = vmatprep.subr.bf16.mxu0 0
    %1347 = vmatpush1.bf16.xpose.msra.mxu0 0
    %1348 = vmatprep.subr.bf16.mxu0 0
    %1349 = vmatpush1.bf16.xpose.msra.mxu0 0
    %1350 = vmatprep.subr.bf16.mxu0 0
    %1351 = vmatpush1.bf16.xpose.msra.mxu0 0
    %1352 = vmatprep.subr.bf16.mxu0 0
    %1353 = vmatpush1.bf16.xpose.msra.mxu0 0
    %1354 = vmatprep.subr.bf16.mxu0 0
    %1355 = vmatpush1.bf16.xpose.msra.mxu0 0
    %1356 = vmatprep.subr.bf16.mxu0 0
    %1357 = vmatpush1.bf16.xpose.msra.mxu0 0
    %1358 = vmatprep.mubr.bf16.mxu0 0
    %1359 = vmatmul.mubr.bf16.gmra.mrb[0].mxu0 %v1318
    %v1360 = vpop.f32.mrb[0].mxu0
    %v1361 = vadd.f32 0.0, %v1360
    %v1362 = vpop.f32.mrb[0].mxu0
    %v1363 = vpop.f32.mrb[0].mxu0
    %v1364 = vadd.f32 0.0, %v1363
    %v1365 = vpop.f32.mrb[0].mxu0
    %1366 = vdwg.mxu0
    %v1369 = vunpack.c.l.b16 %v167
    %v1370 = vunpack.c.l.b16 %v168
    %v1371 = vpack.c.b16 %v1370, %v1369
    %v1375 = vunpack.c.l.b16 %v199
    %v1376 = vunpack.c.l.b16 %v200
    %v1377 = vpack.c.b16 %v1376, %v1375
    %1379 = vmatprep.subr.bf16.mxu0 0
    %1380 = vmatpush1.bf16.xpose.msra.mxu0 %v1377
    %1381 = vmatprep.subr.bf16.mxu0 0
    %1382 = vmatpush1.bf16.xpose.msra.mxu0 0
    %1383 = vmatprep.subr.bf16.mxu0 0
    %1384 = vmatpush1.bf16.xpose.msra.mxu0 0
    %1385 = vmatprep.subr.bf16.mxu0 0
    %1386 = vmatpush1.bf16.xpose.msra.mxu0 0
    %1387 = vmatprep.subr.bf16.mxu0 0
    %1388 = vmatpush1.bf16.xpose.msra.mxu0 0
    %1389 = vmatprep.subr.bf16.mxu0 0
    %1390 = vmatpush1.bf16.xpose.msra.mxu0 0
    %1391 = vmatprep.subr.bf16.mxu0 0
    %1392 = vmatpush1.bf16.xpose.msra.mxu0 0
    %1393 = vmatprep.subr.bf16.mxu0 0
    %1394 = vmatpush1.bf16.xpose.msra.mxu0 0
    %1395 = vmatprep.subr.bf16.mxu0 0
    %1396 = vmatpush1.bf16.xpose.msra.mxu0 0
    %1397 = vmatprep.subr.bf16.mxu0 0
    %1398 = vmatpush1.bf16.xpose.msra.mxu0 0
    %1399 = vmatprep.subr.bf16.mxu0 0
    %1400 = vmatpush1.bf16.xpose.msra.mxu0 0
    %1401 = vmatprep.subr.bf16.mxu0 0
    %1402 = vmatpush1.bf16.xpose.msra.mxu0 0
    %1403 = vmatprep.subr.bf16.mxu0 0
    %1404 = vmatpush1.bf16.xpose.msra.mxu0 0
    %1405 = vmatprep.subr.bf16.mxu0 0
    %1406 = vmatpush1.bf16.xpose.msra.mxu0 0
    %1407 = vmatprep.subr.bf16.mxu0 0
    %1408 = vmatpush1.bf16.xpose.msra.mxu0 0
    %1409 = vmatprep.subr.bf16.mxu0 0
    %1410 = vmatpush1.bf16.xpose.msra.mxu0 0
    %1411 = vmatprep.mubr.bf16.mxu0 0
    %1412 = vmatmul.mubr.bf16.gmra.mrb[0].mxu0 %v1371
    %v1413 = vpop.f32.mrb[0].mxu0
    %v1414 = vadd.f32 0.0, %v1413
    %v1415 = vpop.f32.mrb[0].mxu0
    %v1416 = vpop.f32.mrb[0].mxu0
    %v1417 = vadd.f32 0.0, %v1416
    %v1418 = vpop.f32.mrb[0].mxu0
    %1419 = vdwg.mxu0
    %v1422 = vunpack.c.l.b16 %v169
    %v1423 = vunpack.c.l.b16 %v170
    %v1424 = vpack.c.b16 %v1423, %v1422
    %v1428 = vunpack.c.l.b16 %v201
    %v1429 = vunpack.c.l.b16 %v202
    %v1430 = vpack.c.b16 %v1429, %v1428
    %1432 = vmatprep.subr.bf16.mxu0 0
    %1433 = vmatpush1.bf16.xpose.msra.mxu0 %v1430
    %1434 = vmatprep.subr.bf16.mxu0 0
    %1435 = vmatpush1.bf16.xpose.msra.mxu0 0
    %1436 = vmatprep.subr.bf16.mxu0 0
    %1437 = vmatpush1.bf16.xpose.msra.mxu0 0
    %1438 = vmatprep.subr.bf16.mxu0 0
    %1439 = vmatpush1.bf16.xpose.msra.mxu0 0
    %1440 = vmatprep.subr.bf16.mxu0 0
    %1441 = vmatpush1.bf16.xpose.msra.mxu0 0
    %1442 = vmatprep.subr.bf16.mxu0 0
    %1443 = vmatpush1.bf16.xpose.msra.mxu0 0
    %1444 = vmatprep.subr.bf16.mxu0 0
    %1445 = vmatpush1.bf16.xpose.msra.mxu0 0
    %1446 = vmatprep.subr.bf16.mxu0 0
    %1447 = vmatpush1.bf16.xpose.msra.mxu0 0
    %1448 = vmatprep.subr.bf16.mxu0 0
    %1449 = vmatpush1.bf16.xpose.msra.mxu0 0
    %1450 = vmatprep.subr.bf16.mxu0 0
    %1451 = vmatpush1.bf16.xpose.msra.mxu0 0
    %1452 = vmatprep.subr.bf16.mxu0 0
    %1453 = vmatpush1.bf16.xpose.msra.mxu0 0
    %1454 = vmatprep.subr.bf16.mxu0 0
    %1455 = vmatpush1.bf16.xpose.msra.mxu0 0
    %1456 = vmatprep.subr.bf16.mxu0 0
    %1457 = vmatpush1.bf16.xpose.msra.mxu0 0
    %1458 = vmatprep.subr.bf16.mxu0 0
    %1459 = vmatpush1.bf16.xpose.msra.mxu0 0
    %1460 = vmatprep.subr.bf16.mxu0 0
    %1461 = vmatpush1.bf16.xpose.msra.mxu0 0
    %1462 = vmatprep.subr.bf16.mxu0 0
    %1463 = vmatpush1.bf16.xpose.msra.mxu0 0
    %1464 = vmatprep.mubr.bf16.mxu0 0
    %1465 = vmatmul.mubr.bf16.gmra.mrb[0].mxu0 %v1424
    %v1466 = vpop.f32.mrb[0].mxu0
    %v1467 = vadd.f32 0.0, %v1466
    %v1468 = vpop.f32.mrb[0].mxu0
    %v1469 = vpop.f32.mrb[0].mxu0
    %v1470 = vadd.f32 0.0, %v1469
    %v1471 = vpop.f32.mrb[0].mxu0
    %1472 = vdwg.mxu0
    %v1475 = vunpack.c.l.b16 %v171
    %v1476 = vunpack.c.l.b16 %v172
    %v1477 = vpack.c.b16 %v1476, %v1475
    %v1481 = vunpack.c.l.b16 %v203
    %v1482 = vunpack.c.l.b16 %v204
    %v1483 = vpack.c.b16 %v1482, %v1481
    %1485 = vmatprep.subr.bf16.mxu0 0
    %1486 = vmatpush1.bf16.xpose.msra.mxu0 %v1483
    %1487 = vmatprep.subr.bf16.mxu0 0
    %1488 = vmatpush1.bf16.xpose.msra.mxu0 0
    %1489 = vmatprep.subr.bf16.mxu0 0
    %1490 = vmatpush1.bf16.xpose.msra.mxu0 0
    %1491 = vmatprep.subr.bf16.mxu0 0
    %1492 = vmatpush1.bf16.xpose.msra.mxu0 0
    %1493 = vmatprep.subr.bf16.mxu0 0
    %1494 = vmatpush1.bf16.xpose.msra.mxu0 0
    %1495 = vmatprep.subr.bf16.mxu0 0
    %1496 = vmatpush1.bf16.xpose.msra.mxu0 0
    %1497 = vmatprep.subr.bf16.mxu0 0
    %1498 = vmatpush1.bf16.xpose.msra.mxu0 0
    %1499 = vmatprep.subr.bf16.mxu0 0
    %1500 = vmatpush1.bf16.xpose.msra.mxu0 0
    %1501 = vmatprep.subr.bf16.mxu0 0
    %1502 = vmatpush1.bf16.xpose.msra.mxu0 0
    %1503 = vmatprep.subr.bf16.mxu0 0
    %1504 = vmatpush1.bf16.xpose.msra.mxu0 0
    %1505 = vmatprep.subr.bf16.mxu0 0
    %1506 = vmatpush1.bf16.xpose.msra.mxu0 0
    %1507 = vmatprep.subr.bf16.mxu0 0
    %1508 = vmatpush1.bf16.xpose.msra.mxu0 0
    %1509 = vmatprep.subr.bf16.mxu0 0
    %1510 = vmatpush1.bf16.xpose.msra.mxu0 0
    %1511 = vmatprep.subr.bf16.mxu0 0
    %1512 = vmatpush1.bf16.xpose.msra.mxu0 0
    %1513 = vmatprep.subr.bf16.mxu0 0
    %1514 = vmatpush1.bf16.xpose.msra.mxu0 0
    %1515 = vmatprep.subr.bf16.mxu0 0
    %1516 = vmatpush1.bf16.xpose.msra.mxu0 0
    %1517 = vmatprep.mubr.bf16.mxu0 0
    %1518 = vmatmul.mubr.bf16.gmra.mrb[0].mxu0 %v1477
    %v1519 = vpop.f32.mrb[0].mxu0
    %v1520 = vadd.f32 0.0, %v1519
    %v1521 = vpop.f32.mrb[0].mxu0
    %v1522 = vpop.f32.mrb[0].mxu0
    %v1523 = vadd.f32 0.0, %v1522
    %v1524 = vpop.f32.mrb[0].mxu0
    %1525 = vdwg.mxu0
    %vm1526 = vcmp.gt.f32.partialorder %v725, 0.0
    %vm1527 = vcmp.gt.f32.partialorder %v728, 0.0
    %vm1528 = vcmp.gt.f32.partialorder %v778, 0.0
    %vm1529 = vcmp.gt.f32.partialorder %v781, 0.0
    %vm1530 = vcmp.gt.f32.partialorder %v831, 0.0
    %vm1531 = vcmp.gt.f32.partialorder %v834, 0.0
    %vm1532 = vcmp.gt.f32.partialorder %v884, 0.0
    %vm1533 = vcmp.gt.f32.partialorder %v887, 0.0
    %vm1534 = vcmp.gt.f32.partialorder %v937, 0.0
    %vm1535 = vcmp.gt.f32.partialorder %v940, 0.0
    %vm1536 = vcmp.gt.f32.partialorder %v990, 0.0
    %vm1537 = vcmp.gt.f32.partialorder %v993, 0.0
    %vm1538 = vcmp.gt.f32.partialorder %v1043, 0.0
    %vm1539 = vcmp.gt.f32.partialorder %v1046, 0.0
    %vm1540 = vcmp.gt.f32.partialorder %v1096, 0.0
    %vm1541 = vcmp.gt.f32.partialorder %v1099, 0.0
    %vm1542 = vcmp.gt.f32.partialorder %v1149, 0.0
    %vm1543 = vcmp.gt.f32.partialorder %v1152, 0.0
    %vm1544 = vcmp.gt.f32.partialorder %v1202, 0.0
    %vm1545 = vcmp.gt.f32.partialorder %v1205, 0.0
    %vm1546 = vcmp.gt.f32.partialorder %v1255, 0.0
    %vm1547 = vcmp.gt.f32.partialorder %v1258, 0.0
    %vm1548 = vcmp.gt.f32.partialorder %v1308, 0.0
    %vm1549 = vcmp.gt.f32.partialorder %v1311, 0.0
    %vm1550 = vcmp.gt.f32.partialorder %v1361, 0.0
    %vm1551 = vcmp.gt.f32.partialorder %v1364, 0.0
    %vm1552 = vcmp.gt.f32.partialorder %v1414, 0.0
    %vm1553 = vcmp.gt.f32.partialorder %v1417, 0.0
    %vm1554 = vcmp.gt.f32.partialorder %v1467, 0.0
    %vm1555 = vcmp.gt.f32.partialorder %v1470, 0.0
    %vm1556 = vcmp.gt.f32.partialorder %v1520, 0.0
    %vm1557 = vcmp.gt.f32.partialorder %v1523, 0.0
    %v1558 = vmul.f32 %v725, 0.1
    %v1559 = vmul.f32 %v728, 0.1
    %v1560 = vmul.f32 %v778, 0.1
    %v1561 = vmul.f32 %v781, 0.1
    %v1562 = vmul.f32 %v831, 0.1
    %v1563 = vmul.f32 %v834, 0.1
    %v1564 = vmul.f32 %v884, 0.1
    %v1565 = vmul.f32 %v887, 0.1
    %v1566 = vmul.f32 %v937, 0.1
    %v1567 = vmul.f32 %v940, 0.1
    %v1568 = vmul.f32 %v990, 0.1
    %v1569 = vmul.f32 %v993, 0.1
    %v1570 = vmul.f32 %v1043, 0.1
    %v1571 = vmul.f32 %v1046, 0.1
    %v1572 = vmul.f32 %v1096, 0.1
    %v1573 = vmul.f32 %v1099, 0.1
    %v1574 = vmul.f32 %v1149, 0.1
    %v1575 = vmul.f32 %v1152, 0.1
    %v1576 = vmul.f32 %v1202, 0.1
    %v1577 = vmul.f32 %v1205, 0.1
    %v1578 = vmul.f32 %v1255, 0.1
    %v1579 = vmul.f32 %v1258, 0.1
    %v1580 = vmul.f32 %v1308, 0.1
    %v1581 = vmul.f32 %v1311, 0.1
    %v1582 = vmul.f32 %v1361, 0.1
    %v1583 = vmul.f32 %v1364, 0.1
    %v1584 = vmul.f32 %v1414, 0.1
    %v1585 = vmul.f32 %v1417, 0.1
    %v1586 = vmul.f32 %v1467, 0.1
    %v1587 = vmul.f32 %v1470, 0.1
    %v1588 = vmul.f32 %v1520, 0.1
    %v1589 = vmul.f32 %v1523, 0.1
    %v1590 = vsel %vm1526, %v725, %v1558
    %v1591 = vsel %vm1527, %v728, %v1559
    %v1592 = vsel %vm1528, %v778, %v1560
    %v1593 = vsel %vm1529, %v781, %v1561
    %v1594 = vsel %vm1530, %v831, %v1562
    %v1595 = vsel %vm1531, %v834, %v1563
    %v1596 = vsel %vm1532, %v884, %v1564
    %v1597 = vsel %vm1533, %v887, %v1565
    %v1598 = vsel %vm1534, %v937, %v1566
    %v1599 = vsel %vm1535, %v940, %v1567
    %v1600 = vsel %vm1536, %v990, %v1568
    %v1601 = vsel %vm1537, %v993, %v1569
    %v1602 = vsel %vm1538, %v1043, %v1570
    %v1603 = vsel %vm1539, %v1046, %v1571
    %v1604 = vsel %vm1540, %v1096, %v1572
    %v1605 = vsel %vm1541, %v1099, %v1573
    %v1606 = vsel %vm1542, %v1149, %v1574
    %v1607 = vsel %vm1543, %v1152, %v1575
    %v1608 = vsel %vm1544, %v1202, %v1576
    %v1609 = vsel %vm1545, %v1205, %v1577
    %v1610 = vsel %vm1546, %v1255, %v1578
    %v1611 = vsel %vm1547, %v1258, %v1579
    %v1612 = vsel %vm1548, %v1308, %v1580
    %v1613 = vsel %vm1549, %v1311, %v1581
    %v1614 = vsel %vm1550, %v1361, %v1582
    %v1615 = vsel %vm1551, %v1364, %v1583
    %v1616 = vsel %vm1552, %v1414, %v1584
    %v1617 = vsel %vm1553, %v1417, %v1585
    %v1618 = vsel %vm1554, %v1467, %v1586
    %v1619 = vsel %vm1555, %v1470, %v1587
    %v1620 = vsel %vm1556, %v1520, %v1588
    %v1621 = vsel %vm1557, %v1523, %v1589
    %v1622 = vmul.f32 %v1590, %v1590
    %v1623 = vmul.f32 %v1591, %v1591
    %v1624 = vmul.f32 %v1592, %v1592
    %v1625 = vmul.f32 %v1593, %v1593
    %v1626 = vmul.f32 %v1594, %v1594
    %v1627 = vmul.f32 %v1595, %v1595
    %v1628 = vmul.f32 %v1596, %v1596
    %v1629 = vmul.f32 %v1597, %v1597
    %v1630 = vmul.f32 %v1598, %v1598
    %v1631 = vmul.f32 %v1599, %v1599
    %v1632 = vmul.f32 %v1600, %v1600
    %v1633 = vmul.f32 %v1601, %v1601
    %v1634 = vmul.f32 %v1602, %v1602
    %v1635 = vmul.f32 %v1603, %v1603
    %v1636 = vmul.f32 %v1604, %v1604
    %v1637 = vmul.f32 %v1605, %v1605
    %v1638 = vmul.f32 %v1606, %v1606
    %v1639 = vmul.f32 %v1607, %v1607
    %v1640 = vmul.f32 %v1608, %v1608
    %v1641 = vmul.f32 %v1609, %v1609
    %v1642 = vmul.f32 %v1610, %v1610
    %v1643 = vmul.f32 %v1611, %v1611
    %v1644 = vmul.f32 %v1612, %v1612
    %v1645 = vmul.f32 %v1613, %v1613
    %v1646 = vmul.f32 %v1614, %v1614
    %v1647 = vmul.f32 %v1615, %v1615
    %v1648 = vmul.f32 %v1616, %v1616
    %v1649 = vmul.f32 %v1617, %v1617
    %v1650 = vmul.f32 %v1618, %v1618
    %v1651 = vmul.f32 %v1619, %v1619
    %v1652 = vmul.f32 %v1620, %v1620
    %v1653 = vmul.f32 %v1621, %v1621
    %vm1654 = vcmask 130048
    %v1655 = vsel %vm1654, %v1622, 0.0
    %v1656 = vsel %vm1654, %v1623, 0.0
    %v1657 = vadd.f32 %v1655, %v1656
    %v1658 = vrot.slane %v1657, 4
    %v1659 = vadd.f32 %v1657, %v1658
    %v1660 = vrot.slane %v1659, 2
    %v1661 = vadd.f32 %v1659, %v1660
    %v1662 = vrot.slane %v1661, 1
    %v1663 = vadd.f32 %v1661, %v1662
    %v1664 = vsel %vm1654, %v1624, 0.0
    %v1665 = vsel %vm1654, %v1625, 0.0
    %v1666 = vadd.f32 %v1664, %v1665
    %v1667 = vrot.slane %v1666, 4
    %v1668 = vadd.f32 %v1666, %v1667
    %v1669 = vrot.slane %v1668, 2
    %v1670 = vadd.f32 %v1668, %v1669
    %v1671 = vrot.slane %v1670, 1
    %v1672 = vadd.f32 %v1670, %v1671
    %v1673 = vsel %vm1654, %v1626, 0.0
    %v1674 = vsel %vm1654, %v1627, 0.0
    %v1675 = vadd.f32 %v1673, %v1674
    %v1676 = vrot.slane %v1675, 4
    %v1677 = vadd.f32 %v1675, %v1676
    %v1678 = vrot.slane %v1677, 2
    %v1679 = vadd.f32 %v1677, %v1678
    %v1680 = vrot.slane %v1679, 1
    %v1681 = vadd.f32 %v1679, %v1680
    %v1682 = vsel %vm1654, %v1628, 0.0
    %v1683 = vsel %vm1654, %v1629, 0.0
    %v1684 = vadd.f32 %v1682, %v1683
    %v1685 = vrot.slane %v1684, 4
    %v1686 = vadd.f32 %v1684, %v1685
    %v1687 = vrot.slane %v1686, 2
    %v1688 = vadd.f32 %v1686, %v1687
    %v1689 = vrot.slane %v1688, 1
    %v1690 = vadd.f32 %v1688, %v1689
    %v1691 = vsel %vm1654, %v1630, 0.0
    %v1692 = vsel %vm1654, %v1631, 0.0
    %v1693 = vadd.f32 %v1691, %v1692
    %v1694 = vrot.slane %v1693, 4
    %v1695 = vadd.f32 %v1693, %v1694
    %v1696 = vrot.slane %v1695, 2
    %v1697 = vadd.f32 %v1695, %v1696
    %v1698 = vrot.slane %v1697, 1
    %v1699 = vadd.f32 %v1697, %v1698
    %v1700 = vsel %vm1654, %v1632, 0.0
    %v1701 = vsel %vm1654, %v1633, 0.0
    %v1702 = vadd.f32 %v1700, %v1701
    %v1703 = vrot.slane %v1702, 4
    %v1704 = vadd.f32 %v1702, %v1703
    %v1705 = vrot.slane %v1704, 2
    %v1706 = vadd.f32 %v1704, %v1705
    %v1707 = vrot.slane %v1706, 1
    %v1708 = vadd.f32 %v1706, %v1707
    %v1709 = vsel %vm1654, %v1634, 0.0
    %v1710 = vsel %vm1654, %v1635, 0.0
    %v1711 = vadd.f32 %v1709, %v1710
    %v1712 = vrot.slane %v1711, 4
    %v1713 = vadd.f32 %v1711, %v1712
    %v1714 = vrot.slane %v1713, 2
    %v1715 = vadd.f32 %v1713, %v1714
    %v1716 = vrot.slane %v1715, 1
    %v1717 = vadd.f32 %v1715, %v1716
    %v1718 = vsel %vm1654, %v1636, 0.0
    %v1719 = vsel %vm1654, %v1637, 0.0
    %v1720 = vadd.f32 %v1718, %v1719
    %v1721 = vrot.slane %v1720, 4
    %v1722 = vadd.f32 %v1720, %v1721
    %v1723 = vrot.slane %v1722, 2
    %v1724 = vadd.f32 %v1722, %v1723
    %v1725 = vrot.slane %v1724, 1
    %v1726 = vadd.f32 %v1724, %v1725
    %v1727 = vsel %vm1654, %v1638, 0.0
    %v1728 = vsel %vm1654, %v1639, 0.0
    %v1729 = vadd.f32 %v1727, %v1728
    %v1730 = vrot.slane %v1729, 4
    %v1731 = vadd.f32 %v1729, %v1730
    %v1732 = vrot.slane %v1731, 2
    %v1733 = vadd.f32 %v1731, %v1732
    %v1734 = vrot.slane %v1733, 1
    %v1735 = vadd.f32 %v1733, %v1734
    %v1736 = vsel %vm1654, %v1640, 0.0
    %v1737 = vsel %vm1654, %v1641, 0.0
    %v1738 = vadd.f32 %v1736, %v1737
    %v1739 = vrot.slane %v1738, 4
    %v1740 = vadd.f32 %v1738, %v1739
    %v1741 = vrot.slane %v1740, 2
    %v1742 = vadd.f32 %v1740, %v1741
    %v1743 = vrot.slane %v1742, 1
    %v1744 = vadd.f32 %v1742, %v1743
    %v1745 = vsel %vm1654, %v1642, 0.0
    %v1746 = vsel %vm1654, %v1643, 0.0
    %v1747 = vadd.f32 %v1745, %v1746
    %v1748 = vrot.slane %v1747, 4
    %v1749 = vadd.f32 %v1747, %v1748
    %v1750 = vrot.slane %v1749, 2
    %v1751 = vadd.f32 %v1749, %v1750
    %v1752 = vrot.slane %v1751, 1
    %v1753 = vadd.f32 %v1751, %v1752
    %v1754 = vsel %vm1654, %v1644, 0.0
    %v1755 = vsel %vm1654, %v1645, 0.0
    %v1756 = vadd.f32 %v1754, %v1755
    %v1757 = vrot.slane %v1756, 4
    %v1758 = vadd.f32 %v1756, %v1757
    %v1759 = vrot.slane %v1758, 2
    %v1760 = vadd.f32 %v1758, %v1759
    %v1761 = vrot.slane %v1760, 1
    %v1762 = vadd.f32 %v1760, %v1761
    %v1763 = vsel %vm1654, %v1646, 0.0
    %v1764 = vsel %vm1654, %v1647, 0.0
    %v1765 = vadd.f32 %v1763, %v1764
    %v1766 = vrot.slane %v1765, 4
    %v1767 = vadd.f32 %v1765, %v1766
    %v1768 = vrot.slane %v1767, 2
    %v1769 = vadd.f32 %v1767, %v1768
    %v1770 = vrot.slane %v1769, 1
    %v1771 = vadd.f32 %v1769, %v1770
    %v1772 = vsel %vm1654, %v1648, 0.0
    %v1773 = vsel %vm1654, %v1649, 0.0
    %v1774 = vadd.f32 %v1772, %v1773
    %v1775 = vrot.slane %v1774, 4
    %v1776 = vadd.f32 %v1774, %v1775
    %v1777 = vrot.slane %v1776, 2
    %v1778 = vadd.f32 %v1776, %v1777
    %v1779 = vrot.slane %v1778, 1
    %v1780 = vadd.f32 %v1778, %v1779
    %v1781 = vsel %vm1654, %v1650, 0.0
    %v1782 = vsel %vm1654, %v1651, 0.0
    %v1783 = vadd.f32 %v1781, %v1782
    %v1784 = vrot.slane %v1783, 4
    %v1785 = vadd.f32 %v1783, %v1784
    %v1786 = vrot.slane %v1785, 2
    %v1787 = vadd.f32 %v1785, %v1786
    %v1788 = vrot.slane %v1787, 1
    %v1789 = vadd.f32 %v1787, %v1788
    %v1790 = vsel %vm1654, %v1652, 0.0
    %v1791 = vsel %vm1654, %v1653, 0.0
    %v1792 = vadd.f32 %v1790, %v1791
    %v1793 = vrot.slane %v1792, 4
    %v1794 = vadd.f32 %v1792, %v1793
    %v1795 = vrot.slane %v1794, 2
    %v1796 = vadd.f32 %v1794, %v1795
    %v1797 = vrot.slane %v1796, 1
    %v1798 = vadd.f32 %v1796, %v1797
    %v1799 = vadd.f32 %v1663, 1e-08
    %v1800 = vadd.f32 %v1672, 1e-08
    %v1801 = vadd.f32 %v1681, 1e-08
    %v1802 = vadd.f32 %v1690, 1e-08
    %v1803 = vadd.f32 %v1699, 1e-08
    %v1804 = vadd.f32 %v1708, 1e-08
    %v1805 = vadd.f32 %v1717, 1e-08
    %v1806 = vadd.f32 %v1726, 1e-08
    %v1807 = vadd.f32 %v1735, 1e-08
    %v1808 = vadd.f32 %v1744, 1e-08
    %v1809 = vadd.f32 %v1753, 1e-08
    %v1810 = vadd.f32 %v1762, 1e-08
    %v1811 = vadd.f32 %v1771, 1e-08
    %v1812 = vadd.f32 %v1780, 1e-08
    %v1813 = vadd.f32 %v1789, 1e-08
    %v1814 = vadd.f32 %v1798, 1e-08
    %v1815 = vrsqrt.pop %v1799
    %v1816 = vrsqrt.pop %v1800
    %v1817 = vrsqrt.pop %v1801
    %v1818 = vrsqrt.pop %v1802
    %v1819 = vrsqrt.pop %v1803
    %v1820 = vrsqrt.pop %v1804
    %v1821 = vrsqrt.pop %v1805
    %v1822 = vrsqrt.pop %v1806
    %v1823 = vrsqrt.pop %v1807
    %v1824 = vrsqrt.pop %v1808
    %v1825 = vrsqrt.pop %v1809
    %v1826 = vrsqrt.pop %v1810
    %v1827 = vrsqrt.pop %v1811
    %v1828 = vrsqrt.pop %v1812
    %v1829 = vrsqrt.pop %v1813
    %v1830 = vrsqrt.pop %v1814
    %v1831 = vmul.f32 %v1590, %v1815
    %v1832 = vmul.f32 %v1591, %v1815
    %v1833 = vmul.f32 %v1592, %v1816
    %v1834 = vmul.f32 %v1593, %v1816
    %v1835 = vmul.f32 %v1594, %v1817
    %v1836 = vmul.f32 %v1595, %v1817
    %v1837 = vmul.f32 %v1596, %v1818
    %v1838 = vmul.f32 %v1597, %v1818
    %v1839 = vmul.f32 %v1598, %v1819
    %v1840 = vmul.f32 %v1599, %v1819
    %v1841 = vmul.f32 %v1600, %v1820
    %v1842 = vmul.f32 %v1601, %v1820
    %v1843 = vmul.f32 %v1602, %v1821
    %v1844 = vmul.f32 %v1603, %v1821
    %v1845 = vmul.f32 %v1604, %v1822
    %v1846 = vmul.f32 %v1605, %v1822
    %v1847 = vmul.f32 %v1606, %v1823
    %v1848 = vmul.f32 %v1607, %v1823
    %v1849 = vmul.f32 %v1608, %v1824
    %v1850 = vmul.f32 %v1609, %v1824
    %v1851 = vmul.f32 %v1610, %v1825
    %v1852 = vmul.f32 %v1611, %v1825
    %v1853 = vmul.f32 %v1612, %v1826
    %v1854 = vmul.f32 %v1613, %v1826
    %v1855 = vmul.f32 %v1614, %v1827
    %v1856 = vmul.f32 %v1615, %v1827
    %v1857 = vmul.f32 %v1616, %v1828
    %v1858 = vmul.f32 %v1617, %v1828
    %v1859 = vmul.f32 %v1618, %v1829
    %v1860 = vmul.f32 %v1619, %v1829
    %v1861 = vmul.f32 %v1620, %v1830
    %v1862 = vmul.f32 %v1621, %v1830
    %v1863 = vmul.f32 %v1831, 4.0
    %v1864 = vmul.f32 %v1832, 4.0
    %v1865 = vmul.f32 %v1833, 4.0
    %v1866 = vmul.f32 %v1834, 4.0
    %v1867 = vmul.f32 %v1835, 4.0
    %v1868 = vmul.f32 %v1836, 4.0
    %v1869 = vmul.f32 %v1837, 4.0
    %v1870 = vmul.f32 %v1838, 4.0
    %v1871 = vmul.f32 %v1839, 4.0
    %v1872 = vmul.f32 %v1840, 4.0
    %v1873 = vmul.f32 %v1841, 4.0
    %v1874 = vmul.f32 %v1842, 4.0
    %v1875 = vmul.f32 %v1843, 4.0
    %v1876 = vmul.f32 %v1844, 4.0
    %v1877 = vmul.f32 %v1845, 4.0
    %v1878 = vmul.f32 %v1846, 4.0
    %v1879 = vmul.f32 %v1847, 4.0
    %v1880 = vmul.f32 %v1848, 4.0
    %v1881 = vmul.f32 %v1849, 4.0
    %v1882 = vmul.f32 %v1850, 4.0
    %v1883 = vmul.f32 %v1851, 4.0
    %v1884 = vmul.f32 %v1852, 4.0
    %v1885 = vmul.f32 %v1853, 4.0
    %v1886 = vmul.f32 %v1854, 4.0
    %v1887 = vmul.f32 %v1855, 4.0
    %v1888 = vmul.f32 %v1856, 4.0
    %v1889 = vmul.f32 %v1857, 4.0
    %v1890 = vmul.f32 %v1858, 4.0
    %v1891 = vmul.f32 %v1859, 4.0
    %v1892 = vmul.f32 %v1860, 4.0
    %v1893 = vmul.f32 %v1861, 4.0
    %v1894 = vmul.f32 %v1862, 4.0
    %v1895 = vsel %vm1654, %v1863, -inf
    %1896 = vmax.xlane.f32.xlu0 %v1895
    %v1897 = vpop.xlane.xlu0 %1896
    %v1898 = vsel %vm1654, %v1864, -inf
    %1899 = vmax.xlane.f32.xlu0 %v1898
    %v1900 = vpop.xlane.xlu0 %1899
    %v1901 = vsel %vm1654, %v1865, -inf
    %1902 = vmax.xlane.f32.xlu0 %v1901
    %v1903 = vpop.xlane.xlu0 %1902
    %v1904 = vsel %vm1654, %v1866, -inf
    %1905 = vmax.xlane.f32.xlu0 %v1904
    %v1906 = vpop.xlane.xlu0 %1905
    %v1907 = vsel %vm1654, %v1867, -inf
    %1908 = vmax.xlane.f32.xlu0 %v1907
    %v1909 = vpop.xlane.xlu0 %1908
    %v1910 = vsel %vm1654, %v1868, -inf
    %1911 = vmax.xlane.f32.xlu0 %v1910
    %v1912 = vpop.xlane.xlu0 %1911
    %v1913 = vsel %vm1654, %v1869, -inf
    %1914 = vmax.xlane.f32.xlu0 %v1913
    %v1915 = vpop.xlane.xlu0 %1914
    %v1916 = vsel %vm1654, %v1870, -inf
    %1917 = vmax.xlane.f32.xlu0 %v1916
    %v1918 = vpop.xlane.xlu0 %1917
    %v1919 = vsel %vm1654, %v1871, -inf
    %1920 = vmax.xlane.f32.xlu0 %v1919
    %v1921 = vpop.xlane.xlu0 %1920
    %v1922 = vsel %vm1654, %v1872, -inf
    %1923 = vmax.xlane.f32.xlu0 %v1922
    %v1924 = vpop.xlane.xlu0 %1923
    %v1925 = vsel %vm1654, %v1873, -inf
    %1926 = vmax.xlane.f32.xlu0 %v1925
    %v1927 = vpop.xlane.xlu0 %1926
    %v1928 = vsel %vm1654, %v1874, -inf
    %1929 = vmax.xlane.f32.xlu0 %v1928
    %v1930 = vpop.xlane.xlu0 %1929
    %v1931 = vsel %vm1654, %v1875, -inf
    %1932 = vmax.xlane.f32.xlu0 %v1931
    %v1933 = vpop.xlane.xlu0 %1932
    %v1934 = vsel %vm1654, %v1876, -inf
    %1935 = vmax.xlane.f32.xlu0 %v1934
    %v1936 = vpop.xlane.xlu0 %1935
    %v1937 = vsel %vm1654, %v1877, -inf
    %1938 = vmax.xlane.f32.xlu0 %v1937
    %v1939 = vpop.xlane.xlu0 %1938
    %v1940 = vsel %vm1654, %v1878, -inf
    %1941 = vmax.xlane.f32.xlu0 %v1940
    %v1942 = vpop.xlane.xlu0 %1941
    %v1943 = vsel %vm1654, %v1879, -inf
    %1944 = vmax.xlane.f32.xlu0 %v1943
    %v1945 = vpop.xlane.xlu0 %1944
    %v1946 = vsel %vm1654, %v1880, -inf
    %1947 = vmax.xlane.f32.xlu0 %v1946
    %v1948 = vpop.xlane.xlu0 %1947
    %v1949 = vsel %vm1654, %v1881, -inf
    %1950 = vmax.xlane.f32.xlu0 %v1949
    %v1951 = vpop.xlane.xlu0 %1950
    %v1952 = vsel %vm1654, %v1882, -inf
    %1953 = vmax.xlane.f32.xlu0 %v1952
    %v1954 = vpop.xlane.xlu0 %1953
    %v1955 = vsel %vm1654, %v1883, -inf
    %1956 = vmax.xlane.f32.xlu0 %v1955
    %v1957 = vpop.xlane.xlu0 %1956
    %v1958 = vsel %vm1654, %v1884, -inf
    %1959 = vmax.xlane.f32.xlu0 %v1958
    %v1960 = vpop.xlane.xlu0 %1959
    %v1961 = vsel %vm1654, %v1885, -inf
    %1962 = vmax.xlane.f32.xlu0 %v1961
    %v1963 = vpop.xlane.xlu0 %1962
    %v1964 = vsel %vm1654, %v1886, -inf
    %1965 = vmax.xlane.f32.xlu0 %v1964
    %v1966 = vpop.xlane.xlu0 %1965
    %v1967 = vsel %vm1654, %v1887, -inf
    %1968 = vmax.xlane.f32.xlu0 %v1967
    %v1969 = vpop.xlane.xlu0 %1968
    %v1970 = vsel %vm1654, %v1888, -inf
    %1971 = vmax.xlane.f32.xlu0 %v1970
    %v1972 = vpop.xlane.xlu0 %1971
    %v1973 = vsel %vm1654, %v1889, -inf
    %1974 = vmax.xlane.f32.xlu0 %v1973
    %v1975 = vpop.xlane.xlu0 %1974
    %v1976 = vsel %vm1654, %v1890, -inf
    %1977 = vmax.xlane.f32.xlu0 %v1976
    %v1978 = vpop.xlane.xlu0 %1977
    %v1979 = vsel %vm1654, %v1891, -inf
    %1980 = vmax.xlane.f32.xlu0 %v1979
    %v1981 = vpop.xlane.xlu0 %1980
    %v1982 = vsel %vm1654, %v1892, -inf
    %1983 = vmax.xlane.f32.xlu0 %v1982
    %v1984 = vpop.xlane.xlu0 %1983
    %v1985 = vsel %vm1654, %v1893, -inf
    %1986 = vmax.xlane.f32.xlu0 %v1985
    %v1987 = vpop.xlane.xlu0 %1986
    %v1988 = vsel %vm1654, %v1894, -inf
    %1989 = vmax.xlane.f32.xlu0 %v1988
    %v1990 = vpop.xlane.xlu0 %1989
    %v1991 = vsub.f32 %v1863, %v1897
    %v1992 = vsub.f32 %v1864, %v1900
    %v1993 = vsub.f32 %v1865, %v1903
    %v1994 = vsub.f32 %v1866, %v1906
    %v1995 = vsub.f32 %v1867, %v1909
    %v1996 = vsub.f32 %v1868, %v1912
    %v1997 = vsub.f32 %v1869, %v1915
    %v1998 = vsub.f32 %v1870, %v1918
    %v1999 = vsub.f32 %v1871, %v1921
    %v2000 = vsub.f32 %v1872, %v1924
    %v2001 = vsub.f32 %v1873, %v1927
    %v2002 = vsub.f32 %v1874, %v1930
    %v2003 = vsub.f32 %v1875, %v1933
    %v2004 = vsub.f32 %v1876, %v1936
    %v2005 = vsub.f32 %v1877, %v1939
    %v2006 = vsub.f32 %v1878, %v1942
    %v2007 = vsub.f32 %v1879, %v1945
    %v2008 = vsub.f32 %v1880, %v1948
    %v2009 = vsub.f32 %v1881, %v1951
    %v2010 = vsub.f32 %v1882, %v1954
    %v2011 = vsub.f32 %v1883, %v1957
    %v2012 = vsub.f32 %v1884, %v1960
    %v2013 = vsub.f32 %v1885, %v1963
    %v2014 = vsub.f32 %v1886, %v1966
    %v2015 = vsub.f32 %v1887, %v1969
    %v2016 = vsub.f32 %v1888, %v1972
    %v2017 = vsub.f32 %v1889, %v1975
    %v2018 = vsub.f32 %v1890, %v1978
    %v2019 = vsub.f32 %v1891, %v1981
    %v2020 = vsub.f32 %v1892, %v1984
    %v2021 = vsub.f32 %v1893, %v1987
    %v2022 = vsub.f32 %v1894, %v1990
    %v2023 = vmul.f32 %v1991, 1.442695
    %v2024 = vpow.pop %v2023
    %v2025 = vmul.f32 %v1992, 1.442695
    %v2026 = vpow.pop %v2025
    %v2027 = vmul.f32 %v1993, 1.442695
    %v2028 = vpow.pop %v2027
    %v2029 = vmul.f32 %v1994, 1.442695
    %v2030 = vpow.pop %v2029
    %v2031 = vmul.f32 %v1995, 1.442695
    %v2032 = vpow.pop %v2031
    %v2033 = vmul.f32 %v1996, 1.442695
    %v2034 = vpow.pop %v2033
    %v2035 = vmul.f32 %v1997, 1.442695
    %v2036 = vpow.pop %v2035
    %v2037 = vmul.f32 %v1998, 1.442695
    %v2038 = vpow.pop %v2037
    %v2039 = vmul.f32 %v1999, 1.442695
    %v2040 = vpow.pop %v2039
    %v2041 = vmul.f32 %v2000, 1.442695
    %v2042 = vpow.pop %v2041
    %v2043 = vmul.f32 %v2001, 1.442695
    %v2044 = vpow.pop %v2043
    %v2045 = vmul.f32 %v2002, 1.442695
    %v2046 = vpow.pop %v2045
    %v2047 = vmul.f32 %v2003, 1.442695
    %v2048 = vpow.pop %v2047
    %v2049 = vmul.f32 %v2004, 1.442695
    %v2050 = vpow.pop %v2049
    %v2051 = vmul.f32 %v2005, 1.442695
    %v2052 = vpow.pop %v2051
    %v2053 = vmul.f32 %v2006, 1.442695
    %v2054 = vpow.pop %v2053
    %v2055 = vmul.f32 %v2007, 1.442695
    %v2056 = vpow.pop %v2055
    %v2057 = vmul.f32 %v2008, 1.442695
    %v2058 = vpow.pop %v2057
    %v2059 = vmul.f32 %v2009, 1.442695
    %v2060 = vpow.pop %v2059
    %v2061 = vmul.f32 %v2010, 1.442695
    %v2062 = vpow.pop %v2061
    %v2063 = vmul.f32 %v2011, 1.442695
    %v2064 = vpow.pop %v2063
    %v2065 = vmul.f32 %v2012, 1.442695
    %v2066 = vpow.pop %v2065
    %v2067 = vmul.f32 %v2013, 1.442695
    %v2068 = vpow.pop %v2067
    %v2069 = vmul.f32 %v2014, 1.442695
    %v2070 = vpow.pop %v2069
    %v2071 = vmul.f32 %v2015, 1.442695
    %v2072 = vpow.pop %v2071
    %v2073 = vmul.f32 %v2016, 1.442695
    %v2074 = vpow.pop %v2073
    %v2075 = vmul.f32 %v2017, 1.442695
    %v2076 = vpow.pop %v2075
    %v2077 = vmul.f32 %v2018, 1.442695
    %v2078 = vpow.pop %v2077
    %v2079 = vmul.f32 %v2019, 1.442695
    %v2080 = vpow.pop %v2079
    %v2081 = vmul.f32 %v2020, 1.442695
    %v2082 = vpow.pop %v2081
    %v2083 = vmul.f32 %v2021, 1.442695
    %v2084 = vpow.pop %v2083
    %v2085 = vmul.f32 %v2022, 1.442695
    %v2086 = vpow.pop %v2085
    %v2087 = vsel %vm1654, %v2024, 0.0
    %2088 = vadd.xlane.f32.xlu0 %v2087
    %v2089 = vpop.xlane.xlu0 %2088
    %v2090 = vsel %vm1654, %v2026, 0.0
    %2091 = vadd.xlane.f32.xlu0 %v2090
    %v2092 = vpop.xlane.xlu0 %2091
    %v2093 = vsel %vm1654, %v2028, 0.0
    %2094 = vadd.xlane.f32.xlu0 %v2093
    %v2095 = vpop.xlane.xlu0 %2094
    %v2096 = vsel %vm1654, %v2030, 0.0
    %2097 = vadd.xlane.f32.xlu0 %v2096
    %v2098 = vpop.xlane.xlu0 %2097
    %v2099 = vsel %vm1654, %v2032, 0.0
    %2100 = vadd.xlane.f32.xlu0 %v2099
    %v2101 = vpop.xlane.xlu0 %2100
    %v2102 = vsel %vm1654, %v2034, 0.0
    %2103 = vadd.xlane.f32.xlu0 %v2102
    %v2104 = vpop.xlane.xlu0 %2103
    %v2105 = vsel %vm1654, %v2036, 0.0
    %2106 = vadd.xlane.f32.xlu0 %v2105
    %v2107 = vpop.xlane.xlu0 %2106
    %v2108 = vsel %vm1654, %v2038, 0.0
    %2109 = vadd.xlane.f32.xlu0 %v2108
    %v2110 = vpop.xlane.xlu0 %2109
    %v2111 = vsel %vm1654, %v2040, 0.0
    %2112 = vadd.xlane.f32.xlu0 %v2111
    %v2113 = vpop.xlane.xlu0 %2112
    %v2114 = vsel %vm1654, %v2042, 0.0
    %2115 = vadd.xlane.f32.xlu0 %v2114
    %v2116 = vpop.xlane.xlu0 %2115
    %v2117 = vsel %vm1654, %v2044, 0.0
    %2118 = vadd.xlane.f32.xlu0 %v2117
    %v2119 = vpop.xlane.xlu0 %2118
    %v2120 = vsel %vm1654, %v2046, 0.0
    %2121 = vadd.xlane.f32.xlu0 %v2120
    %v2122 = vpop.xlane.xlu0 %2121
    %v2123 = vsel %vm1654, %v2048, 0.0
    %2124 = vadd.xlane.f32.xlu0 %v2123
    %v2125 = vpop.xlane.xlu0 %2124
    %v2126 = vsel %vm1654, %v2050, 0.0
    %2127 = vadd.xlane.f32.xlu0 %v2126
    %v2128 = vpop.xlane.xlu0 %2127
    %v2129 = vsel %vm1654, %v2052, 0.0
    %2130 = vadd.xlane.f32.xlu0 %v2129
    %v2131 = vpop.xlane.xlu0 %2130
    %v2132 = vsel %vm1654, %v2054, 0.0
    %2133 = vadd.xlane.f32.xlu0 %v2132
    %v2134 = vpop.xlane.xlu0 %2133
    %v2135 = vsel %vm1654, %v2056, 0.0
    %2136 = vadd.xlane.f32.xlu0 %v2135
    %v2137 = vpop.xlane.xlu0 %2136
    %v2138 = vsel %vm1654, %v2058, 0.0
    %2139 = vadd.xlane.f32.xlu0 %v2138
    %v2140 = vpop.xlane.xlu0 %2139
    %v2141 = vsel %vm1654, %v2060, 0.0
    %2142 = vadd.xlane.f32.xlu0 %v2141
    %v2143 = vpop.xlane.xlu0 %2142
    %v2144 = vsel %vm1654, %v2062, 0.0
    %2145 = vadd.xlane.f32.xlu0 %v2144
    %v2146 = vpop.xlane.xlu0 %2145
    %v2147 = vsel %vm1654, %v2064, 0.0
    %2148 = vadd.xlane.f32.xlu0 %v2147
    %v2149 = vpop.xlane.xlu0 %2148
    %v2150 = vsel %vm1654, %v2066, 0.0
    %2151 = vadd.xlane.f32.xlu0 %v2150
    %v2152 = vpop.xlane.xlu0 %2151
    %v2153 = vsel %vm1654, %v2068, 0.0
    %2154 = vadd.xlane.f32.xlu0 %v2153
    %v2155 = vpop.xlane.xlu0 %2154
    %v2156 = vsel %vm1654, %v2070, 0.0
    %2157 = vadd.xlane.f32.xlu0 %v2156
    %v2158 = vpop.xlane.xlu0 %2157
    %v2159 = vsel %vm1654, %v2072, 0.0
    %2160 = vadd.xlane.f32.xlu0 %v2159
    %v2161 = vpop.xlane.xlu0 %2160
    %v2162 = vsel %vm1654, %v2074, 0.0
    %2163 = vadd.xlane.f32.xlu0 %v2162
    %v2164 = vpop.xlane.xlu0 %2163
    %v2165 = vsel %vm1654, %v2076, 0.0
    %2166 = vadd.xlane.f32.xlu0 %v2165
    %v2167 = vpop.xlane.xlu0 %2166
    %v2168 = vsel %vm1654, %v2078, 0.0
    %2169 = vadd.xlane.f32.xlu0 %v2168
    %v2170 = vpop.xlane.xlu0 %2169
    %v2171 = vsel %vm1654, %v2080, 0.0
    %2172 = vadd.xlane.f32.xlu0 %v2171
    %v2173 = vpop.xlane.xlu0 %2172
    %v2174 = vsel %vm1654, %v2082, 0.0
    %2175 = vadd.xlane.f32.xlu0 %v2174
    %v2176 = vpop.xlane.xlu0 %2175
    %v2177 = vsel %vm1654, %v2084, 0.0
    %2178 = vadd.xlane.f32.xlu0 %v2177
    %v2179 = vpop.xlane.xlu0 %2178
    %v2180 = vsel %vm1654, %v2086, 0.0
    %2181 = vadd.xlane.f32.xlu0 %v2180
    %v2182 = vpop.xlane.xlu0 %2181
    %v2183 = vrcp.pop %v2089
    %v2184 = vmul.f32 %v2024, %v2183
    %v2185 = vrcp.pop %v2092
    %v2186 = vmul.f32 %v2026, %v2185
    %v2187 = vrcp.pop %v2095
    %v2188 = vmul.f32 %v2028, %v2187
    %v2189 = vrcp.pop %v2098
    %v2190 = vmul.f32 %v2030, %v2189
    %v2191 = vrcp.pop %v2101
    %v2192 = vmul.f32 %v2032, %v2191
    %v2193 = vrcp.pop %v2104
    %v2194 = vmul.f32 %v2034, %v2193
    %v2195 = vrcp.pop %v2107
    %v2196 = vmul.f32 %v2036, %v2195
    %v2197 = vrcp.pop %v2110
    %v2198 = vmul.f32 %v2038, %v2197
    %v2199 = vrcp.pop %v2113
    %v2200 = vmul.f32 %v2040, %v2199
    %v2201 = vrcp.pop %v2116
    %v2202 = vmul.f32 %v2042, %v2201
    %v2203 = vrcp.pop %v2119
    %v2204 = vmul.f32 %v2044, %v2203
    %v2205 = vrcp.pop %v2122
    %v2206 = vmul.f32 %v2046, %v2205
    %v2207 = vrcp.pop %v2125
    %v2208 = vmul.f32 %v2048, %v2207
    %v2209 = vrcp.pop %v2128
    %v2210 = vmul.f32 %v2050, %v2209
    %v2211 = vrcp.pop %v2131
    %v2212 = vmul.f32 %v2052, %v2211
    %v2213 = vrcp.pop %v2134
    %v2214 = vmul.f32 %v2054, %v2213
    %v2215 = vrcp.pop %v2137
    %v2216 = vmul.f32 %v2056, %v2215
    %v2217 = vrcp.pop %v2140
    %v2218 = vmul.f32 %v2058, %v2217
    %v2219 = vrcp.pop %v2143
    %v2220 = vmul.f32 %v2060, %v2219
    %v2221 = vrcp.pop %v2146
    %v2222 = vmul.f32 %v2062, %v2221
    %v2223 = vrcp.pop %v2149
    %v2224 = vmul.f32 %v2064, %v2223
    %v2225 = vrcp.pop %v2152
    %v2226 = vmul.f32 %v2066, %v2225
    %v2227 = vrcp.pop %v2155
    %v2228 = vmul.f32 %v2068, %v2227
    %v2229 = vrcp.pop %v2158
    %v2230 = vmul.f32 %v2070, %v2229
    %v2231 = vrcp.pop %v2161
    %v2232 = vmul.f32 %v2072, %v2231
    %v2233 = vrcp.pop %v2164
    %v2234 = vmul.f32 %v2074, %v2233
    %v2235 = vrcp.pop %v2167
    %v2236 = vmul.f32 %v2076, %v2235
    %v2237 = vrcp.pop %v2170
    %v2238 = vmul.f32 %v2078, %v2237
    %v2239 = vrcp.pop %v2173
    %v2240 = vmul.f32 %v2080, %v2239
    %v2241 = vrcp.pop %v2176
    %v2242 = vmul.f32 %v2082, %v2241
    %v2243 = vrcp.pop %v2179
    %v2244 = vmul.f32 %v2084, %v2243
    %v2245 = vrcp.pop %v2182
    %v2246 = vmul.f32 %v2086, %v2245
    %v2247 = vpack.c.bf16 %v2186, %v2184
    %v2248 = vpack.c.bf16 %v2190, %v2188
    %v2249 = vpack.c.bf16 %v2194, %v2192
    %v2250 = vpack.c.bf16 %v2198, %v2196
    %v2251 = vpack.c.bf16 %v2202, %v2200
    %v2252 = vpack.c.bf16 %v2206, %v2204
    %v2253 = vpack.c.bf16 %v2210, %v2208
    %v2254 = vpack.c.bf16 %v2214, %v2212
    %v2255 = vpack.c.bf16 %v2218, %v2216
    %v2256 = vpack.c.bf16 %v2222, %v2220
    %v2257 = vpack.c.bf16 %v2226, %v2224
    %v2258 = vpack.c.bf16 %v2230, %v2228
    %v2259 = vpack.c.bf16 %v2234, %v2232
    %v2260 = vpack.c.bf16 %v2238, %v2236
    %v2261 = vpack.c.bf16 %v2242, %v2240
    %v2262 = vpack.c.bf16 %v2246, %v2244
    %v2264 = vsel %vm1654, %v2247, 0
    %2266 = vmatprep.subr.bf16.mxu0 0
    %2267 = vmatpush1.bf16.msra.mxu0 %v688
    %2268 = vmatprep.subr.bf16.mxu0 0
    %2269 = vmatpush1.bf16.msra.mxu0 0
    %2270 = vmatprep.subr.bf16.mxu0 0
    %2271 = vmatpush1.bf16.msra.mxu0 0
    %2272 = vmatprep.subr.bf16.mxu0 0
    %2273 = vmatpush1.bf16.msra.mxu0 0
    %2274 = vmatprep.subr.bf16.mxu0 0
    %2275 = vmatpush1.bf16.msra.mxu0 0
    %2276 = vmatprep.subr.bf16.mxu0 0
    %2277 = vmatpush1.bf16.msra.mxu0 0
    %2278 = vmatprep.subr.bf16.mxu0 0
    %2279 = vmatpush1.bf16.msra.mxu0 0
    %2280 = vmatprep.subr.bf16.mxu0 0
    %2281 = vmatpush1.bf16.msra.mxu0 0
    %2282 = vmatprep.subr.bf16.mxu0 0
    %2283 = vmatpush1.bf16.msra.mxu0 0
    %2284 = vmatprep.subr.bf16.mxu0 0
    %2285 = vmatpush1.bf16.msra.mxu0 0
    %2286 = vmatprep.subr.bf16.mxu0 0
    %2287 = vmatpush1.bf16.msra.mxu0 0
    %2288 = vmatprep.subr.bf16.mxu0 0
    %2289 = vmatpush1.bf16.msra.mxu0 0
    %2290 = vmatprep.subr.bf16.mxu0 0
    %2291 = vmatpush1.bf16.msra.mxu0 0
    %2292 = vmatprep.subr.bf16.mxu0 0
    %2293 = vmatpush1.bf16.msra.mxu0 0
    %2294 = vmatprep.subr.bf16.mxu0 0
    %2295 = vmatpush1.bf16.msra.mxu0 0
    %2296 = vmatprep.subr.bf16.mxu0 0
    %2297 = vmatpush1.bf16.msra.mxu0 0
    %2298 = vmatprep.mubr.bf16.mxu0 0
    %2299 = vmatmul.mubr.bf16.gmra.mrb[0].mxu0 %v2264
    %v2300 = vpop.f32.mrb[0].mxu0
    %v2301 = vadd.f32 0.0, %v2300
    %v2302 = vpop.f32.mrb[0].mxu0
    %v2303 = vpop.f32.mrb[0].mxu0
    %v2304 = vadd.f32 0.0, %v2303
    %v2305 = vpop.f32.mrb[0].mxu0
    %2306 = vdwg.mxu0
    %v2308 = vsel %vm1654, %v2248, 0
    %2310 = vmatprep.subr.bf16.mxu0 0
    %2311 = vmatpush1.bf16.msra.mxu0 %v741
    %2312 = vmatprep.subr.bf16.mxu0 0
    %2313 = vmatpush1.bf16.msra.mxu0 0
    %2314 = vmatprep.subr.bf16.mxu0 0
    %2315 = vmatpush1.bf16.msra.mxu0 0
    %2316 = vmatprep.subr.bf16.mxu0 0
    %2317 = vmatpush1.bf16.msra.mxu0 0
    %2318 = vmatprep.subr.bf16.mxu0 0
    %2319 = vmatpush1.bf16.msra.mxu0 0
    %2320 = vmatprep.subr.bf16.mxu0 0
    %2321 = vmatpush1.bf16.msra.mxu0 0
    %2322 = vmatprep.subr.bf16.mxu0 0
    %2323 = vmatpush1.bf16.msra.mxu0 0
    %2324 = vmatprep.subr.bf16.mxu0 0
    %2325 = vmatpush1.bf16.msra.mxu0 0
    %2326 = vmatprep.subr.bf16.mxu0 0
    %2327 = vmatpush1.bf16.msra.mxu0 0
    %2328 = vmatprep.subr.bf16.mxu0 0
    %2329 = vmatpush1.bf16.msra.mxu0 0
    %2330 = vmatprep.subr.bf16.mxu0 0
    %2331 = vmatpush1.bf16.msra.mxu0 0
    %2332 = vmatprep.subr.bf16.mxu0 0
    %2333 = vmatpush1.bf16.msra.mxu0 0
    %2334 = vmatprep.subr.bf16.mxu0 0
    %2335 = vmatpush1.bf16.msra.mxu0 0
    %2336 = vmatprep.subr.bf16.mxu0 0
    %2337 = vmatpush1.bf16.msra.mxu0 0
    %2338 = vmatprep.subr.bf16.mxu0 0
    %2339 = vmatpush1.bf16.msra.mxu0 0
    %2340 = vmatprep.subr.bf16.mxu0 0
    %2341 = vmatpush1.bf16.msra.mxu0 0
    %2342 = vmatprep.mubr.bf16.mxu0 0
    %2343 = vmatmul.mubr.bf16.gmra.mrb[0].mxu0 %v2308
    %v2344 = vpop.f32.mrb[0].mxu0
    %v2345 = vadd.f32 0.0, %v2344
    %v2346 = vpop.f32.mrb[0].mxu0
    %v2347 = vpop.f32.mrb[0].mxu0
    %v2348 = vadd.f32 0.0, %v2347
    %v2349 = vpop.f32.mrb[0].mxu0
    %2350 = vdwg.mxu0
    %v2352 = vsel %vm1654, %v2249, 0
    %2354 = vmatprep.subr.bf16.mxu0 0
    %2355 = vmatpush1.bf16.msra.mxu0 %v794
    %2356 = vmatprep.subr.bf16.mxu0 0
    %2357 = vmatpush1.bf16.msra.mxu0 0
    %2358 = vmatprep.subr.bf16.mxu0 0
    %2359 = vmatpush1.bf16.msra.mxu0 0
    %2360 = vmatprep.subr.bf16.mxu0 0
    %2361 = vmatpush1.bf16.msra.mxu0 0
    %2362 = vmatprep.subr.bf16.mxu0 0
    %2363 = vmatpush1.bf16.msra.mxu0 0
    %2364 = vmatprep.subr.bf16.mxu0 0
    %2365 = vmatpush1.bf16.msra.mxu0 0
    %2366 = vmatprep.subr.bf16.mxu0 0
    %2367 = vmatpush1.bf16.msra.mxu0 0
    %2368 = vmatprep.subr.bf16.mxu0 0
    %2369 = vmatpush1.bf16.msra.mxu0 0
    %2370 = vmatprep.subr.bf16.mxu0 0
    %2371 = vmatpush1.bf16.msra.mxu0 0
    %2372 = vmatprep.subr.bf16.mxu0 0
    %2373 = vmatpush1.bf16.msra.mxu0 0
    %2374 = vmatprep.subr.bf16.mxu0 0
    %2375 = vmatpush1.bf16.msra.mxu0 0
    %2376 = vmatprep.subr.bf16.mxu0 0
    %2377 = vmatpush1.bf16.msra.mxu0 0
    %2378 = vmatprep.subr.bf16.mxu0 0
    %2379 = vmatpush1.bf16.msra.mxu0 0
    %2380 = vmatprep.subr.bf16.mxu0 0
    %2381 = vmatpush1.bf16.msra.mxu0 0
    %2382 = vmatprep.subr.bf16.mxu0 0
    %2383 = vmatpush1.bf16.msra.mxu0 0
    %2384 = vmatprep.subr.bf16.mxu0 0
    %2385 = vmatpush1.bf16.msra.mxu0 0
    %2386 = vmatprep.mubr.bf16.mxu0 0
    %2387 = vmatmul.mubr.bf16.gmra.mrb[0].mxu0 %v2352
    %v2388 = vpop.f32.mrb[0].mxu0
    %v2389 = vadd.f32 0.0, %v2388
    %v2390 = vpop.f32.mrb[0].mxu0
    %v2391 = vpop.f32.mrb[0].mxu0
    %v2392 = vadd.f32 0.0, %v2391
    %v2393 = vpop.f32.mrb[0].mxu0
    %2394 = vdwg.mxu0
    %v2396 = vsel %vm1654, %v2250, 0
    %2398 = vmatprep.subr.bf16.mxu0 0
    %2399 = vmatpush1.bf16.msra.mxu0 %v847
    %2400 = vmatprep.subr.bf16.mxu0 0
    %2401 = vmatpush1.bf16.msra.mxu0 0
    %2402 = vmatprep.subr.bf16.mxu0 0
    %2403 = vmatpush1.bf16.msra.mxu0 0
    %2404 = vmatprep.subr.bf16.mxu0 0
    %2405 = vmatpush1.bf16.msra.mxu0 0
    %2406 = vmatprep.subr.bf16.mxu0 0
    %2407 = vmatpush1.bf16.msra.mxu0 0
    %2408 = vmatprep.subr.bf16.mxu0 0
    %2409 = vmatpush1.bf16.msra.mxu0 0
    %2410 = vmatprep.subr.bf16.mxu0 0
    %2411 = vmatpush1.bf16.msra.mxu0 0
    %2412 = vmatprep.subr.bf16.mxu0 0
    %2413 = vmatpush1.bf16.msra.mxu0 0
    %2414 = vmatprep.subr.bf16.mxu0 0
    %2415 = vmatpush1.bf16.msra.mxu0 0
    %2416 = vmatprep.subr.bf16.mxu0 0
    %2417 = vmatpush1.bf16.msra.mxu0 0
    %2418 = vmatprep.subr.bf16.mxu0 0
    %2419 = vmatpush1.bf16.msra.mxu0 0
    %2420 = vmatprep.subr.bf16.mxu0 0
    %2421 = vmatpush1.bf16.msra.mxu0 0
    %2422 = vmatprep.subr.bf16.mxu0 0
    %2423 = vmatpush1.bf16.msra.mxu0 0
    %2424 = vmatprep.subr.bf16.mxu0 0
    %2425 = vmatpush1.bf16.msra.mxu0 0
    %2426 = vmatprep.subr.bf16.mxu0 0
    %2427 = vmatpush1.bf16.msra.mxu0 0
    %2428 = vmatprep.subr.bf16.mxu0 0
    %2429 = vmatpush1.bf16.msra.mxu0 0
    %2430 = vmatprep.mubr.bf16.mxu0 0
    %2431 = vmatmul.mubr.bf16.gmra.mrb[0].mxu0 %v2396
    %v2432 = vpop.f32.mrb[0].mxu0
    %v2433 = vadd.f32 0.0, %v2432
    %v2434 = vpop.f32.mrb[0].mxu0
    %v2435 = vpop.f32.mrb[0].mxu0
    %v2436 = vadd.f32 0.0, %v2435
    %v2437 = vpop.f32.mrb[0].mxu0
    %2438 = vdwg.mxu0
    %v2440 = vsel %vm1654, %v2251, 0
    %2442 = vmatprep.subr.bf16.mxu0 0
    %2443 = vmatpush1.bf16.msra.mxu0 %v900
    %2444 = vmatprep.subr.bf16.mxu0 0
    %2445 = vmatpush1.bf16.msra.mxu0 0
    %2446 = vmatprep.subr.bf16.mxu0 0
    %2447 = vmatpush1.bf16.msra.mxu0 0
    %2448 = vmatprep.subr.bf16.mxu0 0
    %2449 = vmatpush1.bf16.msra.mxu0 0
    %2450 = vmatprep.subr.bf16.mxu0 0
    %2451 = vmatpush1.bf16.msra.mxu0 0
    %2452 = vmatprep.subr.bf16.mxu0 0
    %2453 = vmatpush1.bf16.msra.mxu0 0
    %2454 = vmatprep.subr.bf16.mxu0 0
    %2455 = vmatpush1.bf16.msra.mxu0 0
    %2456 = vmatprep.subr.bf16.mxu0 0
    %2457 = vmatpush1.bf16.msra.mxu0 0
    %2458 = vmatprep.subr.bf16.mxu0 0
    %2459 = vmatpush1.bf16.msra.mxu0 0
    %2460 = vmatprep.subr.bf16.mxu0 0
    %2461 = vmatpush1.bf16.msra.mxu0 0
    %2462 = vmatprep.subr.bf16.mxu0 0
    %2463 = vmatpush1.bf16.msra.mxu0 0
    %2464 = vmatprep.subr.bf16.mxu0 0
    %2465 = vmatpush1.bf16.msra.mxu0 0
    %2466 = vmatprep.subr.bf16.mxu0 0
    %2467 = vmatpush1.bf16.msra.mxu0 0
    %2468 = vmatprep.subr.bf16.mxu0 0
    %2469 = vmatpush1.bf16.msra.mxu0 0
    %2470 = vmatprep.subr.bf16.mxu0 0
    %2471 = vmatpush1.bf16.msra.mxu0 0
    %2472 = vmatprep.subr.bf16.mxu0 0
    %2473 = vmatpush1.bf16.msra.mxu0 0
    %2474 = vmatprep.mubr.bf16.mxu0 0
    %2475 = vmatmul.mubr.bf16.gmra.mrb[0].mxu0 %v2440
    %v2476 = vpop.f32.mrb[0].mxu0
    %v2477 = vadd.f32 0.0, %v2476
    %v2478 = vpop.f32.mrb[0].mxu0
    %v2479 = vpop.f32.mrb[0].mxu0
    %v2480 = vadd.f32 0.0, %v2479
    %v2481 = vpop.f32.mrb[0].mxu0
    %2482 = vdwg.mxu0
    %v2484 = vsel %vm1654, %v2252, 0
    %2486 = vmatprep.subr.bf16.mxu0 0
    %2487 = vmatpush1.bf16.msra.mxu0 %v953
    %2488 = vmatprep.subr.bf16.mxu0 0
    %2489 = vmatpush1.bf16.msra.mxu0 0
    %2490 = vmatprep.subr.bf16.mxu0 0
    %2491 = vmatpush1.bf16.msra.mxu0 0
    %2492 = vmatprep.subr.bf16.mxu0 0
    %2493 = vmatpush1.bf16.msra.mxu0 0
    %2494 = vmatprep.subr.bf16.mxu0 0
    %2495 = vmatpush1.bf16.msra.mxu0 0
    %2496 = vmatprep.subr.bf16.mxu0 0
    %2497 = vmatpush1.bf16.msra.mxu0 0
    %2498 = vmatprep.subr.bf16.mxu0 0
    %2499 = vmatpush1.bf16.msra.mxu0 0
    %2500 = vmatprep.subr.bf16.mxu0 0
    %2501 = vmatpush1.bf16.msra.mxu0 0
    %2502 = vmatprep.subr.bf16.mxu0 0
    %2503 = vmatpush1.bf16.msra.mxu0 0
    %2504 = vmatprep.subr.bf16.mxu0 0
    %2505 = vmatpush1.bf16.msra.mxu0 0
    %2506 = vmatprep.subr.bf16.mxu0 0
    %2507 = vmatpush1.bf16.msra.mxu0 0
    %2508 = vmatprep.subr.bf16.mxu0 0
    %2509 = vmatpush1.bf16.msra.mxu0 0
    %2510 = vmatprep.subr.bf16.mxu0 0
    %2511 = vmatpush1.bf16.msra.mxu0 0
    %2512 = vmatprep.subr.bf16.mxu0 0
    %2513 = vmatpush1.bf16.msra.mxu0 0
    %2514 = vmatprep.subr.bf16.mxu0 0
    %2515 = vmatpush1.bf16.msra.mxu0 0
    %2516 = vmatprep.subr.bf16.mxu0 0
    %2517 = vmatpush1.bf16.msra.mxu0 0
    %2518 = vmatprep.mubr.bf16.mxu0 0
    %2519 = vmatmul.mubr.bf16.gmra.mrb[0].mxu0 %v2484
    %v2520 = vpop.f32.mrb[0].mxu0
    %v2521 = vadd.f32 0.0, %v2520
    %v2522 = vpop.f32.mrb[0].mxu0
    %v2523 = vpop.f32.mrb[0].mxu0
    %v2524 = vadd.f32 0.0, %v2523
    %v2525 = vpop.f32.mrb[0].mxu0
    %2526 = vdwg.mxu0
    %v2528 = vsel %vm1654, %v2253, 0
    %2530 = vmatprep.subr.bf16.mxu0 0
    %2531 = vmatpush1.bf16.msra.mxu0 %v1006
    %2532 = vmatprep.subr.bf16.mxu0 0
    %2533 = vmatpush1.bf16.msra.mxu0 0
    %2534 = vmatprep.subr.bf16.mxu0 0
    %2535 = vmatpush1.bf16.msra.mxu0 0
    %2536 = vmatprep.subr.bf16.mxu0 0
    %2537 = vmatpush1.bf16.msra.mxu0 0
    %2538 = vmatprep.subr.bf16.mxu0 0
    %2539 = vmatpush1.bf16.msra.mxu0 0
    %2540 = vmatprep.subr.bf16.mxu0 0
    %2541 = vmatpush1.bf16.msra.mxu0 0
    %2542 = vmatprep.subr.bf16.mxu0 0
    %2543 = vmatpush1.bf16.msra.mxu0 0
    %2544 = vmatprep.subr.bf16.mxu0 0
    %2545 = vmatpush1.bf16.msra.mxu0 0
    %2546 = vmatprep.subr.bf16.mxu0 0
    %2547 = vmatpush1.bf16.msra.mxu0 0
    %2548 = vmatprep.subr.bf16.mxu0 0
    %2549 = vmatpush1.bf16.msra.mxu0 0
    %2550 = vmatprep.subr.bf16.mxu0 0
    %2551 = vmatpush1.bf16.msra.mxu0 0
    %2552 = vmatprep.subr.bf16.mxu0 0
    %2553 = vmatpush1.bf16.msra.mxu0 0
    %2554 = vmatprep.subr.bf16.mxu0 0
    %2555 = vmatpush1.bf16.msra.mxu0 0
    %2556 = vmatprep.subr.bf16.mxu0 0
    %2557 = vmatpush1.bf16.msra.mxu0 0
    %2558 = vmatprep.subr.bf16.mxu0 0
    %2559 = vmatpush1.bf16.msra.mxu0 0
    %2560 = vmatprep.subr.bf16.mxu0 0
    %2561 = vmatpush1.bf16.msra.mxu0 0
    %2562 = vmatprep.mubr.bf16.mxu0 0
    %2563 = vmatmul.mubr.bf16.gmra.mrb[0].mxu0 %v2528
    %v2564 = vpop.f32.mrb[0].mxu0
    %v2565 = vadd.f32 0.0, %v2564
    %v2566 = vpop.f32.mrb[0].mxu0
    %v2567 = vpop.f32.mrb[0].mxu0
    %v2568 = vadd.f32 0.0, %v2567
    %v2569 = vpop.f32.mrb[0].mxu0
    %2570 = vdwg.mxu0
    %v2572 = vsel %vm1654, %v2254, 0
    %2574 = vmatprep.subr.bf16.mxu0 0
    %2575 = vmatpush1.bf16.msra.mxu0 %v1059
    %2576 = vmatprep.subr.bf16.mxu0 0
    %2577 = vmatpush1.bf16.msra.mxu0 0
    %2578 = vmatprep.subr.bf16.mxu0 0
    %2579 = vmatpush1.bf16.msra.mxu0 0
    %2580 = vmatprep.subr.bf16.mxu0 0
    %2581 = vmatpush1.bf16.msra.mxu0 0
    %2582 = vmatprep.subr.bf16.mxu0 0
    %2583 = vmatpush1.bf16.msra.mxu0 0
    %2584 = vmatprep.subr.bf16.mxu0 0
    %2585 = vmatpush1.bf16.msra.mxu0 0
    %2586 = vmatprep.subr.bf16.mxu0 0
    %2587 = vmatpush1.bf16.msra.mxu0 0
    %2588 = vmatprep.subr.bf16.mxu0 0
    %2589 = vmatpush1.bf16.msra.mxu0 0
    %2590 = vmatprep.subr.bf16.mxu0 0
    %2591 = vmatpush1.bf16.msra.mxu0 0
    %2592 = vmatprep.subr.bf16.mxu0 0
    %2593 = vmatpush1.bf16.msra.mxu0 0
    %2594 = vmatprep.subr.bf16.mxu0 0
    %2595 = vmatpush1.bf16.msra.mxu0 0
    %2596 = vmatprep.subr.bf16.mxu0 0
    %2597 = vmatpush1.bf16.msra.mxu0 0
    %2598 = vmatprep.subr.bf16.mxu0 0
    %2599 = vmatpush1.bf16.msra.mxu0 0
    %2600 = vmatprep.subr.bf16.mxu0 0
    %2601 = vmatpush1.bf16.msra.mxu0 0
    %2602 = vmatprep.subr.bf16.mxu0 0
    %2603 = vmatpush1.bf16.msra.mxu0 0
    %2604 = vmatprep.subr.bf16.mxu0 0
    %2605 = vmatpush1.bf16.msra.mxu0 0
    %2606 = vmatprep.mubr.bf16.mxu0 0
    %2607 = vmatmul.mubr.bf16.gmra.mrb[0].mxu0 %v2572
    %v2608 = vpop.f32.mrb[0].mxu0
    %v2609 = vadd.f32 0.0, %v2608
    %v2610 = vpop.f32.mrb[0].mxu0
    %v2611 = vpop.f32.mrb[0].mxu0
    %v2612 = vadd.f32 0.0, %v2611
    %v2613 = vpop.f32.mrb[0].mxu0
    %2614 = vdwg.mxu0
    %v2616 = vsel %vm1654, %v2255, 0
    %2618 = vmatprep.subr.bf16.mxu0 0
    %2619 = vmatpush1.bf16.msra.mxu0 %v1112
    %2620 = vmatprep.subr.bf16.mxu0 0
    %2621 = vmatpush1.bf16.msra.mxu0 0
    %2622 = vmatprep.subr.bf16.mxu0 0
    %2623 = vmatpush1.bf16.msra.mxu0 0
    %2624 = vmatprep.subr.bf16.mxu0 0
    %2625 = vmatpush1.bf16.msra.mxu0 0
    %2626 = vmatprep.subr.bf16.mxu0 0
    %2627 = vmatpush1.bf16.msra.mxu0 0
    %2628 = vmatprep.subr.bf16.mxu0 0
    %2629 = vmatpush1.bf16.msra.mxu0 0
    %2630 = vmatprep.subr.bf16.mxu0 0
    %2631 = vmatpush1.bf16.msra.mxu0 0
    %2632 = vmatprep.subr.bf16.mxu0 0
    %2633 = vmatpush1.bf16.msra.mxu0 0
    %2634 = vmatprep.subr.bf16.mxu0 0
    %2635 = vmatpush1.bf16.msra.mxu0 0
    %2636 = vmatprep.subr.bf16.mxu0 0
    %2637 = vmatpush1.bf16.msra.mxu0 0
    %2638 = vmatprep.subr.bf16.mxu0 0
    %2639 = vmatpush1.bf16.msra.mxu0 0
    %2640 = vmatprep.subr.bf16.mxu0 0
    %2641 = vmatpush1.bf16.msra.mxu0 0
    %2642 = vmatprep.subr.bf16.mxu0 0
    %2643 = vmatpush1.bf16.msra.mxu0 0
    %2644 = vmatprep.subr.bf16.mxu0 0
    %2645 = vmatpush1.bf16.msra.mxu0 0
    %2646 = vmatprep.subr.bf16.mxu0 0
    %2647 = vmatpush1.bf16.msra.mxu0 0
    %2648 = vmatprep.subr.bf16.mxu0 0
    %2649 = vmatpush1.bf16.msra.mxu0 0
    %2650 = vmatprep.mubr.bf16.mxu0 0
    %2651 = vmatmul.mubr.bf16.gmra.mrb[0].mxu0 %v2616
    %v2652 = vpop.f32.mrb[0].mxu0
    %v2653 = vadd.f32 0.0, %v2652
    %v2654 = vpop.f32.mrb[0].mxu0
    %v2655 = vpop.f32.mrb[0].mxu0
    %v2656 = vadd.f32 0.0, %v2655
    %v2657 = vpop.f32.mrb[0].mxu0
    %2658 = vdwg.mxu0
    %v2660 = vsel %vm1654, %v2256, 0
    %2662 = vmatprep.subr.bf16.mxu0 0
    %2663 = vmatpush1.bf16.msra.mxu0 %v1165
    %2664 = vmatprep.subr.bf16.mxu0 0
    %2665 = vmatpush1.bf16.msra.mxu0 0
    %2666 = vmatprep.subr.bf16.mxu0 0
    %2667 = vmatpush1.bf16.msra.mxu0 0
    %2668 = vmatprep.subr.bf16.mxu0 0
    %2669 = vmatpush1.bf16.msra.mxu0 0
    %2670 = vmatprep.subr.bf16.mxu0 0
    %2671 = vmatpush1.bf16.msra.mxu0 0
    %2672 = vmatprep.subr.bf16.mxu0 0
    %2673 = vmatpush1.bf16.msra.mxu0 0
    %2674 = vmatprep.subr.bf16.mxu0 0
    %2675 = vmatpush1.bf16.msra.mxu0 0
    %2676 = vmatprep.subr.bf16.mxu0 0
    %2677 = vmatpush1.bf16.msra.mxu0 0
    %2678 = vmatprep.subr.bf16.mxu0 0
    %2679 = vmatpush1.bf16.msra.mxu0 0
    %2680 = vmatprep.subr.bf16.mxu0 0
    %2681 = vmatpush1.bf16.msra.mxu0 0
    %2682 = vmatprep.subr.bf16.mxu0 0
    %2683 = vmatpush1.bf16.msra.mxu0 0
    %2684 = vmatprep.subr.bf16.mxu0 0
    %2685 = vmatpush1.bf16.msra.mxu0 0
    %2686 = vmatprep.subr.bf16.mxu0 0
    %2687 = vmatpush1.bf16.msra.mxu0 0
    %2688 = vmatprep.subr.bf16.mxu0 0
    %2689 = vmatpush1.bf16.msra.mxu0 0
    %2690 = vmatprep.subr.bf16.mxu0 0
    %2691 = vmatpush1.bf16.msra.mxu0 0
    %2692 = vmatprep.subr.bf16.mxu0 0
    %2693 = vmatpush1.bf16.msra.mxu0 0
    %2694 = vmatprep.mubr.bf16.mxu0 0
    %2695 = vmatmul.mubr.bf16.gmra.mrb[0].mxu0 %v2660
    %v2696 = vpop.f32.mrb[0].mxu0
    %v2697 = vadd.f32 0.0, %v2696
    %v2698 = vpop.f32.mrb[0].mxu0
    %v2699 = vpop.f32.mrb[0].mxu0
    %v2700 = vadd.f32 0.0, %v2699
    %v2701 = vpop.f32.mrb[0].mxu0
    %2702 = vdwg.mxu0
    %v2704 = vsel %vm1654, %v2257, 0
    %2706 = vmatprep.subr.bf16.mxu0 0
    %2707 = vmatpush1.bf16.msra.mxu0 %v1218
    %2708 = vmatprep.subr.bf16.mxu0 0
    %2709 = vmatpush1.bf16.msra.mxu0 0
    %2710 = vmatprep.subr.bf16.mxu0 0
    %2711 = vmatpush1.bf16.msra.mxu0 0
    %2712 = vmatprep.subr.bf16.mxu0 0
    %2713 = vmatpush1.bf16.msra.mxu0 0
    %2714 = vmatprep.subr.bf16.mxu0 0
    %2715 = vmatpush1.bf16.msra.mxu0 0
    %2716 = vmatprep.subr.bf16.mxu0 0
    %2717 = vmatpush1.bf16.msra.mxu0 0
    %2718 = vmatprep.subr.bf16.mxu0 0
    %2719 = vmatpush1.bf16.msra.mxu0 0
    %2720 = vmatprep.subr.bf16.mxu0 0
    %2721 = vmatpush1.bf16.msra.mxu0 0
    %2722 = vmatprep.subr.bf16.mxu0 0
    %2723 = vmatpush1.bf16.msra.mxu0 0
    %2724 = vmatprep.subr.bf16.mxu0 0
    %2725 = vmatpush1.bf16.msra.mxu0 0
    %2726 = vmatprep.subr.bf16.mxu0 0
    %2727 = vmatpush1.bf16.msra.mxu0 0
    %2728 = vmatprep.subr.bf16.mxu0 0
    %2729 = vmatpush1.bf16.msra.mxu0 0
    %2730 = vmatprep.subr.bf16.mxu0 0
    %2731 = vmatpush1.bf16.msra.mxu0 0
    %2732 = vmatprep.subr.bf16.mxu0 0
    %2733 = vmatpush1.bf16.msra.mxu0 0
    %2734 = vmatprep.subr.bf16.mxu0 0
    %2735 = vmatpush1.bf16.msra.mxu0 0
    %2736 = vmatprep.subr.bf16.mxu0 0
    %2737 = vmatpush1.bf16.msra.mxu0 0
    %2738 = vmatprep.mubr.bf16.mxu0 0
    %2739 = vmatmul.mubr.bf16.gmra.mrb[0].mxu0 %v2704
    %v2740 = vpop.f32.mrb[0].mxu0
    %v2741 = vadd.f32 0.0, %v2740
    %v2742 = vpop.f32.mrb[0].mxu0
    %v2743 = vpop.f32.mrb[0].mxu0
    %v2744 = vadd.f32 0.0, %v2743
    %v2745 = vpop.f32.mrb[0].mxu0
    %2746 = vdwg.mxu0
    %v2748 = vsel %vm1654, %v2258, 0
    %2750 = vmatprep.subr.bf16.mxu0 0
    %2751 = vmatpush1.bf16.msra.mxu0 %v1271
    %2752 = vmatprep.subr.bf16.mxu0 0
    %2753 = vmatpush1.bf16.msra.mxu0 0
    %2754 = vmatprep.subr.bf16.mxu0 0
    %2755 = vmatpush1.bf16.msra.mxu0 0
    %2756 = vmatprep.subr.bf16.mxu0 0
    %2757 = vmatpush1.bf16.msra.mxu0 0
    %2758 = vmatprep.subr.bf16.mxu0 0
    %2759 = vmatpush1.bf16.msra.mxu0 0
    %2760 = vmatprep.subr.bf16.mxu0 0
    %2761 = vmatpush1.bf16.msra.mxu0 0
    %2762 = vmatprep.subr.bf16.mxu0 0
    %2763 = vmatpush1.bf16.msra.mxu0 0
    %2764 = vmatprep.subr.bf16.mxu0 0
    %2765 = vmatpush1.bf16.msra.mxu0 0
    %2766 = vmatprep.subr.bf16.mxu0 0
    %2767 = vmatpush1.bf16.msra.mxu0 0
    %2768 = vmatprep.subr.bf16.mxu0 0
    %2769 = vmatpush1.bf16.msra.mxu0 0
    %2770 = vmatprep.subr.bf16.mxu0 0
    %2771 = vmatpush1.bf16.msra.mxu0 0
    %2772 = vmatprep.subr.bf16.mxu0 0
    %2773 = vmatpush1.bf16.msra.mxu0 0
    %2774 = vmatprep.subr.bf16.mxu0 0
    %2775 = vmatpush1.bf16.msra.mxu0 0
    %2776 = vmatprep.subr.bf16.mxu0 0
    %2777 = vmatpush1.bf16.msra.mxu0 0
    %2778 = vmatprep.subr.bf16.mxu0 0
    %2779 = vmatpush1.bf16.msra.mxu0 0
    %2780 = vmatprep.subr.bf16.mxu0 0
    %2781 = vmatpush1.bf16.msra.mxu0 0
    %2782 = vmatprep.mubr.bf16.mxu0 0
    %2783 = vmatmul.mubr.bf16.gmra.mrb[0].mxu0 %v2748
    %v2784 = vpop.f32.mrb[0].mxu0
    %v2785 = vadd.f32 0.0, %v2784
    %v2786 = vpop.f32.mrb[0].mxu0
    %v2787 = vpop.f32.mrb[0].mxu0
    %v2788 = vadd.f32 0.0, %v2787
    %v2789 = vpop.f32.mrb[0].mxu0
    %2790 = vdwg.mxu0
    %v2792 = vsel %vm1654, %v2259, 0
    %2794 = vmatprep.subr.bf16.mxu0 0
    %2795 = vmatpush1.bf16.msra.mxu0 %v1324
    %2796 = vmatprep.subr.bf16.mxu0 0
    %2797 = vmatpush1.bf16.msra.mxu0 0
    %2798 = vmatprep.subr.bf16.mxu0 0
    %2799 = vmatpush1.bf16.msra.mxu0 0
    %2800 = vmatprep.subr.bf16.mxu0 0
    %2801 = vmatpush1.bf16.msra.mxu0 0
    %2802 = vmatprep.subr.bf16.mxu0 0
    %2803 = vmatpush1.bf16.msra.mxu0 0
    %2804 = vmatprep.subr.bf16.mxu0 0
    %2805 = vmatpush1.bf16.msra.mxu0 0
    %2806 = vmatprep.subr.bf16.mxu0 0
    %2807 = vmatpush1.bf16.msra.mxu0 0
    %2808 = vmatprep.subr.bf16.mxu0 0
    %2809 = vmatpush1.bf16.msra.mxu0 0
    %2810 = vmatprep.subr.bf16.mxu0 0
    %2811 = vmatpush1.bf16.msra.mxu0 0
    %2812 = vmatprep.subr.bf16.mxu0 0
    %2813 = vmatpush1.bf16.msra.mxu0 0
    %2814 = vmatprep.subr.bf16.mxu0 0
    %2815 = vmatpush1.bf16.msra.mxu0 0
    %2816 = vmatprep.subr.bf16.mxu0 0
    %2817 = vmatpush1.bf16.msra.mxu0 0
    %2818 = vmatprep.subr.bf16.mxu0 0
    %2819 = vmatpush1.bf16.msra.mxu0 0
    %2820 = vmatprep.subr.bf16.mxu0 0
    %2821 = vmatpush1.bf16.msra.mxu0 0
    %2822 = vmatprep.subr.bf16.mxu0 0
    %2823 = vmatpush1.bf16.msra.mxu0 0
    %2824 = vmatprep.subr.bf16.mxu0 0
    %2825 = vmatpush1.bf16.msra.mxu0 0
    %2826 = vmatprep.mubr.bf16.mxu0 0
    %2827 = vmatmul.mubr.bf16.gmra.mrb[0].mxu0 %v2792
    %v2828 = vpop.f32.mrb[0].mxu0
    %v2829 = vadd.f32 0.0, %v2828
    %v2830 = vpop.f32.mrb[0].mxu0
    %v2831 = vpop.f32.mrb[0].mxu0
    %v2832 = vadd.f32 0.0, %v2831
    %v2833 = vpop.f32.mrb[0].mxu0
    %2834 = vdwg.mxu0
    %v2836 = vsel %vm1654, %v2260, 0
    %2838 = vmatprep.subr.bf16.mxu0 0
    %2839 = vmatpush1.bf16.msra.mxu0 %v1377
    %2840 = vmatprep.subr.bf16.mxu0 0
    %2841 = vmatpush1.bf16.msra.mxu0 0
    %2842 = vmatprep.subr.bf16.mxu0 0
    %2843 = vmatpush1.bf16.msra.mxu0 0
    %2844 = vmatprep.subr.bf16.mxu0 0
    %2845 = vmatpush1.bf16.msra.mxu0 0
    %2846 = vmatprep.subr.bf16.mxu0 0
    %2847 = vmatpush1.bf16.msra.mxu0 0
    %2848 = vmatprep.subr.bf16.mxu0 0
    %2849 = vmatpush1.bf16.msra.mxu0 0
    %2850 = vmatprep.subr.bf16.mxu0 0
    %2851 = vmatpush1.bf16.msra.mxu0 0
    %2852 = vmatprep.subr.bf16.mxu0 0
    %2853 = vmatpush1.bf16.msra.mxu0 0
    %2854 = vmatprep.subr.bf16.mxu0 0
    %2855 = vmatpush1.bf16.msra.mxu0 0
    %2856 = vmatprep.subr.bf16.mxu0 0
    %2857 = vmatpush1.bf16.msra.mxu0 0
    %2858 = vmatprep.subr.bf16.mxu0 0
    %2859 = vmatpush1.bf16.msra.mxu0 0
    %2860 = vmatprep.subr.bf16.mxu0 0
    %2861 = vmatpush1.bf16.msra.mxu0 0
    %2862 = vmatprep.subr.bf16.mxu0 0
    %2863 = vmatpush1.bf16.msra.mxu0 0
    %2864 = vmatprep.subr.bf16.mxu0 0
    %2865 = vmatpush1.bf16.msra.mxu0 0
    %2866 = vmatprep.subr.bf16.mxu0 0
    %2867 = vmatpush1.bf16.msra.mxu0 0
    %2868 = vmatprep.subr.bf16.mxu0 0
    %2869 = vmatpush1.bf16.msra.mxu0 0
    %2870 = vmatprep.mubr.bf16.mxu0 0
    %2871 = vmatmul.mubr.bf16.gmra.mrb[0].mxu0 %v2836
    %v2872 = vpop.f32.mrb[0].mxu0
    %v2873 = vadd.f32 0.0, %v2872
    %v2874 = vpop.f32.mrb[0].mxu0
    %v2875 = vpop.f32.mrb[0].mxu0
    %v2876 = vadd.f32 0.0, %v2875
    %v2877 = vpop.f32.mrb[0].mxu0
    %2878 = vdwg.mxu0
    %v2880 = vsel %vm1654, %v2261, 0
    %2882 = vmatprep.subr.bf16.mxu0 0
    %2883 = vmatpush1.bf16.msra.mxu0 %v1430
    %2884 = vmatprep.subr.bf16.mxu0 0
    %2885 = vmatpush1.bf16.msra.mxu0 0
    %2886 = vmatprep.subr.bf16.mxu0 0
    %2887 = vmatpush1.bf16.msra.mxu0 0
    %2888 = vmatprep.subr.bf16.mxu0 0
    %2889 = vmatpush1.bf16.msra.mxu0 0
    %2890 = vmatprep.subr.bf16.mxu0 0
    %2891 = vmatpush1.bf16.msra.mxu0 0
    %2892 = vmatprep.subr.bf16.mxu0 0
    %2893 = vmatpush1.bf16.msra.mxu0 0
    %2894 = vmatprep.subr.bf16.mxu0 0
    %2895 = vmatpush1.bf16.msra.mxu0 0
    %2896 = vmatprep.subr.bf16.mxu0 0
    %2897 = vmatpush1.bf16.msra.mxu0 0
    %2898 = vmatprep.subr.bf16.mxu0 0
    %2899 = vmatpush1.bf16.msra.mxu0 0
    %2900 = vmatprep.subr.bf16.mxu0 0
    %2901 = vmatpush1.bf16.msra.mxu0 0
    %2902 = vmatprep.subr.bf16.mxu0 0
    %2903 = vmatpush1.bf16.msra.mxu0 0
    %2904 = vmatprep.subr.bf16.mxu0 0
    %2905 = vmatpush1.bf16.msra.mxu0 0
    %2906 = vmatprep.subr.bf16.mxu0 0
    %2907 = vmatpush1.bf16.msra.mxu0 0
    %2908 = vmatprep.subr.bf16.mxu0 0
    %2909 = vmatpush1.bf16.msra.mxu0 0
    %2910 = vmatprep.subr.bf16.mxu0 0
    %2911 = vmatpush1.bf16.msra.mxu0 0
    %2912 = vmatprep.subr.bf16.mxu0 0
    %2913 = vmatpush1.bf16.msra.mxu0 0
    %2914 = vmatprep.mubr.bf16.mxu0 0
    %2915 = vmatmul.mubr.bf16.gmra.mrb[0].mxu0 %v2880
    %v2916 = vpop.f32.mrb[0].mxu0
    %v2917 = vadd.f32 0.0, %v2916
    %v2918 = vpop.f32.mrb[0].mxu0
    %v2919 = vpop.f32.mrb[0].mxu0
    %v2920 = vadd.f32 0.0, %v2919
    %v2921 = vpop.f32.mrb[0].mxu0
    %2922 = vdwg.mxu0
    %v2924 = vsel %vm1654, %v2262, 0
    %2926 = vmatprep.subr.bf16.mxu0 0
    %2927 = vmatpush1.bf16.msra.mxu0 %v1483
    %2928 = vmatprep.subr.bf16.mxu0 0
    %2929 = vmatpush1.bf16.msra.mxu0 0
    %2930 = vmatprep.subr.bf16.mxu0 0
    %2931 = vmatpush1.bf16.msra.mxu0 0
    %2932 = vmatprep.subr.bf16.mxu0 0
    %2933 = vmatpush1.bf16.msra.mxu0 0
    %2934 = vmatprep.subr.bf16.mxu0 0
    %2935 = vmatpush1.bf16.msra.mxu0 0
    %2936 = vmatprep.subr.bf16.mxu0 0
    %2937 = vmatpush1.bf16.msra.mxu0 0
    %2938 = vmatprep.subr.bf16.mxu0 0
    %2939 = vmatpush1.bf16.msra.mxu0 0
    %2940 = vmatprep.subr.bf16.mxu0 0
    %2941 = vmatpush1.bf16.msra.mxu0 0
    %2942 = vmatprep.subr.bf16.mxu0 0
    %2943 = vmatpush1.bf16.msra.mxu0 0
    %2944 = vmatprep.subr.bf16.mxu0 0
    %2945 = vmatpush1.bf16.msra.mxu0 0
    %2946 = vmatprep.subr.bf16.mxu0 0
    %2947 = vmatpush1.bf16.msra.mxu0 0
    %2948 = vmatprep.subr.bf16.mxu0 0
    %2949 = vmatpush1.bf16.msra.mxu0 0
    %2950 = vmatprep.subr.bf16.mxu0 0
    %2951 = vmatpush1.bf16.msra.mxu0 0
    %2952 = vmatprep.subr.bf16.mxu0 0
    %2953 = vmatpush1.bf16.msra.mxu0 0
    %2954 = vmatprep.subr.bf16.mxu0 0
    %2955 = vmatpush1.bf16.msra.mxu0 0
    %2956 = vmatprep.subr.bf16.mxu0 0
    %2957 = vmatpush1.bf16.msra.mxu0 0
    %2958 = vmatprep.mubr.bf16.mxu0 0
    %2959 = vmatmul.mubr.bf16.gmra.mrb[0].mxu0 %v2924
    %v2960 = vpop.f32.mrb[0].mxu0
    %v2961 = vadd.f32 0.0, %v2960
    %v2962 = vpop.f32.mrb[0].mxu0
    %v2963 = vpop.f32.mrb[0].mxu0
    %v2964 = vadd.f32 0.0, %v2963
    %v2965 = vpop.f32.mrb[0].mxu0
    %2966 = vdwg.mxu0
    %v2967 = vpack.c.bf16 %v2304, %v2301
    %v2968 = vpack.c.bf16 %v2348, %v2345
    %v2969 = vpack.c.bf16 %v2392, %v2389
    %v2970 = vpack.c.bf16 %v2436, %v2433
    %v2971 = vpack.c.bf16 %v2480, %v2477
    %v2972 = vpack.c.bf16 %v2524, %v2521
    %v2973 = vpack.c.bf16 %v2568, %v2565
    %v2974 = vpack.c.bf16 %v2612, %v2609
    %v2975 = vpack.c.bf16 %v2656, %v2653
    %v2976 = vpack.c.bf16 %v2700, %v2697
    %v2977 = vpack.c.bf16 %v2744, %v2741
    %v2978 = vpack.c.bf16 %v2788, %v2785
    %v2979 = vpack.c.bf16 %v2832, %v2829
    %v2980 = vpack.c.bf16 %v2876, %v2873
    %v2981 = vpack.c.bf16 %v2920, %v2917
    %v2982 = vpack.c.bf16 %v2964, %v2961
    %v2983 = vld [vmem:[#allocation7] sm:$0xff]
    %v2984 = vld [vmem:[#allocation7 + $0x8] sm:$0xff]
    %v2985 = vld [vmem:[#allocation7 + $0x10] sm:$0xff]
    %v2986 = vld [vmem:[#allocation7 + $0x18] sm:$0xff]
    %v2987 = vld [vmem:[#allocation7 + $0x20] sm:$0xff]
    %v2988 = vld [vmem:[#allocation7 + $0x28] sm:$0xff]
    %v2989 = vld [vmem:[#allocation7 + $0x30] sm:$0xff]
    %v2990 = vld [vmem:[#allocation7 + $0x38] sm:$0xff]
    %v2991 = vld [vmem:[#allocation7 + $0x40] sm:$0xff]
    %v2992 = vld [vmem:[#allocation7 + $0x48] sm:$0xff]
    %v2993 = vld [vmem:[#allocation7 + $0x50] sm:$0xff]
    %v2994 = vld [vmem:[#allocation7 + $0x58] sm:$0xff]
    %v2995 = vld [vmem:[#allocation7 + $0x60] sm:$0xff]
    %v2996 = vld [vmem:[#allocation7 + $0x68] sm:$0xff]
    %v2997 = vld [vmem:[#allocation7 + $0x70] sm:$0xff]
    %v2998 = vld [vmem:[#allocation7 + $0x78] sm:$0xff]
    %v2999 = vld [vmem:[%s3] sm:$0x3]
    %v3001 = vlaneseq
    %v3002 = vshrl.u32 %v3001, 7
    %v3003 = vsub.s32 0, %v3002
    %v3004 = vrot.slane %v2999, %v3003
    %v3005 = vlaneseq
    %v3006 = vshrl.u32 %v3005, 7
    %v3007 = vsub.s32 1, %v3006
    %v3008 = vrot.slane %v2999, %v3007
    %v3027 = vunpack.c.l.b16 %v2983
    %v3028 = vunpack.c.h.b16 %v2983
    %v3029 = vunpack.c.l.b16 %v2984
    %v3030 = vunpack.c.h.b16 %v2984
    %v3031 = vunpack.c.l.b16 %v2985
    %v3032 = vunpack.c.h.b16 %v2985
    %v3033 = vunpack.c.l.b16 %v2986
    %v3034 = vunpack.c.h.b16 %v2986
    %v3035 = vunpack.c.l.b16 %v2987
    %v3036 = vunpack.c.h.b16 %v2987
    %v3037 = vunpack.c.l.b16 %v2988
    %v3038 = vunpack.c.h.b16 %v2988
    %v3039 = vunpack.c.l.b16 %v2989
    %v3040 = vunpack.c.h.b16 %v2989
    %v3041 = vunpack.c.l.b16 %v2990
    %v3042 = vunpack.c.h.b16 %v2990
    %v3043 = vunpack.c.l.b16 %v2991
    %v3044 = vunpack.c.h.b16 %v2991
    %v3045 = vunpack.c.l.b16 %v2992
    %v3046 = vunpack.c.h.b16 %v2992
    %v3047 = vunpack.c.l.b16 %v2993
    %v3048 = vunpack.c.h.b16 %v2993
    %v3049 = vunpack.c.l.b16 %v2994
    %v3050 = vunpack.c.h.b16 %v2994
    %v3051 = vunpack.c.l.b16 %v2995
    %v3052 = vunpack.c.h.b16 %v2995
    %v3053 = vunpack.c.l.b16 %v2996
    %v3054 = vunpack.c.h.b16 %v2996
    %v3055 = vunpack.c.l.b16 %v2997
    %v3056 = vunpack.c.h.b16 %v2997
    %v3057 = vunpack.c.l.b16 %v2998
    %v3058 = vunpack.c.h.b16 %v2998
    %v3059 = vpack.c.b16 %v3029, %v3027
    %v3060 = vpack.c.b16 %v3030, %v3028
    %v3061 = vpack.c.b16 %v3033, %v3031
    %v3062 = vpack.c.b16 %v3034, %v3032
    %v3063 = vpack.c.b16 %v3037, %v3035
    %v3064 = vpack.c.b16 %v3038, %v3036
    %v3065 = vpack.c.b16 %v3041, %v3039
    %v3066 = vpack.c.b16 %v3042, %v3040
    %v3067 = vpack.c.b16 %v3045, %v3043
    %v3068 = vpack.c.b16 %v3046, %v3044
    %v3069 = vpack.c.b16 %v3049, %v3047
    %v3070 = vpack.c.b16 %v3050, %v3048
    %v3071 = vpack.c.b16 %v3053, %v3051
    %v3072 = vpack.c.b16 %v3054, %v3052
    %v3073 = vpack.c.b16 %v3057, %v3055
    %v3074 = vpack.c.b16 %v3058, %v3056
    %3091 = vmatprep.subr.bf16.mxu0 %v3060
    %3092 = vmatpush1.bf16.msra.mxu0 %v3059
    %3093 = vmatprep.subr.bf16.mxu0 %v3062
    %3094 = vmatpush1.bf16.msra.mxu0 %v3061
    %3095 = vmatprep.subr.bf16.mxu0 %v3064
    %3096 = vmatpush1.bf16.msra.mxu0 %v3063
    %3097 = vmatprep.subr.bf16.mxu0 %v3066
    %3098 = vmatpush1.bf16.msra.mxu0 %v3065
    %3099 = vmatprep.subr.bf16.mxu0 %v3068
    %3100 = vmatpush1.bf16.msra.mxu0 %v3067
    %3101 = vmatprep.subr.bf16.mxu0 %v3070
    %3102 = vmatpush1.bf16.msra.mxu0 %v3069
    %3103 = vmatprep.subr.bf16.mxu0 %v3072
    %3104 = vmatpush1.bf16.msra.mxu0 %v3071
    %3105 = vmatprep.subr.bf16.mxu0 %v3074
    %3106 = vmatpush1.bf16.msra.mxu0 %v3073
    %3107 = vmatprep.subr.bf16.mxu0 0
    %3108 = vmatpush1.bf16.msra.mxu0 0
    %3109 = vmatprep.subr.bf16.mxu0 0
    %3110 = vmatpush1.bf16.msra.mxu0 0
    %3111 = vmatprep.subr.bf16.mxu0 0
    %3112 = vmatpush1.bf16.msra.mxu0 0
    %3113 = vmatprep.subr.bf16.mxu0 0
    %3114 = vmatpush1.bf16.msra.mxu0 0
    %3115 = vmatprep.subr.bf16.mxu0 0
    %3116 = vmatpush1.bf16.msra.mxu0 0
    %3117 = vmatprep.subr.bf16.mxu0 0
    %3118 = vmatpush1.bf16.msra.mxu0 0
    %3119 = vmatprep.subr.bf16.mxu0 0
    %3120 = vmatpush1.bf16.msra.mxu0 0
    %3121 = vmatprep.subr.bf16.mxu0 0
    %3122 = vmatpush1.bf16.msra.mxu0 0
    %3123 = vmatprep.mubr.bf16.mxu0 0
    %3124 = vmatmul.mubr.bf16.gmra.mrb[0].mxu0 %v2967
    %v3125 = vpop.f32.mrb[0].mxu0
    %v3126 = vadd.f32 %v3004, %v3125
    %v3127 = vpop.f32.mrb[0].mxu0
    %v3128 = vadd.f32 %v3008, %v3127
    %v3129 = vpop.f32.mrb[0].mxu0
    %v3130 = vadd.f32 %v3004, %v3129
    %v3131 = vpop.f32.mrb[0].mxu0
    %v3132 = vadd.f32 %v3008, %v3131
    %3133 = vmatprep.mubr.bf16.mxu0 0
    %3134 = vmatmul.mubr.bf16.gmra.mrb[0].mxu0 %v2968
    %v3135 = vpop.f32.mrb[0].mxu0
    %v3136 = vadd.f32 %v3004, %v3135
    %v3137 = vpop.f32.mrb[0].mxu0
    %v3138 = vadd.f32 %v3008, %v3137
    %v3139 = vpop.f32.mrb[0].mxu0
    %v3140 = vadd.f32 %v3004, %v3139
    %v3141 = vpop.f32.mrb[0].mxu0
    %v3142 = vadd.f32 %v3008, %v3141
    %3143 = vmatprep.mubr.bf16.mxu0 0
    %3144 = vmatmul.mubr.bf16.gmra.mrb[0].mxu0 %v2969
    %v3145 = vpop.f32.mrb[0].mxu0
    %v3146 = vadd.f32 %v3004, %v3145
    %v3147 = vpop.f32.mrb[0].mxu0
    %v3148 = vadd.f32 %v3008, %v3147
    %v3149 = vpop.f32.mrb[0].mxu0
    %v3150 = vadd.f32 %v3004, %v3149
    %v3151 = vpop.f32.mrb[0].mxu0
    %v3152 = vadd.f32 %v3008, %v3151
    %3153 = vmatprep.mubr.bf16.mxu0 0
    %3154 = vmatmul.mubr.bf16.gmra.mrb[0].mxu0 %v2970
    %v3155 = vpop.f32.mrb[0].mxu0
    %v3156 = vadd.f32 %v3004, %v3155
    %v3157 = vpop.f32.mrb[0].mxu0
    %v3158 = vadd.f32 %v3008, %v3157
    %v3159 = vpop.f32.mrb[0].mxu0
    %v3160 = vadd.f32 %v3004, %v3159
    %v3161 = vpop.f32.mrb[0].mxu0
    %v3162 = vadd.f32 %v3008, %v3161
    %3163 = vmatprep.mubr.bf16.mxu0 0
    %3164 = vmatmul.mubr.bf16.gmra.mrb[0].mxu0 %v2971
    %v3165 = vpop.f32.mrb[0].mxu0
    %v3166 = vadd.f32 %v3004, %v3165
    %v3167 = vpop.f32.mrb[0].mxu0
    %v3168 = vadd.f32 %v3008, %v3167
    %v3169 = vpop.f32.mrb[0].mxu0
    %v3170 = vadd.f32 %v3004, %v3169
    %v3171 = vpop.f32.mrb[0].mxu0
    %v3172 = vadd.f32 %v3008, %v3171
    %3173 = vmatprep.mubr.bf16.mxu0 0
    %3174 = vmatmul.mubr.bf16.gmra.mrb[0].mxu0 %v2972
    %v3175 = vpop.f32.mrb[0].mxu0
    %v3176 = vadd.f32 %v3004, %v3175
    %v3177 = vpop.f32.mrb[0].mxu0
    %v3178 = vadd.f32 %v3008, %v3177
    %v3179 = vpop.f32.mrb[0].mxu0
    %v3180 = vadd.f32 %v3004, %v3179
    %v3181 = vpop.f32.mrb[0].mxu0
    %v3182 = vadd.f32 %v3008, %v3181
    %3183 = vmatprep.mubr.bf16.mxu0 0
    %3184 = vmatmul.mubr.bf16.gmra.mrb[0].mxu0 %v2973
    %v3185 = vpop.f32.mrb[0].mxu0
    %v3186 = vadd.f32 %v3004, %v3185
    %v3187 = vpop.f32.mrb[0].mxu0
    %v3188 = vadd.f32 %v3008, %v3187
    %v3189 = vpop.f32.mrb[0].mxu0
    %v3190 = vadd.f32 %v3004, %v3189
    %v3191 = vpop.f32.mrb[0].mxu0
    %v3192 = vadd.f32 %v3008, %v3191
    %3193 = vmatprep.mubr.bf16.mxu0 0
    %3194 = vmatmul.mubr.bf16.gmra.mrb[0].mxu0 %v2974
    %v3195 = vpop.f32.mrb[0].mxu0
    %v3196 = vadd.f32 %v3004, %v3195
    %v3197 = vpop.f32.mrb[0].mxu0
    %v3198 = vadd.f32 %v3008, %v3197
    %v3199 = vpop.f32.mrb[0].mxu0
    %v3200 = vadd.f32 %v3004, %v3199
    %v3201 = vpop.f32.mrb[0].mxu0
    %v3202 = vadd.f32 %v3008, %v3201
    %3203 = vmatprep.mubr.bf16.mxu0 0
    %3204 = vmatmul.mubr.bf16.gmra.mrb[0].mxu0 %v2975
    %v3205 = vpop.f32.mrb[0].mxu0
    %v3206 = vadd.f32 %v3004, %v3205
    %v3207 = vpop.f32.mrb[0].mxu0
    %v3208 = vadd.f32 %v3008, %v3207
    %v3209 = vpop.f32.mrb[0].mxu0
    %v3210 = vadd.f32 %v3004, %v3209
    %v3211 = vpop.f32.mrb[0].mxu0
    %v3212 = vadd.f32 %v3008, %v3211
    %3213 = vmatprep.mubr.bf16.mxu0 0
    %3214 = vmatmul.mubr.bf16.gmra.mrb[0].mxu0 %v2976
    %v3215 = vpop.f32.mrb[0].mxu0
    %v3216 = vadd.f32 %v3004, %v3215
    %v3217 = vpop.f32.mrb[0].mxu0
    %v3218 = vadd.f32 %v3008, %v3217
    %v3219 = vpop.f32.mrb[0].mxu0
    %v3220 = vadd.f32 %v3004, %v3219
    %v3221 = vpop.f32.mrb[0].mxu0
    %v3222 = vadd.f32 %v3008, %v3221
    %3223 = vmatprep.mubr.bf16.mxu0 0
    %3224 = vmatmul.mubr.bf16.gmra.mrb[0].mxu0 %v2977
    %v3225 = vpop.f32.mrb[0].mxu0
    %v3226 = vadd.f32 %v3004, %v3225
    %v3227 = vpop.f32.mrb[0].mxu0
    %v3228 = vadd.f32 %v3008, %v3227
    %v3229 = vpop.f32.mrb[0].mxu0
    %v3230 = vadd.f32 %v3004, %v3229
    %v3231 = vpop.f32.mrb[0].mxu0
    %v3232 = vadd.f32 %v3008, %v3231
    %3233 = vmatprep.mubr.bf16.mxu0 0
    %3234 = vmatmul.mubr.bf16.gmra.mrb[0].mxu0 %v2978
    %v3235 = vpop.f32.mrb[0].mxu0
    %v3236 = vadd.f32 %v3004, %v3235
    %v3237 = vpop.f32.mrb[0].mxu0
    %v3238 = vadd.f32 %v3008, %v3237
    %v3239 = vpop.f32.mrb[0].mxu0
    %v3240 = vadd.f32 %v3004, %v3239
    %v3241 = vpop.f32.mrb[0].mxu0
    %v3242 = vadd.f32 %v3008, %v3241
    %3243 = vmatprep.mubr.bf16.mxu0 0
    %3244 = vmatmul.mubr.bf16.gmra.mrb[0].mxu0 %v2979
    %v3245 = vpop.f32.mrb[0].mxu0
    %v3246 = vadd.f32 %v3004, %v3245
    %v3247 = vpop.f32.mrb[0].mxu0
    %v3248 = vadd.f32 %v3008, %v3247
    %v3249 = vpop.f32.mrb[0].mxu0
    %v3250 = vadd.f32 %v3004, %v3249
    %v3251 = vpop.f32.mrb[0].mxu0
    %v3252 = vadd.f32 %v3008, %v3251
    %3253 = vmatprep.mubr.bf16.mxu0 0
    %3254 = vmatmul.mubr.bf16.gmra.mrb[0].mxu0 %v2980
    %v3255 = vpop.f32.mrb[0].mxu0
    %v3256 = vadd.f32 %v3004, %v3255
    %v3257 = vpop.f32.mrb[0].mxu0
    %v3258 = vadd.f32 %v3008, %v3257
    %v3259 = vpop.f32.mrb[0].mxu0
    %v3260 = vadd.f32 %v3004, %v3259
    %v3261 = vpop.f32.mrb[0].mxu0
    %v3262 = vadd.f32 %v3008, %v3261
    %3263 = vmatprep.mubr.bf16.mxu0 0
    %3264 = vmatmul.mubr.bf16.gmra.mrb[0].mxu0 %v2981
    %v3265 = vpop.f32.mrb[0].mxu0
    %v3266 = vadd.f32 %v3004, %v3265
    %v3267 = vpop.f32.mrb[0].mxu0
    %v3268 = vadd.f32 %v3008, %v3267
    %v3269 = vpop.f32.mrb[0].mxu0
    %v3270 = vadd.f32 %v3004, %v3269
    %v3271 = vpop.f32.mrb[0].mxu0
    %v3272 = vadd.f32 %v3008, %v3271
    %3273 = vmatprep.mubr.bf16.mxu0 0
    %3274 = vmatmul.mubr.bf16.gmra.mrb[0].mxu0 %v2982
    %v3275 = vpop.f32.mrb[0].mxu0
    %v3276 = vadd.f32 %v3004, %v3275
    %v3277 = vpop.f32.mrb[0].mxu0
    %v3278 = vadd.f32 %v3008, %v3277
    %v3279 = vpop.f32.mrb[0].mxu0
    %v3280 = vadd.f32 %v3004, %v3279
    %v3281 = vpop.f32.mrb[0].mxu0
    %v3282 = vadd.f32 %v3008, %v3281
    %3283 = vdwg.mxu0
    %v3284 = vtanh.pop %v3126
    %v3285 = vtanh.pop %v3130
    %v3286 = vtanh.pop %v3136
    %v3287 = vtanh.pop %v3140
    %v3288 = vtanh.pop %v3146
    %v3289 = vtanh.pop %v3150
    %v3290 = vtanh.pop %v3156
    %v3291 = vtanh.pop %v3160
    %v3292 = vtanh.pop %v3166
    %v3293 = vtanh.pop %v3170
    %v3294 = vtanh.pop %v3176
    %v3295 = vtanh.pop %v3180
    %v3296 = vtanh.pop %v3186
    %v3297 = vtanh.pop %v3190
    %v3298 = vtanh.pop %v3196
    %v3299 = vtanh.pop %v3200
    %v3300 = vtanh.pop %v3206
    %v3301 = vtanh.pop %v3210
    %v3302 = vtanh.pop %v3216
    %v3303 = vtanh.pop %v3220
    %v3304 = vtanh.pop %v3226
    %v3305 = vtanh.pop %v3230
    %v3306 = vtanh.pop %v3236
    %v3307 = vtanh.pop %v3240
    %v3308 = vtanh.pop %v3246
    %v3309 = vtanh.pop %v3250
    %v3310 = vtanh.pop %v3256
    %v3311 = vtanh.pop %v3260
    %v3312 = vtanh.pop %v3266
    %v3313 = vtanh.pop %v3270
    %v3314 = vtanh.pop %v3276
    %v3315 = vtanh.pop %v3280
    %v3316 = vmul.f32 %v205, %v3284
    %v3317 = vmul.f32 %v206, %v3285
    %v3318 = vmul.f32 %v207, %v3286
    %v3319 = vmul.f32 %v208, %v3287
    %v3320 = vmul.f32 %v209, %v3288
    %v3321 = vmul.f32 %v210, %v3289
    %v3322 = vmul.f32 %v211, %v3290
    %v3323 = vmul.f32 %v212, %v3291
    %v3324 = vmul.f32 %v213, %v3292
    %v3325 = vmul.f32 %v214, %v3293
    %v3326 = vmul.f32 %v215, %v3294
    %v3327 = vmul.f32 %v216, %v3295
    %v3328 = vmul.f32 %v217, %v3296
    %v3329 = vmul.f32 %v218, %v3297
    %v3330 = vmul.f32 %v219, %v3298
    %v3331 = vmul.f32 %v220, %v3299
    %v3332 = vmul.f32 %v221, %v3300
    %v3333 = vmul.f32 %v222, %v3301
    %v3334 = vmul.f32 %v223, %v3302
    %v3335 = vmul.f32 %v224, %v3303
    %v3336 = vmul.f32 %v225, %v3304
    %v3337 = vmul.f32 %v226, %v3305
    %v3338 = vmul.f32 %v227, %v3306
    %v3339 = vmul.f32 %v228, %v3307
    %v3340 = vmul.f32 %v229, %v3308
    %v3341 = vmul.f32 %v230, %v3309
    %v3342 = vmul.f32 %v231, %v3310
    %v3343 = vmul.f32 %v232, %v3311
    %v3344 = vmul.f32 %v233, %v3312
    %v3345 = vmul.f32 %v234, %v3313
    %v3346 = vmul.f32 %v235, %v3314
    %v3347 = vmul.f32 %v236, %v3315
    %v3348 = vadd.f32 %v3316, %v3128
    %v3349 = vadd.f32 %v3317, %v3132
    %v3350 = vadd.f32 %v3318, %v3138
    %v3351 = vadd.f32 %v3319, %v3142
    %v3352 = vadd.f32 %v3320, %v3148
    %v3353 = vadd.f32 %v3321, %v3152
    %v3354 = vadd.f32 %v3322, %v3158
    %v3355 = vadd.f32 %v3323, %v3162
    %v3356 = vadd.f32 %v3324, %v3168
    %v3357 = vadd.f32 %v3325, %v3172
    %v3358 = vadd.f32 %v3326, %v3178
    %v3359 = vadd.f32 %v3327, %v3182
    %v3360 = vadd.f32 %v3328, %v3188
    %v3361 = vadd.f32 %v3329, %v3192
    %v3362 = vadd.f32 %v3330, %v3198
    %v3363 = vadd.f32 %v3331, %v3202
    %v3364 = vadd.f32 %v3332, %v3208
    %v3365 = vadd.f32 %v3333, %v3212
    %v3366 = vadd.f32 %v3334, %v3218
    %v3367 = vadd.f32 %v3335, %v3222
    %v3368 = vadd.f32 %v3336, %v3228
    %v3369 = vadd.f32 %v3337, %v3232
    %v3370 = vadd.f32 %v3338, %v3238
    %v3371 = vadd.f32 %v3339, %v3242
    %v3372 = vadd.f32 %v3340, %v3248
    %v3373 = vadd.f32 %v3341, %v3252
    %v3374 = vadd.f32 %v3342, %v3258
    %v3375 = vadd.f32 %v3343, %v3262
    %v3376 = vadd.f32 %v3344, %v3268
    %v3377 = vadd.f32 %v3345, %v3272
    %v3378 = vadd.f32 %v3346, %v3278
    %v3379 = vadd.f32 %v3347, %v3282
    %v3380 = vpack.c.bf16 %v3349, %v3348
    %v3381 = vpack.c.bf16 %v3351, %v3350
    %v3382 = vpack.c.bf16 %v3353, %v3352
    %v3383 = vpack.c.bf16 %v3355, %v3354
    %v3384 = vpack.c.bf16 %v3357, %v3356
    %v3385 = vpack.c.bf16 %v3359, %v3358
    %v3386 = vpack.c.bf16 %v3361, %v3360
    %v3387 = vpack.c.bf16 %v3363, %v3362
    %v3388 = vpack.c.bf16 %v3365, %v3364
    %v3389 = vpack.c.bf16 %v3367, %v3366
    %v3390 = vpack.c.bf16 %v3369, %v3368
    %v3391 = vpack.c.bf16 %v3371, %v3370
    %v3392 = vpack.c.bf16 %v3373, %v3372
    %v3393 = vpack.c.bf16 %v3375, %v3374
    %v3394 = vpack.c.bf16 %v3377, %v3376
    %v3395 = vpack.c.bf16 %v3379, %v3378
    %v3396 = vld [vmem:[#allocation8] sm:$0xf]
    %v3397 = vld [vmem:[#allocation8 + $0x4] sm:$0xf]
    %v3398 = vld [vmem:[#allocation8 + $0x8] sm:$0xf]
    %v3399 = vld [vmem:[#allocation8 + $0xc] sm:$0xf]
    %v3400 = vld [vmem:[#allocation8 + $0x10] sm:$0xf]
    %v3401 = vld [vmem:[#allocation8 + $0x14] sm:$0xf]
    %v3402 = vld [vmem:[#allocation8 + $0x18] sm:$0xf]
    %v3403 = vld [vmem:[#allocation8 + $0x1c] sm:$0xf]
    %v3404 = vld [vmem:[#allocation8 + $0x20] sm:$0xf]
    %v3405 = vld [vmem:[#allocation8 + $0x24] sm:$0xf]
    %v3406 = vld [vmem:[#allocation8 + $0x28] sm:$0xf]
    %v3407 = vld [vmem:[#allocation8 + $0x2c] sm:$0xf]
    %v3408 = vld [vmem:[#allocation8 + $0x30] sm:$0xf]
    %v3409 = vld [vmem:[#allocation8 + $0x34] sm:$0xf]
    %v3410 = vld [vmem:[#allocation8 + $0x38] sm:$0xf]
    %v3411 = vld [vmem:[#allocation8 + $0x3c] sm:$0xf]
    %v3412 = vld [vmem:[%s5] sm:$0x1]
    %v3414 = vlaneseq
    %v3415 = vshrl.u32 %v3414, 7
    %v3416 = vsub.s32 0, %v3415
    %v3417 = vrot.slane %v3412, %v3416
    %v3435 = vunpack.c.l.b16 %v3396
    %v3436 = vunpack.c.l.b16 %v3397
    %v3437 = vunpack.c.l.b16 %v3398
    %v3438 = vunpack.c.l.b16 %v3399
    %v3439 = vunpack.c.l.b16 %v3400
    %v3440 = vunpack.c.l.b16 %v3401
    %v3441 = vunpack.c.l.b16 %v3402
    %v3442 = vunpack.c.l.b16 %v3403
    %v3443 = vunpack.c.l.b16 %v3404
    %v3444 = vunpack.c.l.b16 %v3405
    %v3445 = vunpack.c.l.b16 %v3406
    %v3446 = vunpack.c.l.b16 %v3407
    %v3447 = vunpack.c.l.b16 %v3408
    %v3448 = vunpack.c.l.b16 %v3409
    %v3449 = vunpack.c.l.b16 %v3410
    %v3450 = vunpack.c.l.b16 %v3411
    %v3451 = vpack.c.b16 %v3436, %v3435
    %v3452 = vpack.c.b16 %v3438, %v3437
    %v3453 = vpack.c.b16 %v3440, %v3439
    %v3454 = vpack.c.b16 %v3442, %v3441
    %v3455 = vpack.c.b16 %v3444, %v3443
    %v3456 = vpack.c.b16 %v3446, %v3445
    %v3457 = vpack.c.b16 %v3448, %v3447
    %v3458 = vpack.c.b16 %v3450, %v3449
    %3467 = vmatprep.subr.bf16.mxu0 0
    %3468 = vmatpush1.bf16.msra.mxu0 %v3451
    %3469 = vmatprep.subr.bf16.mxu0 0
    %3470 = vmatpush1.bf16.msra.mxu0 %v3452
    %3471 = vmatprep.subr.bf16.mxu0 0
    %3472 = vmatpush1.bf16.msra.mxu0 %v3453
    %3473 = vmatprep.subr.bf16.mxu0 0
    %3474 = vmatpush1.bf16.msra.mxu0 %v3454
    %3475 = vmatprep.subr.bf16.mxu0 0
    %3476 = vmatpush1.bf16.msra.mxu0 %v3455
    %3477 = vmatprep.subr.bf16.mxu0 0
    %3478 = vmatpush1.bf16.msra.mxu0 %v3456
    %3479 = vmatprep.subr.bf16.mxu0 0
    %3480 = vmatpush1.bf16.msra.mxu0 %v3457
    %3481 = vmatprep.subr.bf16.mxu0 0
    %3482 = vmatpush1.bf16.msra.mxu0 %v3458
    %3483 = vmatprep.subr.bf16.mxu0 0
    %3484 = vmatpush1.bf16.msra.mxu0 0
    %3485 = vmatprep.subr.bf16.mxu0 0
    %3486 = vmatpush1.bf16.msra.mxu0 0
    %3487 = vmatprep.subr.bf16.mxu0 0
    %3488 = vmatpush1.bf16.msra.mxu0 0
    %3489 = vmatprep.subr.bf16.mxu0 0
    %3490 = vmatpush1.bf16.msra.mxu0 0
    %3491 = vmatprep.subr.bf16.mxu0 0
    %3492 = vmatpush1.bf16.msra.mxu0 0
    %3493 = vmatprep.subr.bf16.mxu0 0
    %3494 = vmatpush1.bf16.msra.mxu0 0
    %3495 = vmatprep.subr.bf16.mxu0 0
    %3496 = vmatpush1.bf16.msra.mxu0 0
    %3497 = vmatprep.subr.bf16.mxu0 0
    %3498 = vmatpush1.bf16.msra.mxu0 0
    %3499 = vmatprep.mubr.bf16.mxu0 0
    %3500 = vmatmul.mubr.bf16.gmra.mrb[0].mxu0 %v3380
    %v3501 = vpop.f32.mrb[0].mxu0
    %v3502 = vadd.f32 %v3417, %v3501
    %v3503 = vpop.f32.mrb[0].mxu0
    %v3504 = vpop.f32.mrb[0].mxu0
    %v3505 = vadd.f32 %v3417, %v3504
    %v3506 = vpop.f32.mrb[0].mxu0
    %3507 = vmatprep.mubr.bf16.mxu0 0
    %3508 = vmatmul.mubr.bf16.gmra.mrb[0].mxu0 %v3381
    %v3509 = vpop.f32.mrb[0].mxu0
    %v3510 = vadd.f32 %v3417, %v3509
    %v3511 = vpop.f32.mrb[0].mxu0
    %v3512 = vpop.f32.mrb[0].mxu0
    %v3513 = vadd.f32 %v3417, %v3512
    %v3514 = vpop.f32.mrb[0].mxu0
    %3515 = vmatprep.mubr.bf16.mxu0 0
    %3516 = vmatmul.mubr.bf16.gmra.mrb[0].mxu0 %v3382
    %v3517 = vpop.f32.mrb[0].mxu0
    %v3518 = vadd.f32 %v3417, %v3517
    %v3519 = vpop.f32.mrb[0].mxu0
    %v3520 = vpop.f32.mrb[0].mxu0
    %v3521 = vadd.f32 %v3417, %v3520
    %v3522 = vpop.f32.mrb[0].mxu0
    %3523 = vmatprep.mubr.bf16.mxu0 0
    %3524 = vmatmul.mubr.bf16.gmra.mrb[0].mxu0 %v3383
    %v3525 = vpop.f32.mrb[0].mxu0
    %v3526 = vadd.f32 %v3417, %v3525
    %v3527 = vpop.f32.mrb[0].mxu0
    %v3528 = vpop.f32.mrb[0].mxu0
    %v3529 = vadd.f32 %v3417, %v3528
    %v3530 = vpop.f32.mrb[0].mxu0
    %3531 = vmatprep.mubr.bf16.mxu0 0
    %3532 = vmatmul.mubr.bf16.gmra.mrb[0].mxu0 %v3384
    %v3533 = vpop.f32.mrb[0].mxu0
    %v3534 = vadd.f32 %v3417, %v3533
    %v3535 = vpop.f32.mrb[0].mxu0
    %v3536 = vpop.f32.mrb[0].mxu0
    %v3537 = vadd.f32 %v3417, %v3536
    %v3538 = vpop.f32.mrb[0].mxu0
    %3539 = vmatprep.mubr.bf16.mxu0 0
    %3540 = vmatmul.mubr.bf16.gmra.mrb[0].mxu0 %v3385
    %v3541 = vpop.f32.mrb[0].mxu0
    %v3542 = vadd.f32 %v3417, %v3541
    %v3543 = vpop.f32.mrb[0].mxu0
    %v3544 = vpop.f32.mrb[0].mxu0
    %v3545 = vadd.f32 %v3417, %v3544
    %v3546 = vpop.f32.mrb[0].mxu0
    %3547 = vmatprep.mubr.bf16.mxu0 0
    %3548 = vmatmul.mubr.bf16.gmra.mrb[0].mxu0 %v3386
    %v3549 = vpop.f32.mrb[0].mxu0
    %v3550 = vadd.f32 %v3417, %v3549
    %v3551 = vpop.f32.mrb[0].mxu0
    %v3552 = vpop.f32.mrb[0].mxu0
    %v3553 = vadd.f32 %v3417, %v3552
    %v3554 = vpop.f32.mrb[0].mxu0
    %3555 = vmatprep.mubr.bf16.mxu0 0
    %3556 = vmatmul.mubr.bf16.gmra.mrb[0].mxu0 %v3387
    %v3557 = vpop.f32.mrb[0].mxu0
    %v3558 = vadd.f32 %v3417, %v3557
    %v3559 = vpop.f32.mrb[0].mxu0
    %v3560 = vpop.f32.mrb[0].mxu0
    %v3561 = vadd.f32 %v3417, %v3560
    %v3562 = vpop.f32.mrb[0].mxu0
    %3563 = vmatprep.mubr.bf16.mxu0 0
    %3564 = vmatmul.mubr.bf16.gmra.mrb[0].mxu0 %v3388
    %v3565 = vpop.f32.mrb[0].mxu0
    %v3566 = vadd.f32 %v3417, %v3565
    %v3567 = vpop.f32.mrb[0].mxu0
    %v3568 = vpop.f32.mrb[0].mxu0
    %v3569 = vadd.f32 %v3417, %v3568
    %v3570 = vpop.f32.mrb[0].mxu0
    %3571 = vmatprep.mubr.bf16.mxu0 0
    %3572 = vmatmul.mubr.bf16.gmra.mrb[0].mxu0 %v3389
    %v3573 = vpop.f32.mrb[0].mxu0
    %v3574 = vadd.f32 %v3417, %v3573
    %v3575 = vpop.f32.mrb[0].mxu0
    %v3576 = vpop.f32.mrb[0].mxu0
    %v3577 = vadd.f32 %v3417, %v3576
    %v3578 = vpop.f32.mrb[0].mxu0
    %3579 = vmatprep.mubr.bf16.mxu0 0
    %3580 = vmatmul.mubr.bf16.gmra.mrb[0].mxu0 %v3390
    %v3581 = vpop.f32.mrb[0].mxu0
    %v3582 = vadd.f32 %v3417, %v3581
    %v3583 = vpop.f32.mrb[0].mxu0
    %v3584 = vpop.f32.mrb[0].mxu0
    %v3585 = vadd.f32 %v3417, %v3584
    %v3586 = vpop.f32.mrb[0].mxu0
    %3587 = vmatprep.mubr.bf16.mxu0 0
    %3588 = vmatmul.mubr.bf16.gmra.mrb[0].mxu0 %v3391
    %v3589 = vpop.f32.mrb[0].mxu0
    %v3590 = vadd.f32 %v3417, %v3589
    %v3591 = vpop.f32.mrb[0].mxu0
    %v3592 = vpop.f32.mrb[0].mxu0
    %v3593 = vadd.f32 %v3417, %v3592
    %v3594 = vpop.f32.mrb[0].mxu0
    %3595 = vmatprep.mubr.bf16.mxu0 0
    %3596 = vmatmul.mubr.bf16.gmra.mrb[0].mxu0 %v3392
    %v3597 = vpop.f32.mrb[0].mxu0
    %v3598 = vadd.f32 %v3417, %v3597
    %v3599 = vpop.f32.mrb[0].mxu0
    %v3600 = vpop.f32.mrb[0].mxu0
    %v3601 = vadd.f32 %v3417, %v3600
    %v3602 = vpop.f32.mrb[0].mxu0
    %3603 = vmatprep.mubr.bf16.mxu0 0
    %3604 = vmatmul.mubr.bf16.gmra.mrb[0].mxu0 %v3393
    %v3605 = vpop.f32.mrb[0].mxu0
    %v3606 = vadd.f32 %v3417, %v3605
    %v3607 = vpop.f32.mrb[0].mxu0
    %v3608 = vpop.f32.mrb[0].mxu0
    %v3609 = vadd.f32 %v3417, %v3608
    %v3610 = vpop.f32.mrb[0].mxu0
    %3611 = vmatprep.mubr.bf16.mxu0 0
    %3612 = vmatmul.mubr.bf16.gmra.mrb[0].mxu0 %v3394
    %v3613 = vpop.f32.mrb[0].mxu0
    %v3614 = vadd.f32 %v3417, %v3613
    %v3615 = vpop.f32.mrb[0].mxu0
    %v3616 = vpop.f32.mrb[0].mxu0
    %v3617 = vadd.f32 %v3417, %v3616
    %v3618 = vpop.f32.mrb[0].mxu0
    %3619 = vmatprep.mubr.bf16.mxu0 0
    %3620 = vmatmul.mubr.bf16.gmra.mrb[0].mxu0 %v3395
    %v3621 = vpop.f32.mrb[0].mxu0
    %v3622 = vadd.f32 %v3417, %v3621
    %v3623 = vpop.f32.mrb[0].mxu0
    %v3624 = vpop.f32.mrb[0].mxu0
    %v3625 = vadd.f32 %v3417, %v3624
    %v3626 = vpop.f32.mrb[0].mxu0
    %3627 = vdwg.mxu0
    %v3628 = vmax.f32 %v3502, 0.0
    %v3629 = vmax.f32 %v3505, 0.0
    %v3630 = vmax.f32 %v3510, 0.0
    %v3631 = vmax.f32 %v3513, 0.0
    %v3632 = vmax.f32 %v3518, 0.0
    %v3633 = vmax.f32 %v3521, 0.0
    %v3634 = vmax.f32 %v3526, 0.0
    %v3635 = vmax.f32 %v3529, 0.0
    %v3636 = vmax.f32 %v3534, 0.0
    %v3637 = vmax.f32 %v3537, 0.0
    %v3638 = vmax.f32 %v3542, 0.0
    %v3639 = vmax.f32 %v3545, 0.0
    %v3640 = vmax.f32 %v3550, 0.0
    %v3641 = vmax.f32 %v3553, 0.0
    %v3642 = vmax.f32 %v3558, 0.0
    %v3643 = vmax.f32 %v3561, 0.0
    %v3644 = vmax.f32 %v3566, 0.0
    %v3645 = vmax.f32 %v3569, 0.0
    %v3646 = vmax.f32 %v3574, 0.0
    %v3647 = vmax.f32 %v3577, 0.0
    %v3648 = vmax.f32 %v3582, 0.0
    %v3649 = vmax.f32 %v3585, 0.0
    %v3650 = vmax.f32 %v3590, 0.0
    %v3651 = vmax.f32 %v3593, 0.0
    %v3652 = vmax.f32 %v3598, 0.0
    %v3653 = vmax.f32 %v3601, 0.0
    %v3654 = vmax.f32 %v3606, 0.0
    %v3655 = vmax.f32 %v3609, 0.0
    %v3656 = vmax.f32 %v3614, 0.0
    %v3657 = vmax.f32 %v3617, 0.0
    %v3658 = vmax.f32 %v3622, 0.0
    %v3659 = vmax.f32 %v3625, 0.0
    %v3660 = vpack.c.bf16 %v3629, %v3628
    %v3661 = vpack.c.bf16 %v3631, %v3630
    %v3662 = vpack.c.bf16 %v3633, %v3632
    %v3663 = vpack.c.bf16 %v3635, %v3634
    %v3664 = vpack.c.bf16 %v3637, %v3636
    %v3665 = vpack.c.bf16 %v3639, %v3638
    %v3666 = vpack.c.bf16 %v3641, %v3640
    %v3667 = vpack.c.bf16 %v3643, %v3642
    %v3668 = vpack.c.bf16 %v3645, %v3644
    %v3669 = vpack.c.bf16 %v3647, %v3646
    %v3670 = vpack.c.bf16 %v3649, %v3648
    %v3671 = vpack.c.bf16 %v3651, %v3650
    %v3672 = vpack.c.bf16 %v3653, %v3652
    %v3673 = vpack.c.bf16 %v3655, %v3654
    %v3674 = vpack.c.bf16 %v3657, %v3656
    %v3675 = vpack.c.bf16 %v3659, %v3658
    %v3676 = vld [vmem:[#allocation10] sm:$0xf]
    %v3677 = vld [vmem:[#allocation10 + $0x4] sm:$0xf]
    %v3678 = vld [vmem:[#allocation10 + $0x8] sm:$0xf]
    %v3679 = vld [vmem:[#allocation10 + $0xc] sm:$0xf]
    %v3680 = vld [vmem:[#allocation10 + $0x10] sm:$0xf]
    %v3681 = vld [vmem:[#allocation10 + $0x14] sm:$0xf]
    %v3682 = vld [vmem:[#allocation10 + $0x18] sm:$0xf]
    %v3683 = vld [vmem:[#allocation10 + $0x1c] sm:$0xf]
    %v3684 = vld [vmem:[#allocation10 + $0x20] sm:$0xf]
    %v3685 = vld [vmem:[#allocation10 + $0x24] sm:$0xf]
    %v3686 = vld [vmem:[#allocation10 + $0x28] sm:$0xf]
    %v3687 = vld [vmem:[#allocation10 + $0x2c] sm:$0xf]
    %v3688 = vld [vmem:[#allocation10 + $0x30] sm:$0xf]
    %v3689 = vld [vmem:[#allocation10 + $0x34] sm:$0xf]
    %v3690 = vld [vmem:[#allocation10 + $0x38] sm:$0xf]
    %v3691 = vld [vmem:[#allocation10 + $0x3c] sm:$0xf]
    %v3692 = vld [vmem:[%s7] sm:$0x1]
    %v3694 = vlaneseq
    %v3695 = vshrl.u32 %v3694, 7
    %v3696 = vsub.s32 0, %v3695
    %v3697 = vrot.slane %v3692, %v3696
    %v3715 = vunpack.c.l.b16 %v3676
    %v3716 = vunpack.c.l.b16 %v3677
    %v3717 = vunpack.c.l.b16 %v3678
    %v3718 = vunpack.c.l.b16 %v3679
    %v3719 = vunpack.c.l.b16 %v3680
    %v3720 = vunpack.c.l.b16 %v3681
    %v3721 = vunpack.c.l.b16 %v3682
    %v3722 = vunpack.c.l.b16 %v3683
    %v3723 = vunpack.c.l.b16 %v3684
    %v3724 = vunpack.c.l.b16 %v3685
    %v3725 = vunpack.c.l.b16 %v3686
    %v3726 = vunpack.c.l.b16 %v3687
    %v3727 = vunpack.c.l.b16 %v3688
    %v3728 = vunpack.c.l.b16 %v3689
    %v3729 = vunpack.c.l.b16 %v3690
    %v3730 = vunpack.c.l.b16 %v3691
    %v3731 = vpack.c.b16 %v3716, %v3715
    %v3732 = vpack.c.b16 %v3718, %v3717
    %v3733 = vpack.c.b16 %v3720, %v3719
    %v3734 = vpack.c.b16 %v3722, %v3721
    %v3735 = vpack.c.b16 %v3724, %v3723
    %v3736 = vpack.c.b16 %v3726, %v3725
    %v3737 = vpack.c.b16 %v3728, %v3727
    %v3738 = vpack.c.b16 %v3730, %v3729
    %3747 = vmatprep.subr.bf16.mxu0 0
    %3748 = vmatpush1.bf16.msra.mxu0 %v3731
    %3749 = vmatprep.subr.bf16.mxu0 0
    %3750 = vmatpush1.bf16.msra.mxu0 %v3732
    %3751 = vmatprep.subr.bf16.mxu0 0
    %3752 = vmatpush1.bf16.msra.mxu0 %v3733
    %3753 = vmatprep.subr.bf16.mxu0 0
    %3754 = vmatpush1.bf16.msra.mxu0 %v3734
    %3755 = vmatprep.subr.bf16.mxu0 0
    %3756 = vmatpush1.bf16.msra.mxu0 %v3735
    %3757 = vmatprep.subr.bf16.mxu0 0
    %3758 = vmatpush1.bf16.msra.mxu0 %v3736
    %3759 = vmatprep.subr.bf16.mxu0 0
    %3760 = vmatpush1.bf16.msra.mxu0 %v3737
    %3761 = vmatprep.subr.bf16.mxu0 0
    %3762 = vmatpush1.bf16.msra.mxu0 %v3738
    %3763 = vmatprep.subr.bf16.mxu0 0
    %3764 = vmatpush1.bf16.msra.mxu0 0
    %3765 = vmatprep.subr.bf16.mxu0 0
    %3766 = vmatpush1.bf16.msra.mxu0 0
    %3767 = vmatprep.subr.bf16.mxu0 0
    %3768 = vmatpush1.bf16.msra.mxu0 0
    %3769 = vmatprep.subr.bf16.mxu0 0
    %3770 = vmatpush1.bf16.msra.mxu0 0
    %3771 = vmatprep.subr.bf16.mxu0 0
    %3772 = vmatpush1.bf16.msra.mxu0 0
    %3773 = vmatprep.subr.bf16.mxu0 0
    %3774 = vmatpush1.bf16.msra.mxu0 0
    %3775 = vmatprep.subr.bf16.mxu0 0
    %3776 = vmatpush1.bf16.msra.mxu0 0
    %3777 = vmatprep.subr.bf16.mxu0 0
    %3778 = vmatpush1.bf16.msra.mxu0 0
    %3779 = vmatprep.mubr.bf16.mxu0 0
    %3780 = vmatmul.mubr.bf16.gmra.mrb[0].mxu0 %v3660
    %v3781 = vpop.f32.mrb[0].mxu0
    %v3782 = vadd.f32 %v3697, %v3781
    %v3783 = vpop.f32.mrb[0].mxu0
    %v3784 = vpop.f32.mrb[0].mxu0
    %v3785 = vadd.f32 %v3697, %v3784
    %v3786 = vpop.f32.mrb[0].mxu0
    %3787 = vmatprep.mubr.bf16.mxu0 0
    %3788 = vmatmul.mubr.bf16.gmra.mrb[0].mxu0 %v3661
    %v3789 = vpop.f32.mrb[0].mxu0
    %v3790 = vadd.f32 %v3697, %v3789
    %v3791 = vpop.f32.mrb[0].mxu0
    %v3792 = vpop.f32.mrb[0].mxu0
    %v3793 = vadd.f32 %v3697, %v3792
    %v3794 = vpop.f32.mrb[0].mxu0
    %3795 = vmatprep.mubr.bf16.mxu0 0
    %3796 = vmatmul.mubr.bf16.gmra.mrb[0].mxu0 %v3662
    %v3797 = vpop.f32.mrb[0].mxu0
    %v3798 = vadd.f32 %v3697, %v3797
    %v3799 = vpop.f32.mrb[0].mxu0
    %v3800 = vpop.f32.mrb[0].mxu0
    %v3801 = vadd.f32 %v3697, %v3800
    %v3802 = vpop.f32.mrb[0].mxu0
    %3803 = vmatprep.mubr.bf16.mxu0 0
    %3804 = vmatmul.mubr.bf16.gmra.mrb[0].mxu0 %v3663
    %v3805 = vpop.f32.mrb[0].mxu0
    %v3806 = vadd.f32 %v3697, %v3805
    %v3807 = vpop.f32.mrb[0].mxu0
    %v3808 = vpop.f32.mrb[0].mxu0
    %v3809 = vadd.f32 %v3697, %v3808
    %v3810 = vpop.f32.mrb[0].mxu0
    %3811 = vmatprep.mubr.bf16.mxu0 0
    %3812 = vmatmul.mubr.bf16.gmra.mrb[0].mxu0 %v3664
    %v3813 = vpop.f32.mrb[0].mxu0
    %v3814 = vadd.f32 %v3697, %v3813
    %v3815 = vpop.f32.mrb[0].mxu0
    %v3816 = vpop.f32.mrb[0].mxu0
    %v3817 = vadd.f32 %v3697, %v3816
    %v3818 = vpop.f32.mrb[0].mxu0
    %3819 = vmatprep.mubr.bf16.mxu0 0
    %3820 = vmatmul.mubr.bf16.gmra.mrb[0].mxu0 %v3665
    %v3821 = vpop.f32.mrb[0].mxu0
    %v3822 = vadd.f32 %v3697, %v3821
    %v3823 = vpop.f32.mrb[0].mxu0
    %v3824 = vpop.f32.mrb[0].mxu0
    %v3825 = vadd.f32 %v3697, %v3824
    %v3826 = vpop.f32.mrb[0].mxu0
    %3827 = vmatprep.mubr.bf16.mxu0 0
    %3828 = vmatmul.mubr.bf16.gmra.mrb[0].mxu0 %v3666
    %v3829 = vpop.f32.mrb[0].mxu0
    %v3830 = vadd.f32 %v3697, %v3829
    %v3831 = vpop.f32.mrb[0].mxu0
    %v3832 = vpop.f32.mrb[0].mxu0
    %v3833 = vadd.f32 %v3697, %v3832
    %v3834 = vpop.f32.mrb[0].mxu0
    %3835 = vmatprep.mubr.bf16.mxu0 0
    %3836 = vmatmul.mubr.bf16.gmra.mrb[0].mxu0 %v3667
    %v3837 = vpop.f32.mrb[0].mxu0
    %v3838 = vadd.f32 %v3697, %v3837
    %v3839 = vpop.f32.mrb[0].mxu0
    %v3840 = vpop.f32.mrb[0].mxu0
    %v3841 = vadd.f32 %v3697, %v3840
    %v3842 = vpop.f32.mrb[0].mxu0
    %3843 = vmatprep.mubr.bf16.mxu0 0
    %3844 = vmatmul.mubr.bf16.gmra.mrb[0].mxu0 %v3668
    %v3845 = vpop.f32.mrb[0].mxu0
    %v3846 = vadd.f32 %v3697, %v3845
    %v3847 = vpop.f32.mrb[0].mxu0
    %v3848 = vpop.f32.mrb[0].mxu0
    %v3849 = vadd.f32 %v3697, %v3848
    %v3850 = vpop.f32.mrb[0].mxu0
    %3851 = vmatprep.mubr.bf16.mxu0 0
    %3852 = vmatmul.mubr.bf16.gmra.mrb[0].mxu0 %v3669
    %v3853 = vpop.f32.mrb[0].mxu0
    %v3854 = vadd.f32 %v3697, %v3853
    %v3855 = vpop.f32.mrb[0].mxu0
    %v3856 = vpop.f32.mrb[0].mxu0
    %v3857 = vadd.f32 %v3697, %v3856
    %v3858 = vpop.f32.mrb[0].mxu0
    %3859 = vmatprep.mubr.bf16.mxu0 0
    %3860 = vmatmul.mubr.bf16.gmra.mrb[0].mxu0 %v3670
    %v3861 = vpop.f32.mrb[0].mxu0
    %v3862 = vadd.f32 %v3697, %v3861
    %v3863 = vpop.f32.mrb[0].mxu0
    %v3864 = vpop.f32.mrb[0].mxu0
    %v3865 = vadd.f32 %v3697, %v3864
    %v3866 = vpop.f32.mrb[0].mxu0
    %3867 = vmatprep.mubr.bf16.mxu0 0
    %3868 = vmatmul.mubr.bf16.gmra.mrb[0].mxu0 %v3671
    %v3869 = vpop.f32.mrb[0].mxu0
    %v3870 = vadd.f32 %v3697, %v3869
    %v3871 = vpop.f32.mrb[0].mxu0
    %v3872 = vpop.f32.mrb[0].mxu0
    %v3873 = vadd.f32 %v3697, %v3872
    %v3874 = vpop.f32.mrb[0].mxu0
    %3875 = vmatprep.mubr.bf16.mxu0 0
    %3876 = vmatmul.mubr.bf16.gmra.mrb[0].mxu0 %v3672
    %v3877 = vpop.f32.mrb[0].mxu0
    %v3878 = vadd.f32 %v3697, %v3877
    %v3879 = vpop.f32.mrb[0].mxu0
    %v3880 = vpop.f32.mrb[0].mxu0
    %v3881 = vadd.f32 %v3697, %v3880
    %v3882 = vpop.f32.mrb[0].mxu0
    %3883 = vmatprep.mubr.bf16.mxu0 0
    %3884 = vmatmul.mubr.bf16.gmra.mrb[0].mxu0 %v3673
    %v3885 = vpop.f32.mrb[0].mxu0
    %v3886 = vadd.f32 %v3697, %v3885
    %v3887 = vpop.f32.mrb[0].mxu0
    %v3888 = vpop.f32.mrb[0].mxu0
    %v3889 = vadd.f32 %v3697, %v3888
    %v3890 = vpop.f32.mrb[0].mxu0
    %3891 = vmatprep.mubr.bf16.mxu0 0
    %3892 = vmatmul.mubr.bf16.gmra.mrb[0].mxu0 %v3674
    %v3893 = vpop.f32.mrb[0].mxu0
    %v3894 = vadd.f32 %v3697, %v3893
    %v3895 = vpop.f32.mrb[0].mxu0
    %v3896 = vpop.f32.mrb[0].mxu0
    %v3897 = vadd.f32 %v3697, %v3896
    %v3898 = vpop.f32.mrb[0].mxu0
    %3899 = vmatprep.mubr.bf16.mxu0 0
    %3900 = vmatmul.mubr.bf16.gmra.mrb[0].mxu0 %v3675
    %v3901 = vpop.f32.mrb[0].mxu0
    %v3902 = vadd.f32 %v3697, %v3901
    %v3903 = vpop.f32.mrb[0].mxu0
    %v3904 = vpop.f32.mrb[0].mxu0
    %v3905 = vadd.f32 %v3697, %v3904
    %v3906 = vpop.f32.mrb[0].mxu0
    %3907 = vdwg.mxu0
    %v3908 = vadd.f32 %v3782, %v205
    %v3909 = vadd.f32 %v3785, %v206
    %v3910 = vadd.f32 %v3790, %v207
    %v3911 = vadd.f32 %v3793, %v208
    %v3912 = vadd.f32 %v3798, %v209
    %v3913 = vadd.f32 %v3801, %v210
    %v3914 = vadd.f32 %v3806, %v211
    %v3915 = vadd.f32 %v3809, %v212
    %v3916 = vadd.f32 %v3814, %v213
    %v3917 = vadd.f32 %v3817, %v214
    %v3918 = vadd.f32 %v3822, %v215
    %v3919 = vadd.f32 %v3825, %v216
    %v3920 = vadd.f32 %v3830, %v217
    %v3921 = vadd.f32 %v3833, %v218
    %v3922 = vadd.f32 %v3838, %v219
    %v3923 = vadd.f32 %v3841, %v220
    %v3924 = vadd.f32 %v3846, %v221
    %v3925 = vadd.f32 %v3849, %v222
    %v3926 = vadd.f32 %v3854, %v223
    %v3927 = vadd.f32 %v3857, %v224
    %v3928 = vadd.f32 %v3862, %v225
    %v3929 = vadd.f32 %v3865, %v226
    %v3930 = vadd.f32 %v3870, %v227
    %v3931 = vadd.f32 %v3873, %v228
    %v3932 = vadd.f32 %v3878, %v229
    %v3933 = vadd.f32 %v3881, %v230
    %v3934 = vadd.f32 %v3886, %v231
    %v3935 = vadd.f32 %v3889, %v232
    %v3936 = vadd.f32 %v3894, %v233
    %v3937 = vadd.f32 %v3897, %v234
    %v3938 = vadd.f32 %v3902, %v235
    %v3939 = vadd.f32 %v3905, %v236
    %v3940 = vpack.c.bf16 %v3909, %v3908
    %v3941 = vpack.c.bf16 %v3911, %v3910
    %v3942 = vpack.c.bf16 %v3913, %v3912
    %v3943 = vpack.c.bf16 %v3915, %v3914
    %v3944 = vpack.c.bf16 %v3917, %v3916
    %v3945 = vpack.c.bf16 %v3919, %v3918
    %v3946 = vpack.c.bf16 %v3921, %v3920
    %v3947 = vpack.c.bf16 %v3923, %v3922
    %v3948 = vpack.c.bf16 %v3925, %v3924
    %v3949 = vpack.c.bf16 %v3927, %v3926
    %v3950 = vpack.c.bf16 %v3929, %v3928
    %v3951 = vpack.c.bf16 %v3931, %v3930
    %v3952 = vpack.c.bf16 %v3933, %v3932
    %v3953 = vpack.c.bf16 %v3935, %v3934
    %v3954 = vpack.c.bf16 %v3937, %v3936
    %v3955 = vpack.c.bf16 %v3939, %v3938
    %v3972 = vunpack.c.l.b16 %v3940
    %v3973 = vunpack.c.h.b16 %v3940
    %v3974 = vunpack.c.l.b16 %v3941
    %v3975 = vunpack.c.h.b16 %v3941
    %v3976 = vunpack.c.l.b16 %v3942
    %v3977 = vunpack.c.h.b16 %v3942
    %v3978 = vunpack.c.l.b16 %v3943
    %v3979 = vunpack.c.h.b16 %v3943
    %v3980 = vunpack.c.l.b16 %v3944
    %v3981 = vunpack.c.h.b16 %v3944
    %v3982 = vunpack.c.l.b16 %v3945
    %v3983 = vunpack.c.h.b16 %v3945
    %v3984 = vunpack.c.l.b16 %v3946
    %v3985 = vunpack.c.h.b16 %v3946
    %v3986 = vunpack.c.l.b16 %v3947
    %v3987 = vunpack.c.h.b16 %v3947
    %v3988 = vunpack.c.l.b16 %v3948
    %v3989 = vunpack.c.h.b16 %v3948
    %v3990 = vunpack.c.l.b16 %v3949
    %v3991 = vunpack.c.h.b16 %v3949
    %v3992 = vunpack.c.l.b16 %v3950
    %v3993 = vunpack.c.h.b16 %v3950
    %v3994 = vunpack.c.l.b16 %v3951
    %v3995 = vunpack.c.h.b16 %v3951
    %v3996 = vunpack.c.l.b16 %v3952
    %v3997 = vunpack.c.h.b16 %v3952
    %v3998 = vunpack.c.l.b16 %v3953
    %v3999 = vunpack.c.h.b16 %v3953
    %v4000 = vunpack.c.l.b16 %v3954
    %v4001 = vunpack.c.h.b16 %v3954
    %v4002 = vunpack.c.l.b16 %v3955
    %v4003 = vunpack.c.h.b16 %v3955
    %v4004 = vpack.c.b16 %v3972, %v3972
    %v4005 = vpack.c.b16 %v3973, %v3973
    %v4006 = vpack.c.b16 %v3974, %v3974
    %v4007 = vpack.c.b16 %v3975, %v3975
    %v4008 = vpack.c.b16 %v3976, %v3976
    %v4009 = vpack.c.b16 %v3977, %v3977
    %v4010 = vpack.c.b16 %v3978, %v3978
    %v4011 = vpack.c.b16 %v3979, %v3979
    %v4012 = vpack.c.b16 %v3980, %v3980
    %v4013 = vpack.c.b16 %v3981, %v3981
    %v4014 = vpack.c.b16 %v3982, %v3982
    %v4015 = vpack.c.b16 %v3983, %v3983
    %v4016 = vpack.c.b16 %v3984, %v3984
    %v4017 = vpack.c.b16 %v3985, %v3985
    %v4018 = vpack.c.b16 %v3986, %v3986
    %v4019 = vpack.c.b16 %v3987, %v3987
    %v4020 = vpack.c.b16 %v3988, %v3988
    %v4021 = vpack.c.b16 %v3989, %v3989
    %v4022 = vpack.c.b16 %v3990, %v3990
    %v4023 = vpack.c.b16 %v3991, %v3991
    %v4024 = vpack.c.b16 %v3992, %v3992
    %v4025 = vpack.c.b16 %v3993, %v3993
    %v4026 = vpack.c.b16 %v3994, %v3994
    %v4027 = vpack.c.b16 %v3995, %v3995
    %v4028 = vpack.c.b16 %v3996, %v3996
    %v4029 = vpack.c.b16 %v3997, %v3997
    %v4030 = vpack.c.b16 %v3998, %v3998
    %v4031 = vpack.c.b16 %v3999, %v3999
    %v4032 = vpack.c.b16 %v4000, %v4000
    %v4033 = vpack.c.b16 %v4001, %v4001
    %v4034 = vpack.c.b16 %v4002, %v4002
    %v4035 = vpack.c.b16 %v4003, %v4003
    %4068 = vst [vmem:[#allocation14] sm:$0xf] %v4004
    %4069 = vst [vmem:[#allocation14 + $0x4] sm:$0xf] %v4005
    %4070 = vst [vmem:[#allocation14 + $0x8] sm:$0xf] %v4006
    %4071 = vst [vmem:[#allocation14 + $0xc] sm:$0xf] %v4007
    %4072 = vst [vmem:[#allocation14 + $0x10] sm:$0xf] %v4008
    %4073 = vst [vmem:[#allocation14 + $0x14] sm:$0xf] %v4009
    %4074 = vst [vmem:[#allocation14 + $0x18] sm:$0xf] %v4010
    %4075 = vst [vmem:[#allocation14 + $0x1c] sm:$0xf] %v4011
    %4076 = vst [vmem:[#allocation14 + $0x20] sm:$0xf] %v4012
    %4077 = vst [vmem:[#allocation14 + $0x24] sm:$0xf] %v4013
    %4078 = vst [vmem:[#allocation14 + $0x28] sm:$0xf] %v4014
    %4079 = vst [vmem:[#allocation14 + $0x2c] sm:$0xf] %v4015
    %4080 = vst [vmem:[#allocation14 + $0x30] sm:$0xf] %v4016
    %4081 = vst [vmem:[#allocation14 + $0x34] sm:$0xf] %v4017
    %4082 = vst [vmem:[#allocation14 + $0x38] sm:$0xf] %v4018
    %4083 = vst [vmem:[#allocation14 + $0x3c] sm:$0xf] %v4019
    %4084 = vst [vmem:[#allocation14 + $0x40] sm:$0xf] %v4020
    %4085 = vst [vmem:[#allocation14 + $0x44] sm:$0xf] %v4021
    %4086 = vst [vmem:[#allocation14 + $0x48] sm:$0xf] %v4022
    %4087 = vst [vmem:[#allocation14 + $0x4c] sm:$0xf] %v4023
    %4088 = vst [vmem:[#allocation14 + $0x50] sm:$0xf] %v4024
    %4089 = vst [vmem:[#allocation14 + $0x54] sm:$0xf] %v4025
    %4090 = vst [vmem:[#allocation14 + $0x58] sm:$0xf] %v4026
    %4091 = vst [vmem:[#allocation14 + $0x5c] sm:$0xf] %v4027
    %4092 = vst [vmem:[#allocation14 + $0x60] sm:$0xf] %v4028
    %4093 = vst [vmem:[#allocation14 + $0x64] sm:$0xf] %v4029
    %4094 = vst [vmem:[#allocation14 + $0x68] sm:$0xf] %v4030
    %4095 = vst [vmem:[#allocation14 + $0x6c] sm:$0xf] %v4031
    %4096 = vst [vmem:[#allocation14 + $0x70] sm:$0xf] %v4032
    %4097 = vst [vmem:[#allocation14 + $0x74] sm:$0xf] %v4033
    %4098 = vst [vmem:[#allocation14 + $0x78] sm:$0xf] %v4034
    %4099 = vst [vmem:[#allocation14 + $0x7c] sm:$0xf] %v4035
    // Predicated region
    $region78: #{tpu_custom_call.1} parent=1 // pred_check
      _
    $region79: #{tpu_custom_call.1} parent=1 // pred_check_branch
      %4101 = sbr.rel (0) target = $region81
    $region80: #{tpu_custom_call.1} parent=1 // pred_region
      %s4103 = ssub.s32 2048, 2048
      %4104 = vsyncadd [#allocation4], %s4103
      %s4105 = sshll.u32 [#allocation14], 4
      %s4106 = int_to_ptr.vmem [resolvable:$true] %s4105
      %4111 = dma.vmem_to_hbm [thread:$0]  %s4106, 2048, %s12, [#allocation4], 64, 64, 4
    $region81: #{tpu_custom_call.1} parent=1 // pred_fallthru
      _
    // Predicated region
    $region82: #{tpu_custom_call.1} parent=1 // pred_check
      _
    $region83: #{tpu_custom_call.1} parent=1 // pred_check_branch
      %4113 = sbr.rel (0) target = $region85
    $region84: #{tpu_custom_call.1} parent=1 // pred_region
      %s4115 = ssub.s32 256, 256
      %4116 = vsyncadd [#allocation16], %s4115
      %s4117 = sshll.u32 [#allocation15], 4
      %s4118 = int_to_ptr.vmem [resolvable:$true] %s4117
      %4123 = dma.vmem_to_hbm [thread:$0]  %s4118, 256, %s13, [#allocation16], 128, 128, 8
    $region85: #{tpu_custom_call.1} parent=1 // pred_fallthru
      _
    // Predicated region
    $region86: #{tpu_custom_call.1} parent=1 // pred_check
      _
    $region87: #{tpu_custom_call.1} parent=1 // pred_check_branch
      %4125 = sbr.rel (0) target = $region89
    $region88: #{tpu_custom_call.1} parent=1 // pred_region
      %4126 = dma.done [#allocation4], 2048
    $region89: #{tpu_custom_call.1} parent=1 // pred_fallthru
      _
    // Predicated region
    $region90: #{tpu_custom_call.1} parent=1 // pred_check
      _
    $region91: #{tpu_custom_call.1} parent=1 // pred_check_branch
      %4128 = sbr.rel (0) target = $region93
    $region92: #{tpu_custom_call.1} parent=1 // pred_region
      %4129 = dma.done [#allocation16], 256
    $region93: #{tpu_custom_call.1} parent=1 // pred_fallthru
      _
    %4130 = vsyncpa [#allocation3], 1
    %4131 = vsyncpa [#allocation6], 1
    %4132 = vsyncpa [#allocation9], 1
    %4133 = vsyncpa [#allocation12], 1
    %4134 = vsyncpa [#allocation4], 1
    %4135 = vsyncpa [#allocation16], 1

</llo_original>
